<compile_context>
chip_gen: v7x
topology: tpu7x:2x2x1
jax: 0.10.0
libtpu: 0.0.40
codegen_flags: <defaults>
</compile_context>

<pallas_src>
import functools

import jax
import jax.numpy as jnp
from jax.experimental import pallas as pl
from jax.experimental.pallas import tpu as pltpu


def _bigru_kernel(gi_f_ref, gi_b_ref, whh_ref, bhh_ref,
                  out_f_ref, out_b_ref, h_ref, *, hidden, tc, precision):
    """Fused bidirectional GRU recurrence over one block of Tc timesteps.

    gi_*_ref : (Tc, B, 3H) precomputed input projections (+ b_ih), gate order [r,z,n].
               gi_f is the forward-time block; gi_b is the matching reversed-time block
               (consumed back-to-front inside the block).
    whh_ref  : (2H, 6H) block-diagonal [W_hh_f^T, W_hh_b^T]  (resident in VMEM).
    bhh_ref  : (1, 6H)  [b_hh_f | b_hh_b].
    out_*    : (Tc, B, H) per-direction hidden states, time-major.
    h_ref    : (B, 2H) f32 carry [h_fwd | h_bwd], persists across grid steps.
    """
    H = hidden
    i = pl.program_id(0)

    @pl.when(i == 0)
    def _init():
        h_ref[...] = jnp.zeros_like(h_ref)

    whh = whh_ref[...]                        # (2H, 6H), loaded once per block
    bhh = bhh_ref[...].astype(jnp.float32)    # (1, 6H)

    def gates(gi, gh, h_prev):
        # PyTorch GRU:  r,z = sigmoid(...);  n = tanh(i_n + r * (W_hn h + b_hn))
        r = jax.nn.sigmoid(gi[:, :H] + gh[:, :H])
        z = jax.nn.sigmoid(gi[:, H:2 * H] + gh[:, H:2 * H])
        n = jnp.tanh(gi[:, 2 * H:] + r * gh[:, 2 * H:])
        return (1.0 - z) * n + z * h_prev

    def step(j, h):
        # One fused MXU issue for both directions: (B, 2H) x (2H, 6H) -> (B, 6H)
        gh = jnp.dot(h.astype(whh.dtype), whh,
                     preferred_element_type=jnp.float32,
                     precision=precision) + bhh
        gi_f = gi_f_ref[j].astype(jnp.float32)             # time  i*Tc + j
        gi_b = gi_b_ref[tc - 1 - j].astype(jnp.float32)    # time  T-1-(i*Tc+j)

        h_f = gates(gi_f, gh[:, :3 * H], h[:, :H])
        h_b = gates(gi_b, gh[:, 3 * H:], h[:, H:])

        out_f_ref[j] = h_f.astype(out_f_ref.dtype)
        out_b_ref[tc - 1 - j] = h_b.astype(out_b_ref.dtype)
        return jnp.concatenate([h_f, h_b], axis=-1)

    h_ref[...] = jax.lax.fori_loop(0, tc, step, h_ref[...], unroll=min(tc, 8))


def _pick_time_block(T, max_tc=32):
    tc = min(T, max_tc)
    while T % tc:
        tc -= 1
    return tc


def bigru_forward(x, params, *, time_block=None, compute_dtype=jnp.float32):
    """x: (B, T, n_in) f32 -> (B, T, 2H), matching nn.GRU(bidirectional=True, batch_first)."""
    B, T, n_in = x.shape
    H = params["whh_f"].shape[1]          # whh: (3H, H)
    G = 3 * H
    f32 = jnp.float32
    hi = jax.lax.Precision.HIGHEST

    # ---- Hoisted input projection (both directions, all timesteps at once). -----------
    # One big (B*T, n_in) x (n_in, 3H) matmul per direction, emitted time-major so the
    # recurrent kernel streams dense (Tc, B, 3H) tiles.  b_ih is folded in here.
    gi_f = (jnp.einsum("btk,gk->tbg", x, params["wih_f"], precision=hi)
            + params["bih_f"]).astype(compute_dtype)
    gi_b = (jnp.einsum("btk,gk->tbg", x, params["wih_b"], precision=hi)
            + params["bih_b"]).astype(compute_dtype)

    # ---- Recurrent weights: block-diagonal so one MXU issue serves both directions. ---
    zblk = jnp.zeros((H, G), f32)
    whh_cat = jnp.concatenate(
        [jnp.concatenate([params["whh_f"].T, zblk], axis=1),
         jnp.concatenate([zblk, params["whh_b"].T], axis=1)], axis=0
    ).astype(compute_dtype)                                               # (2H, 6H)
    bhh_cat = jnp.concatenate([params["bhh_f"], params["bhh_b"]])[None, :]  # (1, 6H)

    tc = time_block or _pick_time_block(T)
    assert T % tc == 0, (T, tc)
    nb = T // tc

    mm_precision = hi if jnp.dtype(compute_dtype) == jnp.dtype(jnp.float32) else None
    kernel = functools.partial(_bigru_kernel, hidden=H, tc=tc, precision=mm_precision)

    out_f, out_b = pl.pallas_call(
        kernel,
        out_shape=(jax.ShapeDtypeStruct((T, B, H), x.dtype),
                   jax.ShapeDtypeStruct((T, B, H), x.dtype)),
        grid_spec=pltpu.PrefetchScalarGridSpec(
            num_scalar_prefetch=0,
            grid=(nb,),
            in_specs=[
                pl.BlockSpec((tc, B, G), lambda i: (i, 0, 0)),             # gi fwd
                pl.BlockSpec((tc, B, G), lambda i: (nb - 1 - i, 0, 0)),    # gi bwd (reversed)
                pl.BlockSpec(memory_space=pltpu.MemorySpace.VMEM),         # whh (resident)
                pl.BlockSpec(memory_space=pltpu.MemorySpace.VMEM),         # bhh (resident)
            ],
            out_specs=[
                pl.BlockSpec((tc, B, H), lambda i: (i, 0, 0)),             # fwd hidden
                pl.BlockSpec((tc, B, H), lambda i: (nb - 1 - i, 0, 0)),    # bwd hidden
            ],
            scratch_shapes=[pltpu.VMEM((B, 2 * H), jnp.float32)],          # h carry
        ),
        compiler_params=pltpu.CompilerParams(
            dimension_semantics=("arbitrary",),      # sequential recurrence over time
            vmem_limit_bytes=48 * 1024 * 1024,
        ),
    )(gi_f, gi_b, whh_cat, bhh_cat)

    # Single final re-assembly pass to PyTorch's batch-first (B, T, 2H) layout.
    return jnp.transpose(jnp.concatenate([out_f, out_b], axis=-1), (1, 0, 2))


def init_params(key, n_in, hidden):
    """PyTorch nn.GRU parameter shapes, uniform(-1/sqrt(H), 1/sqrt(H)) init."""
    ks = jax.random.split(key, 8)
    bound = 1.0 / float(hidden) ** 0.5
    u = lambda k, shape: jax.random.uniform(k, shape, jnp.float32, -bound, bound)
    return {
        "wih_f": u(ks[0], (3 * hidden, n_in)),
        "whh_f": u(ks[1], (3 * hidden, hidden)),
        "bih_f": u(ks[2], (3 * hidden,)),
        "bhh_f": u(ks[3], (3 * hidden,)),
        "wih_b": u(ks[4], (3 * hidden, n_in)),
        "whh_b": u(ks[5], (3 * hidden, hidden)),
        "bih_b": u(ks[6], (3 * hidden,)),
        "bhh_b": u(ks[7], (3 * hidden,)),
    }


def bigru_reference(x, params):
    """Pure-JAX lax.scan reference with PyTorch GRU semantics."""
    B, T, _ = x.shape
    H = params["whh_f"].shape[1]
    hp = jax.lax.Precision.HIGHEST

    def cell(xt, h, wih, whh, bih, bhh):
        gi = jnp.dot(xt, wih.T, precision=hp) + bih
        gh = jnp.dot(h, whh.T, precision=hp) + bhh
        r = jax.nn.sigmoid(gi[:, :H] + gh[:, :H])
        z = jax.nn.sigmoid(gi[:, H:2 * H] + gh[:, H:2 * H])
        n = jnp.tanh(gi[:, 2 * H:] + r * gh[:, 2 * H:])
        return (1.0 - z) * n + z * h

    def run(x_tm, wih, whh, bih, bhh):
        def step(h, xt):
            h = cell(xt, h, wih, whh, bih, bhh)
            return h, h
        _, ys = jax.lax.scan(step, jnp.zeros((B, H), jnp.float32), x_tm)
        return ys

    x_tm = jnp.transpose(x, (1, 0, 2))
    yf = run(x_tm, params["wih_f"], params["whh_f"], params["bih_f"], params["bhh_f"])
    yb = run(x_tm[::-1], params["wih_b"], params["whh_b"],
             params["bih_b"], params["bhh_b"])[::-1]
    return jnp.transpose(jnp.concatenate([yf, yb], axis=-1), (1, 0, 2))


if __name__ == "__main__":
    B, T, N_IN, HIDDEN = 2, 8, 16, 32

    key = jax.random.PRNGKey(0)
    kx, kp = jax.random.split(key)
    x = jax.random.normal(kx, (B, T, N_IN), jnp.float32)
    params = init_params(kp, N_IN, HIDDEN)

    out = jax.block_until_ready(bigru_forward(x, params))
    assert out.shape == (B, T, 2 * HIDDEN), out.shape

    ref = jax.block_until_ready(bigru_reference(x, params))
    max_err = float(jnp.max(jnp.abs(out - ref)))
    assert jnp.allclose(out, ref, rtol=5e-4, atol=5e-4), max_err

    print("KERNEL_OK")
</pallas_src>

<mosaic_0001>
module attributes {stable_mosaic.version = 11 : i64} {
  func.func @_bigru_kernel(%arg0: i32, %arg1: memref<8x2x96xf32, #tpu.memory_space<vmem>>, %arg2: memref<8x2x96xf32, #tpu.memory_space<vmem>>, %arg3: memref<64x192xf32, #tpu.memory_space<vmem>>, %arg4: memref<1x192xf32, #tpu.memory_space<vmem>>, %arg5: memref<8x2x32xf32, #tpu.memory_space<vmem>>, %arg6: memref<8x2x32xf32, #tpu.memory_space<vmem>>, %arg7: memref<2x64xf32, #tpu.memory_space<vmem>>) attributes {dimension_semantics = [#tpu.dimension_semantics<arbitrary>], iteration_bounds = array<i64: 1>, scalar_prefetch = 0 : i64, scratch_operands = 1 : i64, tpu.core_type = #tpu.core_type<tc>, window_params = [{transform_indices = @transform_0, window_bounds = array<i64: 8, 2, 96>}, {transform_indices = @transform_1, window_bounds = array<i64: 8, 2, 96>}, {pipeline_mode = #tpu.pipeline_mode<synchronous>, transform_indices = @transform_2, window_bounds = array<i64: 64, 192>}, {pipeline_mode = #tpu.pipeline_mode<synchronous>, transform_indices = @transform_3, window_bounds = array<i64: 1, 192>}, {transform_indices = @transform_4, window_bounds = array<i64: 8, 2, 32>}, {transform_indices = @transform_5, window_bounds = array<i64: 8, 2, 32>}]} {
    %c0_i32 = arith.constant 0 : i32
    %0 = arith.cmpi eq, %arg0, %c0_i32 : i32
    %1 = arith.extui %0 : i1 to i32
    %c0_i32_0 = arith.constant 0 : i32
    %2 = arith.cmpi ne, %1, %c0_i32_0 : i32
    scf.if %2 {
      %cst_144 = arith.constant 0.000000e+00 : f32
      %615 = vector.broadcast %cst_144 : f32 to vector<2x64xf32>
      %c0_145 = arith.constant 0 : index
      %c0_146 = arith.constant 0 : index
      %616 = vector.load %arg7[%c0_145, %c0_146] : memref<2x64xf32, #tpu.memory_space<vmem>>, vector<2x64xf32>
      tpu.vector_store %arg7[%c0_145, %c0_146], %615 {strides = array<i32>} : memref<2x64xf32, #tpu.memory_space<vmem>>, vector<2x64xf32>,
    } else {
    }
    %c0 = arith.constant 0 : index
    %c0_1 = arith.constant 0 : index
    %3 = vector.load %arg3[%c0, %c0_1] : memref<64x192xf32, #tpu.memory_space<vmem>>, vector<64x192xf32>
    %c0_2 = arith.constant 0 : index
    %c0_3 = arith.constant 0 : index
    %4 = vector.load %arg4[%c0_2, %c0_3] : memref<1x192xf32, #tpu.memory_space<vmem>>, vector<1x192xf32>
    %c0_4 = arith.constant 0 : index
    %c0_5 = arith.constant 0 : index
    %5 = vector.load %arg7[%c0_4, %c0_5] : memref<2x64xf32, #tpu.memory_space<vmem>>, vector<2x64xf32>
    %c0_i32_6 = arith.constant 0 : i32
    %cst = arith.constant dense<0.000000e+00> : vector<2x192xf32>
    %6 = tpu.matmul %5, %3, %cst {dimension_numbers = #tpu.dot_dimension_numbers<[1], [0], [0], [1], [0, 0, 1, 1], [], []>, precision = #tpu.contract_precision<fp32>} : vector<2x64xf32>, vector<64x192xf32>, vector<2x192xf32> -> vector<2x192xf32>
    %7 = vector.broadcast %4 : vector<1x192xf32> to vector<2x192xf32>
    %8 = arith.addf %6, %7 : vector<2x192xf32>
    %9 = arith.index_cast %c0_i32_6 : i32 to index
    %c0_7 = arith.constant 0 : index
    %c0_8 = arith.constant 0 : index
    %10 = vector.load %arg1[%9, %c0_7, %c0_8] : memref<8x2x96xf32, #tpu.memory_space<vmem>>, vector<1x2x96xf32>
    %11 = vector.shape_cast %10 : vector<1x2x96xf32> to vector<2x96xf32>
    %c7_i32 = arith.constant 7 : i32
    %12 = arith.subi %c7_i32, %c0_i32_6 : i32
    %13 = arith.index_cast %12 : i32 to index
    %c0_9 = arith.constant 0 : index
    %c0_10 = arith.constant 0 : index
    %14 = vector.load %arg2[%13, %c0_9, %c0_10] : memref<8x2x96xf32, #tpu.memory_space<vmem>>, vector<1x2x96xf32>
    %15 = vector.shape_cast %14 : vector<1x2x96xf32> to vector<2x96xf32>
    %16 = vector.extract_strided_slice %8 {offsets = [0, 0], sizes = [2, 96], strides = [1, 1]} : vector<2x192xf32> to vector<2x96xf32>
    %17 = vector.extract_strided_slice %5 {offsets = [0, 0], sizes = [2, 32], strides = [1, 1]} : vector<2x64xf32> to vector<2x32xf32>
    %18 = vector.extract_strided_slice %11 {offsets = [0, 0], sizes = [2, 32], strides = [1, 1]} : vector<2x96xf32> to vector<2x32xf32>
    %19 = vector.extract_strided_slice %16 {offsets = [0, 0], sizes = [2, 32], strides = [1, 1]} : vector<2x96xf32> to vector<2x32xf32>
    %20 = arith.addf %18, %19 : vector<2x32xf32>
    %21 = arith.negf %20 : vector<2x32xf32>
    %22 = math.exp %21 : vector<2x32xf32>
    %cst_11 = arith.constant 1.000000e+00 : f32
    %23 = vector.broadcast %cst_11 : f32 to vector<2x32xf32>
    %24 = arith.addf %23, %22 : vector<2x32xf32>
    %25 = arith.divf %23, %24 : vector<2x32xf32>
    %26 = vector.extract_strided_slice %11 {offsets = [0, 32], sizes = [2, 32], strides = [1, 1]} : vector<2x96xf32> to vector<2x32xf32>
    %27 = vector.extract_strided_slice %16 {offsets = [0, 32], sizes = [2, 32], strides = [1, 1]} : vector<2x96xf32> to vector<2x32xf32>
    %28 = arith.addf %26, %27 : vector<2x32xf32>
    %29 = arith.negf %28 : vector<2x32xf32>
    %30 = math.exp %29 : vector<2x32xf32>
    %cst_12 = arith.constant 1.000000e+00 : f32
    %31 = vector.broadcast %cst_12 : f32 to vector<2x32xf32>
    %32 = arith.addf %31, %30 : vector<2x32xf32>
    %33 = arith.divf %31, %32 : vector<2x32xf32>
    %34 = vector.extract_strided_slice %11 {offsets = [0, 64], sizes = [2, 32], strides = [1, 1]} : vector<2x96xf32> to vector<2x32xf32>
    %35 = vector.extract_strided_slice %16 {offsets = [0, 64], sizes = [2, 32], strides = [1, 1]} : vector<2x96xf32> to vector<2x32xf32>
    %36 = arith.mulf %25, %35 : vector<2x32xf32>
    %37 = arith.addf %34, %36 : vector<2x32xf32>
    %38 = math.tanh %37 : vector<2x32xf32>
    %cst_13 = arith.constant 1.000000e+00 : f32
    %39 = vector.broadcast %cst_13 : f32 to vector<2x32xf32>
    %40 = arith.subf %39, %33 : vector<2x32xf32>
    %41 = arith.mulf %40, %38 : vector<2x32xf32>
    %42 = arith.mulf %33, %17 : vector<2x32xf32>
    %43 = arith.addf %41, %42 : vector<2x32xf32>
    %44 = vector.extract_strided_slice %8 {offsets = [0, 96], sizes = [2, 96], strides = [1, 1]} : vector<2x192xf32> to vector<2x96xf32>
    %45 = vector.extract_strided_slice %5 {offsets = [0, 32], sizes = [2, 32], strides = [1, 1]} : vector<2x64xf32> to vector<2x32xf32>
    %46 = vector.extract_strided_slice %15 {offsets = [0, 0], sizes = [2, 32], strides = [1, 1]} : vector<2x96xf32> to vector<2x32xf32>
    %47 = vector.extract_strided_slice %44 {offsets = [0, 0], sizes = [2, 32], strides = [1, 1]} : vector<2x96xf32> to vector<2x32xf32>
    %48 = arith.addf %46, %47 : vector<2x32xf32>
    %49 = arith.negf %48 : vector<2x32xf32>
    %50 = math.exp %49 : vector<2x32xf32>
    %cst_14 = arith.constant 1.000000e+00 : f32
    %51 = vector.broadcast %cst_14 : f32 to vector<2x32xf32>
    %52 = arith.addf %51, %50 : vector<2x32xf32>
    %53 = arith.divf %51, %52 : vector<2x32xf32>
    %54 = vector.extract_strided_slice %15 {offsets = [0, 32], sizes = [2, 32], strides = [1, 1]} : vector<2x96xf32> to vector<2x32xf32>
    %55 = vector.extract_strided_slice %44 {offsets = [0, 32], sizes = [2, 32], strides = [1, 1]} : vector<2x96xf32> to vector<2x32xf32>
    %56 = arith.addf %54, %55 : vector<2x32xf32>
    %57 = arith.negf %56 : vector<2x32xf32>
    %58 = math.exp %57 : vector<2x32xf32>
    %cst_15 = arith.constant 1.000000e+00 : f32
    %59 = vector.broadcast %cst_15 : f32 to vector<2x32xf32>
    %60 = arith.addf %59, %58 : vector<2x32xf32>
    %61 = arith.divf %59, %60 : vector<2x32xf32>
    %62 = vector.extract_strided_slice %15 {offsets = [0, 64], sizes = [2, 32], strides = [1, 1]} : vector<2x96xf32> to vector<2x32xf32>
    %63 = vector.extract_strided_slice %44 {offsets = [0, 64], sizes = [2, 32], strides = [1, 1]} : vector<2x96xf32> to vector<2x32xf32>
    %64 = arith.mulf %53, %63 : vector<2x32xf32>
    %65 = arith.addf %62, %64 : vector<2x32xf32>
    %66 = math.tanh %65 : vector<2x32xf32>
    %cst_16 = arith.constant 1.000000e+00 : f32
    %67 = vector.broadcast %cst_16 : f32 to vector<2x32xf32>
    %68 = arith.subf %67, %61 : vector<2x32xf32>
    %69 = arith.mulf %68, %66 : vector<2x32xf32>
    %70 = arith.mulf %61, %45 : vector<2x32xf32>
    %71 = arith.addf %69, %70 : vector<2x32xf32>
    %72 = arith.index_cast %c0_i32_6 : i32 to index
    %c0_17 = arith.constant 0 : index
    %c0_18 = arith.constant 0 : index
    %73 = vector.load %arg5[%72, %c0_17, %c0_18] : memref<8x2x32xf32, #tpu.memory_space<vmem>>, vector<1x2x32xf32>
    %74 = vector.shape_cast %73 : vector<1x2x32xf32> to vector<2x32xf32>
    %75 = vector.shape_cast %43 : vector<2x32xf32> to vector<1x2x32xf32>
    tpu.vector_store %arg5[%72, %c0_17, %c0_18], %75 {strides = array<i32>} : memref<8x2x32xf32, #tpu.memory_space<vmem>>, vector<1x2x32xf32>,
    %c7_i32_19 = arith.constant 7 : i32
    %76 = arith.subi %c7_i32_19, %c0_i32_6 : i32
    %77 = arith.index_cast %76 : i32 to index
    %c0_20 = arith.constant 0 : index
    %c0_21 = arith.constant 0 : index
    %78 = vector.load %arg6[%77, %c0_20, %c0_21] : memref<8x2x32xf32, #tpu.memory_space<vmem>>, vector<1x2x32xf32>
    %79 = vector.shape_cast %78 : vector<1x2x32xf32> to vector<2x32xf32>
    %80 = vector.shape_cast %71 : vector<2x32xf32> to vector<1x2x32xf32>
    tpu.vector_store %arg6[%77, %c0_20, %c0_21], %80 {strides = array<i32>} : memref<8x2x32xf32, #tpu.memory_space<vmem>>, vector<1x2x32xf32>,
    %81 = tpu.concatenate %43, %71 in 1 : vector<2x32xf32>, vector<2x32xf32> -> vector<2x64xf32>
    %c1_i32 = arith.constant 1 : i32
    %cst_22 = arith.constant dense<0.000000e+00> : vector<2x192xf32>
    %82 = tpu.matmul %81, %3, %cst_22 {dimension_numbers = #tpu.dot_dimension_numbers<[1], [0], [0], [1], [0, 0, 1, 1], [], []>, precision = #tpu.contract_precision<fp32>} : vector<2x64xf32>, vector<64x192xf32>, vector<2x192xf32> -> vector<2x192xf32>
    %83 = vector.broadcast %4 : vector<1x192xf32> to vector<2x192xf32>
    %84 = arith.addf %82, %83 : vector<2x192xf32>
    %85 = arith.index_cast %c1_i32 : i32 to index
    %c0_23 = arith.constant 0 : index
    %c0_24 = arith.constant 0 : index
    %86 = vector.load %arg1[%85, %c0_23, %c0_24] : memref<8x2x96xf32, #tpu.memory_space<vmem>>, vector<1x2x96xf32>
    %87 = vector.shape_cast %86 : vector<1x2x96xf32> to vector<2x96xf32>
    %c7_i32_25 = arith.constant 7 : i32
    %88 = arith.subi %c7_i32_25, %c1_i32 : i32
    %89 = arith.index_cast %88 : i32 to index
    %c0_26 = arith.constant 0 : index
    %c0_27 = arith.constant 0 : index
    %90 = vector.load %arg2[%89, %c0_26, %c0_27] : memref<8x2x96xf32, #tpu.memory_space<vmem>>, vector<1x2x96xf32>
    %91 = vector.shape_cast %90 : vector<1x2x96xf32> to vector<2x96xf32>
    %92 = vector.extract_strided_slice %84 {offsets = [0, 0], sizes = [2, 96], strides = [1, 1]} : vector<2x192xf32> to vector<2x96xf32>
    %93 = vector.extract_strided_slice %81 {offsets = [0, 0], sizes = [2, 32], strides = [1, 1]} : vector<2x64xf32> to vector<2x32xf32>
    %94 = vector.extract_strided_slice %87 {offsets = [0, 0], sizes = [2, 32], strides = [1, 1]} : vector<2x96xf32> to vector<2x32xf32>
    %95 = vector.extract_strided_slice %92 {offsets = [0, 0], sizes = [2, 32], strides = [1, 1]} : vector<2x96xf32> to vector<2x32xf32>
    %96 = arith.addf %94, %95 : vector<2x32xf32>
    %97 = arith.negf %96 : vector<2x32xf32>
    %98 = math.exp %97 : vector<2x32xf32>
    %cst_28 = arith.constant 1.000000e+00 : f32
    %99 = vector.broadcast %cst_28 : f32 to vector<2x32xf32>
    %100 = arith.addf %99, %98 : vector<2x32xf32>
    %101 = arith.divf %99, %100 : vector<2x32xf32>
    %102 = vector.extract_strided_slice %87 {offsets = [0, 32], sizes = [2, 32], strides = [1, 1]} : vector<2x96xf32> to vector<2x32xf32>
    %103 = vector.extract_strided_slice %92 {offsets = [0, 32], sizes = [2, 32], strides = [1, 1]} : vector<2x96xf32> to vector<2x32xf32>
    %104 = arith.addf %102, %103 : vector<2x32xf32>
    %105 = arith.negf %104 : vector<2x32xf32>
    %106 = math.exp %105 : vector<2x32xf32>
    %cst_29 = arith.constant 1.000000e+00 : f32
    %107 = vector.broadcast %cst_29 : f32 to vector<2x32xf32>
    %108 = arith.addf %107, %106 : vector<2x32xf32>
    %109 = arith.divf %107, %108 : vector<2x32xf32>
    %110 = vector.extract_strided_slice %87 {offsets = [0, 64], sizes = [2, 32], strides = [1, 1]} : vector<2x96xf32> to vector<2x32xf32>
    %111 = vector.extract_strided_slice %92 {offsets = [0, 64], sizes = [2, 32], strides = [1, 1]} : vector<2x96xf32> to vector<2x32xf32>
    %112 = arith.mulf %101, %111 : vector<2x32xf32>
    %113 = arith.addf %110, %112 : vector<2x32xf32>
    %114 = math.tanh %113 : vector<2x32xf32>
    %cst_30 = arith.constant 1.000000e+00 : f32
    %115 = vector.broadcast %cst_30 : f32 to vector<2x32xf32>
    %116 = arith.subf %115, %109 : vector<2x32xf32>
    %117 = arith.mulf %116, %114 : vector<2x32xf32>
    %118 = arith.mulf %109, %93 : vector<2x32xf32>
    %119 = arith.addf %117, %118 : vector<2x32xf32>
    %120 = vector.extract_strided_slice %84 {offsets = [0, 96], sizes = [2, 96], strides = [1, 1]} : vector<2x192xf32> to vector<2x96xf32>
    %121 = vector.extract_strided_slice %81 {offsets = [0, 32], sizes = [2, 32], strides = [1, 1]} : vector<2x64xf32> to vector<2x32xf32>
    %122 = vector.extract_strided_slice %91 {offsets = [0, 0], sizes = [2, 32], strides = [1, 1]} : vector<2x96xf32> to vector<2x32xf32>
    %123 = vector.extract_strided_slice %120 {offsets = [0, 0], sizes = [2, 32], strides = [1, 1]} : vector<2x96xf32> to vector<2x32xf32>
    %124 = arith.addf %122, %123 : vector<2x32xf32>
    %125 = arith.negf %124 : vector<2x32xf32>
    %126 = math.exp %125 : vector<2x32xf32>
    %cst_31 = arith.constant 1.000000e+00 : f32
    %127 = vector.broadcast %cst_31 : f32 to vector<2x32xf32>
    %128 = arith.addf %127, %126 : vector<2x32xf32>
    %129 = arith.divf %127, %128 : vector<2x32xf32>
    %130 = vector.extract_strided_slice %91 {offsets = [0, 32], sizes = [2, 32], strides = [1, 1]} : vector<2x96xf32> to vector<2x32xf32>
    %131 = vector.extract_strided_slice %120 {offsets = [0, 32], sizes = [2, 32], strides = [1, 1]} : vector<2x96xf32> to vector<2x32xf32>
    %132 = arith.addf %130, %131 : vector<2x32xf32>
    %133 = arith.negf %132 : vector<2x32xf32>
    %134 = math.exp %133 : vector<2x32xf32>
    %cst_32 = arith.constant 1.000000e+00 : f32
    %135 = vector.broadcast %cst_32 : f32 to vector<2x32xf32>
    %136 = arith.addf %135, %134 : vector<2x32xf32>
    %137 = arith.divf %135, %136 : vector<2x32xf32>
    %138 = vector.extract_strided_slice %91 {offsets = [0, 64], sizes = [2, 32], strides = [1, 1]} : vector<2x96xf32> to vector<2x32xf32>
    %139 = vector.extract_strided_slice %120 {offsets = [0, 64], sizes = [2, 32], strides = [1, 1]} : vector<2x96xf32> to vector<2x32xf32>
    %140 = arith.mulf %129, %139 : vector<2x32xf32>
    %141 = arith.addf %138, %140 : vector<2x32xf32>
    %142 = math.tanh %141 : vector<2x32xf32>
    %cst_33 = arith.constant 1.000000e+00 : f32
    %143 = vector.broadcast %cst_33 : f32 to vector<2x32xf32>
    %144 = arith.subf %143, %137 : vector<2x32xf32>
    %145 = arith.mulf %144, %142 : vector<2x32xf32>
    %146 = arith.mulf %137, %121 : vector<2x32xf32>
    %147 = arith.addf %145, %146 : vector<2x32xf32>
    %148 = arith.index_cast %c1_i32 : i32 to index
    %c0_34 = arith.constant 0 : index
    %c0_35 = arith.constant 0 : index
    %149 = vector.load %arg5[%148, %c0_34, %c0_35] : memref<8x2x32xf32, #tpu.memory_space<vmem>>, vector<1x2x32xf32>
    %150 = vector.shape_cast %149 : vector<1x2x32xf32> to vector<2x32xf32>
    %151 = vector.shape_cast %119 : vector<2x32xf32> to vector<1x2x32xf32>
    tpu.vector_store %arg5[%148, %c0_34, %c0_35], %151 {strides = array<i32>} : memref<8x2x32xf32, #tpu.memory_space<vmem>>, vector<1x2x32xf32>,
    %c7_i32_36 = arith.constant 7 : i32
    %152 = arith.subi %c7_i32_36, %c1_i32 : i32
    %153 = arith.index_cast %152 : i32 to index
    %c0_37 = arith.constant 0 : index
    %c0_38 = arith.constant 0 : index
    %154 = vector.load %arg6[%153, %c0_37, %c0_38] : memref<8x2x32xf32, #tpu.memory_space<vmem>>, vector<1x2x32xf32>
    %155 = vector.shape_cast %154 : vector<1x2x32xf32> to vector<2x32xf32>
    %156 = vector.shape_cast %147 : vector<2x32xf32> to vector<1x2x32xf32>
    tpu.vector_store %arg6[%153, %c0_37, %c0_38], %156 {strides = array<i32>} : memref<8x2x32xf32, #tpu.memory_space<vmem>>, vector<1x2x32xf32>,
    %157 = tpu.concatenate %119, %147 in 1 : vector<2x32xf32>, vector<2x32xf32> -> vector<2x64xf32>
    %c2_i32 = arith.constant 2 : i32
    %cst_39 = arith.constant dense<0.000000e+00> : vector<2x192xf32>
    %158 = tpu.matmul %157, %3, %cst_39 {dimension_numbers = #tpu.dot_dimension_numbers<[1], [0], [0], [1], [0, 0, 1, 1], [], []>, precision = #tpu.contract_precision<fp32>} : vector<2x64xf32>, vector<64x192xf32>, vector<2x192xf32> -> vector<2x192xf32>
    %159 = vector.broadcast %4 : vector<1x192xf32> to vector<2x192xf32>
    %160 = arith.addf %158, %159 : vector<2x192xf32>
    %161 = arith.index_cast %c2_i32 : i32 to index
    %c0_40 = arith.constant 0 : index
    %c0_41 = arith.constant 0 : index
    %162 = vector.load %arg1[%161, %c0_40, %c0_41] : memref<8x2x96xf32, #tpu.memory_space<vmem>>, vector<1x2x96xf32>
    %163 = vector.shape_cast %162 : vector<1x2x96xf32> to vector<2x96xf32>
    %c7_i32_42 = arith.constant 7 : i32
    %164 = arith.subi %c7_i32_42, %c2_i32 : i32
    %165 = arith.index_cast %164 : i32 to index
    %c0_43 = arith.constant 0 : index
    %c0_44 = arith.constant 0 : index
    %166 = vector.load %arg2[%165, %c0_43, %c0_44] : memref<8x2x96xf32, #tpu.memory_space<vmem>>, vector<1x2x96xf32>
    %167 = vector.shape_cast %166 : vector<1x2x96xf32> to vector<2x96xf32>
    %168 = vector.extract_strided_slice %160 {offsets = [0, 0], sizes = [2, 96], strides = [1, 1]} : vector<2x192xf32> to vector<2x96xf32>
    %169 = vector.extract_strided_slice %157 {offsets = [0, 0], sizes = [2, 32], strides = [1, 1]} : vector<2x64xf32> to vector<2x32xf32>
    %170 = vector.extract_strided_slice %163 {offsets = [0, 0], sizes = [2, 32], strides = [1, 1]} : vector<2x96xf32> to vector<2x32xf32>
    %171 = vector.extract_strided_slice %168 {offsets = [0, 0], sizes = [2, 32], strides = [1, 1]} : vector<2x96xf32> to vector<2x32xf32>
    %172 = arith.addf %170, %171 : vector<2x32xf32>
    %173 = arith.negf %172 : vector<2x32xf32>
    %174 = math.exp %173 : vector<2x32xf32>
    %cst_45 = arith.constant 1.000000e+00 : f32
    %175 = vector.broadcast %cst_45 : f32 to vector<2x32xf32>
    %176 = arith.addf %175, %174 : vector<2x32xf32>
    %177 = arith.divf %175, %176 : vector<2x32xf32>
    %178 = vector.extract_strided_slice %163 {offsets = [0, 32], sizes = [2, 32], strides = [1, 1]} : vector<2x96xf32> to vector<2x32xf32>
    %179 = vector.extract_strided_slice %168 {offsets = [0, 32], sizes = [2, 32], strides = [1, 1]} : vector<2x96xf32> to vector<2x32xf32>
    %180 = arith.addf %178, %179 : vector<2x32xf32>
    %181 = arith.negf %180 : vector<2x32xf32>
    %182 = math.exp %181 : vector<2x32xf32>
    %cst_46 = arith.constant 1.000000e+00 : f32
    %183 = vector.broadcast %cst_46 : f32 to vector<2x32xf32>
    %184 = arith.addf %183, %182 : vector<2x32xf32>
    %185 = arith.divf %183, %184 : vector<2x32xf32>
    %186 = vector.extract_strided_slice %163 {offsets = [0, 64], sizes = [2, 32], strides = [1, 1]} : vector<2x96xf32> to vector<2x32xf32>
    %187 = vector.extract_strided_slice %168 {offsets = [0, 64], sizes = [2, 32], strides = [1, 1]} : vector<2x96xf32> to vector<2x32xf32>
    %188 = arith.mulf %177, %187 : vector<2x32xf32>
    %189 = arith.addf %186, %188 : vector<2x32xf32>
    %190 = math.tanh %189 : vector<2x32xf32>
    %cst_47 = arith.constant 1.000000e+00 : f32
    %191 = vector.broadcast %cst_47 : f32 to vector<2x32xf32>
    %192 = arith.subf %191, %185 : vector<2x32xf32>
    %193 = arith.mulf %192, %190 : vector<2x32xf32>
    %194 = arith.mulf %185, %169 : vector<2x32xf32>
    %195 = arith.addf %193, %194 : vector<2x32xf32>
    %196 = vector.extract_strided_slice %160 {offsets = [0, 96], sizes = [2, 96], strides = [1, 1]} : vector<2x192xf32> to vector<2x96xf32>
    %197 = vector.extract_strided_slice %157 {offsets = [0, 32], sizes = [2, 32], strides = [1, 1]} : vector<2x64xf32> to vector<2x32xf32>
    %198 = vector.extract_strided_slice %167 {offsets = [0, 0], sizes = [2, 32], strides = [1, 1]} : vector<2x96xf32> to vector<2x32xf32>
    %199 = vector.extract_strided_slice %196 {offsets = [0, 0], sizes = [2, 32], strides = [1, 1]} : vector<2x96xf32> to vector<2x32xf32>
    %200 = arith.addf %198, %199 : vector<2x32xf32>
    %201 = arith.negf %200 : vector<2x32xf32>
    %202 = math.exp %201 : vector<2x32xf32>
    %cst_48 = arith.constant 1.000000e+00 : f32
    %203 = vector.broadcast %cst_48 : f32 to vector<2x32xf32>
    %204 = arith.addf %203, %202 : vector<2x32xf32>
    %205 = arith.divf %203, %204 : vector<2x32xf32>
    %206 = vector.extract_strided_slice %167 {offsets = [0, 32], sizes = [2, 32], strides = [1, 1]} : vector<2x96xf32> to vector<2x32xf32>
    %207 = vector.extract_strided_slice %196 {offsets = [0, 32], sizes = [2, 32], strides = [1, 1]} : vector<2x96xf32> to vector<2x32xf32>
    %208 = arith.addf %206, %207 : vector<2x32xf32>
    %209 = arith.negf %208 : vector<2x32xf32>
    %210 = math.exp %209 : vector<2x32xf32>
    %cst_49 = arith.constant 1.000000e+00 : f32
    %211 = vector.broadcast %cst_49 : f32 to vector<2x32xf32>
    %212 = arith.addf %211, %210 : vector<2x32xf32>
    %213 = arith.divf %211, %212 : vector<2x32xf32>
    %214 = vector.extract_strided_slice %167 {offsets = [0, 64], sizes = [2, 32], strides = [1, 1]} : vector<2x96xf32> to vector<2x32xf32>
    %215 = vector.extract_strided_slice %196 {offsets = [0, 64], sizes = [2, 32], strides = [1, 1]} : vector<2x96xf32> to vector<2x32xf32>
    %216 = arith.mulf %205, %215 : vector<2x32xf32>
    %217 = arith.addf %214, %216 : vector<2x32xf32>
    %218 = math.tanh %217 : vector<2x32xf32>
    %cst_50 = arith.constant 1.000000e+00 : f32
    %219 = vector.broadcast %cst_50 : f32 to vector<2x32xf32>
    %220 = arith.subf %219, %213 : vector<2x32xf32>
    %221 = arith.mulf %220, %218 : vector<2x32xf32>
    %222 = arith.mulf %213, %197 : vector<2x32xf32>
    %223 = arith.addf %221, %222 : vector<2x32xf32>
    %224 = arith.index_cast %c2_i32 : i32 to index
    %c0_51 = arith.constant 0 : index
    %c0_52 = arith.constant 0 : index
    %225 = vector.load %arg5[%224, %c0_51, %c0_52] : memref<8x2x32xf32, #tpu.memory_space<vmem>>, vector<1x2x32xf32>
    %226 = vector.shape_cast %225 : vector<1x2x32xf32> to vector<2x32xf32>
    %227 = vector.shape_cast %195 : vector<2x32xf32> to vector<1x2x32xf32>
    tpu.vector_store %arg5[%224, %c0_51, %c0_52], %227 {strides = array<i32>} : memref<8x2x32xf32, #tpu.memory_space<vmem>>, vector<1x2x32xf32>,
    %c7_i32_53 = arith.constant 7 : i32
    %228 = arith.subi %c7_i32_53, %c2_i32 : i32
    %229 = arith.index_cast %228 : i32 to index
    %c0_54 = arith.constant 0 : index
    %c0_55 = arith.constant 0 : index
    %230 = vector.load %arg6[%229, %c0_54, %c0_55] : memref<8x2x32xf32, #tpu.memory_space<vmem>>, vector<1x2x32xf32>
    %231 = vector.shape_cast %230 : vector<1x2x32xf32> to vector<2x32xf32>
    %232 = vector.shape_cast %223 : vector<2x32xf32> to vector<1x2x32xf32>
    tpu.vector_store %arg6[%229, %c0_54, %c0_55], %232 {strides = array<i32>} : memref<8x2x32xf32, #tpu.memory_space<vmem>>, vector<1x2x32xf32>,
    %233 = tpu.concatenate %195, %223 in 1 : vector<2x32xf32>, vector<2x32xf32> -> vector<2x64xf32>
    %c3_i32 = arith.constant 3 : i32
    %cst_56 = arith.constant dense<0.000000e+00> : vector<2x192xf32>
    %234 = tpu.matmul %233, %3, %cst_56 {dimension_numbers = #tpu.dot_dimension_numbers<[1], [0], [0], [1], [0, 0, 1, 1], [], []>, precision = #tpu.contract_precision<fp32>} : vector<2x64xf32>, vector<64x192xf32>, vector<2x192xf32> -> vector<2x192xf32>
    %235 = vector.broadcast %4 : vector<1x192xf32> to vector<2x192xf32>
    %236 = arith.addf %234, %235 : vector<2x192xf32>
    %237 = arith.index_cast %c3_i32 : i32 to index
    %c0_57 = arith.constant 0 : index
    %c0_58 = arith.constant 0 : index
    %238 = vector.load %arg1[%237, %c0_57, %c0_58] : memref<8x2x96xf32, #tpu.memory_space<vmem>>, vector<1x2x96xf32>
    %239 = vector.shape_cast %238 : vector<1x2x96xf32> to vector<2x96xf32>
    %c7_i32_59 = arith.constant 7 : i32
    %240 = arith.subi %c7_i32_59, %c3_i32 : i32
    %241 = arith.index_cast %240 : i32 to index
    %c0_60 = arith.constant 0 : index
    %c0_61 = arith.constant 0 : index
    %242 = vector.load %arg2[%241, %c0_60, %c0_61] : memref<8x2x96xf32, #tpu.memory_space<vmem>>, vector<1x2x96xf32>
    %243 = vector.shape_cast %242 : vector<1x2x96xf32> to vector<2x96xf32>
    %244 = vector.extract_strided_slice %236 {offsets = [0, 0], sizes = [2, 96], strides = [1, 1]} : vector<2x192xf32> to vector<2x96xf32>
    %245 = vector.extract_strided_slice %233 {offsets = [0, 0], sizes = [2, 32], strides = [1, 1]} : vector<2x64xf32> to vector<2x32xf32>
    %246 = vector.extract_strided_slice %239 {offsets = [0, 0], sizes = [2, 32], strides = [1, 1]} : vector<2x96xf32> to vector<2x32xf32>
    %247 = vector.extract_strided_slice %244 {offsets = [0, 0], sizes = [2, 32], strides = [1, 1]} : vector<2x96xf32> to vector<2x32xf32>
    %248 = arith.addf %246, %247 : vector<2x32xf32>
    %249 = arith.negf %248 : vector<2x32xf32>
    %250 = math.exp %249 : vector<2x32xf32>
    %cst_62 = arith.constant 1.000000e+00 : f32
    %251 = vector.broadcast %cst_62 : f32 to vector<2x32xf32>
    %252 = arith.addf %251, %250 : vector<2x32xf32>
    %253 = arith.divf %251, %252 : vector<2x32xf32>
    %254 = vector.extract_strided_slice %239 {offsets = [0, 32], sizes = [2, 32], strides = [1, 1]} : vector<2x96xf32> to vector<2x32xf32>
    %255 = vector.extract_strided_slice %244 {offsets = [0, 32], sizes = [2, 32], strides = [1, 1]} : vector<2x96xf32> to vector<2x32xf32>
    %256 = arith.addf %254, %255 : vector<2x32xf32>
    %257 = arith.negf %256 : vector<2x32xf32>
    %258 = math.exp %257 : vector<2x32xf32>
    %cst_63 = arith.constant 1.000000e+00 : f32
    %259 = vector.broadcast %cst_63 : f32 to vector<2x32xf32>
    %260 = arith.addf %259, %258 : vector<2x32xf32>
    %261 = arith.divf %259, %260 : vector<2x32xf32>
    %262 = vector.extract_strided_slice %239 {offsets = [0, 64], sizes = [2, 32], strides = [1, 1]} : vector<2x96xf32> to vector<2x32xf32>
    %263 = vector.extract_strided_slice %244 {offsets = [0, 64], sizes = [2, 32], strides = [1, 1]} : vector<2x96xf32> to vector<2x32xf32>
    %264 = arith.mulf %253, %263 : vector<2x32xf32>
    %265 = arith.addf %262, %264 : vector<2x32xf32>
    %266 = math.tanh %265 : vector<2x32xf32>
    %cst_64 = arith.constant 1.000000e+00 : f32
    %267 = vector.broadcast %cst_64 : f32 to vector<2x32xf32>
    %268 = arith.subf %267, %261 : vector<2x32xf32>
    %269 = arith.mulf %268, %266 : vector<2x32xf32>
    %270 = arith.mulf %261, %245 : vector<2x32xf32>
    %271 = arith.addf %269, %270 : vector<2x32xf32>
    %272 = vector.extract_strided_slice %236 {offsets = [0, 96], sizes = [2, 96], strides = [1, 1]} : vector<2x192xf32> to vector<2x96xf32>
    %273 = vector.extract_strided_slice %233 {offsets = [0, 32], sizes = [2, 32], strides = [1, 1]} : vector<2x64xf32> to vector<2x32xf32>
    %274 = vector.extract_strided_slice %243 {offsets = [0, 0], sizes = [2, 32], strides = [1, 1]} : vector<2x96xf32> to vector<2x32xf32>
    %275 = vector.extract_strided_slice %272 {offsets = [0, 0], sizes = [2, 32], strides = [1, 1]} : vector<2x96xf32> to vector<2x32xf32>
    %276 = arith.addf %274, %275 : vector<2x32xf32>
    %277 = arith.negf %276 : vector<2x32xf32>
    %278 = math.exp %277 : vector<2x32xf32>
    %cst_65 = arith.constant 1.000000e+00 : f32
    %279 = vector.broadcast %cst_65 : f32 to vector<2x32xf32>
    %280 = arith.addf %279, %278 : vector<2x32xf32>
    %281 = arith.divf %279, %280 : vector<2x32xf32>
    %282 = vector.extract_strided_slice %243 {offsets = [0, 32], sizes = [2, 32], strides = [1, 1]} : vector<2x96xf32> to vector<2x32xf32>
    %283 = vector.extract_strided_slice %272 {offsets = [0, 32], sizes = [2, 32], strides = [1, 1]} : vector<2x96xf32> to vector<2x32xf32>
    %284 = arith.addf %282, %283 : vector<2x32xf32>
    %285 = arith.negf %284 : vector<2x32xf32>
    %286 = math.exp %285 : vector<2x32xf32>
    %cst_66 = arith.constant 1.000000e+00 : f32
    %287 = vector.broadcast %cst_66 : f32 to vector<2x32xf32>
    %288 = arith.addf %287, %286 : vector<2x32xf32>
    %289 = arith.divf %287, %288 : vector<2x32xf32>
    %290 = vector.extract_strided_slice %243 {offsets = [0, 64], sizes = [2, 32], strides = [1, 1]} : vector<2x96xf32> to vector<2x32xf32>
    %291 = vector.extract_strided_slice %272 {offsets = [0, 64], sizes = [2, 32], strides = [1, 1]} : vector<2x96xf32> to vector<2x32xf32>
    %292 = arith.mulf %281, %291 : vector<2x32xf32>
    %293 = arith.addf %290, %292 : vector<2x32xf32>
    %294 = math.tanh %293 : vector<2x32xf32>
    %cst_67 = arith.constant 1.000000e+00 : f32
    %295 = vector.broadcast %cst_67 : f32 to vector<2x32xf32>
    %296 = arith.subf %295, %289 : vector<2x32xf32>
    %297 = arith.mulf %296, %294 : vector<2x32xf32>
    %298 = arith.mulf %289, %273 : vector<2x32xf32>
    %299 = arith.addf %297, %298 : vector<2x32xf32>
    %300 = arith.index_cast %c3_i32 : i32 to index
    %c0_68 = arith.constant 0 : index
    %c0_69 = arith.constant 0 : index
    %301 = vector.load %arg5[%300, %c0_68, %c0_69] : memref<8x2x32xf32, #tpu.memory_space<vmem>>, vector<1x2x32xf32>
    %302 = vector.shape_cast %301 : vector<1x2x32xf32> to vector<2x32xf32>
    %303 = vector.shape_cast %271 : vector<2x32xf32> to vector<1x2x32xf32>
    tpu.vector_store %arg5[%300, %c0_68, %c0_69], %303 {strides = array<i32>} : memref<8x2x32xf32, #tpu.memory_space<vmem>>, vector<1x2x32xf32>,
    %c7_i32_70 = arith.constant 7 : i32
    %304 = arith.subi %c7_i32_70, %c3_i32 : i32
    %305 = arith.index_cast %304 : i32 to index
    %c0_71 = arith.constant 0 : index
    %c0_72 = arith.constant 0 : index
    %306 = vector.load %arg6[%305, %c0_71, %c0_72] : memref<8x2x32xf32, #tpu.memory_space<vmem>>, vector<1x2x32xf32>
    %307 = vector.shape_cast %306 : vector<1x2x32xf32> to vector<2x32xf32>
    %308 = vector.shape_cast %299 : vector<2x32xf32> to vector<1x2x32xf32>
    tpu.vector_store %arg6[%305, %c0_71, %c0_72], %308 {strides = array<i32>} : memref<8x2x32xf32, #tpu.memory_space<vmem>>, vector<1x2x32xf32>,
    %309 = tpu.concatenate %271, %299 in 1 : vector<2x32xf32>, vector<2x32xf32> -> vector<2x64xf32>
    %c4_i32 = arith.constant 4 : i32
    %cst_73 = arith.constant dense<0.000000e+00> : vector<2x192xf32>
    %310 = tpu.matmul %309, %3, %cst_73 {dimension_numbers = #tpu.dot_dimension_numbers<[1], [0], [0], [1], [0, 0, 1, 1], [], []>, precision = #tpu.contract_precision<fp32>} : vector<2x64xf32>, vector<64x192xf32>, vector<2x192xf32> -> vector<2x192xf32>
    %311 = vector.broadcast %4 : vector<1x192xf32> to vector<2x192xf32>
    %312 = arith.addf %310, %311 : vector<2x192xf32>
    %313 = arith.index_cast %c4_i32 : i32 to index
    %c0_74 = arith.constant 0 : index
    %c0_75 = arith.constant 0 : index
    %314 = vector.load %arg1[%313, %c0_74, %c0_75] : memref<8x2x96xf32, #tpu.memory_space<vmem>>, vector<1x2x96xf32>
    %315 = vector.shape_cast %314 : vector<1x2x96xf32> to vector<2x96xf32>
    %c7_i32_76 = arith.constant 7 : i32
    %316 = arith.subi %c7_i32_76, %c4_i32 : i32
    %317 = arith.index_cast %316 : i32 to index
    %c0_77 = arith.constant 0 : index
    %c0_78 = arith.constant 0 : index
    %318 = vector.load %arg2[%317, %c0_77, %c0_78] : memref<8x2x96xf32, #tpu.memory_space<vmem>>, vector<1x2x96xf32>
    %319 = vector.shape_cast %318 : vector<1x2x96xf32> to vector<2x96xf32>
    %320 = vector.extract_strided_slice %312 {offsets = [0, 0], sizes = [2, 96], strides = [1, 1]} : vector<2x192xf32> to vector<2x96xf32>
    %321 = vector.extract_strided_slice %309 {offsets = [0, 0], sizes = [2, 32], strides = [1, 1]} : vector<2x64xf32> to vector<2x32xf32>
    %322 = vector.extract_strided_slice %315 {offsets = [0, 0], sizes = [2, 32], strides = [1, 1]} : vector<2x96xf32> to vector<2x32xf32>
    %323 = vector.extract_strided_slice %320 {offsets = [0, 0], sizes = [2, 32], strides = [1, 1]} : vector<2x96xf32> to vector<2x32xf32>
    %324 = arith.addf %322, %323 : vector<2x32xf32>
    %325 = arith.negf %324 : vector<2x32xf32>
    %326 = math.exp %325 : vector<2x32xf32>
    %cst_79 = arith.constant 1.000000e+00 : f32
    %327 = vector.broadcast %cst_79 : f32 to vector<2x32xf32>
    %328 = arith.addf %327, %326 : vector<2x32xf32>
    %329 = arith.divf %327, %328 : vector<2x32xf32>
    %330 = vector.extract_strided_slice %315 {offsets = [0, 32], sizes = [2, 32], strides = [1, 1]} : vector<2x96xf32> to vector<2x32xf32>
    %331 = vector.extract_strided_slice %320 {offsets = [0, 32], sizes = [2, 32], strides = [1, 1]} : vector<2x96xf32> to vector<2x32xf32>
    %332 = arith.addf %330, %331 : vector<2x32xf32>
    %333 = arith.negf %332 : vector<2x32xf32>
    %334 = math.exp %333 : vector<2x32xf32>
    %cst_80 = arith.constant 1.000000e+00 : f32
    %335 = vector.broadcast %cst_80 : f32 to vector<2x32xf32>
    %336 = arith.addf %335, %334 : vector<2x32xf32>
    %337 = arith.divf %335, %336 : vector<2x32xf32>
    %338 = vector.extract_strided_slice %315 {offsets = [0, 64], sizes = [2, 32], strides = [1, 1]} : vector<2x96xf32> to vector<2x32xf32>
    %339 = vector.extract_strided_slice %320 {offsets = [0, 64], sizes = [2, 32], strides = [1, 1]} : vector<2x96xf32> to vector<2x32xf32>
    %340 = arith.mulf %329, %339 : vector<2x32xf32>
    %341 = arith.addf %338, %340 : vector<2x32xf32>
    %342 = math.tanh %341 : vector<2x32xf32>
    %cst_81 = arith.constant 1.000000e+00 : f32
    %343 = vector.broadcast %cst_81 : f32 to vector<2x32xf32>
    %344 = arith.subf %343, %337 : vector<2x32xf32>
    %345 = arith.mulf %344, %342 : vector<2x32xf32>
    %346 = arith.mulf %337, %321 : vector<2x32xf32>
    %347 = arith.addf %345, %346 : vector<2x32xf32>
    %348 = vector.extract_strided_slice %312 {offsets = [0, 96], sizes = [2, 96], strides = [1, 1]} : vector<2x192xf32> to vector<2x96xf32>
    %349 = vector.extract_strided_slice %309 {offsets = [0, 32], sizes = [2, 32], strides = [1, 1]} : vector<2x64xf32> to vector<2x32xf32>
    %350 = vector.extract_strided_slice %319 {offsets = [0, 0], sizes = [2, 32], strides = [1, 1]} : vector<2x96xf32> to vector<2x32xf32>
    %351 = vector.extract_strided_slice %348 {offsets = [0, 0], sizes = [2, 32], strides = [1, 1]} : vector<2x96xf32> to vector<2x32xf32>
    %352 = arith.addf %350, %351 : vector<2x32xf32>
    %353 = arith.negf %352 : vector<2x32xf32>
    %354 = math.exp %353 : vector<2x32xf32>
    %cst_82 = arith.constant 1.000000e+00 : f32
    %355 = vector.broadcast %cst_82 : f32 to vector<2x32xf32>
    %356 = arith.addf %355, %354 : vector<2x32xf32>
    %357 = arith.divf %355, %356 : vector<2x32xf32>
    %358 = vector.extract_strided_slice %319 {offsets = [0, 32], sizes = [2, 32], strides = [1, 1]} : vector<2x96xf32> to vector<2x32xf32>
    %359 = vector.extract_strided_slice %348 {offsets = [0, 32], sizes = [2, 32], strides = [1, 1]} : vector<2x96xf32> to vector<2x32xf32>
    %360 = arith.addf %358, %359 : vector<2x32xf32>
    %361 = arith.negf %360 : vector<2x32xf32>
    %362 = math.exp %361 : vector<2x32xf32>
    %cst_83 = arith.constant 1.000000e+00 : f32
    %363 = vector.broadcast %cst_83 : f32 to vector<2x32xf32>
    %364 = arith.addf %363, %362 : vector<2x32xf32>
    %365 = arith.divf %363, %364 : vector<2x32xf32>
    %366 = vector.extract_strided_slice %319 {offsets = [0, 64], sizes = [2, 32], strides = [1, 1]} : vector<2x96xf32> to vector<2x32xf32>
    %367 = vector.extract_strided_slice %348 {offsets = [0, 64], sizes = [2, 32], strides = [1, 1]} : vector<2x96xf32> to vector<2x32xf32>
    %368 = arith.mulf %357, %367 : vector<2x32xf32>
    %369 = arith.addf %366, %368 : vector<2x32xf32>
    %370 = math.tanh %369 : vector<2x32xf32>
    %cst_84 = arith.constant 1.000000e+00 : f32
    %371 = vector.broadcast %cst_84 : f32 to vector<2x32xf32>
    %372 = arith.subf %371, %365 : vector<2x32xf32>
    %373 = arith.mulf %372, %370 : vector<2x32xf32>
    %374 = arith.mulf %365, %349 : vector<2x32xf32>
    %375 = arith.addf %373, %374 : vector<2x32xf32>
    %376 = arith.index_cast %c4_i32 : i32 to index
    %c0_85 = arith.constant 0 : index
    %c0_86 = arith.constant 0 : index
    %377 = vector.load %arg5[%376, %c0_85, %c0_86] : memref<8x2x32xf32, #tpu.memory_space<vmem>>, vector<1x2x32xf32>
    %378 = vector.shape_cast %377 : vector<1x2x32xf32> to vector<2x32xf32>
    %379 = vector.shape_cast %347 : vector<2x32xf32> to vector<1x2x32xf32>
    tpu.vector_store %arg5[%376, %c0_85, %c0_86], %379 {strides = array<i32>} : memref<8x2x32xf32, #tpu.memory_space<vmem>>, vector<1x2x32xf32>,
    %c7_i32_87 = arith.constant 7 : i32
    %380 = arith.subi %c7_i32_87, %c4_i32 : i32
    %381 = arith.index_cast %380 : i32 to index
    %c0_88 = arith.constant 0 : index
    %c0_89 = arith.constant 0 : index
    %382 = vector.load %arg6[%381, %c0_88, %c0_89] : memref<8x2x32xf32, #tpu.memory_space<vmem>>, vector<1x2x32xf32>
    %383 = vector.shape_cast %382 : vector<1x2x32xf32> to vector<2x32xf32>
    %384 = vector.shape_cast %375 : vector<2x32xf32> to vector<1x2x32xf32>
    tpu.vector_store %arg6[%381, %c0_88, %c0_89], %384 {strides = array<i32>} : memref<8x2x32xf32, #tpu.memory_space<vmem>>, vector<1x2x32xf32>,
    %385 = tpu.concatenate %347, %375 in 1 : vector<2x32xf32>, vector<2x32xf32> -> vector<2x64xf32>
    %c5_i32 = arith.constant 5 : i32
    %cst_90 = arith.constant dense<0.000000e+00> : vector<2x192xf32>
    %386 = tpu.matmul %385, %3, %cst_90 {dimension_numbers = #tpu.dot_dimension_numbers<[1], [0], [0], [1], [0, 0, 1, 1], [], []>, precision = #tpu.contract_precision<fp32>} : vector<2x64xf32>, vector<64x192xf32>, vector<2x192xf32> -> vector<2x192xf32>
    %387 = vector.broadcast %4 : vector<1x192xf32> to vector<2x192xf32>
    %388 = arith.addf %386, %387 : vector<2x192xf32>
    %389 = arith.index_cast %c5_i32 : i32 to index
    %c0_91 = arith.constant 0 : index
    %c0_92 = arith.constant 0 : index
    %390 = vector.load %arg1[%389, %c0_91, %c0_92] : memref<8x2x96xf32, #tpu.memory_space<vmem>>, vector<1x2x96xf32>
    %391 = vector.shape_cast %390 : vector<1x2x96xf32> to vector<2x96xf32>
    %c7_i32_93 = arith.constant 7 : i32
    %392 = arith.subi %c7_i32_93, %c5_i32 : i32
    %393 = arith.index_cast %392 : i32 to index
    %c0_94 = arith.constant 0 : index
    %c0_95 = arith.constant 0 : index
    %394 = vector.load %arg2[%393, %c0_94, %c0_95] : memref<8x2x96xf32, #tpu.memory_space<vmem>>, vector<1x2x96xf32>
    %395 = vector.shape_cast %394 : vector<1x2x96xf32> to vector<2x96xf32>
    %396 = vector.extract_strided_slice %388 {offsets = [0, 0], sizes = [2, 96], strides = [1, 1]} : vector<2x192xf32> to vector<2x96xf32>
    %397 = vector.extract_strided_slice %385 {offsets = [0, 0], sizes = [2, 32], strides = [1, 1]} : vector<2x64xf32> to vector<2x32xf32>
    %398 = vector.extract_strided_slice %391 {offsets = [0, 0], sizes = [2, 32], strides = [1, 1]} : vector<2x96xf32> to vector<2x32xf32>
    %399 = vector.extract_strided_slice %396 {offsets = [0, 0], sizes = [2, 32], strides = [1, 1]} : vector<2x96xf32> to vector<2x32xf32>
    %400 = arith.addf %398, %399 : vector<2x32xf32>
    %401 = arith.negf %400 : vector<2x32xf32>
    %402 = math.exp %401 : vector<2x32xf32>
    %cst_96 = arith.constant 1.000000e+00 : f32
    %403 = vector.broadcast %cst_96 : f32 to vector<2x32xf32>
    %404 = arith.addf %403, %402 : vector<2x32xf32>
    %405 = arith.divf %403, %404 : vector<2x32xf32>
    %406 = vector.extract_strided_slice %391 {offsets = [0, 32], sizes = [2, 32], strides = [1, 1]} : vector<2x96xf32> to vector<2x32xf32>
    %407 = vector.extract_strided_slice %396 {offsets = [0, 32], sizes = [2, 32], strides = [1, 1]} : vector<2x96xf32> to vector<2x32xf32>
    %408 = arith.addf %406, %407 : vector<2x32xf32>
    %409 = arith.negf %408 : vector<2x32xf32>
    %410 = math.exp %409 : vector<2x32xf32>
    %cst_97 = arith.constant 1.000000e+00 : f32
    %411 = vector.broadcast %cst_97 : f32 to vector<2x32xf32>
    %412 = arith.addf %411, %410 : vector<2x32xf32>
    %413 = arith.divf %411, %412 : vector<2x32xf32>
    %414 = vector.extract_strided_slice %391 {offsets = [0, 64], sizes = [2, 32], strides = [1, 1]} : vector<2x96xf32> to vector<2x32xf32>
    %415 = vector.extract_strided_slice %396 {offsets = [0, 64], sizes = [2, 32], strides = [1, 1]} : vector<2x96xf32> to vector<2x32xf32>
    %416 = arith.mulf %405, %415 : vector<2x32xf32>
    %417 = arith.addf %414, %416 : vector<2x32xf32>
    %418 = math.tanh %417 : vector<2x32xf32>
    %cst_98 = arith.constant 1.000000e+00 : f32
    %419 = vector.broadcast %cst_98 : f32 to vector<2x32xf32>
    %420 = arith.subf %419, %413 : vector<2x32xf32>
    %421 = arith.mulf %420, %418 : vector<2x32xf32>
    %422 = arith.mulf %413, %397 : vector<2x32xf32>
    %423 = arith.addf %421, %422 : vector<2x32xf32>
    %424 = vector.extract_strided_slice %388 {offsets = [0, 96], sizes = [2, 96], strides = [1, 1]} : vector<2x192xf32> to vector<2x96xf32>
    %425 = vector.extract_strided_slice %385 {offsets = [0, 32], sizes = [2, 32], strides = [1, 1]} : vector<2x64xf32> to vector<2x32xf32>
    %426 = vector.extract_strided_slice %395 {offsets = [0, 0], sizes = [2, 32], strides = [1, 1]} : vector<2x96xf32> to vector<2x32xf32>
    %427 = vector.extract_strided_slice %424 {offsets = [0, 0], sizes = [2, 32], strides = [1, 1]} : vector<2x96xf32> to vector<2x32xf32>
    %428 = arith.addf %426, %427 : vector<2x32xf32>
    %429 = arith.negf %428 : vector<2x32xf32>
    %430 = math.exp %429 : vector<2x32xf32>
    %cst_99 = arith.constant 1.000000e+00 : f32
    %431 = vector.broadcast %cst_99 : f32 to vector<2x32xf32>
    %432 = arith.addf %431, %430 : vector<2x32xf32>
    %433 = arith.divf %431, %432 : vector<2x32xf32>
    %434 = vector.extract_strided_slice %395 {offsets = [0, 32], sizes = [2, 32], strides = [1, 1]} : vector<2x96xf32> to vector<2x32xf32>
    %435 = vector.extract_strided_slice %424 {offsets = [0, 32], sizes = [2, 32], strides = [1, 1]} : vector<2x96xf32> to vector<2x32xf32>
    %436 = arith.addf %434, %435 : vector<2x32xf32>
    %437 = arith.negf %436 : vector<2x32xf32>
    %438 = math.exp %437 : vector<2x32xf32>
    %cst_100 = arith.constant 1.000000e+00 : f32
    %439 = vector.broadcast %cst_100 : f32 to vector<2x32xf32>
    %440 = arith.addf %439, %438 : vector<2x32xf32>
    %441 = arith.divf %439, %440 : vector<2x32xf32>
    %442 = vector.extract_strided_slice %395 {offsets = [0, 64], sizes = [2, 32], strides = [1, 1]} : vector<2x96xf32> to vector<2x32xf32>
    %443 = vector.extract_strided_slice %424 {offsets = [0, 64], sizes = [2, 32], strides = [1, 1]} : vector<2x96xf32> to vector<2x32xf32>
    %444 = arith.mulf %433, %443 : vector<2x32xf32>
    %445 = arith.addf %442, %444 : vector<2x32xf32>
    %446 = math.tanh %445 : vector<2x32xf32>
    %cst_101 = arith.constant 1.000000e+00 : f32
    %447 = vector.broadcast %cst_101 : f32 to vector<2x32xf32>
    %448 = arith.subf %447, %441 : vector<2x32xf32>
    %449 = arith.mulf %448, %446 : vector<2x32xf32>
    %450 = arith.mulf %441, %425 : vector<2x32xf32>
    %451 = arith.addf %449, %450 : vector<2x32xf32>
    %452 = arith.index_cast %c5_i32 : i32 to index
    %c0_102 = arith.constant 0 : index
    %c0_103 = arith.constant 0 : index
    %453 = vector.load %arg5[%452, %c0_102, %c0_103] : memref<8x2x32xf32, #tpu.memory_space<vmem>>, vector<1x2x32xf32>
    %454 = vector.shape_cast %453 : vector<1x2x32xf32> to vector<2x32xf32>
    %455 = vector.shape_cast %423 : vector<2x32xf32> to vector<1x2x32xf32>
    tpu.vector_store %arg5[%452, %c0_102, %c0_103], %455 {strides = array<i32>} : memref<8x2x32xf32, #tpu.memory_space<vmem>>, vector<1x2x32xf32>,
    %c7_i32_104 = arith.constant 7 : i32
    %456 = arith.subi %c7_i32_104, %c5_i32 : i32
    %457 = arith.index_cast %456 : i32 to index
    %c0_105 = arith.constant 0 : index
    %c0_106 = arith.constant 0 : index
    %458 = vector.load %arg6[%457, %c0_105, %c0_106] : memref<8x2x32xf32, #tpu.memory_space<vmem>>, vector<1x2x32xf32>
    %459 = vector.shape_cast %458 : vector<1x2x32xf32> to vector<2x32xf32>
    %460 = vector.shape_cast %451 : vector<2x32xf32> to vector<1x2x32xf32>
    tpu.vector_store %arg6[%457, %c0_105, %c0_106], %460 {strides = array<i32>} : memref<8x2x32xf32, #tpu.memory_space<vmem>>, vector<1x2x32xf32>,
    %461 = tpu.concatenate %423, %451 in 1 : vector<2x32xf32>, vector<2x32xf32> -> vector<2x64xf32>
    %c6_i32 = arith.constant 6 : i32
    %cst_107 = arith.constant dense<0.000000e+00> : vector<2x192xf32>
    %462 = tpu.matmul %461, %3, %cst_107 {dimension_numbers = #tpu.dot_dimension_numbers<[1], [0], [0], [1], [0, 0, 1, 1], [], []>, precision = #tpu.contract_precision<fp32>} : vector<2x64xf32>, vector<64x192xf32>, vector<2x192xf32> -> vector<2x192xf32>
    %463 = vector.broadcast %4 : vector<1x192xf32> to vector<2x192xf32>
    %464 = arith.addf %462, %463 : vector<2x192xf32>
    %465 = arith.index_cast %c6_i32 : i32 to index
    %c0_108 = arith.constant 0 : index
    %c0_109 = arith.constant 0 : index
    %466 = vector.load %arg1[%465, %c0_108, %c0_109] : memref<8x2x96xf32, #tpu.memory_space<vmem>>, vector<1x2x96xf32>
    %467 = vector.shape_cast %466 : vector<1x2x96xf32> to vector<2x96xf32>
    %c7_i32_110 = arith.constant 7 : i32
    %468 = arith.subi %c7_i32_110, %c6_i32 : i32
    %469 = arith.index_cast %468 : i32 to index
    %c0_111 = arith.constant 0 : index
    %c0_112 = arith.constant 0 : index
    %470 = vector.load %arg2[%469, %c0_111, %c0_112] : memref<8x2x96xf32, #tpu.memory_space<vmem>>, vector<1x2x96xf32>
    %471 = vector.shape_cast %470 : vector<1x2x96xf32> to vector<2x96xf32>
    %472 = vector.extract_strided_slice %464 {offsets = [0, 0], sizes = [2, 96], strides = [1, 1]} : vector<2x192xf32> to vector<2x96xf32>
    %473 = vector.extract_strided_slice %461 {offsets = [0, 0], sizes = [2, 32], strides = [1, 1]} : vector<2x64xf32> to vector<2x32xf32>
    %474 = vector.extract_strided_slice %467 {offsets = [0, 0], sizes = [2, 32], strides = [1, 1]} : vector<2x96xf32> to vector<2x32xf32>
    %475 = vector.extract_strided_slice %472 {offsets = [0, 0], sizes = [2, 32], strides = [1, 1]} : vector<2x96xf32> to vector<2x32xf32>
    %476 = arith.addf %474, %475 : vector<2x32xf32>
    %477 = arith.negf %476 : vector<2x32xf32>
    %478 = math.exp %477 : vector<2x32xf32>
    %cst_113 = arith.constant 1.000000e+00 : f32
    %479 = vector.broadcast %cst_113 : f32 to vector<2x32xf32>
    %480 = arith.addf %479, %478 : vector<2x32xf32>
    %481 = arith.divf %479, %480 : vector<2x32xf32>
    %482 = vector.extract_strided_slice %467 {offsets = [0, 32], sizes = [2, 32], strides = [1, 1]} : vector<2x96xf32> to vector<2x32xf32>
    %483 = vector.extract_strided_slice %472 {offsets = [0, 32], sizes = [2, 32], strides = [1, 1]} : vector<2x96xf32> to vector<2x32xf32>
    %484 = arith.addf %482, %483 : vector<2x32xf32>
    %485 = arith.negf %484 : vector<2x32xf32>
    %486 = math.exp %485 : vector<2x32xf32>
    %cst_114 = arith.constant 1.000000e+00 : f32
    %487 = vector.broadcast %cst_114 : f32 to vector<2x32xf32>
    %488 = arith.addf %487, %486 : vector<2x32xf32>
    %489 = arith.divf %487, %488 : vector<2x32xf32>
    %490 = vector.extract_strided_slice %467 {offsets = [0, 64], sizes = [2, 32], strides = [1, 1]} : vector<2x96xf32> to vector<2x32xf32>
    %491 = vector.extract_strided_slice %472 {offsets = [0, 64], sizes = [2, 32], strides = [1, 1]} : vector<2x96xf32> to vector<2x32xf32>
    %492 = arith.mulf %481, %491 : vector<2x32xf32>
    %493 = arith.addf %490, %492 : vector<2x32xf32>
    %494 = math.tanh %493 : vector<2x32xf32>
    %cst_115 = arith.constant 1.000000e+00 : f32
    %495 = vector.broadcast %cst_115 : f32 to vector<2x32xf32>
    %496 = arith.subf %495, %489 : vector<2x32xf32>
    %497 = arith.mulf %496, %494 : vector<2x32xf32>
    %498 = arith.mulf %489, %473 : vector<2x32xf32>
    %499 = arith.addf %497, %498 : vector<2x32xf32>
    %500 = vector.extract_strided_slice %464 {offsets = [0, 96], sizes = [2, 96], strides = [1, 1]} : vector<2x192xf32> to vector<2x96xf32>
    %501 = vector.extract_strided_slice %461 {offsets = [0, 32], sizes = [2, 32], strides = [1, 1]} : vector<2x64xf32> to vector<2x32xf32>
    %502 = vector.extract_strided_slice %471 {offsets = [0, 0], sizes = [2, 32], strides = [1, 1]} : vector<2x96xf32> to vector<2x32xf32>
    %503 = vector.extract_strided_slice %500 {offsets = [0, 0], sizes = [2, 32], strides = [1, 1]} : vector<2x96xf32> to vector<2x32xf32>
    %504 = arith.addf %502, %503 : vector<2x32xf32>
    %505 = arith.negf %504 : vector<2x32xf32>
    %506 = math.exp %505 : vector<2x32xf32>
    %cst_116 = arith.constant 1.000000e+00 : f32
    %507 = vector.broadcast %cst_116 : f32 to vector<2x32xf32>
    %508 = arith.addf %507, %506 : vector<2x32xf32>
    %509 = arith.divf %507, %508 : vector<2x32xf32>
    %510 = vector.extract_strided_slice %471 {offsets = [0, 32], sizes = [2, 32], strides = [1, 1]} : vector<2x96xf32> to vector<2x32xf32>
    %511 = vector.extract_strided_slice %500 {offsets = [0, 32], sizes = [2, 32], strides = [1, 1]} : vector<2x96xf32> to vector<2x32xf32>
    %512 = arith.addf %510, %511 : vector<2x32xf32>
    %513 = arith.negf %512 : vector<2x32xf32>
    %514 = math.exp %513 : vector<2x32xf32>
    %cst_117 = arith.constant 1.000000e+00 : f32
    %515 = vector.broadcast %cst_117 : f32 to vector<2x32xf32>
    %516 = arith.addf %515, %514 : vector<2x32xf32>
    %517 = arith.divf %515, %516 : vector<2x32xf32>
    %518 = vector.extract_strided_slice %471 {offsets = [0, 64], sizes = [2, 32], strides = [1, 1]} : vector<2x96xf32> to vector<2x32xf32>
    %519 = vector.extract_strided_slice %500 {offsets = [0, 64], sizes = [2, 32], strides = [1, 1]} : vector<2x96xf32> to vector<2x32xf32>
    %520 = arith.mulf %509, %519 : vector<2x32xf32>
    %521 = arith.addf %518, %520 : vector<2x32xf32>
    %522 = math.tanh %521 : vector<2x32xf32>
    %cst_118 = arith.constant 1.000000e+00 : f32
    %523 = vector.broadcast %cst_118 : f32 to vector<2x32xf32>
    %524 = arith.subf %523, %517 : vector<2x32xf32>
    %525 = arith.mulf %524, %522 : vector<2x32xf32>
    %526 = arith.mulf %517, %501 : vector<2x32xf32>
    %527 = arith.addf %525, %526 : vector<2x32xf32>
    %528 = arith.index_cast %c6_i32 : i32 to index
    %c0_119 = arith.constant 0 : index
    %c0_120 = arith.constant 0 : index
    %529 = vector.load %arg5[%528, %c0_119, %c0_120] : memref<8x2x32xf32, #tpu.memory_space<vmem>>, vector<1x2x32xf32>
    %530 = vector.shape_cast %529 : vector<1x2x32xf32> to vector<2x32xf32>
    %531 = vector.shape_cast %499 : vector<2x32xf32> to vector<1x2x32xf32>
    tpu.vector_store %arg5[%528, %c0_119, %c0_120], %531 {strides = array<i32>} : memref<8x2x32xf32, #tpu.memory_space<vmem>>, vector<1x2x32xf32>,
    %c7_i32_121 = arith.constant 7 : i32
    %532 = arith.subi %c7_i32_121, %c6_i32 : i32
    %533 = arith.index_cast %532 : i32 to index
    %c0_122 = arith.constant 0 : index
    %c0_123 = arith.constant 0 : index
    %534 = vector.load %arg6[%533, %c0_122, %c0_123] : memref<8x2x32xf32, #tpu.memory_space<vmem>>, vector<1x2x32xf32>
    %535 = vector.shape_cast %534 : vector<1x2x32xf32> to vector<2x32xf32>
    %536 = vector.shape_cast %527 : vector<2x32xf32> to vector<1x2x32xf32>
    tpu.vector_store %arg6[%533, %c0_122, %c0_123], %536 {strides = array<i32>} : memref<8x2x32xf32, #tpu.memory_space<vmem>>, vector<1x2x32xf32>,
    %537 = tpu.concatenate %499, %527 in 1 : vector<2x32xf32>, vector<2x32xf32> -> vector<2x64xf32>
    %c7_i32_124 = arith.constant 7 : i32
    %cst_125 = arith.constant dense<0.000000e+00> : vector<2x192xf32>
    %538 = tpu.matmul %537, %3, %cst_125 {dimension_numbers = #tpu.dot_dimension_numbers<[1], [0], [0], [1], [0, 0, 1, 1], [], []>, precision = #tpu.contract_precision<fp32>} : vector<2x64xf32>, vector<64x192xf32>, vector<2x192xf32> -> vector<2x192xf32>
    %539 = vector.broadcast %4 : vector<1x192xf32> to vector<2x192xf32>
    %540 = arith.addf %538, %539 : vector<2x192xf32>
    %541 = arith.index_cast %c7_i32_124 : i32 to index
    %c0_126 = arith.constant 0 : index
    %c0_127 = arith.constant 0 : index
    %542 = vector.load %arg1[%541, %c0_126, %c0_127] : memref<8x2x96xf32, #tpu.memory_space<vmem>>, vector<1x2x96xf32>
    %543 = vector.shape_cast %542 : vector<1x2x96xf32> to vector<2x96xf32>
    %c7_i32_128 = arith.constant 7 : i32
    %544 = arith.subi %c7_i32_128, %c7_i32_124 : i32
    %545 = arith.index_cast %544 : i32 to index
    %c0_129 = arith.constant 0 : index
    %c0_130 = arith.constant 0 : index
    %546 = vector.load %arg2[%545, %c0_129, %c0_130] : memref<8x2x96xf32, #tpu.memory_space<vmem>>, vector<1x2x96xf32>
    %547 = vector.shape_cast %546 : vector<1x2x96xf32> to vector<2x96xf32>
    %548 = vector.extract_strided_slice %540 {offsets = [0, 0], sizes = [2, 96], strides = [1, 1]} : vector<2x192xf32> to vector<2x96xf32>
    %549 = vector.extract_strided_slice %537 {offsets = [0, 0], sizes = [2, 32], strides = [1, 1]} : vector<2x64xf32> to vector<2x32xf32>
    %550 = vector.extract_strided_slice %543 {offsets = [0, 0], sizes = [2, 32], strides = [1, 1]} : vector<2x96xf32> to vector<2x32xf32>
    %551 = vector.extract_strided_slice %548 {offsets = [0, 0], sizes = [2, 32], strides = [1, 1]} : vector<2x96xf32> to vector<2x32xf32>
    %552 = arith.addf %550, %551 : vector<2x32xf32>
    %553 = arith.negf %552 : vector<2x32xf32>
    %554 = math.exp %553 : vector<2x32xf32>
    %cst_131 = arith.constant 1.000000e+00 : f32
    %555 = vector.broadcast %cst_131 : f32 to vector<2x32xf32>
    %556 = arith.addf %555, %554 : vector<2x32xf32>
    %557 = arith.divf %555, %556 : vector<2x32xf32>
    %558 = vector.extract_strided_slice %543 {offsets = [0, 32], sizes = [2, 32], strides = [1, 1]} : vector<2x96xf32> to vector<2x32xf32>
    %559 = vector.extract_strided_slice %548 {offsets = [0, 32], sizes = [2, 32], strides = [1, 1]} : vector<2x96xf32> to vector<2x32xf32>
    %560 = arith.addf %558, %559 : vector<2x32xf32>
    %561 = arith.negf %560 : vector<2x32xf32>
    %562 = math.exp %561 : vector<2x32xf32>
    %cst_132 = arith.constant 1.000000e+00 : f32
    %563 = vector.broadcast %cst_132 : f32 to vector<2x32xf32>
    %564 = arith.addf %563, %562 : vector<2x32xf32>
    %565 = arith.divf %563, %564 : vector<2x32xf32>
    %566 = vector.extract_strided_slice %543 {offsets = [0, 64], sizes = [2, 32], strides = [1, 1]} : vector<2x96xf32> to vector<2x32xf32>
    %567 = vector.extract_strided_slice %548 {offsets = [0, 64], sizes = [2, 32], strides = [1, 1]} : vector<2x96xf32> to vector<2x32xf32>
    %568 = arith.mulf %557, %567 : vector<2x32xf32>
    %569 = arith.addf %566, %568 : vector<2x32xf32>
    %570 = math.tanh %569 : vector<2x32xf32>
    %cst_133 = arith.constant 1.000000e+00 : f32
    %571 = vector.broadcast %cst_133 : f32 to vector<2x32xf32>
    %572 = arith.subf %571, %565 : vector<2x32xf32>
    %573 = arith.mulf %572, %570 : vector<2x32xf32>
    %574 = arith.mulf %565, %549 : vector<2x32xf32>
    %575 = arith.addf %573, %574 : vector<2x32xf32>
    %576 = vector.extract_strided_slice %540 {offsets = [0, 96], sizes = [2, 96], strides = [1, 1]} : vector<2x192xf32> to vector<2x96xf32>
    %577 = vector.extract_strided_slice %537 {offsets = [0, 32], sizes = [2, 32], strides = [1, 1]} : vector<2x64xf32> to vector<2x32xf32>
    %578 = vector.extract_strided_slice %547 {offsets = [0, 0], sizes = [2, 32], strides = [1, 1]} : vector<2x96xf32> to vector<2x32xf32>
    %579 = vector.extract_strided_slice %576 {offsets = [0, 0], sizes = [2, 32], strides = [1, 1]} : vector<2x96xf32> to vector<2x32xf32>
    %580 = arith.addf %578, %579 : vector<2x32xf32>
    %581 = arith.negf %580 : vector<2x32xf32>
    %582 = math.exp %581 : vector<2x32xf32>
    %cst_134 = arith.constant 1.000000e+00 : f32
    %583 = vector.broadcast %cst_134 : f32 to vector<2x32xf32>
    %584 = arith.addf %583, %582 : vector<2x32xf32>
    %585 = arith.divf %583, %584 : vector<2x32xf32>
    %586 = vector.extract_strided_slice %547 {offsets = [0, 32], sizes = [2, 32], strides = [1, 1]} : vector<2x96xf32> to vector<2x32xf32>
    %587 = vector.extract_strided_slice %576 {offsets = [0, 32], sizes = [2, 32], strides = [1, 1]} : vector<2x96xf32> to vector<2x32xf32>
    %588 = arith.addf %586, %587 : vector<2x32xf32>
    %589 = arith.negf %588 : vector<2x32xf32>
    %590 = math.exp %589 : vector<2x32xf32>
    %cst_135 = arith.constant 1.000000e+00 : f32
    %591 = vector.broadcast %cst_135 : f32 to vector<2x32xf32>
    %592 = arith.addf %591, %590 : vector<2x32xf32>
    %593 = arith.divf %591, %592 : vector<2x32xf32>
    %594 = vector.extract_strided_slice %547 {offsets = [0, 64], sizes = [2, 32], strides = [1, 1]} : vector<2x96xf32> to vector<2x32xf32>
    %595 = vector.extract_strided_slice %576 {offsets = [0, 64], sizes = [2, 32], strides = [1, 1]} : vector<2x96xf32> to vector<2x32xf32>
    %596 = arith.mulf %585, %595 : vector<2x32xf32>
    %597 = arith.addf %594, %596 : vector<2x32xf32>
    %598 = math.tanh %597 : vector<2x32xf32>
    %cst_136 = arith.constant 1.000000e+00 : f32
    %599 = vector.broadcast %cst_136 : f32 to vector<2x32xf32>
    %600 = arith.subf %599, %593 : vector<2x32xf32>
    %601 = arith.mulf %600, %598 : vector<2x32xf32>
    %602 = arith.mulf %593, %577 : vector<2x32xf32>
    %603 = arith.addf %601, %602 : vector<2x32xf32>
    %604 = arith.index_cast %c7_i32_124 : i32 to index
    %c0_137 = arith.constant 0 : index
    %c0_138 = arith.constant 0 : index
    %605 = vector.load %arg5[%604, %c0_137, %c0_138] : memref<8x2x32xf32, #tpu.memory_space<vmem>>, vector<1x2x32xf32>
    %606 = vector.shape_cast %605 : vector<1x2x32xf32> to vector<2x32xf32>
    %607 = vector.shape_cast %575 : vector<2x32xf32> to vector<1x2x32xf32>
    tpu.vector_store %arg5[%604, %c0_137, %c0_138], %607 {strides = array<i32>} : memref<8x2x32xf32, #tpu.memory_space<vmem>>, vector<1x2x32xf32>,
    %c7_i32_139 = arith.constant 7 : i32
    %608 = arith.subi %c7_i32_139, %c7_i32_124 : i32
    %609 = arith.index_cast %608 : i32 to index
    %c0_140 = arith.constant 0 : index
    %c0_141 = arith.constant 0 : index
    %610 = vector.load %arg6[%609, %c0_140, %c0_141] : memref<8x2x32xf32, #tpu.memory_space<vmem>>, vector<1x2x32xf32>
    %611 = vector.shape_cast %610 : vector<1x2x32xf32> to vector<2x32xf32>
    %612 = vector.shape_cast %603 : vector<2x32xf32> to vector<1x2x32xf32>
    tpu.vector_store %arg6[%609, %c0_140, %c0_141], %612 {strides = array<i32>} : memref<8x2x32xf32, #tpu.memory_space<vmem>>, vector<1x2x32xf32>,
    %613 = tpu.concatenate %575, %603 in 1 : vector<2x32xf32>, vector<2x32xf32> -> vector<2x64xf32>
    %c8_i32 = arith.constant 8 : i32
    %c0_142 = arith.constant 0 : index
    %c0_143 = arith.constant 0 : index
    %614 = vector.load %arg7[%c0_142, %c0_143] : memref<2x64xf32, #tpu.memory_space<vmem>>, vector<2x64xf32>
    tpu.vector_store %arg7[%c0_142, %c0_143], %613 {strides = array<i32>} : memref<2x64xf32, #tpu.memory_space<vmem>>, vector<2x64xf32>,
    return
  }
  func.func @transform_0(%arg0: i32) -> (i32, i32, i32) {
    %c0_i32 = arith.constant 0 : i32
    %c0_i32_0 = arith.constant 0 : i32
    %c0_i32_1 = arith.constant 0 : i32
    return %arg0, %c0_i32, %c0_i32_0 : i32, i32, i32
  }
  func.func @transform_1(%arg0: i32) -> (i32, i32, i32) {
    %c0_i32 = arith.constant 0 : i32
    %0 = arith.subi %c0_i32, %arg0 : i32
    %c0_i32_0 = arith.constant 0 : i32
    %c0_i32_1 = arith.constant 0 : i32
    %c0_i32_2 = arith.constant 0 : i32
    return %0, %c0_i32_0, %c0_i32_1 : i32, i32, i32
  }
  func.func @transform_2(%arg0: i32) -> (i32, i32) {
    %c0_i32 = arith.constant 0 : i32
    %c0_i32_0 = arith.constant 0 : i32
    %c0_i32_1 = arith.constant 0 : i32
    return %c0_i32, %c0_i32_0 : i32, i32
  }
  func.func @transform_3(%arg0: i32) -> (i32, i32) {
    %c0_i32 = arith.constant 0 : i32
    %c0_i32_0 = arith.constant 0 : i32
    %c0_i32_1 = arith.constant 0 : i32
    return %c0_i32, %c0_i32_0 : i32, i32
  }
  func.func @transform_4(%arg0: i32) -> (i32, i32, i32) {
    %c0_i32 = arith.constant 0 : i32
    %c0_i32_0 = arith.constant 0 : i32
    %c0_i32_1 = arith.constant 0 : i32
    return %arg0, %c0_i32, %c0_i32_0 : i32, i32, i32
  }
  func.func @transform_5(%arg0: i32) -> (i32, i32, i32) {
    %c0_i32 = arith.constant 0 : i32
    %0 = arith.subi %c0_i32, %arg0 : i32
    %c0_i32_0 = arith.constant 0 : i32
    %c0_i32_1 = arith.constant 0 : i32
    %c0_i32_2 = arith.constant 0 : i32
    return %0, %c0_i32_0, %c0_i32_1 : i32, i32, i32
  }
}

</mosaic_0001>

<llo_original>
// kernel: tpu_custom_call.1
$region0: #{tpu_custom_call.1}
  #allocation0 [shape = 'u32[]', space=smem, size = 0x4, offset = 0x4, fixed_abs, tag = 'smem constant byte address 0x4 - core index']
  #allocation1 [shape = 'u32[144,128]{1,0:T(1,128)}', space=vmem, size = 0x12000, scoped, tag = 'internal scratch']
  #allocation2 [shape = 'f32[2,64]{1,0:T(2,128)}', space=vmem, size = 0x400, scoped, tag = 'scratch operand']
  %s0 = inlined_call_operand.hbm [shape: f32[8,2,96], index: 0, kind: input, shape index: {}]
  %s1 = inlined_call_operand.hbm [shape: f32[8,2,96], index: 1, kind: input, shape index: {}]
  %s2 = inlined_call_operand.hbm [shape: f32[64,192], index: 2, kind: input, shape index: {}]
  %s3 = inlined_call_operand.vmem [shape: f32[1,192], index: 3, kind: input, shape index: {}]
  %s4 = inlined_call_operand.hbm [shape: f32[8,2,32], index: 4, kind: output, shape index: {0}]
  %s5 = inlined_call_operand.hbm [shape: f32[8,2,32], index: 5, kind: output, shape index: {1}]
  %6 = xla_tuple %s4, %s5
  %s7 = sld [smem:[#allocation0]]
  $region50: #{tpu_custom_call.1} parent=0
    _
  %s9 = ssub.s32 1, %s7
  %s10 = scalar_select 0, %s9, %s7
  $region1: #{tpu_custom_call.1} parent=0
    #allocation3 [shape = 'u8[8192]{0}', space=vmem, size = 0x2000, scoped, tag = 'input window, operand 0, single buffered']
    #allocation4 [shape = 's32[1]{0}', space=sflag, size = 0x4, scoped, tag = 'scoped memory for tpu_custom_call.1']
    #allocation5 [shape = 's32[1]{0}', space=sflag, size = 0x4, scoped, tag = 'scoped memory for tpu_custom_call.1']
    #allocation6 [shape = 'u8[8192]{0}', space=vmem, size = 0x2000, scoped, tag = 'input window, operand 1, single buffered']
    #allocation7 [shape = 's32[1]{0}', space=sflag, size = 0x4, scoped, tag = 'scoped memory for tpu_custom_call.1']
    #allocation8 [shape = 'u8[65536]{0}', space=vmem, size = 0x10000, scoped, tag = 'input window, operand 2, single buffered']
    #allocation9 [shape = 'u8[8192]{0}', space=vmem, size = 0x2000, scoped, tag = 'output window, operand 0, single buffered']
    #allocation10 [shape = 'u8[8192]{0}', space=vmem, size = 0x2000, scoped, tag = 'output window, operand 1, single buffered']
    #allocation11 [shape = 's32[1]{0}', space=sflag, size = 0x4, scoped, tag = 'scoped memory for tpu_custom_call.1']
    %11 = vsyncpa [#allocation4], 0
    %12 = vsyncpa [#allocation7], 0
    %13 = vsyncpa [#allocation5], 0
    %14 = vsyncpa [#allocation11], 0
    // Predicated region
    $region2: #{tpu_custom_call.1} parent=1 // pred_check
      _
    $region3: #{tpu_custom_call.1} parent=1 // pred_check_branch
      %16 = sbr.rel (0) target = $region5
    $region4: #{tpu_custom_call.1} parent=1 // pred_region
      %s18 = ssub.s32 256, 256
      %19 = vsyncadd [#allocation4], %s18
      %s20 = sshll.u32 [#allocation3], 4
      %s21 = int_to_ptr.vmem [resolvable:$true] %s20
      %26 = dma.hbm_to_vmem [thread:$0]  %s0, 256, %s21, [#allocation4], 32, 32, 2
    $region5: #{tpu_custom_call.1} parent=1 // pred_fallthru
      _
    // Predicated region
    $region6: #{tpu_custom_call.1} parent=1 // pred_check
      _
    $region7: #{tpu_custom_call.1} parent=1 // pred_check_branch
      %28 = sbr.rel (0) target = $region9
    $region8: #{tpu_custom_call.1} parent=1 // pred_region
      %s29 = ssub.s32 0, 0
      %s30 = smul.u32 8, %s29
      %s32 = ssub.s32 256, 256
      %33 = vsyncadd [#allocation7], %s32
      %s34 = smul.addr %s30, 32
      %s35 = scalar_lea.hbm %s1, %s34
      %s36 = sshll.u32 [#allocation6], 4
      %s37 = int_to_ptr.vmem [resolvable:$true] %s36
      %42 = dma.hbm_to_vmem [thread:$0]  %s35, 256, %s37, [#allocation7], 32, 32, 2
    $region9: #{tpu_custom_call.1} parent=1 // pred_fallthru
      _
    // Predicated region
    $region10: #{tpu_custom_call.1} parent=1 // pred_check
      _
    $region11: #{tpu_custom_call.1} parent=1 // pred_check_branch
      %44 = sbr.rel (0) target = $region13
    $region12: #{tpu_custom_call.1} parent=1 // pred_region
      %s46 = ssub.s32 2048, 2048
      %47 = vsyncadd [#allocation7], %s46
      %s48 = sshll.u32 [#allocation8], 4
      %s49 = int_to_ptr.vmem [resolvable:$true] %s48
      %54 = dma.hbm_to_vmem [thread:$0]  %s2, 2048, %s49, [#allocation7], 256, 256, 16
    $region13: #{tpu_custom_call.1} parent=1 // pred_fallthru
      _
    // Predicated region
    $region14: #{tpu_custom_call.1} parent=1 // pred_check
      _
    $region15: #{tpu_custom_call.1} parent=1 // pred_check_branch
      %56 = sbr.rel (0) target = $region17
    $region16: #{tpu_custom_call.1} parent=1 // pred_region
      _
    $region17: #{tpu_custom_call.1} parent=1 // pred_fallthru
      _
    // Predicated region
    $region18: #{tpu_custom_call.1} parent=1 // pred_check
      _
    $region19: #{tpu_custom_call.1} parent=1 // pred_check_branch
      %58 = sbr.rel (0) target = $region21
    $region20: #{tpu_custom_call.1} parent=1 // pred_region
      %59 = dma.done [#allocation4], 256
    $region21: #{tpu_custom_call.1} parent=1 // pred_fallthru
      _
    // Predicated region
    $region22: #{tpu_custom_call.1} parent=1 // pred_check
      _
    $region23: #{tpu_custom_call.1} parent=1 // pred_check_branch
      %61 = sbr.rel (0) target = $region25
    $region24: #{tpu_custom_call.1} parent=1 // pred_region
      %62 = dma.done [#allocation7], 256
    $region25: #{tpu_custom_call.1} parent=1 // pred_fallthru
      _
    // Predicated region
    $region26: #{tpu_custom_call.1} parent=1 // pred_check
      _
    $region27: #{tpu_custom_call.1} parent=1 // pred_check_branch
      %64 = sbr.rel (0) target = $region29
    $region28: #{tpu_custom_call.1} parent=1 // pred_region
      %65 = dma.done [#allocation7], 2048
    $region29: #{tpu_custom_call.1} parent=1 // pred_fallthru
      _
    %s66 = ssub.s32 0, 0
    %s67 = smul.u32 8, %s66
    %s68 = ssub.s32 0, 0
    %s69 = smul.u32 8, %s68
    %p70 = scmp.eq.s32.totalorder 0, 0
    // Predicated region
    $region30: #{tpu_custom_call.1} parent=1 // pred_check
      %p71 = pneg %p70
    $region31: #{tpu_custom_call.1} parent=1 // pred_check_branch
      %73 = sbr.rel (%p71) target = $region33
    $region32: #{tpu_custom_call.1} parent=1 // pred_region
      %vm74 = vcmask 517120
      %75 = vst.msk [vmem:[#allocation2] sm:$0x3] %vm74, 0.0
    $region33: #{tpu_custom_call.1} parent=1 // pred_fallthru
      _
    %v76 = vld [vmem:[#allocation8] sm:$0xff]
    %v77 = vld [vmem:[#allocation8 + $0x8] sm:$0xff]
    %v78 = vld [vmem:[#allocation8 + $0x10] sm:$0xff]
    %v79 = vld [vmem:[#allocation8 + $0x18] sm:$0xff]
    %v80 = vld [vmem:[#allocation8 + $0x20] sm:$0xff]
    %v81 = vld [vmem:[#allocation8 + $0x28] sm:$0xff]
    %v82 = vld [vmem:[#allocation8 + $0x30] sm:$0xff]
    %v83 = vld [vmem:[#allocation8 + $0x38] sm:$0xff]
    %v84 = vld [vmem:[#allocation8 + $0x40] sm:$0xff]
    %v85 = vld [vmem:[#allocation8 + $0x48] sm:$0xff]
    %v86 = vld [vmem:[#allocation8 + $0x50] sm:$0xff]
    %v87 = vld [vmem:[#allocation8 + $0x58] sm:$0xff]
    %v88 = vld [vmem:[#allocation8 + $0x60] sm:$0xff]
    %v89 = vld [vmem:[#allocation8 + $0x68] sm:$0xff]
    %v90 = vld [vmem:[#allocation8 + $0x70] sm:$0xff]
    %v91 = vld [vmem:[#allocation8 + $0x78] sm:$0xff]
    %v92 = vld [vmem:[%s3] sm:$0x3]
    %v93 = vld [vmem:[#allocation2] sm:$0x3]
    %v95 = vlaneseq
    %v96 = vshrl.u32 %v95, 7
    %v97 = vsub.s32 0, %v96
    %v98 = vrot.slane %v92, %v97
    %v99 = vlaneseq
    %v100 = vshrl.u32 %v99, 7
    %v101 = vsub.s32 1, %v100
    %v102 = vrot.slane %v92, %v101
    %vm105 = vcmask 523264
    %v107 = vsel %vm105, %v93, 0
    %v109 = vand.u32 %v77, 4294901760
    %110 = vmatprep.subr.mxu0 %v109
    %v111 = vand.u32 %v76, 4294901760
    %112 = vmatpush1.msra.mxu0 %v111
    %v113 = vand.u32 %v79, 4294901760
    %114 = vmatprep.subr.mxu0 %v113
    %v115 = vand.u32 %v78, 4294901760
    %116 = vmatpush1.msra.mxu0 %v115
    %v117 = vand.u32 %v81, 4294901760
    %118 = vmatprep.subr.mxu0 %v117
    %v119 = vand.u32 %v80, 4294901760
    %120 = vmatpush1.msra.mxu0 %v119
    %v121 = vand.u32 %v83, 4294901760
    %122 = vmatprep.subr.mxu0 %v121
    %v123 = vand.u32 %v82, 4294901760
    %124 = vmatpush1.msra.mxu0 %v123
    %v125 = vand.u32 %v85, 4294901760
    %126 = vmatprep.subr.mxu0 %v125
    %v127 = vand.u32 %v84, 4294901760
    %128 = vmatpush1.msra.mxu0 %v127
    %v129 = vand.u32 %v87, 4294901760
    %130 = vmatprep.subr.mxu0 %v129
    %v131 = vand.u32 %v86, 4294901760
    %132 = vmatpush1.msra.mxu0 %v131
    %v133 = vand.u32 %v89, 4294901760
    %134 = vmatprep.subr.mxu0 %v133
    %v135 = vand.u32 %v88, 4294901760
    %136 = vmatpush1.msra.mxu0 %v135
    %v137 = vand.u32 %v91, 4294901760
    %138 = vmatprep.subr.mxu0 %v137
    %v139 = vand.u32 %v90, 4294901760
    %140 = vmatpush1.msra.mxu0 %v139
    %141 = vmatprep.subr.mxu0 0.0
    %142 = vmatpush1.msra.mxu0 0.0
    %143 = vmatprep.subr.mxu0 0.0
    %144 = vmatpush1.msra.mxu0 0.0
    %145 = vmatprep.subr.mxu0 0.0
    %146 = vmatpush1.msra.mxu0 0.0
    %147 = vmatprep.subr.mxu0 0.0
    %148 = vmatpush1.msra.mxu0 0.0
    %149 = vmatprep.subr.mxu0 0.0
    %150 = vmatpush1.msra.mxu0 0.0
    %151 = vmatprep.subr.mxu0 0.0
    %152 = vmatpush1.msra.mxu0 0.0
    %153 = vmatprep.subr.mxu0 0.0
    %154 = vmatpush1.msra.mxu0 0.0
    %155 = vmatprep.subr.mxu0 0.0
    %156 = vmatpush1.msra.mxu0 0.0
    %157 = vmatprep.subr.mxu0 0.0
    %158 = vmatpush1.msra.mxu0 0.0
    %159 = vmatprep.subr.mxu0 0.0
    %160 = vmatpush1.msra.mxu0 0.0
    %161 = vmatprep.subr.mxu0 0.0
    %162 = vmatpush1.msra.mxu0 0.0
    %163 = vmatprep.subr.mxu0 0.0
    %164 = vmatpush1.msra.mxu0 0.0
    %165 = vmatprep.subr.mxu0 0.0
    %166 = vmatpush1.msra.mxu0 0.0
    %167 = vmatprep.subr.mxu0 0.0
    %168 = vmatpush1.msra.mxu0 0.0
    %169 = vmatprep.subr.mxu0 0.0
    %170 = vmatpush1.msra.mxu0 0.0
    %171 = vmatprep.subr.mxu0 0.0
    %172 = vmatpush1.msra.mxu0 0.0
    %173 = vmatprep.subr.mxu0 0.0
    %174 = vmatpush1.msra.mxu0 0.0
    %175 = vmatprep.subr.mxu0 0.0
    %176 = vmatpush1.msra.mxu0 0.0
    %177 = vmatprep.subr.mxu0 0.0
    %178 = vmatpush1.msra.mxu0 0.0
    %179 = vmatprep.subr.mxu0 0.0
    %180 = vmatpush1.msra.mxu0 0.0
    %181 = vmatprep.subr.mxu0 0.0
    %182 = vmatpush1.msra.mxu0 0.0
    %183 = vmatprep.subr.mxu0 0.0
    %184 = vmatpush1.msra.mxu0 0.0
    %185 = vmatprep.subr.mxu0 0.0
    %186 = vmatpush1.msra.mxu0 0.0
    %187 = vmatprep.subr.mxu0 0.0
    %188 = vmatpush1.msra.mxu0 0.0
    %189 = vmatprep.mubr.f32.mxu0 0.0
    %v190 = vand.u32 %v107, 4294901760
    %v191 = vsub.f32 %v107, %v190
    %v192 = vand.u32 %v191, 4294901760
    %v193 = vsub.f32 %v191, %v192
    %v194 = vand.u32 %v193, 4294901760
    %195 = vmatmul.mubr.f32.gmra.mrb[0].mxu0 %v194
    %v196 = vpop.f32.mrb[0].mxu0
    %v197 = vadd.f32 %v98, %v196
    %v198 = vpop.f32.mrb[0].mxu0
    %v199 = vadd.f32 %v102, %v198
    %200 = vdwg.mxu0
    %v201 = vand.u32 %v77, 4294901760
    %v202 = vsub.f32 %v77, %v201
    %v203 = vand.u32 %v202, 4294901760
    %v204 = vsub.f32 %v202, %v203
    %v205 = vand.u32 %v204, 4294901760
    %206 = vmatprep.subr.mxu0 %v205
    %v207 = vand.u32 %v76, 4294901760
    %v208 = vsub.f32 %v76, %v207
    %v209 = vand.u32 %v208, 4294901760
    %v210 = vsub.f32 %v208, %v209
    %v211 = vand.u32 %v210, 4294901760
    %212 = vmatpush1.msra.mxu0 %v211
    %v213 = vand.u32 %v79, 4294901760
    %v214 = vsub.f32 %v79, %v213
    %v215 = vand.u32 %v214, 4294901760
    %v216 = vsub.f32 %v214, %v215
    %v217 = vand.u32 %v216, 4294901760
    %218 = vmatprep.subr.mxu0 %v217
    %v219 = vand.u32 %v78, 4294901760
    %v220 = vsub.f32 %v78, %v219
    %v221 = vand.u32 %v220, 4294901760
    %v222 = vsub.f32 %v220, %v221
    %v223 = vand.u32 %v222, 4294901760
    %224 = vmatpush1.msra.mxu0 %v223
    %v225 = vand.u32 %v81, 4294901760
    %v226 = vsub.f32 %v81, %v225
    %v227 = vand.u32 %v226, 4294901760
    %v228 = vsub.f32 %v226, %v227
    %v229 = vand.u32 %v228, 4294901760
    %230 = vmatprep.subr.mxu0 %v229
    %v231 = vand.u32 %v80, 4294901760
    %v232 = vsub.f32 %v80, %v231
    %v233 = vand.u32 %v232, 4294901760
    %v234 = vsub.f32 %v232, %v233
    %v235 = vand.u32 %v234, 4294901760
    %236 = vmatpush1.msra.mxu0 %v235
    %v237 = vand.u32 %v83, 4294901760
    %v238 = vsub.f32 %v83, %v237
    %v239 = vand.u32 %v238, 4294901760
    %v240 = vsub.f32 %v238, %v239
    %v241 = vand.u32 %v240, 4294901760
    %242 = vmatprep.subr.mxu0 %v241
    %v243 = vand.u32 %v82, 4294901760
    %v244 = vsub.f32 %v82, %v243
    %v245 = vand.u32 %v244, 4294901760
    %v246 = vsub.f32 %v244, %v245
    %v247 = vand.u32 %v246, 4294901760
    %248 = vmatpush1.msra.mxu0 %v247
    %v249 = vand.u32 %v85, 4294901760
    %v250 = vsub.f32 %v85, %v249
    %v251 = vand.u32 %v250, 4294901760
    %v252 = vsub.f32 %v250, %v251
    %v253 = vand.u32 %v252, 4294901760
    %254 = vmatprep.subr.mxu0 %v253
    %v255 = vand.u32 %v84, 4294901760
    %v256 = vsub.f32 %v84, %v255
    %v257 = vand.u32 %v256, 4294901760
    %v258 = vsub.f32 %v256, %v257
    %v259 = vand.u32 %v258, 4294901760
    %260 = vmatpush1.msra.mxu0 %v259
    %v261 = vand.u32 %v87, 4294901760
    %v262 = vsub.f32 %v87, %v261
    %v263 = vand.u32 %v262, 4294901760
    %v264 = vsub.f32 %v262, %v263
    %v265 = vand.u32 %v264, 4294901760
    %266 = vmatprep.subr.mxu0 %v265
    %v267 = vand.u32 %v86, 4294901760
    %v268 = vsub.f32 %v86, %v267
    %v269 = vand.u32 %v268, 4294901760
    %v270 = vsub.f32 %v268, %v269
    %v271 = vand.u32 %v270, 4294901760
    %272 = vmatpush1.msra.mxu0 %v271
    %v273 = vand.u32 %v89, 4294901760
    %v274 = vsub.f32 %v89, %v273
    %v275 = vand.u32 %v274, 4294901760
    %v276 = vsub.f32 %v274, %v275
    %v277 = vand.u32 %v276, 4294901760
    %278 = vmatprep.subr.mxu0 %v277
    %v279 = vand.u32 %v88, 4294901760
    %v280 = vsub.f32 %v88, %v279
    %v281 = vand.u32 %v280, 4294901760
    %v282 = vsub.f32 %v280, %v281
    %v283 = vand.u32 %v282, 4294901760
    %284 = vmatpush1.msra.mxu0 %v283
    %v285 = vand.u32 %v91, 4294901760
    %v286 = vsub.f32 %v91, %v285
    %v287 = vand.u32 %v286, 4294901760
    %v288 = vsub.f32 %v286, %v287
    %v289 = vand.u32 %v288, 4294901760
    %290 = vmatprep.subr.mxu0 %v289
    %v291 = vand.u32 %v90, 4294901760
    %v292 = vsub.f32 %v90, %v291
    %v293 = vand.u32 %v292, 4294901760
    %v294 = vsub.f32 %v292, %v293
    %v295 = vand.u32 %v294, 4294901760
    %296 = vmatpush1.msra.mxu0 %v295
    %297 = vmatprep.subr.mxu0 0.0
    %298 = vmatpush1.msra.mxu0 0.0
    %299 = vmatprep.subr.mxu0 0.0
    %300 = vmatpush1.msra.mxu0 0.0
    %301 = vmatprep.subr.mxu0 0.0
    %302 = vmatpush1.msra.mxu0 0.0
    %303 = vmatprep.subr.mxu0 0.0
    %304 = vmatpush1.msra.mxu0 0.0
    %305 = vmatprep.subr.mxu0 0.0
    %306 = vmatpush1.msra.mxu0 0.0
    %307 = vmatprep.subr.mxu0 0.0
    %308 = vmatpush1.msra.mxu0 0.0
    %309 = vmatprep.subr.mxu0 0.0
    %310 = vmatpush1.msra.mxu0 0.0
    %311 = vmatprep.subr.mxu0 0.0
    %312 = vmatpush1.msra.mxu0 0.0
    %313 = vmatprep.subr.mxu0 0.0
    %314 = vmatpush1.msra.mxu0 0.0
    %315 = vmatprep.subr.mxu0 0.0
    %316 = vmatpush1.msra.mxu0 0.0
    %317 = vmatprep.subr.mxu0 0.0
    %318 = vmatpush1.msra.mxu0 0.0
    %319 = vmatprep.subr.mxu0 0.0
    %320 = vmatpush1.msra.mxu0 0.0
    %321 = vmatprep.subr.mxu0 0.0
    %322 = vmatpush1.msra.mxu0 0.0
    %323 = vmatprep.subr.mxu0 0.0
    %324 = vmatpush1.msra.mxu0 0.0
    %325 = vmatprep.subr.mxu0 0.0
    %326 = vmatpush1.msra.mxu0 0.0
    %327 = vmatprep.subr.mxu0 0.0
    %328 = vmatpush1.msra.mxu0 0.0
    %329 = vmatprep.subr.mxu0 0.0
    %330 = vmatpush1.msra.mxu0 0.0
    %331 = vmatprep.subr.mxu0 0.0
    %332 = vmatpush1.msra.mxu0 0.0
    %333 = vmatprep.subr.mxu0 0.0
    %334 = vmatpush1.msra.mxu0 0.0
    %335 = vmatprep.subr.mxu0 0.0
    %336 = vmatpush1.msra.mxu0 0.0
    %337 = vmatprep.subr.mxu0 0.0
    %338 = vmatpush1.msra.mxu0 0.0
    %339 = vmatprep.subr.mxu0 0.0
    %340 = vmatpush1.msra.mxu0 0.0
    %341 = vmatprep.subr.mxu0 0.0
    %342 = vmatpush1.msra.mxu0 0.0
    %343 = vmatprep.subr.mxu0 0.0
    %344 = vmatpush1.msra.mxu0 0.0
    %345 = vmatprep.mubr.f32.mxu0 0.0
    %v346 = vand.u32 %v107, 4294901760
    %347 = vmatmul.mubr.f32.gmra.mrb[0].mxu0 %v346
    %v348 = vpop.f32.mrb[0].mxu0
    %v349 = vadd.f32 %v197, %v348
    %v350 = vpop.f32.mrb[0].mxu0
    %v351 = vadd.f32 %v199, %v350
    %352 = vdwg.mxu0
    %v353 = vand.u32 %v77, 4294901760
    %v354 = vsub.f32 %v77, %v353
    %355 = vmatprep.subr.mxu0 %v354
    %v356 = vand.u32 %v76, 4294901760
    %v357 = vsub.f32 %v76, %v356
    %358 = vmatpush1.msra.mxu0 %v357
    %v359 = vand.u32 %v79, 4294901760
    %v360 = vsub.f32 %v79, %v359
    %361 = vmatprep.subr.mxu0 %v360
    %v362 = vand.u32 %v78, 4294901760
    %v363 = vsub.f32 %v78, %v362
    %364 = vmatpush1.msra.mxu0 %v363
    %v365 = vand.u32 %v81, 4294901760
    %v366 = vsub.f32 %v81, %v365
    %367 = vmatprep.subr.mxu0 %v366
    %v368 = vand.u32 %v80, 4294901760
    %v369 = vsub.f32 %v80, %v368
    %370 = vmatpush1.msra.mxu0 %v369
    %v371 = vand.u32 %v83, 4294901760
    %v372 = vsub.f32 %v83, %v371
    %373 = vmatprep.subr.mxu0 %v372
    %v374 = vand.u32 %v82, 4294901760
    %v375 = vsub.f32 %v82, %v374
    %376 = vmatpush1.msra.mxu0 %v375
    %v377 = vand.u32 %v85, 4294901760
    %v378 = vsub.f32 %v85, %v377
    %379 = vmatprep.subr.mxu0 %v378
    %v380 = vand.u32 %v84, 4294901760
    %v381 = vsub.f32 %v84, %v380
    %382 = vmatpush1.msra.mxu0 %v381
    %v383 = vand.u32 %v87, 4294901760
    %v384 = vsub.f32 %v87, %v383
    %385 = vmatprep.subr.mxu0 %v384
    %v386 = vand.u32 %v86, 4294901760
    %v387 = vsub.f32 %v86, %v386
    %388 = vmatpush1.msra.mxu0 %v387
    %v389 = vand.u32 %v89, 4294901760
    %v390 = vsub.f32 %v89, %v389
    %391 = vmatprep.subr.mxu0 %v390
    %v392 = vand.u32 %v88, 4294901760
    %v393 = vsub.f32 %v88, %v392
    %394 = vmatpush1.msra.mxu0 %v393
    %v395 = vand.u32 %v91, 4294901760
    %v396 = vsub.f32 %v91, %v395
    %397 = vmatprep.subr.mxu0 %v396
    %v398 = vand.u32 %v90, 4294901760
    %v399 = vsub.f32 %v90, %v398
    %400 = vmatpush1.msra.mxu0 %v399
    %401 = vmatprep.subr.mxu0 0.0
    %402 = vmatpush1.msra.mxu0 0.0
    %403 = vmatprep.subr.mxu0 0.0
    %404 = vmatpush1.msra.mxu0 0.0
    %405 = vmatprep.subr.mxu0 0.0
    %406 = vmatpush1.msra.mxu0 0.0
    %407 = vmatprep.subr.mxu0 0.0
    %408 = vmatpush1.msra.mxu0 0.0
    %409 = vmatprep.subr.mxu0 0.0
    %410 = vmatpush1.msra.mxu0 0.0
    %411 = vmatprep.subr.mxu0 0.0
    %412 = vmatpush1.msra.mxu0 0.0
    %413 = vmatprep.subr.mxu0 0.0
    %414 = vmatpush1.msra.mxu0 0.0
    %415 = vmatprep.subr.mxu0 0.0
    %416 = vmatpush1.msra.mxu0 0.0
    %417 = vmatprep.subr.mxu0 0.0
    %418 = vmatpush1.msra.mxu0 0.0
    %419 = vmatprep.subr.mxu0 0.0
    %420 = vmatpush1.msra.mxu0 0.0
    %421 = vmatprep.subr.mxu0 0.0
    %422 = vmatpush1.msra.mxu0 0.0
    %423 = vmatprep.subr.mxu0 0.0
    %424 = vmatpush1.msra.mxu0 0.0
    %425 = vmatprep.subr.mxu0 0.0
    %426 = vmatpush1.msra.mxu0 0.0
    %427 = vmatprep.subr.mxu0 0.0
    %428 = vmatpush1.msra.mxu0 0.0
    %429 = vmatprep.subr.mxu0 0.0
    %430 = vmatpush1.msra.mxu0 0.0
    %431 = vmatprep.subr.mxu0 0.0
    %432 = vmatpush1.msra.mxu0 0.0
    %433 = vmatprep.subr.mxu0 0.0
    %434 = vmatpush1.msra.mxu0 0.0
    %435 = vmatprep.subr.mxu0 0.0
    %436 = vmatpush1.msra.mxu0 0.0
    %437 = vmatprep.subr.mxu0 0.0
    %438 = vmatpush1.msra.mxu0 0.0
    %439 = vmatprep.subr.mxu0 0.0
    %440 = vmatpush1.msra.mxu0 0.0
    %441 = vmatprep.subr.mxu0 0.0
    %442 = vmatpush1.msra.mxu0 0.0
    %443 = vmatprep.subr.mxu0 0.0
    %444 = vmatpush1.msra.mxu0 0.0
    %445 = vmatprep.subr.mxu0 0.0
    %446 = vmatpush1.msra.mxu0 0.0
    %447 = vmatprep.subr.mxu0 0.0
    %448 = vmatpush1.msra.mxu0 0.0
    %449 = vmatprep.mubr.f32.mxu0 0.0
    %v450 = vand.u32 %v107, 4294901760
    %v451 = vsub.f32 %v107, %v450
    %452 = vmatmul.mubr.f32.gmra.mrb[0].mxu0 %v451
    %v453 = vpop.f32.mrb[0].mxu0
    %v454 = vadd.f32 %v349, %v453
    %v455 = vpop.f32.mrb[0].mxu0
    %v456 = vadd.f32 %v351, %v455
    %457 = vdwg.mxu0
    %v458 = vand.u32 %v77, 4294901760
    %459 = vmatprep.subr.mxu0 %v458
    %v460 = vand.u32 %v76, 4294901760
    %461 = vmatpush1.msra.mxu0 %v460
    %v462 = vand.u32 %v79, 4294901760
    %463 = vmatprep.subr.mxu0 %v462
    %v464 = vand.u32 %v78, 4294901760
    %465 = vmatpush1.msra.mxu0 %v464
    %v466 = vand.u32 %v81, 4294901760
    %467 = vmatprep.subr.mxu0 %v466
    %v468 = vand.u32 %v80, 4294901760
    %469 = vmatpush1.msra.mxu0 %v468
    %v470 = vand.u32 %v83, 4294901760
    %471 = vmatprep.subr.mxu0 %v470
    %v472 = vand.u32 %v82, 4294901760
    %473 = vmatpush1.msra.mxu0 %v472
    %v474 = vand.u32 %v85, 4294901760
    %475 = vmatprep.subr.mxu0 %v474
    %v476 = vand.u32 %v84, 4294901760
    %477 = vmatpush1.msra.mxu0 %v476
    %v478 = vand.u32 %v87, 4294901760
    %479 = vmatprep.subr.mxu0 %v478
    %v480 = vand.u32 %v86, 4294901760
    %481 = vmatpush1.msra.mxu0 %v480
    %v482 = vand.u32 %v89, 4294901760
    %483 = vmatprep.subr.mxu0 %v482
    %v484 = vand.u32 %v88, 4294901760
    %485 = vmatpush1.msra.mxu0 %v484
    %v486 = vand.u32 %v91, 4294901760
    %487 = vmatprep.subr.mxu0 %v486
    %v488 = vand.u32 %v90, 4294901760
    %489 = vmatpush1.msra.mxu0 %v488
    %490 = vmatprep.subr.mxu0 0.0
    %491 = vmatpush1.msra.mxu0 0.0
    %492 = vmatprep.subr.mxu0 0.0
    %493 = vmatpush1.msra.mxu0 0.0
    %494 = vmatprep.subr.mxu0 0.0
    %495 = vmatpush1.msra.mxu0 0.0
    %496 = vmatprep.subr.mxu0 0.0
    %497 = vmatpush1.msra.mxu0 0.0
    %498 = vmatprep.subr.mxu0 0.0
    %499 = vmatpush1.msra.mxu0 0.0
    %500 = vmatprep.subr.mxu0 0.0
    %501 = vmatpush1.msra.mxu0 0.0
    %502 = vmatprep.subr.mxu0 0.0
    %503 = vmatpush1.msra.mxu0 0.0
    %504 = vmatprep.subr.mxu0 0.0
    %505 = vmatpush1.msra.mxu0 0.0
    %506 = vmatprep.subr.mxu0 0.0
    %507 = vmatpush1.msra.mxu0 0.0
    %508 = vmatprep.subr.mxu0 0.0
    %509 = vmatpush1.msra.mxu0 0.0
    %510 = vmatprep.subr.mxu0 0.0
    %511 = vmatpush1.msra.mxu0 0.0
    %512 = vmatprep.subr.mxu0 0.0
    %513 = vmatpush1.msra.mxu0 0.0
    %514 = vmatprep.subr.mxu0 0.0
    %515 = vmatpush1.msra.mxu0 0.0
    %516 = vmatprep.subr.mxu0 0.0
    %517 = vmatpush1.msra.mxu0 0.0
    %518 = vmatprep.subr.mxu0 0.0
    %519 = vmatpush1.msra.mxu0 0.0
    %520 = vmatprep.subr.mxu0 0.0
    %521 = vmatpush1.msra.mxu0 0.0
    %522 = vmatprep.subr.mxu0 0.0
    %523 = vmatpush1.msra.mxu0 0.0
    %524 = vmatprep.subr.mxu0 0.0
    %525 = vmatpush1.msra.mxu0 0.0
    %526 = vmatprep.subr.mxu0 0.0
    %527 = vmatpush1.msra.mxu0 0.0
    %528 = vmatprep.subr.mxu0 0.0
    %529 = vmatpush1.msra.mxu0 0.0
    %530 = vmatprep.subr.mxu0 0.0
    %531 = vmatpush1.msra.mxu0 0.0
    %532 = vmatprep.subr.mxu0 0.0
    %533 = vmatpush1.msra.mxu0 0.0
    %534 = vmatprep.subr.mxu0 0.0
    %535 = vmatpush1.msra.mxu0 0.0
    %536 = vmatprep.subr.mxu0 0.0
    %537 = vmatpush1.msra.mxu0 0.0
    %538 = vmatprep.mubr.f32.mxu0 0.0
    %v539 = vand.u32 %v107, 4294901760
    %v540 = vsub.f32 %v107, %v539
    %v541 = vand.u32 %v540, 4294901760
    %542 = vmatmul.mubr.f32.gmra.mrb[0].mxu0 %v541
    %v543 = vpop.f32.mrb[0].mxu0
    %v544 = vadd.f32 %v454, %v543
    %v545 = vpop.f32.mrb[0].mxu0
    %v546 = vadd.f32 %v456, %v545
    %547 = vdwg.mxu0
    %v548 = vand.u32 %v77, 4294901760
    %v549 = vsub.f32 %v77, %v548
    %v550 = vand.u32 %v549, 4294901760
    %551 = vmatprep.subr.mxu0 %v550
    %v552 = vand.u32 %v76, 4294901760
    %v553 = vsub.f32 %v76, %v552
    %v554 = vand.u32 %v553, 4294901760
    %555 = vmatpush1.msra.mxu0 %v554
    %v556 = vand.u32 %v79, 4294901760
    %v557 = vsub.f32 %v79, %v556
    %v558 = vand.u32 %v557, 4294901760
    %559 = vmatprep.subr.mxu0 %v558
    %v560 = vand.u32 %v78, 4294901760
    %v561 = vsub.f32 %v78, %v560
    %v562 = vand.u32 %v561, 4294901760
    %563 = vmatpush1.msra.mxu0 %v562
    %v564 = vand.u32 %v81, 4294901760
    %v565 = vsub.f32 %v81, %v564
    %v566 = vand.u32 %v565, 4294901760
    %567 = vmatprep.subr.mxu0 %v566
    %v568 = vand.u32 %v80, 4294901760
    %v569 = vsub.f32 %v80, %v568
    %v570 = vand.u32 %v569, 4294901760
    %571 = vmatpush1.msra.mxu0 %v570
    %v572 = vand.u32 %v83, 4294901760
    %v573 = vsub.f32 %v83, %v572
    %v574 = vand.u32 %v573, 4294901760
    %575 = vmatprep.subr.mxu0 %v574
    %v576 = vand.u32 %v82, 4294901760
    %v577 = vsub.f32 %v82, %v576
    %v578 = vand.u32 %v577, 4294901760
    %579 = vmatpush1.msra.mxu0 %v578
    %v580 = vand.u32 %v85, 4294901760
    %v581 = vsub.f32 %v85, %v580
    %v582 = vand.u32 %v581, 4294901760
    %583 = vmatprep.subr.mxu0 %v582
    %v584 = vand.u32 %v84, 4294901760
    %v585 = vsub.f32 %v84, %v584
    %v586 = vand.u32 %v585, 4294901760
    %587 = vmatpush1.msra.mxu0 %v586
    %v588 = vand.u32 %v87, 4294901760
    %v589 = vsub.f32 %v87, %v588
    %v590 = vand.u32 %v589, 4294901760
    %591 = vmatprep.subr.mxu0 %v590
    %v592 = vand.u32 %v86, 4294901760
    %v593 = vsub.f32 %v86, %v592
    %v594 = vand.u32 %v593, 4294901760
    %595 = vmatpush1.msra.mxu0 %v594
    %v596 = vand.u32 %v89, 4294901760
    %v597 = vsub.f32 %v89, %v596
    %v598 = vand.u32 %v597, 4294901760
    %599 = vmatprep.subr.mxu0 %v598
    %v600 = vand.u32 %v88, 4294901760
    %v601 = vsub.f32 %v88, %v600
    %v602 = vand.u32 %v601, 4294901760
    %603 = vmatpush1.msra.mxu0 %v602
    %v604 = vand.u32 %v91, 4294901760
    %v605 = vsub.f32 %v91, %v604
    %v606 = vand.u32 %v605, 4294901760
    %607 = vmatprep.subr.mxu0 %v606
    %v608 = vand.u32 %v90, 4294901760
    %v609 = vsub.f32 %v90, %v608
    %v610 = vand.u32 %v609, 4294901760
    %611 = vmatpush1.msra.mxu0 %v610
    %612 = vmatprep.subr.mxu0 0.0
    %613 = vmatpush1.msra.mxu0 0.0
    %614 = vmatprep.subr.mxu0 0.0
    %615 = vmatpush1.msra.mxu0 0.0
    %616 = vmatprep.subr.mxu0 0.0
    %617 = vmatpush1.msra.mxu0 0.0
    %618 = vmatprep.subr.mxu0 0.0
    %619 = vmatpush1.msra.mxu0 0.0
    %620 = vmatprep.subr.mxu0 0.0
    %621 = vmatpush1.msra.mxu0 0.0
    %622 = vmatprep.subr.mxu0 0.0
    %623 = vmatpush1.msra.mxu0 0.0
    %624 = vmatprep.subr.mxu0 0.0
    %625 = vmatpush1.msra.mxu0 0.0
    %626 = vmatprep.subr.mxu0 0.0
    %627 = vmatpush1.msra.mxu0 0.0
    %628 = vmatprep.subr.mxu0 0.0
    %629 = vmatpush1.msra.mxu0 0.0
    %630 = vmatprep.subr.mxu0 0.0
    %631 = vmatpush1.msra.mxu0 0.0
    %632 = vmatprep.subr.mxu0 0.0
    %633 = vmatpush1.msra.mxu0 0.0
    %634 = vmatprep.subr.mxu0 0.0
    %635 = vmatpush1.msra.mxu0 0.0
    %636 = vmatprep.subr.mxu0 0.0
    %637 = vmatpush1.msra.mxu0 0.0
    %638 = vmatprep.subr.mxu0 0.0
    %639 = vmatpush1.msra.mxu0 0.0
    %640 = vmatprep.subr.mxu0 0.0
    %641 = vmatpush1.msra.mxu0 0.0
    %642 = vmatprep.subr.mxu0 0.0
    %643 = vmatpush1.msra.mxu0 0.0
    %644 = vmatprep.subr.mxu0 0.0
    %645 = vmatpush1.msra.mxu0 0.0
    %646 = vmatprep.subr.mxu0 0.0
    %647 = vmatpush1.msra.mxu0 0.0
    %648 = vmatprep.subr.mxu0 0.0
    %649 = vmatpush1.msra.mxu0 0.0
    %650 = vmatprep.subr.mxu0 0.0
    %651 = vmatpush1.msra.mxu0 0.0
    %652 = vmatprep.subr.mxu0 0.0
    %653 = vmatpush1.msra.mxu0 0.0
    %654 = vmatprep.subr.mxu0 0.0
    %655 = vmatpush1.msra.mxu0 0.0
    %656 = vmatprep.subr.mxu0 0.0
    %657 = vmatpush1.msra.mxu0 0.0
    %658 = vmatprep.subr.mxu0 0.0
    %659 = vmatpush1.msra.mxu0 0.0
    %660 = vmatprep.mubr.f32.mxu0 0.0
    %v661 = vand.u32 %v107, 4294901760
    %662 = vmatmul.mubr.f32.gmra.mrb[0].mxu0 %v661
    %v663 = vpop.f32.mrb[0].mxu0
    %v664 = vadd.f32 %v544, %v663
    %v665 = vpop.f32.mrb[0].mxu0
    %v666 = vadd.f32 %v546, %v665
    %667 = vdwg.mxu0
    %v668 = vand.u32 %v77, 4294901760
    %669 = vmatprep.subr.mxu0 %v668
    %v670 = vand.u32 %v76, 4294901760
    %671 = vmatpush1.msra.mxu0 %v670
    %v672 = vand.u32 %v79, 4294901760
    %673 = vmatprep.subr.mxu0 %v672
    %v674 = vand.u32 %v78, 4294901760
    %675 = vmatpush1.msra.mxu0 %v674
    %v676 = vand.u32 %v81, 4294901760
    %677 = vmatprep.subr.mxu0 %v676
    %v678 = vand.u32 %v80, 4294901760
    %679 = vmatpush1.msra.mxu0 %v678
    %v680 = vand.u32 %v83, 4294901760
    %681 = vmatprep.subr.mxu0 %v680
    %v682 = vand.u32 %v82, 4294901760
    %683 = vmatpush1.msra.mxu0 %v682
    %v684 = vand.u32 %v85, 4294901760
    %685 = vmatprep.subr.mxu0 %v684
    %v686 = vand.u32 %v84, 4294901760
    %687 = vmatpush1.msra.mxu0 %v686
    %v688 = vand.u32 %v87, 4294901760
    %689 = vmatprep.subr.mxu0 %v688
    %v690 = vand.u32 %v86, 4294901760
    %691 = vmatpush1.msra.mxu0 %v690
    %v692 = vand.u32 %v89, 4294901760
    %693 = vmatprep.subr.mxu0 %v692
    %v694 = vand.u32 %v88, 4294901760
    %695 = vmatpush1.msra.mxu0 %v694
    %v696 = vand.u32 %v91, 4294901760
    %697 = vmatprep.subr.mxu0 %v696
    %v698 = vand.u32 %v90, 4294901760
    %699 = vmatpush1.msra.mxu0 %v698
    %700 = vmatprep.subr.mxu0 0.0
    %701 = vmatpush1.msra.mxu0 0.0
    %702 = vmatprep.subr.mxu0 0.0
    %703 = vmatpush1.msra.mxu0 0.0
    %704 = vmatprep.subr.mxu0 0.0
    %705 = vmatpush1.msra.mxu0 0.0
    %706 = vmatprep.subr.mxu0 0.0
    %707 = vmatpush1.msra.mxu0 0.0
    %708 = vmatprep.subr.mxu0 0.0
    %709 = vmatpush1.msra.mxu0 0.0
    %710 = vmatprep.subr.mxu0 0.0
    %711 = vmatpush1.msra.mxu0 0.0
    %712 = vmatprep.subr.mxu0 0.0
    %713 = vmatpush1.msra.mxu0 0.0
    %714 = vmatprep.subr.mxu0 0.0
    %715 = vmatpush1.msra.mxu0 0.0
    %716 = vmatprep.subr.mxu0 0.0
    %717 = vmatpush1.msra.mxu0 0.0
    %718 = vmatprep.subr.mxu0 0.0
    %719 = vmatpush1.msra.mxu0 0.0
    %720 = vmatprep.subr.mxu0 0.0
    %721 = vmatpush1.msra.mxu0 0.0
    %722 = vmatprep.subr.mxu0 0.0
    %723 = vmatpush1.msra.mxu0 0.0
    %724 = vmatprep.subr.mxu0 0.0
    %725 = vmatpush1.msra.mxu0 0.0
    %726 = vmatprep.subr.mxu0 0.0
    %727 = vmatpush1.msra.mxu0 0.0
    %728 = vmatprep.subr.mxu0 0.0
    %729 = vmatpush1.msra.mxu0 0.0
    %730 = vmatprep.subr.mxu0 0.0
    %731 = vmatpush1.msra.mxu0 0.0
    %732 = vmatprep.subr.mxu0 0.0
    %733 = vmatpush1.msra.mxu0 0.0
    %734 = vmatprep.subr.mxu0 0.0
    %735 = vmatpush1.msra.mxu0 0.0
    %736 = vmatprep.subr.mxu0 0.0
    %737 = vmatpush1.msra.mxu0 0.0
    %738 = vmatprep.subr.mxu0 0.0
    %739 = vmatpush1.msra.mxu0 0.0
    %740 = vmatprep.subr.mxu0 0.0
    %741 = vmatpush1.msra.mxu0 0.0
    %742 = vmatprep.subr.mxu0 0.0
    %743 = vmatpush1.msra.mxu0 0.0
    %744 = vmatprep.subr.mxu0 0.0
    %745 = vmatpush1.msra.mxu0 0.0
    %746 = vmatprep.subr.mxu0 0.0
    %747 = vmatpush1.msra.mxu0 0.0
    %748 = vmatprep.mubr.f32.mxu0 0.0
    %v749 = vand.u32 %v107, 4294901760
    %750 = vmatmul.mubr.f32.gmra.mrb[0].mxu0 %v749
    %v751 = vpop.f32.mrb[0].mxu0
    %v752 = vadd.f32 %v664, %v751
    %v753 = vpop.f32.mrb[0].mxu0
    %v754 = vadd.f32 %v666, %v753
    %755 = vdwg.mxu0
    %v756 = vld [vmem:[#allocation3] sm:$0x3]
    %s757 = scalar_lea.vmem [#allocation6], 14
    %v758 = vld [vmem:[%s757] sm:$0x3]
    %v759 = vadd.f32 %v756, %v752
    %v760 = vxor.u32 %v759, 2147483648
    %v761 = vmul.f32 %v760, 1.442695
    %v762 = vpow.pop %v761
    %v763 = vadd.f32 %v762, 1.0
    %v764 = vrcp.pop %v763
    %v765 = vmul.f32 1.0, %v764
    %767 = vrot.lane.b32.xlu0 %v752, 64
    %v768 = vpop.permute.xlu0 %767
    %v770 = vmul.f32 %v765, %v768
    %772 = vrot.lane.b32.xlu0 %v770, 64
    %v773 = vpop.permute.xlu0 %772
    %v775 = vadd.f32 %v756, %v773
    %v776 = vtanh.pop %v775
    %v777 = vsub.f32 1.0, %v765
    %779 = vrot.lane.b32.xlu0 %v776, 96
    %v780 = vpop.permute.xlu0 %779
    %v782 = vmul.f32 %v777, %v780
    %783 = vrot.lane.b32.xlu0 %v93, 32
    %v784 = vpop.permute.xlu0 %783
    %v786 = vmul.f32 %v765, %v784
    %v787 = vadd.f32 %v782, %v786
    %788 = vrot.lane.b32.xlu0 %v752, 32
    %v789 = vpop.permute.xlu0 %788
    %v791 = vadd.f32 %v758, %v789
    %v792 = vxor.u32 %v791, 2147483648
    %v793 = vmul.f32 %v792, 1.442695
    %v794 = vpow.pop %v793
    %v795 = vadd.f32 %v794, 1.0
    %v796 = vrcp.pop %v795
    %v797 = vmul.f32 1.0, %v796
    %799 = vrot.lane.b32.xlu0 %v754, 32
    %v800 = vpop.permute.xlu0 %799
    %v802 = vadd.f32 %v758, %v800
    %v803 = vxor.u32 %v802, 2147483648
    %v804 = vmul.f32 %v803, 1.442695
    %v805 = vpow.pop %v804
    %v806 = vadd.f32 %v805, 1.0
    %v807 = vrcp.pop %v806
    %v808 = vmul.f32 1.0, %v807
    %809 = vrot.lane.b32.xlu0 %v754, 96
    %v810 = vpop.permute.xlu0 %809
    %v812 = vmul.f32 %v797, %v810
    %814 = vrot.lane.b32.xlu0 %v812, 64
    %v815 = vpop.permute.xlu0 %814
    %v817 = vadd.f32 %v758, %v815
    %v818 = vtanh.pop %v817
    %v819 = vsub.f32 1.0, %v808
    %821 = vrot.lane.b32.xlu0 %v818, 96
    %v822 = vpop.permute.xlu0 %821
    %v824 = vmul.f32 %v819, %v822
    %v825 = vmul.f32 %v808, %v93
    %v826 = vadd.f32 %v824, %v825
    %828 = vrot.lane.b32.xlu0 %v787, 96
    %v829 = vpop.permute.xlu0 %828
    %vm831 = vcmask 254976
    %832 = vst.msk [vmem:[#allocation9] sm:$0x3] %vm831, %v829
    %834 = vrot.lane.b32.xlu0 %v826, 96
    %v835 = vpop.permute.xlu0 %834
    %s837 = scalar_lea.vmem [#allocation10], 14
    %838 = vst.msk [vmem:[%s837] sm:$0x3] %vm831, %v835
    %vm839 = vcmask 261120
    %v840 = vsel %vm839, %v829, %v826
    %v842 = vsel %vm105, %v840, 0
    %v844 = vand.u32 %v77, 4294901760
    %845 = vmatprep.subr.mxu0 %v844
    %v846 = vand.u32 %v76, 4294901760
    %847 = vmatpush1.msra.mxu0 %v846
    %v848 = vand.u32 %v79, 4294901760
    %849 = vmatprep.subr.mxu0 %v848
    %v850 = vand.u32 %v78, 4294901760
    %851 = vmatpush1.msra.mxu0 %v850
    %v852 = vand.u32 %v81, 4294901760
    %853 = vmatprep.subr.mxu0 %v852
    %v854 = vand.u32 %v80, 4294901760
    %855 = vmatpush1.msra.mxu0 %v854
    %v856 = vand.u32 %v83, 4294901760
    %857 = vmatprep.subr.mxu0 %v856
    %v858 = vand.u32 %v82, 4294901760
    %859 = vmatpush1.msra.mxu0 %v858
    %v860 = vand.u32 %v85, 4294901760
    %861 = vmatprep.subr.mxu0 %v860
    %v862 = vand.u32 %v84, 4294901760
    %863 = vmatpush1.msra.mxu0 %v862
    %v864 = vand.u32 %v87, 4294901760
    %865 = vmatprep.subr.mxu0 %v864
    %v866 = vand.u32 %v86, 4294901760
    %867 = vmatpush1.msra.mxu0 %v866
    %v868 = vand.u32 %v89, 4294901760
    %869 = vmatprep.subr.mxu0 %v868
    %v870 = vand.u32 %v88, 4294901760
    %871 = vmatpush1.msra.mxu0 %v870
    %v872 = vand.u32 %v91, 4294901760
    %873 = vmatprep.subr.mxu0 %v872
    %v874 = vand.u32 %v90, 4294901760
    %875 = vmatpush1.msra.mxu0 %v874
    %876 = vmatprep.subr.mxu0 0.0
    %877 = vmatpush1.msra.mxu0 0.0
    %878 = vmatprep.subr.mxu0 0.0
    %879 = vmatpush1.msra.mxu0 0.0
    %880 = vmatprep.subr.mxu0 0.0
    %881 = vmatpush1.msra.mxu0 0.0
    %882 = vmatprep.subr.mxu0 0.0
    %883 = vmatpush1.msra.mxu0 0.0
    %884 = vmatprep.subr.mxu0 0.0
    %885 = vmatpush1.msra.mxu0 0.0
    %886 = vmatprep.subr.mxu0 0.0
    %887 = vmatpush1.msra.mxu0 0.0
    %888 = vmatprep.subr.mxu0 0.0
    %889 = vmatpush1.msra.mxu0 0.0
    %890 = vmatprep.subr.mxu0 0.0
    %891 = vmatpush1.msra.mxu0 0.0
    %892 = vmatprep.subr.mxu0 0.0
    %893 = vmatpush1.msra.mxu0 0.0
    %894 = vmatprep.subr.mxu0 0.0
    %895 = vmatpush1.msra.mxu0 0.0
    %896 = vmatprep.subr.mxu0 0.0
    %897 = vmatpush1.msra.mxu0 0.0
    %898 = vmatprep.subr.mxu0 0.0
    %899 = vmatpush1.msra.mxu0 0.0
    %900 = vmatprep.subr.mxu0 0.0
    %901 = vmatpush1.msra.mxu0 0.0
    %902 = vmatprep.subr.mxu0 0.0
    %903 = vmatpush1.msra.mxu0 0.0
    %904 = vmatprep.subr.mxu0 0.0
    %905 = vmatpush1.msra.mxu0 0.0
    %906 = vmatprep.subr.mxu0 0.0
    %907 = vmatpush1.msra.mxu0 0.0
    %908 = vmatprep.subr.mxu0 0.0
    %909 = vmatpush1.msra.mxu0 0.0
    %910 = vmatprep.subr.mxu0 0.0
    %911 = vmatpush1.msra.mxu0 0.0
    %912 = vmatprep.subr.mxu0 0.0
    %913 = vmatpush1.msra.mxu0 0.0
    %914 = vmatprep.subr.mxu0 0.0
    %915 = vmatpush1.msra.mxu0 0.0
    %916 = vmatprep.subr.mxu0 0.0
    %917 = vmatpush1.msra.mxu0 0.0
    %918 = vmatprep.subr.mxu0 0.0
    %919 = vmatpush1.msra.mxu0 0.0
    %920 = vmatprep.subr.mxu0 0.0
    %921 = vmatpush1.msra.mxu0 0.0
    %922 = vmatprep.subr.mxu0 0.0
    %923 = vmatpush1.msra.mxu0 0.0
    %924 = vmatprep.mubr.f32.mxu0 0.0
    %v925 = vand.u32 %v842, 4294901760
    %v926 = vsub.f32 %v842, %v925
    %v927 = vand.u32 %v926, 4294901760
    %v928 = vsub.f32 %v926, %v927
    %v929 = vand.u32 %v928, 4294901760
    %930 = vmatmul.mubr.f32.gmra.mrb[0].mxu0 %v929
    %v931 = vpop.f32.mrb[0].mxu0
    %v932 = vadd.f32 %v98, %v931
    %v933 = vpop.f32.mrb[0].mxu0
    %v934 = vadd.f32 %v102, %v933
    %935 = vdwg.mxu0
    %v936 = vand.u32 %v77, 4294901760
    %v937 = vsub.f32 %v77, %v936
    %v938 = vand.u32 %v937, 4294901760
    %v939 = vsub.f32 %v937, %v938
    %v940 = vand.u32 %v939, 4294901760
    %941 = vmatprep.subr.mxu0 %v940
    %v942 = vand.u32 %v76, 4294901760
    %v943 = vsub.f32 %v76, %v942
    %v944 = vand.u32 %v943, 4294901760
    %v945 = vsub.f32 %v943, %v944
    %v946 = vand.u32 %v945, 4294901760
    %947 = vmatpush1.msra.mxu0 %v946
    %v948 = vand.u32 %v79, 4294901760
    %v949 = vsub.f32 %v79, %v948
    %v950 = vand.u32 %v949, 4294901760
    %v951 = vsub.f32 %v949, %v950
    %v952 = vand.u32 %v951, 4294901760
    %953 = vmatprep.subr.mxu0 %v952
    %v954 = vand.u32 %v78, 4294901760
    %v955 = vsub.f32 %v78, %v954
    %v956 = vand.u32 %v955, 4294901760
    %v957 = vsub.f32 %v955, %v956
    %v958 = vand.u32 %v957, 4294901760
    %959 = vmatpush1.msra.mxu0 %v958
    %v960 = vand.u32 %v81, 4294901760
    %v961 = vsub.f32 %v81, %v960
    %v962 = vand.u32 %v961, 4294901760
    %v963 = vsub.f32 %v961, %v962
    %v964 = vand.u32 %v963, 4294901760
    %965 = vmatprep.subr.mxu0 %v964
    %v966 = vand.u32 %v80, 4294901760
    %v967 = vsub.f32 %v80, %v966
    %v968 = vand.u32 %v967, 4294901760
    %v969 = vsub.f32 %v967, %v968
    %v970 = vand.u32 %v969, 4294901760
    %971 = vmatpush1.msra.mxu0 %v970
    %v972 = vand.u32 %v83, 4294901760
    %v973 = vsub.f32 %v83, %v972
    %v974 = vand.u32 %v973, 4294901760
    %v975 = vsub.f32 %v973, %v974
    %v976 = vand.u32 %v975, 4294901760
    %977 = vmatprep.subr.mxu0 %v976
    %v978 = vand.u32 %v82, 4294901760
    %v979 = vsub.f32 %v82, %v978
    %v980 = vand.u32 %v979, 4294901760
    %v981 = vsub.f32 %v979, %v980
    %v982 = vand.u32 %v981, 4294901760
    %983 = vmatpush1.msra.mxu0 %v982
    %v984 = vand.u32 %v85, 4294901760
    %v985 = vsub.f32 %v85, %v984
    %v986 = vand.u32 %v985, 4294901760
    %v987 = vsub.f32 %v985, %v986
    %v988 = vand.u32 %v987, 4294901760
    %989 = vmatprep.subr.mxu0 %v988
    %v990 = vand.u32 %v84, 4294901760
    %v991 = vsub.f32 %v84, %v990
    %v992 = vand.u32 %v991, 4294901760
    %v993 = vsub.f32 %v991, %v992
    %v994 = vand.u32 %v993, 4294901760
    %995 = vmatpush1.msra.mxu0 %v994
    %v996 = vand.u32 %v87, 4294901760
    %v997 = vsub.f32 %v87, %v996
    %v998 = vand.u32 %v997, 4294901760
    %v999 = vsub.f32 %v997, %v998
    %v1000 = vand.u32 %v999, 4294901760
    %1001 = vmatprep.subr.mxu0 %v1000
    %v1002 = vand.u32 %v86, 4294901760
    %v1003 = vsub.f32 %v86, %v1002
    %v1004 = vand.u32 %v1003, 4294901760
    %v1005 = vsub.f32 %v1003, %v1004
    %v1006 = vand.u32 %v1005, 4294901760
    %1007 = vmatpush1.msra.mxu0 %v1006
    %v1008 = vand.u32 %v89, 4294901760
    %v1009 = vsub.f32 %v89, %v1008
    %v1010 = vand.u32 %v1009, 4294901760
    %v1011 = vsub.f32 %v1009, %v1010
    %v1012 = vand.u32 %v1011, 4294901760
    %1013 = vmatprep.subr.mxu0 %v1012
    %v1014 = vand.u32 %v88, 4294901760
    %v1015 = vsub.f32 %v88, %v1014
    %v1016 = vand.u32 %v1015, 4294901760
    %v1017 = vsub.f32 %v1015, %v1016
    %v1018 = vand.u32 %v1017, 4294901760
    %1019 = vmatpush1.msra.mxu0 %v1018
    %v1020 = vand.u32 %v91, 4294901760
    %v1021 = vsub.f32 %v91, %v1020
    %v1022 = vand.u32 %v1021, 4294901760
    %v1023 = vsub.f32 %v1021, %v1022
    %v1024 = vand.u32 %v1023, 4294901760
    %1025 = vmatprep.subr.mxu0 %v1024
    %v1026 = vand.u32 %v90, 4294901760
    %v1027 = vsub.f32 %v90, %v1026
    %v1028 = vand.u32 %v1027, 4294901760
    %v1029 = vsub.f32 %v1027, %v1028
    %v1030 = vand.u32 %v1029, 4294901760
    %1031 = vmatpush1.msra.mxu0 %v1030
    %1032 = vmatprep.subr.mxu0 0.0
    %1033 = vmatpush1.msra.mxu0 0.0
    %1034 = vmatprep.subr.mxu0 0.0
    %1035 = vmatpush1.msra.mxu0 0.0
    %1036 = vmatprep.subr.mxu0 0.0
    %1037 = vmatpush1.msra.mxu0 0.0
    %1038 = vmatprep.subr.mxu0 0.0
    %1039 = vmatpush1.msra.mxu0 0.0
    %1040 = vmatprep.subr.mxu0 0.0
    %1041 = vmatpush1.msra.mxu0 0.0
    %1042 = vmatprep.subr.mxu0 0.0
    %1043 = vmatpush1.msra.mxu0 0.0
    %1044 = vmatprep.subr.mxu0 0.0
    %1045 = vmatpush1.msra.mxu0 0.0
    %1046 = vmatprep.subr.mxu0 0.0
    %1047 = vmatpush1.msra.mxu0 0.0
    %1048 = vmatprep.subr.mxu0 0.0
    %1049 = vmatpush1.msra.mxu0 0.0
    %1050 = vmatprep.subr.mxu0 0.0
    %1051 = vmatpush1.msra.mxu0 0.0
    %1052 = vmatprep.subr.mxu0 0.0
    %1053 = vmatpush1.msra.mxu0 0.0
    %1054 = vmatprep.subr.mxu0 0.0
    %1055 = vmatpush1.msra.mxu0 0.0
    %1056 = vmatprep.subr.mxu0 0.0
    %1057 = vmatpush1.msra.mxu0 0.0
    %1058 = vmatprep.subr.mxu0 0.0
    %1059 = vmatpush1.msra.mxu0 0.0
    %1060 = vmatprep.subr.mxu0 0.0
    %1061 = vmatpush1.msra.mxu0 0.0
    %1062 = vmatprep.subr.mxu0 0.0
    %1063 = vmatpush1.msra.mxu0 0.0
    %1064 = vmatprep.subr.mxu0 0.0
    %1065 = vmatpush1.msra.mxu0 0.0
    %1066 = vmatprep.subr.mxu0 0.0
    %1067 = vmatpush1.msra.mxu0 0.0
    %1068 = vmatprep.subr.mxu0 0.0
    %1069 = vmatpush1.msra.mxu0 0.0
    %1070 = vmatprep.subr.mxu0 0.0
    %1071 = vmatpush1.msra.mxu0 0.0
    %1072 = vmatprep.subr.mxu0 0.0
    %1073 = vmatpush1.msra.mxu0 0.0
    %1074 = vmatprep.subr.mxu0 0.0
    %1075 = vmatpush1.msra.mxu0 0.0
    %1076 = vmatprep.subr.mxu0 0.0
    %1077 = vmatpush1.msra.mxu0 0.0
    %1078 = vmatprep.subr.mxu0 0.0
    %1079 = vmatpush1.msra.mxu0 0.0
    %1080 = vmatprep.mubr.f32.mxu0 0.0
    %v1081 = vand.u32 %v842, 4294901760
    %1082 = vmatmul.mubr.f32.gmra.mrb[0].mxu0 %v1081
    %v1083 = vpop.f32.mrb[0].mxu0
    %v1084 = vadd.f32 %v932, %v1083
    %v1085 = vpop.f32.mrb[0].mxu0
    %v1086 = vadd.f32 %v934, %v1085
    %1087 = vdwg.mxu0
    %v1088 = vand.u32 %v77, 4294901760
    %v1089 = vsub.f32 %v77, %v1088
    %1090 = vmatprep.subr.mxu0 %v1089
    %v1091 = vand.u32 %v76, 4294901760
    %v1092 = vsub.f32 %v76, %v1091
    %1093 = vmatpush1.msra.mxu0 %v1092
    %v1094 = vand.u32 %v79, 4294901760
    %v1095 = vsub.f32 %v79, %v1094
    %1096 = vmatprep.subr.mxu0 %v1095
    %v1097 = vand.u32 %v78, 4294901760
    %v1098 = vsub.f32 %v78, %v1097
    %1099 = vmatpush1.msra.mxu0 %v1098
    %v1100 = vand.u32 %v81, 4294901760
    %v1101 = vsub.f32 %v81, %v1100
    %1102 = vmatprep.subr.mxu0 %v1101
    %v1103 = vand.u32 %v80, 4294901760
    %v1104 = vsub.f32 %v80, %v1103
    %1105 = vmatpush1.msra.mxu0 %v1104
    %v1106 = vand.u32 %v83, 4294901760
    %v1107 = vsub.f32 %v83, %v1106
    %1108 = vmatprep.subr.mxu0 %v1107
    %v1109 = vand.u32 %v82, 4294901760
    %v1110 = vsub.f32 %v82, %v1109
    %1111 = vmatpush1.msra.mxu0 %v1110
    %v1112 = vand.u32 %v85, 4294901760
    %v1113 = vsub.f32 %v85, %v1112
    %1114 = vmatprep.subr.mxu0 %v1113
    %v1115 = vand.u32 %v84, 4294901760
    %v1116 = vsub.f32 %v84, %v1115
    %1117 = vmatpush1.msra.mxu0 %v1116
    %v1118 = vand.u32 %v87, 4294901760
    %v1119 = vsub.f32 %v87, %v1118
    %1120 = vmatprep.subr.mxu0 %v1119
    %v1121 = vand.u32 %v86, 4294901760
    %v1122 = vsub.f32 %v86, %v1121
    %1123 = vmatpush1.msra.mxu0 %v1122
    %v1124 = vand.u32 %v89, 4294901760
    %v1125 = vsub.f32 %v89, %v1124
    %1126 = vmatprep.subr.mxu0 %v1125
    %v1127 = vand.u32 %v88, 4294901760
    %v1128 = vsub.f32 %v88, %v1127
    %1129 = vmatpush1.msra.mxu0 %v1128
    %v1130 = vand.u32 %v91, 4294901760
    %v1131 = vsub.f32 %v91, %v1130
    %1132 = vmatprep.subr.mxu0 %v1131
    %v1133 = vand.u32 %v90, 4294901760
    %v1134 = vsub.f32 %v90, %v1133
    %1135 = vmatpush1.msra.mxu0 %v1134
    %1136 = vmatprep.subr.mxu0 0.0
    %1137 = vmatpush1.msra.mxu0 0.0
    %1138 = vmatprep.subr.mxu0 0.0
    %1139 = vmatpush1.msra.mxu0 0.0
    %1140 = vmatprep.subr.mxu0 0.0
    %1141 = vmatpush1.msra.mxu0 0.0
    %1142 = vmatprep.subr.mxu0 0.0
    %1143 = vmatpush1.msra.mxu0 0.0
    %1144 = vmatprep.subr.mxu0 0.0
    %1145 = vmatpush1.msra.mxu0 0.0
    %1146 = vmatprep.subr.mxu0 0.0
    %1147 = vmatpush1.msra.mxu0 0.0
    %1148 = vmatprep.subr.mxu0 0.0
    %1149 = vmatpush1.msra.mxu0 0.0
    %1150 = vmatprep.subr.mxu0 0.0
    %1151 = vmatpush1.msra.mxu0 0.0
    %1152 = vmatprep.subr.mxu0 0.0
    %1153 = vmatpush1.msra.mxu0 0.0
    %1154 = vmatprep.subr.mxu0 0.0
    %1155 = vmatpush1.msra.mxu0 0.0
    %1156 = vmatprep.subr.mxu0 0.0
    %1157 = vmatpush1.msra.mxu0 0.0
    %1158 = vmatprep.subr.mxu0 0.0
    %1159 = vmatpush1.msra.mxu0 0.0
    %1160 = vmatprep.subr.mxu0 0.0
    %1161 = vmatpush1.msra.mxu0 0.0
    %1162 = vmatprep.subr.mxu0 0.0
    %1163 = vmatpush1.msra.mxu0 0.0
    %1164 = vmatprep.subr.mxu0 0.0
    %1165 = vmatpush1.msra.mxu0 0.0
    %1166 = vmatprep.subr.mxu0 0.0
    %1167 = vmatpush1.msra.mxu0 0.0
    %1168 = vmatprep.subr.mxu0 0.0
    %1169 = vmatpush1.msra.mxu0 0.0
    %1170 = vmatprep.subr.mxu0 0.0
    %1171 = vmatpush1.msra.mxu0 0.0
    %1172 = vmatprep.subr.mxu0 0.0
    %1173 = vmatpush1.msra.mxu0 0.0
    %1174 = vmatprep.subr.mxu0 0.0
    %1175 = vmatpush1.msra.mxu0 0.0
    %1176 = vmatprep.subr.mxu0 0.0
    %1177 = vmatpush1.msra.mxu0 0.0
    %1178 = vmatprep.subr.mxu0 0.0
    %1179 = vmatpush1.msra.mxu0 0.0
    %1180 = vmatprep.subr.mxu0 0.0
    %1181 = vmatpush1.msra.mxu0 0.0
    %1182 = vmatprep.subr.mxu0 0.0
    %1183 = vmatpush1.msra.mxu0 0.0
    %1184 = vmatprep.mubr.f32.mxu0 0.0
    %v1185 = vand.u32 %v842, 4294901760
    %v1186 = vsub.f32 %v842, %v1185
    %1187 = vmatmul.mubr.f32.gmra.mrb[0].mxu0 %v1186
    %v1188 = vpop.f32.mrb[0].mxu0
    %v1189 = vadd.f32 %v1084, %v1188
    %v1190 = vpop.f32.mrb[0].mxu0
    %v1191 = vadd.f32 %v1086, %v1190
    %1192 = vdwg.mxu0
    %v1193 = vand.u32 %v77, 4294901760
    %1194 = vmatprep.subr.mxu0 %v1193
    %v1195 = vand.u32 %v76, 4294901760
    %1196 = vmatpush1.msra.mxu0 %v1195
    %v1197 = vand.u32 %v79, 4294901760
    %1198 = vmatprep.subr.mxu0 %v1197
    %v1199 = vand.u32 %v78, 4294901760
    %1200 = vmatpush1.msra.mxu0 %v1199
    %v1201 = vand.u32 %v81, 4294901760
    %1202 = vmatprep.subr.mxu0 %v1201
    %v1203 = vand.u32 %v80, 4294901760
    %1204 = vmatpush1.msra.mxu0 %v1203
    %v1205 = vand.u32 %v83, 4294901760
    %1206 = vmatprep.subr.mxu0 %v1205
    %v1207 = vand.u32 %v82, 4294901760
    %1208 = vmatpush1.msra.mxu0 %v1207
    %v1209 = vand.u32 %v85, 4294901760
    %1210 = vmatprep.subr.mxu0 %v1209
    %v1211 = vand.u32 %v84, 4294901760
    %1212 = vmatpush1.msra.mxu0 %v1211
    %v1213 = vand.u32 %v87, 4294901760
    %1214 = vmatprep.subr.mxu0 %v1213
    %v1215 = vand.u32 %v86, 4294901760
    %1216 = vmatpush1.msra.mxu0 %v1215
    %v1217 = vand.u32 %v89, 4294901760
    %1218 = vmatprep.subr.mxu0 %v1217
    %v1219 = vand.u32 %v88, 4294901760
    %1220 = vmatpush1.msra.mxu0 %v1219
    %v1221 = vand.u32 %v91, 4294901760
    %1222 = vmatprep.subr.mxu0 %v1221
    %v1223 = vand.u32 %v90, 4294901760
    %1224 = vmatpush1.msra.mxu0 %v1223
    %1225 = vmatprep.subr.mxu0 0.0
    %1226 = vmatpush1.msra.mxu0 0.0
    %1227 = vmatprep.subr.mxu0 0.0
    %1228 = vmatpush1.msra.mxu0 0.0
    %1229 = vmatprep.subr.mxu0 0.0
    %1230 = vmatpush1.msra.mxu0 0.0
    %1231 = vmatprep.subr.mxu0 0.0
    %1232 = vmatpush1.msra.mxu0 0.0
    %1233 = vmatprep.subr.mxu0 0.0
    %1234 = vmatpush1.msra.mxu0 0.0
    %1235 = vmatprep.subr.mxu0 0.0
    %1236 = vmatpush1.msra.mxu0 0.0
    %1237 = vmatprep.subr.mxu0 0.0
    %1238 = vmatpush1.msra.mxu0 0.0
    %1239 = vmatprep.subr.mxu0 0.0
    %1240 = vmatpush1.msra.mxu0 0.0
    %1241 = vmatprep.subr.mxu0 0.0
    %1242 = vmatpush1.msra.mxu0 0.0
    %1243 = vmatprep.subr.mxu0 0.0
    %1244 = vmatpush1.msra.mxu0 0.0
    %1245 = vmatprep.subr.mxu0 0.0
    %1246 = vmatpush1.msra.mxu0 0.0
    %1247 = vmatprep.subr.mxu0 0.0
    %1248 = vmatpush1.msra.mxu0 0.0
    %1249 = vmatprep.subr.mxu0 0.0
    %1250 = vmatpush1.msra.mxu0 0.0
    %1251 = vmatprep.subr.mxu0 0.0
    %1252 = vmatpush1.msra.mxu0 0.0
    %1253 = vmatprep.subr.mxu0 0.0
    %1254 = vmatpush1.msra.mxu0 0.0
    %1255 = vmatprep.subr.mxu0 0.0
    %1256 = vmatpush1.msra.mxu0 0.0
    %1257 = vmatprep.subr.mxu0 0.0
    %1258 = vmatpush1.msra.mxu0 0.0
    %1259 = vmatprep.subr.mxu0 0.0
    %1260 = vmatpush1.msra.mxu0 0.0
    %1261 = vmatprep.subr.mxu0 0.0
    %1262 = vmatpush1.msra.mxu0 0.0
    %1263 = vmatprep.subr.mxu0 0.0
    %1264 = vmatpush1.msra.mxu0 0.0
    %1265 = vmatprep.subr.mxu0 0.0
    %1266 = vmatpush1.msra.mxu0 0.0
    %1267 = vmatprep.subr.mxu0 0.0
    %1268 = vmatpush1.msra.mxu0 0.0
    %1269 = vmatprep.subr.mxu0 0.0
    %1270 = vmatpush1.msra.mxu0 0.0
    %1271 = vmatprep.subr.mxu0 0.0
    %1272 = vmatpush1.msra.mxu0 0.0
    %1273 = vmatprep.mubr.f32.mxu0 0.0
    %v1274 = vand.u32 %v842, 4294901760
    %v1275 = vsub.f32 %v842, %v1274
    %v1276 = vand.u32 %v1275, 4294901760
    %1277 = vmatmul.mubr.f32.gmra.mrb[0].mxu0 %v1276
    %v1278 = vpop.f32.mrb[0].mxu0
    %v1279 = vadd.f32 %v1189, %v1278
    %v1280 = vpop.f32.mrb[0].mxu0
    %v1281 = vadd.f32 %v1191, %v1280
    %1282 = vdwg.mxu0
    %v1283 = vand.u32 %v77, 4294901760
    %v1284 = vsub.f32 %v77, %v1283
    %v1285 = vand.u32 %v1284, 4294901760
    %1286 = vmatprep.subr.mxu0 %v1285
    %v1287 = vand.u32 %v76, 4294901760
    %v1288 = vsub.f32 %v76, %v1287
    %v1289 = vand.u32 %v1288, 4294901760
    %1290 = vmatpush1.msra.mxu0 %v1289
    %v1291 = vand.u32 %v79, 4294901760
    %v1292 = vsub.f32 %v79, %v1291
    %v1293 = vand.u32 %v1292, 4294901760
    %1294 = vmatprep.subr.mxu0 %v1293
    %v1295 = vand.u32 %v78, 4294901760
    %v1296 = vsub.f32 %v78, %v1295
    %v1297 = vand.u32 %v1296, 4294901760
    %1298 = vmatpush1.msra.mxu0 %v1297
    %v1299 = vand.u32 %v81, 4294901760
    %v1300 = vsub.f32 %v81, %v1299
    %v1301 = vand.u32 %v1300, 4294901760
    %1302 = vmatprep.subr.mxu0 %v1301
    %v1303 = vand.u32 %v80, 4294901760
    %v1304 = vsub.f32 %v80, %v1303
    %v1305 = vand.u32 %v1304, 4294901760
    %1306 = vmatpush1.msra.mxu0 %v1305
    %v1307 = vand.u32 %v83, 4294901760
    %v1308 = vsub.f32 %v83, %v1307
    %v1309 = vand.u32 %v1308, 4294901760
    %1310 = vmatprep.subr.mxu0 %v1309
    %v1311 = vand.u32 %v82, 4294901760
    %v1312 = vsub.f32 %v82, %v1311
    %v1313 = vand.u32 %v1312, 4294901760
    %1314 = vmatpush1.msra.mxu0 %v1313
    %v1315 = vand.u32 %v85, 4294901760
    %v1316 = vsub.f32 %v85, %v1315
    %v1317 = vand.u32 %v1316, 4294901760
    %1318 = vmatprep.subr.mxu0 %v1317
    %v1319 = vand.u32 %v84, 4294901760
    %v1320 = vsub.f32 %v84, %v1319
    %v1321 = vand.u32 %v1320, 4294901760
    %1322 = vmatpush1.msra.mxu0 %v1321
    %v1323 = vand.u32 %v87, 4294901760
    %v1324 = vsub.f32 %v87, %v1323
    %v1325 = vand.u32 %v1324, 4294901760
    %1326 = vmatprep.subr.mxu0 %v1325
    %v1327 = vand.u32 %v86, 4294901760
    %v1328 = vsub.f32 %v86, %v1327
    %v1329 = vand.u32 %v1328, 4294901760
    %1330 = vmatpush1.msra.mxu0 %v1329
    %v1331 = vand.u32 %v89, 4294901760
    %v1332 = vsub.f32 %v89, %v1331
    %v1333 = vand.u32 %v1332, 4294901760
    %1334 = vmatprep.subr.mxu0 %v1333
    %v1335 = vand.u32 %v88, 4294901760
    %v1336 = vsub.f32 %v88, %v1335
    %v1337 = vand.u32 %v1336, 4294901760
    %1338 = vmatpush1.msra.mxu0 %v1337
    %v1339 = vand.u32 %v91, 4294901760
    %v1340 = vsub.f32 %v91, %v1339
    %v1341 = vand.u32 %v1340, 4294901760
    %1342 = vmatprep.subr.mxu0 %v1341
    %v1343 = vand.u32 %v90, 4294901760
    %v1344 = vsub.f32 %v90, %v1343
    %v1345 = vand.u32 %v1344, 4294901760
    %1346 = vmatpush1.msra.mxu0 %v1345
    %1347 = vmatprep.subr.mxu0 0.0
    %1348 = vmatpush1.msra.mxu0 0.0
    %1349 = vmatprep.subr.mxu0 0.0
    %1350 = vmatpush1.msra.mxu0 0.0
    %1351 = vmatprep.subr.mxu0 0.0
    %1352 = vmatpush1.msra.mxu0 0.0
    %1353 = vmatprep.subr.mxu0 0.0
    %1354 = vmatpush1.msra.mxu0 0.0
    %1355 = vmatprep.subr.mxu0 0.0
    %1356 = vmatpush1.msra.mxu0 0.0
    %1357 = vmatprep.subr.mxu0 0.0
    %1358 = vmatpush1.msra.mxu0 0.0
    %1359 = vmatprep.subr.mxu0 0.0
    %1360 = vmatpush1.msra.mxu0 0.0
    %1361 = vmatprep.subr.mxu0 0.0
    %1362 = vmatpush1.msra.mxu0 0.0
    %1363 = vmatprep.subr.mxu0 0.0
    %1364 = vmatpush1.msra.mxu0 0.0
    %1365 = vmatprep.subr.mxu0 0.0
    %1366 = vmatpush1.msra.mxu0 0.0
    %1367 = vmatprep.subr.mxu0 0.0
    %1368 = vmatpush1.msra.mxu0 0.0
    %1369 = vmatprep.subr.mxu0 0.0
    %1370 = vmatpush1.msra.mxu0 0.0
    %1371 = vmatprep.subr.mxu0 0.0
    %1372 = vmatpush1.msra.mxu0 0.0
    %1373 = vmatprep.subr.mxu0 0.0
    %1374 = vmatpush1.msra.mxu0 0.0
    %1375 = vmatprep.subr.mxu0 0.0
    %1376 = vmatpush1.msra.mxu0 0.0
    %1377 = vmatprep.subr.mxu0 0.0
    %1378 = vmatpush1.msra.mxu0 0.0
    %1379 = vmatprep.subr.mxu0 0.0
    %1380 = vmatpush1.msra.mxu0 0.0
    %1381 = vmatprep.subr.mxu0 0.0
    %1382 = vmatpush1.msra.mxu0 0.0
    %1383 = vmatprep.subr.mxu0 0.0
    %1384 = vmatpush1.msra.mxu0 0.0
    %1385 = vmatprep.subr.mxu0 0.0
    %1386 = vmatpush1.msra.mxu0 0.0
    %1387 = vmatprep.subr.mxu0 0.0
    %1388 = vmatpush1.msra.mxu0 0.0
    %1389 = vmatprep.subr.mxu0 0.0
    %1390 = vmatpush1.msra.mxu0 0.0
    %1391 = vmatprep.subr.mxu0 0.0
    %1392 = vmatpush1.msra.mxu0 0.0
    %1393 = vmatprep.subr.mxu0 0.0
    %1394 = vmatpush1.msra.mxu0 0.0
    %1395 = vmatprep.mubr.f32.mxu0 0.0
    %v1396 = vand.u32 %v842, 4294901760
    %1397 = vmatmul.mubr.f32.gmra.mrb[0].mxu0 %v1396
    %v1398 = vpop.f32.mrb[0].mxu0
    %v1399 = vadd.f32 %v1279, %v1398
    %v1400 = vpop.f32.mrb[0].mxu0
    %v1401 = vadd.f32 %v1281, %v1400
    %1402 = vdwg.mxu0
    %v1403 = vand.u32 %v77, 4294901760
    %1404 = vmatprep.subr.mxu0 %v1403
    %v1405 = vand.u32 %v76, 4294901760
    %1406 = vmatpush1.msra.mxu0 %v1405
    %v1407 = vand.u32 %v79, 4294901760
    %1408 = vmatprep.subr.mxu0 %v1407
    %v1409 = vand.u32 %v78, 4294901760
    %1410 = vmatpush1.msra.mxu0 %v1409
    %v1411 = vand.u32 %v81, 4294901760
    %1412 = vmatprep.subr.mxu0 %v1411
    %v1413 = vand.u32 %v80, 4294901760
    %1414 = vmatpush1.msra.mxu0 %v1413
    %v1415 = vand.u32 %v83, 4294901760
    %1416 = vmatprep.subr.mxu0 %v1415
    %v1417 = vand.u32 %v82, 4294901760
    %1418 = vmatpush1.msra.mxu0 %v1417
    %v1419 = vand.u32 %v85, 4294901760
    %1420 = vmatprep.subr.mxu0 %v1419
    %v1421 = vand.u32 %v84, 4294901760
    %1422 = vmatpush1.msra.mxu0 %v1421
    %v1423 = vand.u32 %v87, 4294901760
    %1424 = vmatprep.subr.mxu0 %v1423
    %v1425 = vand.u32 %v86, 4294901760
    %1426 = vmatpush1.msra.mxu0 %v1425
    %v1427 = vand.u32 %v89, 4294901760
    %1428 = vmatprep.subr.mxu0 %v1427
    %v1429 = vand.u32 %v88, 4294901760
    %1430 = vmatpush1.msra.mxu0 %v1429
    %v1431 = vand.u32 %v91, 4294901760
    %1432 = vmatprep.subr.mxu0 %v1431
    %v1433 = vand.u32 %v90, 4294901760
    %1434 = vmatpush1.msra.mxu0 %v1433
    %1435 = vmatprep.subr.mxu0 0.0
    %1436 = vmatpush1.msra.mxu0 0.0
    %1437 = vmatprep.subr.mxu0 0.0
    %1438 = vmatpush1.msra.mxu0 0.0
    %1439 = vmatprep.subr.mxu0 0.0
    %1440 = vmatpush1.msra.mxu0 0.0
    %1441 = vmatprep.subr.mxu0 0.0
    %1442 = vmatpush1.msra.mxu0 0.0
    %1443 = vmatprep.subr.mxu0 0.0
    %1444 = vmatpush1.msra.mxu0 0.0
    %1445 = vmatprep.subr.mxu0 0.0
    %1446 = vmatpush1.msra.mxu0 0.0
    %1447 = vmatprep.subr.mxu0 0.0
    %1448 = vmatpush1.msra.mxu0 0.0
    %1449 = vmatprep.subr.mxu0 0.0
    %1450 = vmatpush1.msra.mxu0 0.0
    %1451 = vmatprep.subr.mxu0 0.0
    %1452 = vmatpush1.msra.mxu0 0.0
    %1453 = vmatprep.subr.mxu0 0.0
    %1454 = vmatpush1.msra.mxu0 0.0
    %1455 = vmatprep.subr.mxu0 0.0
    %1456 = vmatpush1.msra.mxu0 0.0
    %1457 = vmatprep.subr.mxu0 0.0
    %1458 = vmatpush1.msra.mxu0 0.0
    %1459 = vmatprep.subr.mxu0 0.0
    %1460 = vmatpush1.msra.mxu0 0.0
    %1461 = vmatprep.subr.mxu0 0.0
    %1462 = vmatpush1.msra.mxu0 0.0
    %1463 = vmatprep.subr.mxu0 0.0
    %1464 = vmatpush1.msra.mxu0 0.0
    %1465 = vmatprep.subr.mxu0 0.0
    %1466 = vmatpush1.msra.mxu0 0.0
    %1467 = vmatprep.subr.mxu0 0.0
    %1468 = vmatpush1.msra.mxu0 0.0
    %1469 = vmatprep.subr.mxu0 0.0
    %1470 = vmatpush1.msra.mxu0 0.0
    %1471 = vmatprep.subr.mxu0 0.0
    %1472 = vmatpush1.msra.mxu0 0.0
    %1473 = vmatprep.subr.mxu0 0.0
    %1474 = vmatpush1.msra.mxu0 0.0
    %1475 = vmatprep.subr.mxu0 0.0
    %1476 = vmatpush1.msra.mxu0 0.0
    %1477 = vmatprep.subr.mxu0 0.0
    %1478 = vmatpush1.msra.mxu0 0.0
    %1479 = vmatprep.subr.mxu0 0.0
    %1480 = vmatpush1.msra.mxu0 0.0
    %1481 = vmatprep.subr.mxu0 0.0
    %1482 = vmatpush1.msra.mxu0 0.0
    %1483 = vmatprep.mubr.f32.mxu0 0.0
    %v1484 = vand.u32 %v842, 4294901760
    %1485 = vmatmul.mubr.f32.gmra.mrb[0].mxu0 %v1484
    %v1486 = vpop.f32.mrb[0].mxu0
    %v1487 = vadd.f32 %v1399, %v1486
    %v1488 = vpop.f32.mrb[0].mxu0
    %v1489 = vadd.f32 %v1401, %v1488
    %1490 = vdwg.mxu0
    %s1491 = scalar_lea.vmem [#allocation3], 2
    %v1492 = vld [vmem:[%s1491] sm:$0x3]
    %s1493 = scalar_lea.vmem [#allocation6], 12
    %v1494 = vld [vmem:[%s1493] sm:$0x3]
    %v1495 = vadd.f32 %v1492, %v1487
    %v1496 = vxor.u32 %v1495, 2147483648
    %v1497 = vmul.f32 %v1496, 1.442695
    %v1498 = vpow.pop %v1497
    %v1499 = vadd.f32 %v1498, 1.0
    %v1500 = vrcp.pop %v1499
    %v1501 = vmul.f32 1.0, %v1500
    %1503 = vrot.lane.b32.xlu0 %v1487, 64
    %v1504 = vpop.permute.xlu0 %1503
    %v1506 = vmul.f32 %v1501, %v1504
    %1508 = vrot.lane.b32.xlu0 %v1506, 64
    %v1509 = vpop.permute.xlu0 %1508
    %v1511 = vadd.f32 %v1492, %v1509
    %v1512 = vtanh.pop %v1511
    %v1513 = vsub.f32 1.0, %v1501
    %1515 = vrot.lane.b32.xlu0 %v1512, 96
    %v1516 = vpop.permute.xlu0 %1515
    %v1518 = vmul.f32 %v1513, %v1516
    %1519 = vrot.lane.b32.xlu0 %v840, 32
    %v1520 = vpop.permute.xlu0 %1519
    %v1522 = vmul.f32 %v1501, %v1520
    %v1523 = vadd.f32 %v1518, %v1522
    %1524 = vrot.lane.b32.xlu0 %v1487, 32
    %v1525 = vpop.permute.xlu0 %1524
    %v1527 = vadd.f32 %v1494, %v1525
    %v1528 = vxor.u32 %v1527, 2147483648
    %v1529 = vmul.f32 %v1528, 1.442695
    %v1530 = vpow.pop %v1529
    %v1531 = vadd.f32 %v1530, 1.0
    %v1532 = vrcp.pop %v1531
    %v1533 = vmul.f32 1.0, %v1532
    %1535 = vrot.lane.b32.xlu0 %v1489, 32
    %v1536 = vpop.permute.xlu0 %1535
    %v1538 = vadd.f32 %v1494, %v1536
    %v1539 = vxor.u32 %v1538, 2147483648
    %v1540 = vmul.f32 %v1539, 1.442695
    %v1541 = vpow.pop %v1540
    %v1542 = vadd.f32 %v1541, 1.0
    %v1543 = vrcp.pop %v1542
    %v1544 = vmul.f32 1.0, %v1543
    %1545 = vrot.lane.b32.xlu0 %v1489, 96
    %v1546 = vpop.permute.xlu0 %1545
    %v1548 = vmul.f32 %v1533, %v1546
    %1550 = vrot.lane.b32.xlu0 %v1548, 64
    %v1551 = vpop.permute.xlu0 %1550
    %v1553 = vadd.f32 %v1494, %v1551
    %v1554 = vtanh.pop %v1553
    %v1555 = vsub.f32 1.0, %v1544
    %1557 = vrot.lane.b32.xlu0 %v1554, 96
    %v1558 = vpop.permute.xlu0 %1557
    %v1560 = vmul.f32 %v1555, %v1558
    %v1561 = vmul.f32 %v1544, %v840
    %v1562 = vadd.f32 %v1560, %v1561
    %1564 = vrot.lane.b32.xlu0 %v1523, 96
    %v1565 = vpop.permute.xlu0 %1564
    %s1567 = scalar_lea.vmem [#allocation9], 2
    %1568 = vst.msk [vmem:[%s1567] sm:$0x3] %vm831, %v1565
    %1570 = vrot.lane.b32.xlu0 %v1562, 96
    %v1571 = vpop.permute.xlu0 %1570
    %s1573 = scalar_lea.vmem [#allocation10], 12
    %1574 = vst.msk [vmem:[%s1573] sm:$0x3] %vm831, %v1571
    %v1575 = vsel %vm839, %v1565, %v1562
    %v1577 = vsel %vm105, %v1575, 0
    %v1579 = vand.u32 %v77, 4294901760
    %1580 = vmatprep.subr.mxu0 %v1579
    %v1581 = vand.u32 %v76, 4294901760
    %1582 = vmatpush1.msra.mxu0 %v1581
    %v1583 = vand.u32 %v79, 4294901760
    %1584 = vmatprep.subr.mxu0 %v1583
    %v1585 = vand.u32 %v78, 4294901760
    %1586 = vmatpush1.msra.mxu0 %v1585
    %v1587 = vand.u32 %v81, 4294901760
    %1588 = vmatprep.subr.mxu0 %v1587
    %v1589 = vand.u32 %v80, 4294901760
    %1590 = vmatpush1.msra.mxu0 %v1589
    %v1591 = vand.u32 %v83, 4294901760
    %1592 = vmatprep.subr.mxu0 %v1591
    %v1593 = vand.u32 %v82, 4294901760
    %1594 = vmatpush1.msra.mxu0 %v1593
    %v1595 = vand.u32 %v85, 4294901760
    %1596 = vmatprep.subr.mxu0 %v1595
    %v1597 = vand.u32 %v84, 4294901760
    %1598 = vmatpush1.msra.mxu0 %v1597
    %v1599 = vand.u32 %v87, 4294901760
    %1600 = vmatprep.subr.mxu0 %v1599
    %v1601 = vand.u32 %v86, 4294901760
    %1602 = vmatpush1.msra.mxu0 %v1601
    %v1603 = vand.u32 %v89, 4294901760
    %1604 = vmatprep.subr.mxu0 %v1603
    %v1605 = vand.u32 %v88, 4294901760
    %1606 = vmatpush1.msra.mxu0 %v1605
    %v1607 = vand.u32 %v91, 4294901760
    %1608 = vmatprep.subr.mxu0 %v1607
    %v1609 = vand.u32 %v90, 4294901760
    %1610 = vmatpush1.msra.mxu0 %v1609
    %1611 = vmatprep.subr.mxu0 0.0
    %1612 = vmatpush1.msra.mxu0 0.0
    %1613 = vmatprep.subr.mxu0 0.0
    %1614 = vmatpush1.msra.mxu0 0.0
    %1615 = vmatprep.subr.mxu0 0.0
    %1616 = vmatpush1.msra.mxu0 0.0
    %1617 = vmatprep.subr.mxu0 0.0
    %1618 = vmatpush1.msra.mxu0 0.0
    %1619 = vmatprep.subr.mxu0 0.0
    %1620 = vmatpush1.msra.mxu0 0.0
    %1621 = vmatprep.subr.mxu0 0.0
    %1622 = vmatpush1.msra.mxu0 0.0
    %1623 = vmatprep.subr.mxu0 0.0
    %1624 = vmatpush1.msra.mxu0 0.0
    %1625 = vmatprep.subr.mxu0 0.0
    %1626 = vmatpush1.msra.mxu0 0.0
    %1627 = vmatprep.subr.mxu0 0.0
    %1628 = vmatpush1.msra.mxu0 0.0
    %1629 = vmatprep.subr.mxu0 0.0
    %1630 = vmatpush1.msra.mxu0 0.0
    %1631 = vmatprep.subr.mxu0 0.0
    %1632 = vmatpush1.msra.mxu0 0.0
    %1633 = vmatprep.subr.mxu0 0.0
    %1634 = vmatpush1.msra.mxu0 0.0
    %1635 = vmatprep.subr.mxu0 0.0
    %1636 = vmatpush1.msra.mxu0 0.0
    %1637 = vmatprep.subr.mxu0 0.0
    %1638 = vmatpush1.msra.mxu0 0.0
    %1639 = vmatprep.subr.mxu0 0.0
    %1640 = vmatpush1.msra.mxu0 0.0
    %1641 = vmatprep.subr.mxu0 0.0
    %1642 = vmatpush1.msra.mxu0 0.0
    %1643 = vmatprep.subr.mxu0 0.0
    %1644 = vmatpush1.msra.mxu0 0.0
    %1645 = vmatprep.subr.mxu0 0.0
    %1646 = vmatpush1.msra.mxu0 0.0
    %1647 = vmatprep.subr.mxu0 0.0
    %1648 = vmatpush1.msra.mxu0 0.0
    %1649 = vmatprep.subr.mxu0 0.0
    %1650 = vmatpush1.msra.mxu0 0.0
    %1651 = vmatprep.subr.mxu0 0.0
    %1652 = vmatpush1.msra.mxu0 0.0
    %1653 = vmatprep.subr.mxu0 0.0
    %1654 = vmatpush1.msra.mxu0 0.0
    %1655 = vmatprep.subr.mxu0 0.0
    %1656 = vmatpush1.msra.mxu0 0.0
    %1657 = vmatprep.subr.mxu0 0.0
    %1658 = vmatpush1.msra.mxu0 0.0
    %1659 = vmatprep.mubr.f32.mxu0 0.0
    %v1660 = vand.u32 %v1577, 4294901760
    %v1661 = vsub.f32 %v1577, %v1660
    %v1662 = vand.u32 %v1661, 4294901760
    %v1663 = vsub.f32 %v1661, %v1662
    %v1664 = vand.u32 %v1663, 4294901760
    %1665 = vmatmul.mubr.f32.gmra.mrb[0].mxu0 %v1664
    %v1666 = vpop.f32.mrb[0].mxu0
    %v1667 = vadd.f32 %v98, %v1666
    %v1668 = vpop.f32.mrb[0].mxu0
    %v1669 = vadd.f32 %v102, %v1668
    %1670 = vdwg.mxu0
    %v1671 = vand.u32 %v77, 4294901760
    %v1672 = vsub.f32 %v77, %v1671
    %v1673 = vand.u32 %v1672, 4294901760
    %v1674 = vsub.f32 %v1672, %v1673
    %v1675 = vand.u32 %v1674, 4294901760
    %1676 = vmatprep.subr.mxu0 %v1675
    %v1677 = vand.u32 %v76, 4294901760
    %v1678 = vsub.f32 %v76, %v1677
    %v1679 = vand.u32 %v1678, 4294901760
    %v1680 = vsub.f32 %v1678, %v1679
    %v1681 = vand.u32 %v1680, 4294901760
    %1682 = vmatpush1.msra.mxu0 %v1681
    %v1683 = vand.u32 %v79, 4294901760
    %v1684 = vsub.f32 %v79, %v1683
    %v1685 = vand.u32 %v1684, 4294901760
    %v1686 = vsub.f32 %v1684, %v1685
    %v1687 = vand.u32 %v1686, 4294901760
    %1688 = vmatprep.subr.mxu0 %v1687
    %v1689 = vand.u32 %v78, 4294901760
    %v1690 = vsub.f32 %v78, %v1689
    %v1691 = vand.u32 %v1690, 4294901760
    %v1692 = vsub.f32 %v1690, %v1691
    %v1693 = vand.u32 %v1692, 4294901760
    %1694 = vmatpush1.msra.mxu0 %v1693
    %v1695 = vand.u32 %v81, 4294901760
    %v1696 = vsub.f32 %v81, %v1695
    %v1697 = vand.u32 %v1696, 4294901760
    %v1698 = vsub.f32 %v1696, %v1697
    %v1699 = vand.u32 %v1698, 4294901760
    %1700 = vmatprep.subr.mxu0 %v1699
    %v1701 = vand.u32 %v80, 4294901760
    %v1702 = vsub.f32 %v80, %v1701
    %v1703 = vand.u32 %v1702, 4294901760
    %v1704 = vsub.f32 %v1702, %v1703
    %v1705 = vand.u32 %v1704, 4294901760
    %1706 = vmatpush1.msra.mxu0 %v1705
    %v1707 = vand.u32 %v83, 4294901760
    %v1708 = vsub.f32 %v83, %v1707
    %v1709 = vand.u32 %v1708, 4294901760
    %v1710 = vsub.f32 %v1708, %v1709
    %v1711 = vand.u32 %v1710, 4294901760
    %1712 = vmatprep.subr.mxu0 %v1711
    %v1713 = vand.u32 %v82, 4294901760
    %v1714 = vsub.f32 %v82, %v1713
    %v1715 = vand.u32 %v1714, 4294901760
    %v1716 = vsub.f32 %v1714, %v1715
    %v1717 = vand.u32 %v1716, 4294901760
    %1718 = vmatpush1.msra.mxu0 %v1717
    %v1719 = vand.u32 %v85, 4294901760
    %v1720 = vsub.f32 %v85, %v1719
    %v1721 = vand.u32 %v1720, 4294901760
    %v1722 = vsub.f32 %v1720, %v1721
    %v1723 = vand.u32 %v1722, 4294901760
    %1724 = vmatprep.subr.mxu0 %v1723
    %v1725 = vand.u32 %v84, 4294901760
    %v1726 = vsub.f32 %v84, %v1725
    %v1727 = vand.u32 %v1726, 4294901760
    %v1728 = vsub.f32 %v1726, %v1727
    %v1729 = vand.u32 %v1728, 4294901760
    %1730 = vmatpush1.msra.mxu0 %v1729
    %v1731 = vand.u32 %v87, 4294901760
    %v1732 = vsub.f32 %v87, %v1731
    %v1733 = vand.u32 %v1732, 4294901760
    %v1734 = vsub.f32 %v1732, %v1733
    %v1735 = vand.u32 %v1734, 4294901760
    %1736 = vmatprep.subr.mxu0 %v1735
    %v1737 = vand.u32 %v86, 4294901760
    %v1738 = vsub.f32 %v86, %v1737
    %v1739 = vand.u32 %v1738, 4294901760
    %v1740 = vsub.f32 %v1738, %v1739
    %v1741 = vand.u32 %v1740, 4294901760
    %1742 = vmatpush1.msra.mxu0 %v1741
    %v1743 = vand.u32 %v89, 4294901760
    %v1744 = vsub.f32 %v89, %v1743
    %v1745 = vand.u32 %v1744, 4294901760
    %v1746 = vsub.f32 %v1744, %v1745
    %v1747 = vand.u32 %v1746, 4294901760
    %1748 = vmatprep.subr.mxu0 %v1747
    %v1749 = vand.u32 %v88, 4294901760
    %v1750 = vsub.f32 %v88, %v1749
    %v1751 = vand.u32 %v1750, 4294901760
    %v1752 = vsub.f32 %v1750, %v1751
    %v1753 = vand.u32 %v1752, 4294901760
    %1754 = vmatpush1.msra.mxu0 %v1753
    %v1755 = vand.u32 %v91, 4294901760
    %v1756 = vsub.f32 %v91, %v1755
    %v1757 = vand.u32 %v1756, 4294901760
    %v1758 = vsub.f32 %v1756, %v1757
    %v1759 = vand.u32 %v1758, 4294901760
    %1760 = vmatprep.subr.mxu0 %v1759
    %v1761 = vand.u32 %v90, 4294901760
    %v1762 = vsub.f32 %v90, %v1761
    %v1763 = vand.u32 %v1762, 4294901760
    %v1764 = vsub.f32 %v1762, %v1763
    %v1765 = vand.u32 %v1764, 4294901760
    %1766 = vmatpush1.msra.mxu0 %v1765
    %1767 = vmatprep.subr.mxu0 0.0
    %1768 = vmatpush1.msra.mxu0 0.0
    %1769 = vmatprep.subr.mxu0 0.0
    %1770 = vmatpush1.msra.mxu0 0.0
    %1771 = vmatprep.subr.mxu0 0.0
    %1772 = vmatpush1.msra.mxu0 0.0
    %1773 = vmatprep.subr.mxu0 0.0
    %1774 = vmatpush1.msra.mxu0 0.0
    %1775 = vmatprep.subr.mxu0 0.0
    %1776 = vmatpush1.msra.mxu0 0.0
    %1777 = vmatprep.subr.mxu0 0.0
    %1778 = vmatpush1.msra.mxu0 0.0
    %1779 = vmatprep.subr.mxu0 0.0
    %1780 = vmatpush1.msra.mxu0 0.0
    %1781 = vmatprep.subr.mxu0 0.0
    %1782 = vmatpush1.msra.mxu0 0.0
    %1783 = vmatprep.subr.mxu0 0.0
    %1784 = vmatpush1.msra.mxu0 0.0
    %1785 = vmatprep.subr.mxu0 0.0
    %1786 = vmatpush1.msra.mxu0 0.0
    %1787 = vmatprep.subr.mxu0 0.0
    %1788 = vmatpush1.msra.mxu0 0.0
    %1789 = vmatprep.subr.mxu0 0.0
    %1790 = vmatpush1.msra.mxu0 0.0
    %1791 = vmatprep.subr.mxu0 0.0
    %1792 = vmatpush1.msra.mxu0 0.0
    %1793 = vmatprep.subr.mxu0 0.0
    %1794 = vmatpush1.msra.mxu0 0.0
    %1795 = vmatprep.subr.mxu0 0.0
    %1796 = vmatpush1.msra.mxu0 0.0
    %1797 = vmatprep.subr.mxu0 0.0
    %1798 = vmatpush1.msra.mxu0 0.0
    %1799 = vmatprep.subr.mxu0 0.0
    %1800 = vmatpush1.msra.mxu0 0.0
    %1801 = vmatprep.subr.mxu0 0.0
    %1802 = vmatpush1.msra.mxu0 0.0
    %1803 = vmatprep.subr.mxu0 0.0
    %1804 = vmatpush1.msra.mxu0 0.0
    %1805 = vmatprep.subr.mxu0 0.0
    %1806 = vmatpush1.msra.mxu0 0.0
    %1807 = vmatprep.subr.mxu0 0.0
    %1808 = vmatpush1.msra.mxu0 0.0
    %1809 = vmatprep.subr.mxu0 0.0
    %1810 = vmatpush1.msra.mxu0 0.0
    %1811 = vmatprep.subr.mxu0 0.0
    %1812 = vmatpush1.msra.mxu0 0.0
    %1813 = vmatprep.subr.mxu0 0.0
    %1814 = vmatpush1.msra.mxu0 0.0
    %1815 = vmatprep.mubr.f32.mxu0 0.0
    %v1816 = vand.u32 %v1577, 4294901760
    %1817 = vmatmul.mubr.f32.gmra.mrb[0].mxu0 %v1816
    %v1818 = vpop.f32.mrb[0].mxu0
    %v1819 = vadd.f32 %v1667, %v1818
    %v1820 = vpop.f32.mrb[0].mxu0
    %v1821 = vadd.f32 %v1669, %v1820
    %1822 = vdwg.mxu0
    %v1823 = vand.u32 %v77, 4294901760
    %v1824 = vsub.f32 %v77, %v1823
    %1825 = vmatprep.subr.mxu0 %v1824
    %v1826 = vand.u32 %v76, 4294901760
    %v1827 = vsub.f32 %v76, %v1826
    %1828 = vmatpush1.msra.mxu0 %v1827
    %v1829 = vand.u32 %v79, 4294901760
    %v1830 = vsub.f32 %v79, %v1829
    %1831 = vmatprep.subr.mxu0 %v1830
    %v1832 = vand.u32 %v78, 4294901760
    %v1833 = vsub.f32 %v78, %v1832
    %1834 = vmatpush1.msra.mxu0 %v1833
    %v1835 = vand.u32 %v81, 4294901760
    %v1836 = vsub.f32 %v81, %v1835
    %1837 = vmatprep.subr.mxu0 %v1836
    %v1838 = vand.u32 %v80, 4294901760
    %v1839 = vsub.f32 %v80, %v1838
    %1840 = vmatpush1.msra.mxu0 %v1839
    %v1841 = vand.u32 %v83, 4294901760
    %v1842 = vsub.f32 %v83, %v1841
    %1843 = vmatprep.subr.mxu0 %v1842
    %v1844 = vand.u32 %v82, 4294901760
    %v1845 = vsub.f32 %v82, %v1844
    %1846 = vmatpush1.msra.mxu0 %v1845
    %v1847 = vand.u32 %v85, 4294901760
    %v1848 = vsub.f32 %v85, %v1847
    %1849 = vmatprep.subr.mxu0 %v1848
    %v1850 = vand.u32 %v84, 4294901760
    %v1851 = vsub.f32 %v84, %v1850
    %1852 = vmatpush1.msra.mxu0 %v1851
    %v1853 = vand.u32 %v87, 4294901760
    %v1854 = vsub.f32 %v87, %v1853
    %1855 = vmatprep.subr.mxu0 %v1854
    %v1856 = vand.u32 %v86, 4294901760
    %v1857 = vsub.f32 %v86, %v1856
    %1858 = vmatpush1.msra.mxu0 %v1857
    %v1859 = vand.u32 %v89, 4294901760
    %v1860 = vsub.f32 %v89, %v1859
    %1861 = vmatprep.subr.mxu0 %v1860
    %v1862 = vand.u32 %v88, 4294901760
    %v1863 = vsub.f32 %v88, %v1862
    %1864 = vmatpush1.msra.mxu0 %v1863
    %v1865 = vand.u32 %v91, 4294901760
    %v1866 = vsub.f32 %v91, %v1865
    %1867 = vmatprep.subr.mxu0 %v1866
    %v1868 = vand.u32 %v90, 4294901760
    %v1869 = vsub.f32 %v90, %v1868
    %1870 = vmatpush1.msra.mxu0 %v1869
    %1871 = vmatprep.subr.mxu0 0.0
    %1872 = vmatpush1.msra.mxu0 0.0
    %1873 = vmatprep.subr.mxu0 0.0
    %1874 = vmatpush1.msra.mxu0 0.0
    %1875 = vmatprep.subr.mxu0 0.0
    %1876 = vmatpush1.msra.mxu0 0.0
    %1877 = vmatprep.subr.mxu0 0.0
    %1878 = vmatpush1.msra.mxu0 0.0
    %1879 = vmatprep.subr.mxu0 0.0
    %1880 = vmatpush1.msra.mxu0 0.0
    %1881 = vmatprep.subr.mxu0 0.0
    %1882 = vmatpush1.msra.mxu0 0.0
    %1883 = vmatprep.subr.mxu0 0.0
    %1884 = vmatpush1.msra.mxu0 0.0
    %1885 = vmatprep.subr.mxu0 0.0
    %1886 = vmatpush1.msra.mxu0 0.0
    %1887 = vmatprep.subr.mxu0 0.0
    %1888 = vmatpush1.msra.mxu0 0.0
    %1889 = vmatprep.subr.mxu0 0.0
    %1890 = vmatpush1.msra.mxu0 0.0
    %1891 = vmatprep.subr.mxu0 0.0
    %1892 = vmatpush1.msra.mxu0 0.0
    %1893 = vmatprep.subr.mxu0 0.0
    %1894 = vmatpush1.msra.mxu0 0.0
    %1895 = vmatprep.subr.mxu0 0.0
    %1896 = vmatpush1.msra.mxu0 0.0
    %1897 = vmatprep.subr.mxu0 0.0
    %1898 = vmatpush1.msra.mxu0 0.0
    %1899 = vmatprep.subr.mxu0 0.0
    %1900 = vmatpush1.msra.mxu0 0.0
    %1901 = vmatprep.subr.mxu0 0.0
    %1902 = vmatpush1.msra.mxu0 0.0
    %1903 = vmatprep.subr.mxu0 0.0
    %1904 = vmatpush1.msra.mxu0 0.0
    %1905 = vmatprep.subr.mxu0 0.0
    %1906 = vmatpush1.msra.mxu0 0.0
    %1907 = vmatprep.subr.mxu0 0.0
    %1908 = vmatpush1.msra.mxu0 0.0
    %1909 = vmatprep.subr.mxu0 0.0
    %1910 = vmatpush1.msra.mxu0 0.0
    %1911 = vmatprep.subr.mxu0 0.0
    %1912 = vmatpush1.msra.mxu0 0.0
    %1913 = vmatprep.subr.mxu0 0.0
    %1914 = vmatpush1.msra.mxu0 0.0
    %1915 = vmatprep.subr.mxu0 0.0
    %1916 = vmatpush1.msra.mxu0 0.0
    %1917 = vmatprep.subr.mxu0 0.0
    %1918 = vmatpush1.msra.mxu0 0.0
    %1919 = vmatprep.mubr.f32.mxu0 0.0
    %v1920 = vand.u32 %v1577, 4294901760
    %v1921 = vsub.f32 %v1577, %v1920
    %1922 = vmatmul.mubr.f32.gmra.mrb[0].mxu0 %v1921
    %v1923 = vpop.f32.mrb[0].mxu0
    %v1924 = vadd.f32 %v1819, %v1923
    %v1925 = vpop.f32.mrb[0].mxu0
    %v1926 = vadd.f32 %v1821, %v1925
    %1927 = vdwg.mxu0
    %v1928 = vand.u32 %v77, 4294901760
    %1929 = vmatprep.subr.mxu0 %v1928
    %v1930 = vand.u32 %v76, 4294901760
    %1931 = vmatpush1.msra.mxu0 %v1930
    %v1932 = vand.u32 %v79, 4294901760
    %1933 = vmatprep.subr.mxu0 %v1932
    %v1934 = vand.u32 %v78, 4294901760
    %1935 = vmatpush1.msra.mxu0 %v1934
    %v1936 = vand.u32 %v81, 4294901760
    %1937 = vmatprep.subr.mxu0 %v1936
    %v1938 = vand.u32 %v80, 4294901760
    %1939 = vmatpush1.msra.mxu0 %v1938
    %v1940 = vand.u32 %v83, 4294901760
    %1941 = vmatprep.subr.mxu0 %v1940
    %v1942 = vand.u32 %v82, 4294901760
    %1943 = vmatpush1.msra.mxu0 %v1942
    %v1944 = vand.u32 %v85, 4294901760
    %1945 = vmatprep.subr.mxu0 %v1944
    %v1946 = vand.u32 %v84, 4294901760
    %1947 = vmatpush1.msra.mxu0 %v1946
    %v1948 = vand.u32 %v87, 4294901760
    %1949 = vmatprep.subr.mxu0 %v1948
    %v1950 = vand.u32 %v86, 4294901760
    %1951 = vmatpush1.msra.mxu0 %v1950
    %v1952 = vand.u32 %v89, 4294901760
    %1953 = vmatprep.subr.mxu0 %v1952
    %v1954 = vand.u32 %v88, 4294901760
    %1955 = vmatpush1.msra.mxu0 %v1954
    %v1956 = vand.u32 %v91, 4294901760
    %1957 = vmatprep.subr.mxu0 %v1956
    %v1958 = vand.u32 %v90, 4294901760
    %1959 = vmatpush1.msra.mxu0 %v1958
    %1960 = vmatprep.subr.mxu0 0.0
    %1961 = vmatpush1.msra.mxu0 0.0
    %1962 = vmatprep.subr.mxu0 0.0
    %1963 = vmatpush1.msra.mxu0 0.0
    %1964 = vmatprep.subr.mxu0 0.0
    %1965 = vmatpush1.msra.mxu0 0.0
    %1966 = vmatprep.subr.mxu0 0.0
    %1967 = vmatpush1.msra.mxu0 0.0
    %1968 = vmatprep.subr.mxu0 0.0
    %1969 = vmatpush1.msra.mxu0 0.0
    %1970 = vmatprep.subr.mxu0 0.0
    %1971 = vmatpush1.msra.mxu0 0.0
    %1972 = vmatprep.subr.mxu0 0.0
    %1973 = vmatpush1.msra.mxu0 0.0
    %1974 = vmatprep.subr.mxu0 0.0
    %1975 = vmatpush1.msra.mxu0 0.0
    %1976 = vmatprep.subr.mxu0 0.0
    %1977 = vmatpush1.msra.mxu0 0.0
    %1978 = vmatprep.subr.mxu0 0.0
    %1979 = vmatpush1.msra.mxu0 0.0
    %1980 = vmatprep.subr.mxu0 0.0
    %1981 = vmatpush1.msra.mxu0 0.0
    %1982 = vmatprep.subr.mxu0 0.0
    %1983 = vmatpush1.msra.mxu0 0.0
    %1984 = vmatprep.subr.mxu0 0.0
    %1985 = vmatpush1.msra.mxu0 0.0
    %1986 = vmatprep.subr.mxu0 0.0
    %1987 = vmatpush1.msra.mxu0 0.0
    %1988 = vmatprep.subr.mxu0 0.0
    %1989 = vmatpush1.msra.mxu0 0.0
    %1990 = vmatprep.subr.mxu0 0.0
    %1991 = vmatpush1.msra.mxu0 0.0
    %1992 = vmatprep.subr.mxu0 0.0
    %1993 = vmatpush1.msra.mxu0 0.0
    %1994 = vmatprep.subr.mxu0 0.0
    %1995 = vmatpush1.msra.mxu0 0.0
    %1996 = vmatprep.subr.mxu0 0.0
    %1997 = vmatpush1.msra.mxu0 0.0
    %1998 = vmatprep.subr.mxu0 0.0
    %1999 = vmatpush1.msra.mxu0 0.0
    %2000 = vmatprep.subr.mxu0 0.0
    %2001 = vmatpush1.msra.mxu0 0.0
    %2002 = vmatprep.subr.mxu0 0.0
    %2003 = vmatpush1.msra.mxu0 0.0
    %2004 = vmatprep.subr.mxu0 0.0
    %2005 = vmatpush1.msra.mxu0 0.0
    %2006 = vmatprep.subr.mxu0 0.0
    %2007 = vmatpush1.msra.mxu0 0.0
    %2008 = vmatprep.mubr.f32.mxu0 0.0
    %v2009 = vand.u32 %v1577, 4294901760
    %v2010 = vsub.f32 %v1577, %v2009
    %v2011 = vand.u32 %v2010, 4294901760
    %2012 = vmatmul.mubr.f32.gmra.mrb[0].mxu0 %v2011
    %v2013 = vpop.f32.mrb[0].mxu0
    %v2014 = vadd.f32 %v1924, %v2013
    %v2015 = vpop.f32.mrb[0].mxu0
    %v2016 = vadd.f32 %v1926, %v2015
    %2017 = vdwg.mxu0
    %v2018 = vand.u32 %v77, 4294901760
    %v2019 = vsub.f32 %v77, %v2018
    %v2020 = vand.u32 %v2019, 4294901760
    %2021 = vmatprep.subr.mxu0 %v2020
    %v2022 = vand.u32 %v76, 4294901760
    %v2023 = vsub.f32 %v76, %v2022
    %v2024 = vand.u32 %v2023, 4294901760
    %2025 = vmatpush1.msra.mxu0 %v2024
    %v2026 = vand.u32 %v79, 4294901760
    %v2027 = vsub.f32 %v79, %v2026
    %v2028 = vand.u32 %v2027, 4294901760
    %2029 = vmatprep.subr.mxu0 %v2028
    %v2030 = vand.u32 %v78, 4294901760
    %v2031 = vsub.f32 %v78, %v2030
    %v2032 = vand.u32 %v2031, 4294901760
    %2033 = vmatpush1.msra.mxu0 %v2032
    %v2034 = vand.u32 %v81, 4294901760
    %v2035 = vsub.f32 %v81, %v2034
    %v2036 = vand.u32 %v2035, 4294901760
    %2037 = vmatprep.subr.mxu0 %v2036
    %v2038 = vand.u32 %v80, 4294901760
    %v2039 = vsub.f32 %v80, %v2038
    %v2040 = vand.u32 %v2039, 4294901760
    %2041 = vmatpush1.msra.mxu0 %v2040
    %v2042 = vand.u32 %v83, 4294901760
    %v2043 = vsub.f32 %v83, %v2042
    %v2044 = vand.u32 %v2043, 4294901760
    %2045 = vmatprep.subr.mxu0 %v2044
    %v2046 = vand.u32 %v82, 4294901760
    %v2047 = vsub.f32 %v82, %v2046
    %v2048 = vand.u32 %v2047, 4294901760
    %2049 = vmatpush1.msra.mxu0 %v2048
    %v2050 = vand.u32 %v85, 4294901760
    %v2051 = vsub.f32 %v85, %v2050
    %v2052 = vand.u32 %v2051, 4294901760
    %2053 = vmatprep.subr.mxu0 %v2052
    %v2054 = vand.u32 %v84, 4294901760
    %v2055 = vsub.f32 %v84, %v2054
    %v2056 = vand.u32 %v2055, 4294901760
    %2057 = vmatpush1.msra.mxu0 %v2056
    %v2058 = vand.u32 %v87, 4294901760
    %v2059 = vsub.f32 %v87, %v2058
    %v2060 = vand.u32 %v2059, 4294901760
    %2061 = vmatprep.subr.mxu0 %v2060
    %v2062 = vand.u32 %v86, 4294901760
    %v2063 = vsub.f32 %v86, %v2062
    %v2064 = vand.u32 %v2063, 4294901760
    %2065 = vmatpush1.msra.mxu0 %v2064
    %v2066 = vand.u32 %v89, 4294901760
    %v2067 = vsub.f32 %v89, %v2066
    %v2068 = vand.u32 %v2067, 4294901760
    %2069 = vmatprep.subr.mxu0 %v2068
    %v2070 = vand.u32 %v88, 4294901760
    %v2071 = vsub.f32 %v88, %v2070
    %v2072 = vand.u32 %v2071, 4294901760
    %2073 = vmatpush1.msra.mxu0 %v2072
    %v2074 = vand.u32 %v91, 4294901760
    %v2075 = vsub.f32 %v91, %v2074
    %v2076 = vand.u32 %v2075, 4294901760
    %2077 = vmatprep.subr.mxu0 %v2076
    %v2078 = vand.u32 %v90, 4294901760
    %v2079 = vsub.f32 %v90, %v2078
    %v2080 = vand.u32 %v2079, 4294901760
    %2081 = vmatpush1.msra.mxu0 %v2080
    %2082 = vmatprep.subr.mxu0 0.0
    %2083 = vmatpush1.msra.mxu0 0.0
    %2084 = vmatprep.subr.mxu0 0.0
    %2085 = vmatpush1.msra.mxu0 0.0
    %2086 = vmatprep.subr.mxu0 0.0
    %2087 = vmatpush1.msra.mxu0 0.0
    %2088 = vmatprep.subr.mxu0 0.0
    %2089 = vmatpush1.msra.mxu0 0.0
    %2090 = vmatprep.subr.mxu0 0.0
    %2091 = vmatpush1.msra.mxu0 0.0
    %2092 = vmatprep.subr.mxu0 0.0
    %2093 = vmatpush1.msra.mxu0 0.0
    %2094 = vmatprep.subr.mxu0 0.0
    %2095 = vmatpush1.msra.mxu0 0.0
    %2096 = vmatprep.subr.mxu0 0.0
    %2097 = vmatpush1.msra.mxu0 0.0
    %2098 = vmatprep.subr.mxu0 0.0
    %2099 = vmatpush1.msra.mxu0 0.0
    %2100 = vmatprep.subr.mxu0 0.0
    %2101 = vmatpush1.msra.mxu0 0.0
    %2102 = vmatprep.subr.mxu0 0.0
    %2103 = vmatpush1.msra.mxu0 0.0
    %2104 = vmatprep.subr.mxu0 0.0
    %2105 = vmatpush1.msra.mxu0 0.0
    %2106 = vmatprep.subr.mxu0 0.0
    %2107 = vmatpush1.msra.mxu0 0.0
    %2108 = vmatprep.subr.mxu0 0.0
    %2109 = vmatpush1.msra.mxu0 0.0
    %2110 = vmatprep.subr.mxu0 0.0
    %2111 = vmatpush1.msra.mxu0 0.0
    %2112 = vmatprep.subr.mxu0 0.0
    %2113 = vmatpush1.msra.mxu0 0.0
    %2114 = vmatprep.subr.mxu0 0.0
    %2115 = vmatpush1.msra.mxu0 0.0
    %2116 = vmatprep.subr.mxu0 0.0
    %2117 = vmatpush1.msra.mxu0 0.0
    %2118 = vmatprep.subr.mxu0 0.0
    %2119 = vmatpush1.msra.mxu0 0.0
    %2120 = vmatprep.subr.mxu0 0.0
    %2121 = vmatpush1.msra.mxu0 0.0
    %2122 = vmatprep.subr.mxu0 0.0
    %2123 = vmatpush1.msra.mxu0 0.0
    %2124 = vmatprep.subr.mxu0 0.0
    %2125 = vmatpush1.msra.mxu0 0.0
    %2126 = vmatprep.subr.mxu0 0.0
    %2127 = vmatpush1.msra.mxu0 0.0
    %2128 = vmatprep.subr.mxu0 0.0
    %2129 = vmatpush1.msra.mxu0 0.0
    %2130 = vmatprep.mubr.f32.mxu0 0.0
    %v2131 = vand.u32 %v1577, 4294901760
    %2132 = vmatmul.mubr.f32.gmra.mrb[0].mxu0 %v2131
    %v2133 = vpop.f32.mrb[0].mxu0
    %v2134 = vadd.f32 %v2014, %v2133
    %v2135 = vpop.f32.mrb[0].mxu0
    %v2136 = vadd.f32 %v2016, %v2135
    %2137 = vdwg.mxu0
    %v2138 = vand.u32 %v77, 4294901760
    %2139 = vmatprep.subr.mxu0 %v2138
    %v2140 = vand.u32 %v76, 4294901760
    %2141 = vmatpush1.msra.mxu0 %v2140
    %v2142 = vand.u32 %v79, 4294901760
    %2143 = vmatprep.subr.mxu0 %v2142
    %v2144 = vand.u32 %v78, 4294901760
    %2145 = vmatpush1.msra.mxu0 %v2144
    %v2146 = vand.u32 %v81, 4294901760
    %2147 = vmatprep.subr.mxu0 %v2146
    %v2148 = vand.u32 %v80, 4294901760
    %2149 = vmatpush1.msra.mxu0 %v2148
    %v2150 = vand.u32 %v83, 4294901760
    %2151 = vmatprep.subr.mxu0 %v2150
    %v2152 = vand.u32 %v82, 4294901760
    %2153 = vmatpush1.msra.mxu0 %v2152
    %v2154 = vand.u32 %v85, 4294901760
    %2155 = vmatprep.subr.mxu0 %v2154
    %v2156 = vand.u32 %v84, 4294901760
    %2157 = vmatpush1.msra.mxu0 %v2156
    %v2158 = vand.u32 %v87, 4294901760
    %2159 = vmatprep.subr.mxu0 %v2158
    %v2160 = vand.u32 %v86, 4294901760
    %2161 = vmatpush1.msra.mxu0 %v2160
    %v2162 = vand.u32 %v89, 4294901760
    %2163 = vmatprep.subr.mxu0 %v2162
    %v2164 = vand.u32 %v88, 4294901760
    %2165 = vmatpush1.msra.mxu0 %v2164
    %v2166 = vand.u32 %v91, 4294901760
    %2167 = vmatprep.subr.mxu0 %v2166
    %v2168 = vand.u32 %v90, 4294901760
    %2169 = vmatpush1.msra.mxu0 %v2168
    %2170 = vmatprep.subr.mxu0 0.0
    %2171 = vmatpush1.msra.mxu0 0.0
    %2172 = vmatprep.subr.mxu0 0.0
    %2173 = vmatpush1.msra.mxu0 0.0
    %2174 = vmatprep.subr.mxu0 0.0
    %2175 = vmatpush1.msra.mxu0 0.0
    %2176 = vmatprep.subr.mxu0 0.0
    %2177 = vmatpush1.msra.mxu0 0.0
    %2178 = vmatprep.subr.mxu0 0.0
    %2179 = vmatpush1.msra.mxu0 0.0
    %2180 = vmatprep.subr.mxu0 0.0
    %2181 = vmatpush1.msra.mxu0 0.0
    %2182 = vmatprep.subr.mxu0 0.0
    %2183 = vmatpush1.msra.mxu0 0.0
    %2184 = vmatprep.subr.mxu0 0.0
    %2185 = vmatpush1.msra.mxu0 0.0
    %2186 = vmatprep.subr.mxu0 0.0
    %2187 = vmatpush1.msra.mxu0 0.0
    %2188 = vmatprep.subr.mxu0 0.0
    %2189 = vmatpush1.msra.mxu0 0.0
    %2190 = vmatprep.subr.mxu0 0.0
    %2191 = vmatpush1.msra.mxu0 0.0
    %2192 = vmatprep.subr.mxu0 0.0
    %2193 = vmatpush1.msra.mxu0 0.0
    %2194 = vmatprep.subr.mxu0 0.0
    %2195 = vmatpush1.msra.mxu0 0.0
    %2196 = vmatprep.subr.mxu0 0.0
    %2197 = vmatpush1.msra.mxu0 0.0
    %2198 = vmatprep.subr.mxu0 0.0
    %2199 = vmatpush1.msra.mxu0 0.0
    %2200 = vmatprep.subr.mxu0 0.0
    %2201 = vmatpush1.msra.mxu0 0.0
    %2202 = vmatprep.subr.mxu0 0.0
    %2203 = vmatpush1.msra.mxu0 0.0
    %2204 = vmatprep.subr.mxu0 0.0
    %2205 = vmatpush1.msra.mxu0 0.0
    %2206 = vmatprep.subr.mxu0 0.0
    %2207 = vmatpush1.msra.mxu0 0.0
    %2208 = vmatprep.subr.mxu0 0.0
    %2209 = vmatpush1.msra.mxu0 0.0
    %2210 = vmatprep.subr.mxu0 0.0
    %2211 = vmatpush1.msra.mxu0 0.0
    %2212 = vmatprep.subr.mxu0 0.0
    %2213 = vmatpush1.msra.mxu0 0.0
    %2214 = vmatprep.subr.mxu0 0.0
    %2215 = vmatpush1.msra.mxu0 0.0
    %2216 = vmatprep.subr.mxu0 0.0
    %2217 = vmatpush1.msra.mxu0 0.0
    %2218 = vmatprep.mubr.f32.mxu0 0.0
    %v2219 = vand.u32 %v1577, 4294901760
    %2220 = vmatmul.mubr.f32.gmra.mrb[0].mxu0 %v2219
    %v2221 = vpop.f32.mrb[0].mxu0
    %v2222 = vadd.f32 %v2134, %v2221
    %v2223 = vpop.f32.mrb[0].mxu0
    %v2224 = vadd.f32 %v2136, %v2223
    %2225 = vdwg.mxu0
    %s2226 = scalar_lea.vmem [#allocation3], 4
    %v2227 = vld [vmem:[%s2226] sm:$0x3]
    %s2228 = scalar_lea.vmem [#allocation6], 10
    %v2229 = vld [vmem:[%s2228] sm:$0x3]
    %v2230 = vadd.f32 %v2227, %v2222
    %v2231 = vxor.u32 %v2230, 2147483648
    %v2232 = vmul.f32 %v2231, 1.442695
    %v2233 = vpow.pop %v2232
    %v2234 = vadd.f32 %v2233, 1.0
    %v2235 = vrcp.pop %v2234
    %v2236 = vmul.f32 1.0, %v2235
    %2238 = vrot.lane.b32.xlu0 %v2222, 64
    %v2239 = vpop.permute.xlu0 %2238
    %v2241 = vmul.f32 %v2236, %v2239
    %2243 = vrot.lane.b32.xlu0 %v2241, 64
    %v2244 = vpop.permute.xlu0 %2243
    %v2246 = vadd.f32 %v2227, %v2244
    %v2247 = vtanh.pop %v2246
    %v2248 = vsub.f32 1.0, %v2236
    %2250 = vrot.lane.b32.xlu0 %v2247, 96
    %v2251 = vpop.permute.xlu0 %2250
    %v2253 = vmul.f32 %v2248, %v2251
    %2254 = vrot.lane.b32.xlu0 %v1575, 32
    %v2255 = vpop.permute.xlu0 %2254
    %v2257 = vmul.f32 %v2236, %v2255
    %v2258 = vadd.f32 %v2253, %v2257
    %2259 = vrot.lane.b32.xlu0 %v2222, 32
    %v2260 = vpop.permute.xlu0 %2259
    %v2262 = vadd.f32 %v2229, %v2260
    %v2263 = vxor.u32 %v2262, 2147483648
    %v2264 = vmul.f32 %v2263, 1.442695
    %v2265 = vpow.pop %v2264
    %v2266 = vadd.f32 %v2265, 1.0
    %v2267 = vrcp.pop %v2266
    %v2268 = vmul.f32 1.0, %v2267
    %2270 = vrot.lane.b32.xlu0 %v2224, 32
    %v2271 = vpop.permute.xlu0 %2270
    %v2273 = vadd.f32 %v2229, %v2271
    %v2274 = vxor.u32 %v2273, 2147483648
    %v2275 = vmul.f32 %v2274, 1.442695
    %v2276 = vpow.pop %v2275
    %v2277 = vadd.f32 %v2276, 1.0
    %v2278 = vrcp.pop %v2277
    %v2279 = vmul.f32 1.0, %v2278
    %2280 = vrot.lane.b32.xlu0 %v2224, 96
    %v2281 = vpop.permute.xlu0 %2280
    %v2283 = vmul.f32 %v2268, %v2281
    %2285 = vrot.lane.b32.xlu0 %v2283, 64
    %v2286 = vpop.permute.xlu0 %2285
    %v2288 = vadd.f32 %v2229, %v2286
    %v2289 = vtanh.pop %v2288
    %v2290 = vsub.f32 1.0, %v2279
    %2292 = vrot.lane.b32.xlu0 %v2289, 96
    %v2293 = vpop.permute.xlu0 %2292
    %v2295 = vmul.f32 %v2290, %v2293
    %v2296 = vmul.f32 %v2279, %v1575
    %v2297 = vadd.f32 %v2295, %v2296
    %2299 = vrot.lane.b32.xlu0 %v2258, 96
    %v2300 = vpop.permute.xlu0 %2299
    %s2302 = scalar_lea.vmem [#allocation9], 4
    %2303 = vst.msk [vmem:[%s2302] sm:$0x3] %vm831, %v2300
    %2305 = vrot.lane.b32.xlu0 %v2297, 96
    %v2306 = vpop.permute.xlu0 %2305
    %s2308 = scalar_lea.vmem [#allocation10], 10
    %2309 = vst.msk [vmem:[%s2308] sm:$0x3] %vm831, %v2306
    %v2310 = vsel %vm839, %v2300, %v2297
    %v2312 = vsel %vm105, %v2310, 0
    %v2314 = vand.u32 %v77, 4294901760
    %2315 = vmatprep.subr.mxu0 %v2314
    %v2316 = vand.u32 %v76, 4294901760
    %2317 = vmatpush1.msra.mxu0 %v2316
    %v2318 = vand.u32 %v79, 4294901760
    %2319 = vmatprep.subr.mxu0 %v2318
    %v2320 = vand.u32 %v78, 4294901760
    %2321 = vmatpush1.msra.mxu0 %v2320
    %v2322 = vand.u32 %v81, 4294901760
    %2323 = vmatprep.subr.mxu0 %v2322
    %v2324 = vand.u32 %v80, 4294901760
    %2325 = vmatpush1.msra.mxu0 %v2324
    %v2326 = vand.u32 %v83, 4294901760
    %2327 = vmatprep.subr.mxu0 %v2326
    %v2328 = vand.u32 %v82, 4294901760
    %2329 = vmatpush1.msra.mxu0 %v2328
    %v2330 = vand.u32 %v85, 4294901760
    %2331 = vmatprep.subr.mxu0 %v2330
    %v2332 = vand.u32 %v84, 4294901760
    %2333 = vmatpush1.msra.mxu0 %v2332
    %v2334 = vand.u32 %v87, 4294901760
    %2335 = vmatprep.subr.mxu0 %v2334
    %v2336 = vand.u32 %v86, 4294901760
    %2337 = vmatpush1.msra.mxu0 %v2336
    %v2338 = vand.u32 %v89, 4294901760
    %2339 = vmatprep.subr.mxu0 %v2338
    %v2340 = vand.u32 %v88, 4294901760
    %2341 = vmatpush1.msra.mxu0 %v2340
    %v2342 = vand.u32 %v91, 4294901760
    %2343 = vmatprep.subr.mxu0 %v2342
    %v2344 = vand.u32 %v90, 4294901760
    %2345 = vmatpush1.msra.mxu0 %v2344
    %2346 = vmatprep.subr.mxu0 0.0
    %2347 = vmatpush1.msra.mxu0 0.0
    %2348 = vmatprep.subr.mxu0 0.0
    %2349 = vmatpush1.msra.mxu0 0.0
    %2350 = vmatprep.subr.mxu0 0.0
    %2351 = vmatpush1.msra.mxu0 0.0
    %2352 = vmatprep.subr.mxu0 0.0
    %2353 = vmatpush1.msra.mxu0 0.0
    %2354 = vmatprep.subr.mxu0 0.0
    %2355 = vmatpush1.msra.mxu0 0.0
    %2356 = vmatprep.subr.mxu0 0.0
    %2357 = vmatpush1.msra.mxu0 0.0
    %2358 = vmatprep.subr.mxu0 0.0
    %2359 = vmatpush1.msra.mxu0 0.0
    %2360 = vmatprep.subr.mxu0 0.0
    %2361 = vmatpush1.msra.mxu0 0.0
    %2362 = vmatprep.subr.mxu0 0.0
    %2363 = vmatpush1.msra.mxu0 0.0
    %2364 = vmatprep.subr.mxu0 0.0
    %2365 = vmatpush1.msra.mxu0 0.0
    %2366 = vmatprep.subr.mxu0 0.0
    %2367 = vmatpush1.msra.mxu0 0.0
    %2368 = vmatprep.subr.mxu0 0.0
    %2369 = vmatpush1.msra.mxu0 0.0
    %2370 = vmatprep.subr.mxu0 0.0
    %2371 = vmatpush1.msra.mxu0 0.0
    %2372 = vmatprep.subr.mxu0 0.0
    %2373 = vmatpush1.msra.mxu0 0.0
    %2374 = vmatprep.subr.mxu0 0.0
    %2375 = vmatpush1.msra.mxu0 0.0
    %2376 = vmatprep.subr.mxu0 0.0
    %2377 = vmatpush1.msra.mxu0 0.0
    %2378 = vmatprep.subr.mxu0 0.0
    %2379 = vmatpush1.msra.mxu0 0.0
    %2380 = vmatprep.subr.mxu0 0.0
    %2381 = vmatpush1.msra.mxu0 0.0
    %2382 = vmatprep.subr.mxu0 0.0
    %2383 = vmatpush1.msra.mxu0 0.0
    %2384 = vmatprep.subr.mxu0 0.0
    %2385 = vmatpush1.msra.mxu0 0.0
    %2386 = vmatprep.subr.mxu0 0.0
    %2387 = vmatpush1.msra.mxu0 0.0
    %2388 = vmatprep.subr.mxu0 0.0
    %2389 = vmatpush1.msra.mxu0 0.0
    %2390 = vmatprep.subr.mxu0 0.0
    %2391 = vmatpush1.msra.mxu0 0.0
    %2392 = vmatprep.subr.mxu0 0.0
    %2393 = vmatpush1.msra.mxu0 0.0
    %2394 = vmatprep.mubr.f32.mxu0 0.0
    %v2395 = vand.u32 %v2312, 4294901760
    %v2396 = vsub.f32 %v2312, %v2395
    %v2397 = vand.u32 %v2396, 4294901760
    %v2398 = vsub.f32 %v2396, %v2397
    %v2399 = vand.u32 %v2398, 4294901760
    %2400 = vmatmul.mubr.f32.gmra.mrb[0].mxu0 %v2399
    %v2401 = vpop.f32.mrb[0].mxu0
    %v2402 = vadd.f32 %v98, %v2401
    %v2403 = vpop.f32.mrb[0].mxu0
    %v2404 = vadd.f32 %v102, %v2403
    %2405 = vdwg.mxu0
    %v2406 = vand.u32 %v77, 4294901760
    %v2407 = vsub.f32 %v77, %v2406
    %v2408 = vand.u32 %v2407, 4294901760
    %v2409 = vsub.f32 %v2407, %v2408
    %v2410 = vand.u32 %v2409, 4294901760
    %2411 = vmatprep.subr.mxu0 %v2410
    %v2412 = vand.u32 %v76, 4294901760
    %v2413 = vsub.f32 %v76, %v2412
    %v2414 = vand.u32 %v2413, 4294901760
    %v2415 = vsub.f32 %v2413, %v2414
    %v2416 = vand.u32 %v2415, 4294901760
    %2417 = vmatpush1.msra.mxu0 %v2416
    %v2418 = vand.u32 %v79, 4294901760
    %v2419 = vsub.f32 %v79, %v2418
    %v2420 = vand.u32 %v2419, 4294901760
    %v2421 = vsub.f32 %v2419, %v2420
    %v2422 = vand.u32 %v2421, 4294901760
    %2423 = vmatprep.subr.mxu0 %v2422
    %v2424 = vand.u32 %v78, 4294901760
    %v2425 = vsub.f32 %v78, %v2424
    %v2426 = vand.u32 %v2425, 4294901760
    %v2427 = vsub.f32 %v2425, %v2426
    %v2428 = vand.u32 %v2427, 4294901760
    %2429 = vmatpush1.msra.mxu0 %v2428
    %v2430 = vand.u32 %v81, 4294901760
    %v2431 = vsub.f32 %v81, %v2430
    %v2432 = vand.u32 %v2431, 4294901760
    %v2433 = vsub.f32 %v2431, %v2432
    %v2434 = vand.u32 %v2433, 4294901760
    %2435 = vmatprep.subr.mxu0 %v2434
    %v2436 = vand.u32 %v80, 4294901760
    %v2437 = vsub.f32 %v80, %v2436
    %v2438 = vand.u32 %v2437, 4294901760
    %v2439 = vsub.f32 %v2437, %v2438
    %v2440 = vand.u32 %v2439, 4294901760
    %2441 = vmatpush1.msra.mxu0 %v2440
    %v2442 = vand.u32 %v83, 4294901760
    %v2443 = vsub.f32 %v83, %v2442
    %v2444 = vand.u32 %v2443, 4294901760
    %v2445 = vsub.f32 %v2443, %v2444
    %v2446 = vand.u32 %v2445, 4294901760
    %2447 = vmatprep.subr.mxu0 %v2446
    %v2448 = vand.u32 %v82, 4294901760
    %v2449 = vsub.f32 %v82, %v2448
    %v2450 = vand.u32 %v2449, 4294901760
    %v2451 = vsub.f32 %v2449, %v2450
    %v2452 = vand.u32 %v2451, 4294901760
    %2453 = vmatpush1.msra.mxu0 %v2452
    %v2454 = vand.u32 %v85, 4294901760
    %v2455 = vsub.f32 %v85, %v2454
    %v2456 = vand.u32 %v2455, 4294901760
    %v2457 = vsub.f32 %v2455, %v2456
    %v2458 = vand.u32 %v2457, 4294901760
    %2459 = vmatprep.subr.mxu0 %v2458
    %v2460 = vand.u32 %v84, 4294901760
    %v2461 = vsub.f32 %v84, %v2460
    %v2462 = vand.u32 %v2461, 4294901760
    %v2463 = vsub.f32 %v2461, %v2462
    %v2464 = vand.u32 %v2463, 4294901760
    %2465 = vmatpush1.msra.mxu0 %v2464
    %v2466 = vand.u32 %v87, 4294901760
    %v2467 = vsub.f32 %v87, %v2466
    %v2468 = vand.u32 %v2467, 4294901760
    %v2469 = vsub.f32 %v2467, %v2468
    %v2470 = vand.u32 %v2469, 4294901760
    %2471 = vmatprep.subr.mxu0 %v2470
    %v2472 = vand.u32 %v86, 4294901760
    %v2473 = vsub.f32 %v86, %v2472
    %v2474 = vand.u32 %v2473, 4294901760
    %v2475 = vsub.f32 %v2473, %v2474
    %v2476 = vand.u32 %v2475, 4294901760
    %2477 = vmatpush1.msra.mxu0 %v2476
    %v2478 = vand.u32 %v89, 4294901760
    %v2479 = vsub.f32 %v89, %v2478
    %v2480 = vand.u32 %v2479, 4294901760
    %v2481 = vsub.f32 %v2479, %v2480
    %v2482 = vand.u32 %v2481, 4294901760
    %2483 = vmatprep.subr.mxu0 %v2482
    %v2484 = vand.u32 %v88, 4294901760
    %v2485 = vsub.f32 %v88, %v2484
    %v2486 = vand.u32 %v2485, 4294901760
    %v2487 = vsub.f32 %v2485, %v2486
    %v2488 = vand.u32 %v2487, 4294901760
    %2489 = vmatpush1.msra.mxu0 %v2488
    %v2490 = vand.u32 %v91, 4294901760
    %v2491 = vsub.f32 %v91, %v2490
    %v2492 = vand.u32 %v2491, 4294901760
    %v2493 = vsub.f32 %v2491, %v2492
    %v2494 = vand.u32 %v2493, 4294901760
    %2495 = vmatprep.subr.mxu0 %v2494
    %v2496 = vand.u32 %v90, 4294901760
    %v2497 = vsub.f32 %v90, %v2496
    %v2498 = vand.u32 %v2497, 4294901760
    %v2499 = vsub.f32 %v2497, %v2498
    %v2500 = vand.u32 %v2499, 4294901760
    %2501 = vmatpush1.msra.mxu0 %v2500
    %2502 = vmatprep.subr.mxu0 0.0
    %2503 = vmatpush1.msra.mxu0 0.0
    %2504 = vmatprep.subr.mxu0 0.0
    %2505 = vmatpush1.msra.mxu0 0.0
    %2506 = vmatprep.subr.mxu0 0.0
    %2507 = vmatpush1.msra.mxu0 0.0
    %2508 = vmatprep.subr.mxu0 0.0
    %2509 = vmatpush1.msra.mxu0 0.0
    %2510 = vmatprep.subr.mxu0 0.0
    %2511 = vmatpush1.msra.mxu0 0.0
    %2512 = vmatprep.subr.mxu0 0.0
    %2513 = vmatpush1.msra.mxu0 0.0
    %2514 = vmatprep.subr.mxu0 0.0
    %2515 = vmatpush1.msra.mxu0 0.0
    %2516 = vmatprep.subr.mxu0 0.0
    %2517 = vmatpush1.msra.mxu0 0.0
    %2518 = vmatprep.subr.mxu0 0.0
    %2519 = vmatpush1.msra.mxu0 0.0
    %2520 = vmatprep.subr.mxu0 0.0
    %2521 = vmatpush1.msra.mxu0 0.0
    %2522 = vmatprep.subr.mxu0 0.0
    %2523 = vmatpush1.msra.mxu0 0.0
    %2524 = vmatprep.subr.mxu0 0.0
    %2525 = vmatpush1.msra.mxu0 0.0
    %2526 = vmatprep.subr.mxu0 0.0
    %2527 = vmatpush1.msra.mxu0 0.0
    %2528 = vmatprep.subr.mxu0 0.0
    %2529 = vmatpush1.msra.mxu0 0.0
    %2530 = vmatprep.subr.mxu0 0.0
    %2531 = vmatpush1.msra.mxu0 0.0
    %2532 = vmatprep.subr.mxu0 0.0
    %2533 = vmatpush1.msra.mxu0 0.0
    %2534 = vmatprep.subr.mxu0 0.0
    %2535 = vmatpush1.msra.mxu0 0.0
    %2536 = vmatprep.subr.mxu0 0.0
    %2537 = vmatpush1.msra.mxu0 0.0
    %2538 = vmatprep.subr.mxu0 0.0
    %2539 = vmatpush1.msra.mxu0 0.0
    %2540 = vmatprep.subr.mxu0 0.0
    %2541 = vmatpush1.msra.mxu0 0.0
    %2542 = vmatprep.subr.mxu0 0.0
    %2543 = vmatpush1.msra.mxu0 0.0
    %2544 = vmatprep.subr.mxu0 0.0
    %2545 = vmatpush1.msra.mxu0 0.0
    %2546 = vmatprep.subr.mxu0 0.0
    %2547 = vmatpush1.msra.mxu0 0.0
    %2548 = vmatprep.subr.mxu0 0.0
    %2549 = vmatpush1.msra.mxu0 0.0
    %2550 = vmatprep.mubr.f32.mxu0 0.0
    %v2551 = vand.u32 %v2312, 4294901760
    %2552 = vmatmul.mubr.f32.gmra.mrb[0].mxu0 %v2551
    %v2553 = vpop.f32.mrb[0].mxu0
    %v2554 = vadd.f32 %v2402, %v2553
    %v2555 = vpop.f32.mrb[0].mxu0
    %v2556 = vadd.f32 %v2404, %v2555
    %2557 = vdwg.mxu0
    %v2558 = vand.u32 %v77, 4294901760
    %v2559 = vsub.f32 %v77, %v2558
    %2560 = vmatprep.subr.mxu0 %v2559
    %v2561 = vand.u32 %v76, 4294901760
    %v2562 = vsub.f32 %v76, %v2561
    %2563 = vmatpush1.msra.mxu0 %v2562
    %v2564 = vand.u32 %v79, 4294901760
    %v2565 = vsub.f32 %v79, %v2564
    %2566 = vmatprep.subr.mxu0 %v2565
    %v2567 = vand.u32 %v78, 4294901760
    %v2568 = vsub.f32 %v78, %v2567
    %2569 = vmatpush1.msra.mxu0 %v2568
    %v2570 = vand.u32 %v81, 4294901760
    %v2571 = vsub.f32 %v81, %v2570
    %2572 = vmatprep.subr.mxu0 %v2571
    %v2573 = vand.u32 %v80, 4294901760
    %v2574 = vsub.f32 %v80, %v2573
    %2575 = vmatpush1.msra.mxu0 %v2574
    %v2576 = vand.u32 %v83, 4294901760
    %v2577 = vsub.f32 %v83, %v2576
    %2578 = vmatprep.subr.mxu0 %v2577
    %v2579 = vand.u32 %v82, 4294901760
    %v2580 = vsub.f32 %v82, %v2579
    %2581 = vmatpush1.msra.mxu0 %v2580
    %v2582 = vand.u32 %v85, 4294901760
    %v2583 = vsub.f32 %v85, %v2582
    %2584 = vmatprep.subr.mxu0 %v2583
    %v2585 = vand.u32 %v84, 4294901760
    %v2586 = vsub.f32 %v84, %v2585
    %2587 = vmatpush1.msra.mxu0 %v2586
    %v2588 = vand.u32 %v87, 4294901760
    %v2589 = vsub.f32 %v87, %v2588
    %2590 = vmatprep.subr.mxu0 %v2589
    %v2591 = vand.u32 %v86, 4294901760
    %v2592 = vsub.f32 %v86, %v2591
    %2593 = vmatpush1.msra.mxu0 %v2592
    %v2594 = vand.u32 %v89, 4294901760
    %v2595 = vsub.f32 %v89, %v2594
    %2596 = vmatprep.subr.mxu0 %v2595
    %v2597 = vand.u32 %v88, 4294901760
    %v2598 = vsub.f32 %v88, %v2597
    %2599 = vmatpush1.msra.mxu0 %v2598
    %v2600 = vand.u32 %v91, 4294901760
    %v2601 = vsub.f32 %v91, %v2600
    %2602 = vmatprep.subr.mxu0 %v2601
    %v2603 = vand.u32 %v90, 4294901760
    %v2604 = vsub.f32 %v90, %v2603
    %2605 = vmatpush1.msra.mxu0 %v2604
    %2606 = vmatprep.subr.mxu0 0.0
    %2607 = vmatpush1.msra.mxu0 0.0
    %2608 = vmatprep.subr.mxu0 0.0
    %2609 = vmatpush1.msra.mxu0 0.0
    %2610 = vmatprep.subr.mxu0 0.0
    %2611 = vmatpush1.msra.mxu0 0.0
    %2612 = vmatprep.subr.mxu0 0.0
    %2613 = vmatpush1.msra.mxu0 0.0
    %2614 = vmatprep.subr.mxu0 0.0
    %2615 = vmatpush1.msra.mxu0 0.0
    %2616 = vmatprep.subr.mxu0 0.0
    %2617 = vmatpush1.msra.mxu0 0.0
    %2618 = vmatprep.subr.mxu0 0.0
    %2619 = vmatpush1.msra.mxu0 0.0
    %2620 = vmatprep.subr.mxu0 0.0
    %2621 = vmatpush1.msra.mxu0 0.0
    %2622 = vmatprep.subr.mxu0 0.0
    %2623 = vmatpush1.msra.mxu0 0.0
    %2624 = vmatprep.subr.mxu0 0.0
    %2625 = vmatpush1.msra.mxu0 0.0
    %2626 = vmatprep.subr.mxu0 0.0
    %2627 = vmatpush1.msra.mxu0 0.0
    %2628 = vmatprep.subr.mxu0 0.0
    %2629 = vmatpush1.msra.mxu0 0.0
    %2630 = vmatprep.subr.mxu0 0.0
    %2631 = vmatpush1.msra.mxu0 0.0
    %2632 = vmatprep.subr.mxu0 0.0
    %2633 = vmatpush1.msra.mxu0 0.0
    %2634 = vmatprep.subr.mxu0 0.0
    %2635 = vmatpush1.msra.mxu0 0.0
    %2636 = vmatprep.subr.mxu0 0.0
    %2637 = vmatpush1.msra.mxu0 0.0
    %2638 = vmatprep.subr.mxu0 0.0
    %2639 = vmatpush1.msra.mxu0 0.0
    %2640 = vmatprep.subr.mxu0 0.0
    %2641 = vmatpush1.msra.mxu0 0.0
    %2642 = vmatprep.subr.mxu0 0.0
    %2643 = vmatpush1.msra.mxu0 0.0
    %2644 = vmatprep.subr.mxu0 0.0
    %2645 = vmatpush1.msra.mxu0 0.0
    %2646 = vmatprep.subr.mxu0 0.0
    %2647 = vmatpush1.msra.mxu0 0.0
    %2648 = vmatprep.subr.mxu0 0.0
    %2649 = vmatpush1.msra.mxu0 0.0
    %2650 = vmatprep.subr.mxu0 0.0
    %2651 = vmatpush1.msra.mxu0 0.0
    %2652 = vmatprep.subr.mxu0 0.0
    %2653 = vmatpush1.msra.mxu0 0.0
    %2654 = vmatprep.mubr.f32.mxu0 0.0
    %v2655 = vand.u32 %v2312, 4294901760
    %v2656 = vsub.f32 %v2312, %v2655
    %2657 = vmatmul.mubr.f32.gmra.mrb[0].mxu0 %v2656
    %v2658 = vpop.f32.mrb[0].mxu0
    %v2659 = vadd.f32 %v2554, %v2658
    %v2660 = vpop.f32.mrb[0].mxu0
    %v2661 = vadd.f32 %v2556, %v2660
    %2662 = vdwg.mxu0
    %v2663 = vand.u32 %v77, 4294901760
    %2664 = vmatprep.subr.mxu0 %v2663
    %v2665 = vand.u32 %v76, 4294901760
    %2666 = vmatpush1.msra.mxu0 %v2665
    %v2667 = vand.u32 %v79, 4294901760
    %2668 = vmatprep.subr.mxu0 %v2667
    %v2669 = vand.u32 %v78, 4294901760
    %2670 = vmatpush1.msra.mxu0 %v2669
    %v2671 = vand.u32 %v81, 4294901760
    %2672 = vmatprep.subr.mxu0 %v2671
    %v2673 = vand.u32 %v80, 4294901760
    %2674 = vmatpush1.msra.mxu0 %v2673
    %v2675 = vand.u32 %v83, 4294901760
    %2676 = vmatprep.subr.mxu0 %v2675
    %v2677 = vand.u32 %v82, 4294901760
    %2678 = vmatpush1.msra.mxu0 %v2677
    %v2679 = vand.u32 %v85, 4294901760
    %2680 = vmatprep.subr.mxu0 %v2679
    %v2681 = vand.u32 %v84, 4294901760
    %2682 = vmatpush1.msra.mxu0 %v2681
    %v2683 = vand.u32 %v87, 4294901760
    %2684 = vmatprep.subr.mxu0 %v2683
    %v2685 = vand.u32 %v86, 4294901760
    %2686 = vmatpush1.msra.mxu0 %v2685
    %v2687 = vand.u32 %v89, 4294901760
    %2688 = vmatprep.subr.mxu0 %v2687
    %v2689 = vand.u32 %v88, 4294901760
    %2690 = vmatpush1.msra.mxu0 %v2689
    %v2691 = vand.u32 %v91, 4294901760
    %2692 = vmatprep.subr.mxu0 %v2691
    %v2693 = vand.u32 %v90, 4294901760
    %2694 = vmatpush1.msra.mxu0 %v2693
    %2695 = vmatprep.subr.mxu0 0.0
    %2696 = vmatpush1.msra.mxu0 0.0
    %2697 = vmatprep.subr.mxu0 0.0
    %2698 = vmatpush1.msra.mxu0 0.0
    %2699 = vmatprep.subr.mxu0 0.0
    %2700 = vmatpush1.msra.mxu0 0.0
    %2701 = vmatprep.subr.mxu0 0.0
    %2702 = vmatpush1.msra.mxu0 0.0
    %2703 = vmatprep.subr.mxu0 0.0
    %2704 = vmatpush1.msra.mxu0 0.0
    %2705 = vmatprep.subr.mxu0 0.0
    %2706 = vmatpush1.msra.mxu0 0.0
    %2707 = vmatprep.subr.mxu0 0.0
    %2708 = vmatpush1.msra.mxu0 0.0
    %2709 = vmatprep.subr.mxu0 0.0
    %2710 = vmatpush1.msra.mxu0 0.0
    %2711 = vmatprep.subr.mxu0 0.0
    %2712 = vmatpush1.msra.mxu0 0.0
    %2713 = vmatprep.subr.mxu0 0.0
    %2714 = vmatpush1.msra.mxu0 0.0
    %2715 = vmatprep.subr.mxu0 0.0
    %2716 = vmatpush1.msra.mxu0 0.0
    %2717 = vmatprep.subr.mxu0 0.0
    %2718 = vmatpush1.msra.mxu0 0.0
    %2719 = vmatprep.subr.mxu0 0.0
    %2720 = vmatpush1.msra.mxu0 0.0
    %2721 = vmatprep.subr.mxu0 0.0
    %2722 = vmatpush1.msra.mxu0 0.0
    %2723 = vmatprep.subr.mxu0 0.0
    %2724 = vmatpush1.msra.mxu0 0.0
    %2725 = vmatprep.subr.mxu0 0.0
    %2726 = vmatpush1.msra.mxu0 0.0
    %2727 = vmatprep.subr.mxu0 0.0
    %2728 = vmatpush1.msra.mxu0 0.0
    %2729 = vmatprep.subr.mxu0 0.0
    %2730 = vmatpush1.msra.mxu0 0.0
    %2731 = vmatprep.subr.mxu0 0.0
    %2732 = vmatpush1.msra.mxu0 0.0
    %2733 = vmatprep.subr.mxu0 0.0
    %2734 = vmatpush1.msra.mxu0 0.0
    %2735 = vmatprep.subr.mxu0 0.0
    %2736 = vmatpush1.msra.mxu0 0.0
    %2737 = vmatprep.subr.mxu0 0.0
    %2738 = vmatpush1.msra.mxu0 0.0
    %2739 = vmatprep.subr.mxu0 0.0
    %2740 = vmatpush1.msra.mxu0 0.0
    %2741 = vmatprep.subr.mxu0 0.0
    %2742 = vmatpush1.msra.mxu0 0.0
    %2743 = vmatprep.mubr.f32.mxu0 0.0
    %v2744 = vand.u32 %v2312, 4294901760
    %v2745 = vsub.f32 %v2312, %v2744
    %v2746 = vand.u32 %v2745, 4294901760
    %2747 = vmatmul.mubr.f32.gmra.mrb[0].mxu0 %v2746
    %v2748 = vpop.f32.mrb[0].mxu0
    %v2749 = vadd.f32 %v2659, %v2748
    %v2750 = vpop.f32.mrb[0].mxu0
    %v2751 = vadd.f32 %v2661, %v2750
    %2752 = vdwg.mxu0
    %v2753 = vand.u32 %v77, 4294901760
    %v2754 = vsub.f32 %v77, %v2753
    %v2755 = vand.u32 %v2754, 4294901760
    %2756 = vmatprep.subr.mxu0 %v2755
    %v2757 = vand.u32 %v76, 4294901760
    %v2758 = vsub.f32 %v76, %v2757
    %v2759 = vand.u32 %v2758, 4294901760
    %2760 = vmatpush1.msra.mxu0 %v2759
    %v2761 = vand.u32 %v79, 4294901760
    %v2762 = vsub.f32 %v79, %v2761
    %v2763 = vand.u32 %v2762, 4294901760
    %2764 = vmatprep.subr.mxu0 %v2763
    %v2765 = vand.u32 %v78, 4294901760
    %v2766 = vsub.f32 %v78, %v2765
    %v2767 = vand.u32 %v2766, 4294901760
    %2768 = vmatpush1.msra.mxu0 %v2767
    %v2769 = vand.u32 %v81, 4294901760
    %v2770 = vsub.f32 %v81, %v2769
    %v2771 = vand.u32 %v2770, 4294901760
    %2772 = vmatprep.subr.mxu0 %v2771
    %v2773 = vand.u32 %v80, 4294901760
    %v2774 = vsub.f32 %v80, %v2773
    %v2775 = vand.u32 %v2774, 4294901760
    %2776 = vmatpush1.msra.mxu0 %v2775
    %v2777 = vand.u32 %v83, 4294901760
    %v2778 = vsub.f32 %v83, %v2777
    %v2779 = vand.u32 %v2778, 4294901760
    %2780 = vmatprep.subr.mxu0 %v2779
    %v2781 = vand.u32 %v82, 4294901760
    %v2782 = vsub.f32 %v82, %v2781
    %v2783 = vand.u32 %v2782, 4294901760
    %2784 = vmatpush1.msra.mxu0 %v2783
    %v2785 = vand.u32 %v85, 4294901760
    %v2786 = vsub.f32 %v85, %v2785
    %v2787 = vand.u32 %v2786, 4294901760
    %2788 = vmatprep.subr.mxu0 %v2787
    %v2789 = vand.u32 %v84, 4294901760
    %v2790 = vsub.f32 %v84, %v2789
    %v2791 = vand.u32 %v2790, 4294901760
    %2792 = vmatpush1.msra.mxu0 %v2791
    %v2793 = vand.u32 %v87, 4294901760
    %v2794 = vsub.f32 %v87, %v2793
    %v2795 = vand.u32 %v2794, 4294901760
    %2796 = vmatprep.subr.mxu0 %v2795
    %v2797 = vand.u32 %v86, 4294901760
    %v2798 = vsub.f32 %v86, %v2797
    %v2799 = vand.u32 %v2798, 4294901760
    %2800 = vmatpush1.msra.mxu0 %v2799
    %v2801 = vand.u32 %v89, 4294901760
    %v2802 = vsub.f32 %v89, %v2801
    %v2803 = vand.u32 %v2802, 4294901760
    %2804 = vmatprep.subr.mxu0 %v2803
    %v2805 = vand.u32 %v88, 4294901760
    %v2806 = vsub.f32 %v88, %v2805
    %v2807 = vand.u32 %v2806, 4294901760
    %2808 = vmatpush1.msra.mxu0 %v2807
    %v2809 = vand.u32 %v91, 4294901760
    %v2810 = vsub.f32 %v91, %v2809
    %v2811 = vand.u32 %v2810, 4294901760
    %2812 = vmatprep.subr.mxu0 %v2811
    %v2813 = vand.u32 %v90, 4294901760
    %v2814 = vsub.f32 %v90, %v2813
    %v2815 = vand.u32 %v2814, 4294901760
    %2816 = vmatpush1.msra.mxu0 %v2815
    %2817 = vmatprep.subr.mxu0 0.0
    %2818 = vmatpush1.msra.mxu0 0.0
    %2819 = vmatprep.subr.mxu0 0.0
    %2820 = vmatpush1.msra.mxu0 0.0
    %2821 = vmatprep.subr.mxu0 0.0
    %2822 = vmatpush1.msra.mxu0 0.0
    %2823 = vmatprep.subr.mxu0 0.0
    %2824 = vmatpush1.msra.mxu0 0.0
    %2825 = vmatprep.subr.mxu0 0.0
    %2826 = vmatpush1.msra.mxu0 0.0
    %2827 = vmatprep.subr.mxu0 0.0
    %2828 = vmatpush1.msra.mxu0 0.0
    %2829 = vmatprep.subr.mxu0 0.0
    %2830 = vmatpush1.msra.mxu0 0.0
    %2831 = vmatprep.subr.mxu0 0.0
    %2832 = vmatpush1.msra.mxu0 0.0
    %2833 = vmatprep.subr.mxu0 0.0
    %2834 = vmatpush1.msra.mxu0 0.0
    %2835 = vmatprep.subr.mxu0 0.0
    %2836 = vmatpush1.msra.mxu0 0.0
    %2837 = vmatprep.subr.mxu0 0.0
    %2838 = vmatpush1.msra.mxu0 0.0
    %2839 = vmatprep.subr.mxu0 0.0
    %2840 = vmatpush1.msra.mxu0 0.0
    %2841 = vmatprep.subr.mxu0 0.0
    %2842 = vmatpush1.msra.mxu0 0.0
    %2843 = vmatprep.subr.mxu0 0.0
    %2844 = vmatpush1.msra.mxu0 0.0
    %2845 = vmatprep.subr.mxu0 0.0
    %2846 = vmatpush1.msra.mxu0 0.0
    %2847 = vmatprep.subr.mxu0 0.0
    %2848 = vmatpush1.msra.mxu0 0.0
    %2849 = vmatprep.subr.mxu0 0.0
    %2850 = vmatpush1.msra.mxu0 0.0
    %2851 = vmatprep.subr.mxu0 0.0
    %2852 = vmatpush1.msra.mxu0 0.0
    %2853 = vmatprep.subr.mxu0 0.0
    %2854 = vmatpush1.msra.mxu0 0.0
    %2855 = vmatprep.subr.mxu0 0.0
    %2856 = vmatpush1.msra.mxu0 0.0
    %2857 = vmatprep.subr.mxu0 0.0
    %2858 = vmatpush1.msra.mxu0 0.0
    %2859 = vmatprep.subr.mxu0 0.0
    %2860 = vmatpush1.msra.mxu0 0.0
    %2861 = vmatprep.subr.mxu0 0.0
    %2862 = vmatpush1.msra.mxu0 0.0
    %2863 = vmatprep.subr.mxu0 0.0
    %2864 = vmatpush1.msra.mxu0 0.0
    %2865 = vmatprep.mubr.f32.mxu0 0.0
    %v2866 = vand.u32 %v2312, 4294901760
    %2867 = vmatmul.mubr.f32.gmra.mrb[0].mxu0 %v2866
    %v2868 = vpop.f32.mrb[0].mxu0
    %v2869 = vadd.f32 %v2749, %v2868
    %v2870 = vpop.f32.mrb[0].mxu0
    %v2871 = vadd.f32 %v2751, %v2870
    %2872 = vdwg.mxu0
    %v2873 = vand.u32 %v77, 4294901760
    %2874 = vmatprep.subr.mxu0 %v2873
    %v2875 = vand.u32 %v76, 4294901760
    %2876 = vmatpush1.msra.mxu0 %v2875
    %v2877 = vand.u32 %v79, 4294901760
    %2878 = vmatprep.subr.mxu0 %v2877
    %v2879 = vand.u32 %v78, 4294901760
    %2880 = vmatpush1.msra.mxu0 %v2879
    %v2881 = vand.u32 %v81, 4294901760
    %2882 = vmatprep.subr.mxu0 %v2881
    %v2883 = vand.u32 %v80, 4294901760
    %2884 = vmatpush1.msra.mxu0 %v2883
    %v2885 = vand.u32 %v83, 4294901760
    %2886 = vmatprep.subr.mxu0 %v2885
    %v2887 = vand.u32 %v82, 4294901760
    %2888 = vmatpush1.msra.mxu0 %v2887
    %v2889 = vand.u32 %v85, 4294901760
    %2890 = vmatprep.subr.mxu0 %v2889
    %v2891 = vand.u32 %v84, 4294901760
    %2892 = vmatpush1.msra.mxu0 %v2891
    %v2893 = vand.u32 %v87, 4294901760
    %2894 = vmatprep.subr.mxu0 %v2893
    %v2895 = vand.u32 %v86, 4294901760
    %2896 = vmatpush1.msra.mxu0 %v2895
    %v2897 = vand.u32 %v89, 4294901760
    %2898 = vmatprep.subr.mxu0 %v2897
    %v2899 = vand.u32 %v88, 4294901760
    %2900 = vmatpush1.msra.mxu0 %v2899
    %v2901 = vand.u32 %v91, 4294901760
    %2902 = vmatprep.subr.mxu0 %v2901
    %v2903 = vand.u32 %v90, 4294901760
    %2904 = vmatpush1.msra.mxu0 %v2903
    %2905 = vmatprep.subr.mxu0 0.0
    %2906 = vmatpush1.msra.mxu0 0.0
    %2907 = vmatprep.subr.mxu0 0.0
    %2908 = vmatpush1.msra.mxu0 0.0
    %2909 = vmatprep.subr.mxu0 0.0
    %2910 = vmatpush1.msra.mxu0 0.0
    %2911 = vmatprep.subr.mxu0 0.0
    %2912 = vmatpush1.msra.mxu0 0.0
    %2913 = vmatprep.subr.mxu0 0.0
    %2914 = vmatpush1.msra.mxu0 0.0
    %2915 = vmatprep.subr.mxu0 0.0
    %2916 = vmatpush1.msra.mxu0 0.0
    %2917 = vmatprep.subr.mxu0 0.0
    %2918 = vmatpush1.msra.mxu0 0.0
    %2919 = vmatprep.subr.mxu0 0.0
    %2920 = vmatpush1.msra.mxu0 0.0
    %2921 = vmatprep.subr.mxu0 0.0
    %2922 = vmatpush1.msra.mxu0 0.0
    %2923 = vmatprep.subr.mxu0 0.0
    %2924 = vmatpush1.msra.mxu0 0.0
    %2925 = vmatprep.subr.mxu0 0.0
    %2926 = vmatpush1.msra.mxu0 0.0
    %2927 = vmatprep.subr.mxu0 0.0
    %2928 = vmatpush1.msra.mxu0 0.0
    %2929 = vmatprep.subr.mxu0 0.0
    %2930 = vmatpush1.msra.mxu0 0.0
    %2931 = vmatprep.subr.mxu0 0.0
    %2932 = vmatpush1.msra.mxu0 0.0
    %2933 = vmatprep.subr.mxu0 0.0
    %2934 = vmatpush1.msra.mxu0 0.0
    %2935 = vmatprep.subr.mxu0 0.0
    %2936 = vmatpush1.msra.mxu0 0.0
    %2937 = vmatprep.subr.mxu0 0.0
    %2938 = vmatpush1.msra.mxu0 0.0
    %2939 = vmatprep.subr.mxu0 0.0
    %2940 = vmatpush1.msra.mxu0 0.0
    %2941 = vmatprep.subr.mxu0 0.0
    %2942 = vmatpush1.msra.mxu0 0.0
    %2943 = vmatprep.subr.mxu0 0.0
    %2944 = vmatpush1.msra.mxu0 0.0
    %2945 = vmatprep.subr.mxu0 0.0
    %2946 = vmatpush1.msra.mxu0 0.0
    %2947 = vmatprep.subr.mxu0 0.0
    %2948 = vmatpush1.msra.mxu0 0.0
    %2949 = vmatprep.subr.mxu0 0.0
    %2950 = vmatpush1.msra.mxu0 0.0
    %2951 = vmatprep.subr.mxu0 0.0
    %2952 = vmatpush1.msra.mxu0 0.0
    %2953 = vmatprep.mubr.f32.mxu0 0.0
    %v2954 = vand.u32 %v2312, 4294901760
    %2955 = vmatmul.mubr.f32.gmra.mrb[0].mxu0 %v2954
    %v2956 = vpop.f32.mrb[0].mxu0
    %v2957 = vadd.f32 %v2869, %v2956
    %v2958 = vpop.f32.mrb[0].mxu0
    %v2959 = vadd.f32 %v2871, %v2958
    %2960 = vdwg.mxu0
    %s2961 = scalar_lea.vmem [#allocation3], 6
    %v2962 = vld [vmem:[%s2961] sm:$0x3]
    %s2963 = scalar_lea.vmem [#allocation6], 8
    %v2964 = vld [vmem:[%s2963] sm:$0x3]
    %v2965 = vadd.f32 %v2962, %v2957
    %v2966 = vxor.u32 %v2965, 2147483648
    %v2967 = vmul.f32 %v2966, 1.442695
    %v2968 = vpow.pop %v2967
    %v2969 = vadd.f32 %v2968, 1.0
    %v2970 = vrcp.pop %v2969
    %v2971 = vmul.f32 1.0, %v2970
    %2973 = vrot.lane.b32.xlu0 %v2957, 64
    %v2974 = vpop.permute.xlu0 %2973
    %v2976 = vmul.f32 %v2971, %v2974
    %2978 = vrot.lane.b32.xlu0 %v2976, 64
    %v2979 = vpop.permute.xlu0 %2978
    %v2981 = vadd.f32 %v2962, %v2979
    %v2982 = vtanh.pop %v2981
    %v2983 = vsub.f32 1.0, %v2971
    %2985 = vrot.lane.b32.xlu0 %v2982, 96
    %v2986 = vpop.permute.xlu0 %2985
    %v2988 = vmul.f32 %v2983, %v2986
    %2989 = vrot.lane.b32.xlu0 %v2310, 32
    %v2990 = vpop.permute.xlu0 %2989
    %v2992 = vmul.f32 %v2971, %v2990
    %v2993 = vadd.f32 %v2988, %v2992
    %2994 = vrot.lane.b32.xlu0 %v2957, 32
    %v2995 = vpop.permute.xlu0 %2994
    %v2997 = vadd.f32 %v2964, %v2995
    %v2998 = vxor.u32 %v2997, 2147483648
    %v2999 = vmul.f32 %v2998, 1.442695
    %v3000 = vpow.pop %v2999
    %v3001 = vadd.f32 %v3000, 1.0
    %v3002 = vrcp.pop %v3001
    %v3003 = vmul.f32 1.0, %v3002
    %3005 = vrot.lane.b32.xlu0 %v2959, 32
    %v3006 = vpop.permute.xlu0 %3005
    %v3008 = vadd.f32 %v2964, %v3006
    %v3009 = vxor.u32 %v3008, 2147483648
    %v3010 = vmul.f32 %v3009, 1.442695
    %v3011 = vpow.pop %v3010
    %v3012 = vadd.f32 %v3011, 1.0
    %v3013 = vrcp.pop %v3012
    %v3014 = vmul.f32 1.0, %v3013
    %3015 = vrot.lane.b32.xlu0 %v2959, 96
    %v3016 = vpop.permute.xlu0 %3015
    %v3018 = vmul.f32 %v3003, %v3016
    %3020 = vrot.lane.b32.xlu0 %v3018, 64
    %v3021 = vpop.permute.xlu0 %3020
    %v3023 = vadd.f32 %v2964, %v3021
    %v3024 = vtanh.pop %v3023
    %v3025 = vsub.f32 1.0, %v3014
    %3027 = vrot.lane.b32.xlu0 %v3024, 96
    %v3028 = vpop.permute.xlu0 %3027
    %v3030 = vmul.f32 %v3025, %v3028
    %v3031 = vmul.f32 %v3014, %v2310
    %v3032 = vadd.f32 %v3030, %v3031
    %3034 = vrot.lane.b32.xlu0 %v2993, 96
    %v3035 = vpop.permute.xlu0 %3034
    %s3037 = scalar_lea.vmem [#allocation9], 6
    %3038 = vst.msk [vmem:[%s3037] sm:$0x3] %vm831, %v3035
    %3040 = vrot.lane.b32.xlu0 %v3032, 96
    %v3041 = vpop.permute.xlu0 %3040
    %s3043 = scalar_lea.vmem [#allocation10], 8
    %3044 = vst.msk [vmem:[%s3043] sm:$0x3] %vm831, %v3041
    %v3045 = vsel %vm839, %v3035, %v3032
    %v3047 = vsel %vm105, %v3045, 0
    %v3049 = vand.u32 %v77, 4294901760
    %3050 = vmatprep.subr.mxu0 %v3049
    %v3051 = vand.u32 %v76, 4294901760
    %3052 = vmatpush1.msra.mxu0 %v3051
    %v3053 = vand.u32 %v79, 4294901760
    %3054 = vmatprep.subr.mxu0 %v3053
    %v3055 = vand.u32 %v78, 4294901760
    %3056 = vmatpush1.msra.mxu0 %v3055
    %v3057 = vand.u32 %v81, 4294901760
    %3058 = vmatprep.subr.mxu0 %v3057
    %v3059 = vand.u32 %v80, 4294901760
    %3060 = vmatpush1.msra.mxu0 %v3059
    %v3061 = vand.u32 %v83, 4294901760
    %3062 = vmatprep.subr.mxu0 %v3061
    %v3063 = vand.u32 %v82, 4294901760
    %3064 = vmatpush1.msra.mxu0 %v3063
    %v3065 = vand.u32 %v85, 4294901760
    %3066 = vmatprep.subr.mxu0 %v3065
    %v3067 = vand.u32 %v84, 4294901760
    %3068 = vmatpush1.msra.mxu0 %v3067
    %v3069 = vand.u32 %v87, 4294901760
    %3070 = vmatprep.subr.mxu0 %v3069
    %v3071 = vand.u32 %v86, 4294901760
    %3072 = vmatpush1.msra.mxu0 %v3071
    %v3073 = vand.u32 %v89, 4294901760
    %3074 = vmatprep.subr.mxu0 %v3073
    %v3075 = vand.u32 %v88, 4294901760
    %3076 = vmatpush1.msra.mxu0 %v3075
    %v3077 = vand.u32 %v91, 4294901760
    %3078 = vmatprep.subr.mxu0 %v3077
    %v3079 = vand.u32 %v90, 4294901760
    %3080 = vmatpush1.msra.mxu0 %v3079
    %3081 = vmatprep.subr.mxu0 0.0
    %3082 = vmatpush1.msra.mxu0 0.0
    %3083 = vmatprep.subr.mxu0 0.0
    %3084 = vmatpush1.msra.mxu0 0.0
    %3085 = vmatprep.subr.mxu0 0.0
    %3086 = vmatpush1.msra.mxu0 0.0
    %3087 = vmatprep.subr.mxu0 0.0
    %3088 = vmatpush1.msra.mxu0 0.0
    %3089 = vmatprep.subr.mxu0 0.0
    %3090 = vmatpush1.msra.mxu0 0.0
    %3091 = vmatprep.subr.mxu0 0.0
    %3092 = vmatpush1.msra.mxu0 0.0
    %3093 = vmatprep.subr.mxu0 0.0
    %3094 = vmatpush1.msra.mxu0 0.0
    %3095 = vmatprep.subr.mxu0 0.0
    %3096 = vmatpush1.msra.mxu0 0.0
    %3097 = vmatprep.subr.mxu0 0.0
    %3098 = vmatpush1.msra.mxu0 0.0
    %3099 = vmatprep.subr.mxu0 0.0
    %3100 = vmatpush1.msra.mxu0 0.0
    %3101 = vmatprep.subr.mxu0 0.0
    %3102 = vmatpush1.msra.mxu0 0.0
    %3103 = vmatprep.subr.mxu0 0.0
    %3104 = vmatpush1.msra.mxu0 0.0
    %3105 = vmatprep.subr.mxu0 0.0
    %3106 = vmatpush1.msra.mxu0 0.0
    %3107 = vmatprep.subr.mxu0 0.0
    %3108 = vmatpush1.msra.mxu0 0.0
    %3109 = vmatprep.subr.mxu0 0.0
    %3110 = vmatpush1.msra.mxu0 0.0
    %3111 = vmatprep.subr.mxu0 0.0
    %3112 = vmatpush1.msra.mxu0 0.0
    %3113 = vmatprep.subr.mxu0 0.0
    %3114 = vmatpush1.msra.mxu0 0.0
    %3115 = vmatprep.subr.mxu0 0.0
    %3116 = vmatpush1.msra.mxu0 0.0
    %3117 = vmatprep.subr.mxu0 0.0
    %3118 = vmatpush1.msra.mxu0 0.0
    %3119 = vmatprep.subr.mxu0 0.0
    %3120 = vmatpush1.msra.mxu0 0.0
    %3121 = vmatprep.subr.mxu0 0.0
    %3122 = vmatpush1.msra.mxu0 0.0
    %3123 = vmatprep.subr.mxu0 0.0
    %3124 = vmatpush1.msra.mxu0 0.0
    %3125 = vmatprep.subr.mxu0 0.0
    %3126 = vmatpush1.msra.mxu0 0.0
    %3127 = vmatprep.subr.mxu0 0.0
    %3128 = vmatpush1.msra.mxu0 0.0
    %3129 = vmatprep.mubr.f32.mxu0 0.0
    %v3130 = vand.u32 %v3047, 4294901760
    %v3131 = vsub.f32 %v3047, %v3130
    %v3132 = vand.u32 %v3131, 4294901760
    %v3133 = vsub.f32 %v3131, %v3132
    %v3134 = vand.u32 %v3133, 4294901760
    %3135 = vmatmul.mubr.f32.gmra.mrb[0].mxu0 %v3134
    %v3136 = vpop.f32.mrb[0].mxu0
    %v3137 = vadd.f32 %v98, %v3136
    %v3138 = vpop.f32.mrb[0].mxu0
    %v3139 = vadd.f32 %v102, %v3138
    %3140 = vdwg.mxu0
    %v3141 = vand.u32 %v77, 4294901760
    %v3142 = vsub.f32 %v77, %v3141
    %v3143 = vand.u32 %v3142, 4294901760
    %v3144 = vsub.f32 %v3142, %v3143
    %v3145 = vand.u32 %v3144, 4294901760
    %3146 = vmatprep.subr.mxu0 %v3145
    %v3147 = vand.u32 %v76, 4294901760
    %v3148 = vsub.f32 %v76, %v3147
    %v3149 = vand.u32 %v3148, 4294901760
    %v3150 = vsub.f32 %v3148, %v3149
    %v3151 = vand.u32 %v3150, 4294901760
    %3152 = vmatpush1.msra.mxu0 %v3151
    %v3153 = vand.u32 %v79, 4294901760
    %v3154 = vsub.f32 %v79, %v3153
    %v3155 = vand.u32 %v3154, 4294901760
    %v3156 = vsub.f32 %v3154, %v3155
    %v3157 = vand.u32 %v3156, 4294901760
    %3158 = vmatprep.subr.mxu0 %v3157
    %v3159 = vand.u32 %v78, 4294901760
    %v3160 = vsub.f32 %v78, %v3159
    %v3161 = vand.u32 %v3160, 4294901760
    %v3162 = vsub.f32 %v3160, %v3161
    %v3163 = vand.u32 %v3162, 4294901760
    %3164 = vmatpush1.msra.mxu0 %v3163
    %v3165 = vand.u32 %v81, 4294901760
    %v3166 = vsub.f32 %v81, %v3165
    %v3167 = vand.u32 %v3166, 4294901760
    %v3168 = vsub.f32 %v3166, %v3167
    %v3169 = vand.u32 %v3168, 4294901760
    %3170 = vmatprep.subr.mxu0 %v3169
    %v3171 = vand.u32 %v80, 4294901760
    %v3172 = vsub.f32 %v80, %v3171
    %v3173 = vand.u32 %v3172, 4294901760
    %v3174 = vsub.f32 %v3172, %v3173
    %v3175 = vand.u32 %v3174, 4294901760
    %3176 = vmatpush1.msra.mxu0 %v3175
    %v3177 = vand.u32 %v83, 4294901760
    %v3178 = vsub.f32 %v83, %v3177
    %v3179 = vand.u32 %v3178, 4294901760
    %v3180 = vsub.f32 %v3178, %v3179
    %v3181 = vand.u32 %v3180, 4294901760
    %3182 = vmatprep.subr.mxu0 %v3181
    %v3183 = vand.u32 %v82, 4294901760
    %v3184 = vsub.f32 %v82, %v3183
    %v3185 = vand.u32 %v3184, 4294901760
    %v3186 = vsub.f32 %v3184, %v3185
    %v3187 = vand.u32 %v3186, 4294901760
    %3188 = vmatpush1.msra.mxu0 %v3187
    %v3189 = vand.u32 %v85, 4294901760
    %v3190 = vsub.f32 %v85, %v3189
    %v3191 = vand.u32 %v3190, 4294901760
    %v3192 = vsub.f32 %v3190, %v3191
    %v3193 = vand.u32 %v3192, 4294901760
    %3194 = vmatprep.subr.mxu0 %v3193
    %v3195 = vand.u32 %v84, 4294901760
    %v3196 = vsub.f32 %v84, %v3195
    %v3197 = vand.u32 %v3196, 4294901760
    %v3198 = vsub.f32 %v3196, %v3197
    %v3199 = vand.u32 %v3198, 4294901760
    %3200 = vmatpush1.msra.mxu0 %v3199
    %v3201 = vand.u32 %v87, 4294901760
    %v3202 = vsub.f32 %v87, %v3201
    %v3203 = vand.u32 %v3202, 4294901760
    %v3204 = vsub.f32 %v3202, %v3203
    %v3205 = vand.u32 %v3204, 4294901760
    %3206 = vmatprep.subr.mxu0 %v3205
    %v3207 = vand.u32 %v86, 4294901760
    %v3208 = vsub.f32 %v86, %v3207
    %v3209 = vand.u32 %v3208, 4294901760
    %v3210 = vsub.f32 %v3208, %v3209
    %v3211 = vand.u32 %v3210, 4294901760
    %3212 = vmatpush1.msra.mxu0 %v3211
    %v3213 = vand.u32 %v89, 4294901760
    %v3214 = vsub.f32 %v89, %v3213
    %v3215 = vand.u32 %v3214, 4294901760
    %v3216 = vsub.f32 %v3214, %v3215
    %v3217 = vand.u32 %v3216, 4294901760
    %3218 = vmatprep.subr.mxu0 %v3217
    %v3219 = vand.u32 %v88, 4294901760
    %v3220 = vsub.f32 %v88, %v3219
    %v3221 = vand.u32 %v3220, 4294901760
    %v3222 = vsub.f32 %v3220, %v3221
    %v3223 = vand.u32 %v3222, 4294901760
    %3224 = vmatpush1.msra.mxu0 %v3223
    %v3225 = vand.u32 %v91, 4294901760
    %v3226 = vsub.f32 %v91, %v3225
    %v3227 = vand.u32 %v3226, 4294901760
    %v3228 = vsub.f32 %v3226, %v3227
    %v3229 = vand.u32 %v3228, 4294901760
    %3230 = vmatprep.subr.mxu0 %v3229
    %v3231 = vand.u32 %v90, 4294901760
    %v3232 = vsub.f32 %v90, %v3231
    %v3233 = vand.u32 %v3232, 4294901760
    %v3234 = vsub.f32 %v3232, %v3233
    %v3235 = vand.u32 %v3234, 4294901760
    %3236 = vmatpush1.msra.mxu0 %v3235
    %3237 = vmatprep.subr.mxu0 0.0
    %3238 = vmatpush1.msra.mxu0 0.0
    %3239 = vmatprep.subr.mxu0 0.0
    %3240 = vmatpush1.msra.mxu0 0.0
    %3241 = vmatprep.subr.mxu0 0.0
    %3242 = vmatpush1.msra.mxu0 0.0
    %3243 = vmatprep.subr.mxu0 0.0
    %3244 = vmatpush1.msra.mxu0 0.0
    %3245 = vmatprep.subr.mxu0 0.0
    %3246 = vmatpush1.msra.mxu0 0.0
    %3247 = vmatprep.subr.mxu0 0.0
    %3248 = vmatpush1.msra.mxu0 0.0
    %3249 = vmatprep.subr.mxu0 0.0
    %3250 = vmatpush1.msra.mxu0 0.0
    %3251 = vmatprep.subr.mxu0 0.0
    %3252 = vmatpush1.msra.mxu0 0.0
    %3253 = vmatprep.subr.mxu0 0.0
    %3254 = vmatpush1.msra.mxu0 0.0
    %3255 = vmatprep.subr.mxu0 0.0
    %3256 = vmatpush1.msra.mxu0 0.0
    %3257 = vmatprep.subr.mxu0 0.0
    %3258 = vmatpush1.msra.mxu0 0.0
    %3259 = vmatprep.subr.mxu0 0.0
    %3260 = vmatpush1.msra.mxu0 0.0
    %3261 = vmatprep.subr.mxu0 0.0
    %3262 = vmatpush1.msra.mxu0 0.0
    %3263 = vmatprep.subr.mxu0 0.0
    %3264 = vmatpush1.msra.mxu0 0.0
    %3265 = vmatprep.subr.mxu0 0.0
    %3266 = vmatpush1.msra.mxu0 0.0
    %3267 = vmatprep.subr.mxu0 0.0
    %3268 = vmatpush1.msra.mxu0 0.0
    %3269 = vmatprep.subr.mxu0 0.0
    %3270 = vmatpush1.msra.mxu0 0.0
    %3271 = vmatprep.subr.mxu0 0.0
    %3272 = vmatpush1.msra.mxu0 0.0
    %3273 = vmatprep.subr.mxu0 0.0
    %3274 = vmatpush1.msra.mxu0 0.0
    %3275 = vmatprep.subr.mxu0 0.0
    %3276 = vmatpush1.msra.mxu0 0.0
    %3277 = vmatprep.subr.mxu0 0.0
    %3278 = vmatpush1.msra.mxu0 0.0
    %3279 = vmatprep.subr.mxu0 0.0
    %3280 = vmatpush1.msra.mxu0 0.0
    %3281 = vmatprep.subr.mxu0 0.0
    %3282 = vmatpush1.msra.mxu0 0.0
    %3283 = vmatprep.subr.mxu0 0.0
    %3284 = vmatpush1.msra.mxu0 0.0
    %3285 = vmatprep.mubr.f32.mxu0 0.0
    %v3286 = vand.u32 %v3047, 4294901760
    %3287 = vmatmul.mubr.f32.gmra.mrb[0].mxu0 %v3286
    %v3288 = vpop.f32.mrb[0].mxu0
    %v3289 = vadd.f32 %v3137, %v3288
    %v3290 = vpop.f32.mrb[0].mxu0
    %v3291 = vadd.f32 %v3139, %v3290
    %3292 = vdwg.mxu0
    %v3293 = vand.u32 %v77, 4294901760
    %v3294 = vsub.f32 %v77, %v3293
    %3295 = vmatprep.subr.mxu0 %v3294
    %v3296 = vand.u32 %v76, 4294901760
    %v3297 = vsub.f32 %v76, %v3296
    %3298 = vmatpush1.msra.mxu0 %v3297
    %v3299 = vand.u32 %v79, 4294901760
    %v3300 = vsub.f32 %v79, %v3299
    %3301 = vmatprep.subr.mxu0 %v3300
    %v3302 = vand.u32 %v78, 4294901760
    %v3303 = vsub.f32 %v78, %v3302
    %3304 = vmatpush1.msra.mxu0 %v3303
    %v3305 = vand.u32 %v81, 4294901760
    %v3306 = vsub.f32 %v81, %v3305
    %3307 = vmatprep.subr.mxu0 %v3306
    %v3308 = vand.u32 %v80, 4294901760
    %v3309 = vsub.f32 %v80, %v3308
    %3310 = vmatpush1.msra.mxu0 %v3309
    %v3311 = vand.u32 %v83, 4294901760
    %v3312 = vsub.f32 %v83, %v3311
    %3313 = vmatprep.subr.mxu0 %v3312
    %v3314 = vand.u32 %v82, 4294901760
    %v3315 = vsub.f32 %v82, %v3314
    %3316 = vmatpush1.msra.mxu0 %v3315
    %v3317 = vand.u32 %v85, 4294901760
    %v3318 = vsub.f32 %v85, %v3317
    %3319 = vmatprep.subr.mxu0 %v3318
    %v3320 = vand.u32 %v84, 4294901760
    %v3321 = vsub.f32 %v84, %v3320
    %3322 = vmatpush1.msra.mxu0 %v3321
    %v3323 = vand.u32 %v87, 4294901760
    %v3324 = vsub.f32 %v87, %v3323
    %3325 = vmatprep.subr.mxu0 %v3324
    %v3326 = vand.u32 %v86, 4294901760
    %v3327 = vsub.f32 %v86, %v3326
    %3328 = vmatpush1.msra.mxu0 %v3327
    %v3329 = vand.u32 %v89, 4294901760
    %v3330 = vsub.f32 %v89, %v3329
    %3331 = vmatprep.subr.mxu0 %v3330
    %v3332 = vand.u32 %v88, 4294901760
    %v3333 = vsub.f32 %v88, %v3332
    %3334 = vmatpush1.msra.mxu0 %v3333
    %v3335 = vand.u32 %v91, 4294901760
    %v3336 = vsub.f32 %v91, %v3335
    %3337 = vmatprep.subr.mxu0 %v3336
    %v3338 = vand.u32 %v90, 4294901760
    %v3339 = vsub.f32 %v90, %v3338
    %3340 = vmatpush1.msra.mxu0 %v3339
    %3341 = vmatprep.subr.mxu0 0.0
    %3342 = vmatpush1.msra.mxu0 0.0
    %3343 = vmatprep.subr.mxu0 0.0
    %3344 = vmatpush1.msra.mxu0 0.0
    %3345 = vmatprep.subr.mxu0 0.0
    %3346 = vmatpush1.msra.mxu0 0.0
    %3347 = vmatprep.subr.mxu0 0.0
    %3348 = vmatpush1.msra.mxu0 0.0
    %3349 = vmatprep.subr.mxu0 0.0
    %3350 = vmatpush1.msra.mxu0 0.0
    %3351 = vmatprep.subr.mxu0 0.0
    %3352 = vmatpush1.msra.mxu0 0.0
    %3353 = vmatprep.subr.mxu0 0.0
    %3354 = vmatpush1.msra.mxu0 0.0
    %3355 = vmatprep.subr.mxu0 0.0
    %3356 = vmatpush1.msra.mxu0 0.0
    %3357 = vmatprep.subr.mxu0 0.0
    %3358 = vmatpush1.msra.mxu0 0.0
    %3359 = vmatprep.subr.mxu0 0.0
    %3360 = vmatpush1.msra.mxu0 0.0
    %3361 = vmatprep.subr.mxu0 0.0
    %3362 = vmatpush1.msra.mxu0 0.0
    %3363 = vmatprep.subr.mxu0 0.0
    %3364 = vmatpush1.msra.mxu0 0.0
    %3365 = vmatprep.subr.mxu0 0.0
    %3366 = vmatpush1.msra.mxu0 0.0
    %3367 = vmatprep.subr.mxu0 0.0
    %3368 = vmatpush1.msra.mxu0 0.0
    %3369 = vmatprep.subr.mxu0 0.0
    %3370 = vmatpush1.msra.mxu0 0.0
    %3371 = vmatprep.subr.mxu0 0.0
    %3372 = vmatpush1.msra.mxu0 0.0
    %3373 = vmatprep.subr.mxu0 0.0
    %3374 = vmatpush1.msra.mxu0 0.0
    %3375 = vmatprep.subr.mxu0 0.0
    %3376 = vmatpush1.msra.mxu0 0.0
    %3377 = vmatprep.subr.mxu0 0.0
    %3378 = vmatpush1.msra.mxu0 0.0
    %3379 = vmatprep.subr.mxu0 0.0
    %3380 = vmatpush1.msra.mxu0 0.0
    %3381 = vmatprep.subr.mxu0 0.0
    %3382 = vmatpush1.msra.mxu0 0.0
    %3383 = vmatprep.subr.mxu0 0.0
    %3384 = vmatpush1.msra.mxu0 0.0
    %3385 = vmatprep.subr.mxu0 0.0
    %3386 = vmatpush1.msra.mxu0 0.0
    %3387 = vmatprep.subr.mxu0 0.0
    %3388 = vmatpush1.msra.mxu0 0.0
    %3389 = vmatprep.mubr.f32.mxu0 0.0
    %v3390 = vand.u32 %v3047, 4294901760
    %v3391 = vsub.f32 %v3047, %v3390
    %3392 = vmatmul.mubr.f32.gmra.mrb[0].mxu0 %v3391
    %v3393 = vpop.f32.mrb[0].mxu0
    %v3394 = vadd.f32 %v3289, %v3393
    %v3395 = vpop.f32.mrb[0].mxu0
    %v3396 = vadd.f32 %v3291, %v3395
    %3397 = vdwg.mxu0
    %v3398 = vand.u32 %v77, 4294901760
    %3399 = vmatprep.subr.mxu0 %v3398
    %v3400 = vand.u32 %v76, 4294901760
    %3401 = vmatpush1.msra.mxu0 %v3400
    %v3402 = vand.u32 %v79, 4294901760
    %3403 = vmatprep.subr.mxu0 %v3402
    %v3404 = vand.u32 %v78, 4294901760
    %3405 = vmatpush1.msra.mxu0 %v3404
    %v3406 = vand.u32 %v81, 4294901760
    %3407 = vmatprep.subr.mxu0 %v3406
    %v3408 = vand.u32 %v80, 4294901760
    %3409 = vmatpush1.msra.mxu0 %v3408
    %v3410 = vand.u32 %v83, 4294901760
    %3411 = vmatprep.subr.mxu0 %v3410
    %v3412 = vand.u32 %v82, 4294901760
    %3413 = vmatpush1.msra.mxu0 %v3412
    %v3414 = vand.u32 %v85, 4294901760
    %3415 = vmatprep.subr.mxu0 %v3414
    %v3416 = vand.u32 %v84, 4294901760
    %3417 = vmatpush1.msra.mxu0 %v3416
    %v3418 = vand.u32 %v87, 4294901760
    %3419 = vmatprep.subr.mxu0 %v3418
    %v3420 = vand.u32 %v86, 4294901760
    %3421 = vmatpush1.msra.mxu0 %v3420
    %v3422 = vand.u32 %v89, 4294901760
    %3423 = vmatprep.subr.mxu0 %v3422
    %v3424 = vand.u32 %v88, 4294901760
    %3425 = vmatpush1.msra.mxu0 %v3424
    %v3426 = vand.u32 %v91, 4294901760
    %3427 = vmatprep.subr.mxu0 %v3426
    %v3428 = vand.u32 %v90, 4294901760
    %3429 = vmatpush1.msra.mxu0 %v3428
    %3430 = vmatprep.subr.mxu0 0.0
    %3431 = vmatpush1.msra.mxu0 0.0
    %3432 = vmatprep.subr.mxu0 0.0
    %3433 = vmatpush1.msra.mxu0 0.0
    %3434 = vmatprep.subr.mxu0 0.0
    %3435 = vmatpush1.msra.mxu0 0.0
    %3436 = vmatprep.subr.mxu0 0.0
    %3437 = vmatpush1.msra.mxu0 0.0
    %3438 = vmatprep.subr.mxu0 0.0
    %3439 = vmatpush1.msra.mxu0 0.0
    %3440 = vmatprep.subr.mxu0 0.0
    %3441 = vmatpush1.msra.mxu0 0.0
    %3442 = vmatprep.subr.mxu0 0.0
    %3443 = vmatpush1.msra.mxu0 0.0
    %3444 = vmatprep.subr.mxu0 0.0
    %3445 = vmatpush1.msra.mxu0 0.0
    %3446 = vmatprep.subr.mxu0 0.0
    %3447 = vmatpush1.msra.mxu0 0.0
    %3448 = vmatprep.subr.mxu0 0.0
    %3449 = vmatpush1.msra.mxu0 0.0
    %3450 = vmatprep.subr.mxu0 0.0
    %3451 = vmatpush1.msra.mxu0 0.0
    %3452 = vmatprep.subr.mxu0 0.0
    %3453 = vmatpush1.msra.mxu0 0.0
    %3454 = vmatprep.subr.mxu0 0.0
    %3455 = vmatpush1.msra.mxu0 0.0
    %3456 = vmatprep.subr.mxu0 0.0
    %3457 = vmatpush1.msra.mxu0 0.0
    %3458 = vmatprep.subr.mxu0 0.0
    %3459 = vmatpush1.msra.mxu0 0.0
    %3460 = vmatprep.subr.mxu0 0.0
    %3461 = vmatpush1.msra.mxu0 0.0
    %3462 = vmatprep.subr.mxu0 0.0
    %3463 = vmatpush1.msra.mxu0 0.0
    %3464 = vmatprep.subr.mxu0 0.0
    %3465 = vmatpush1.msra.mxu0 0.0
    %3466 = vmatprep.subr.mxu0 0.0
    %3467 = vmatpush1.msra.mxu0 0.0
    %3468 = vmatprep.subr.mxu0 0.0
    %3469 = vmatpush1.msra.mxu0 0.0
    %3470 = vmatprep.subr.mxu0 0.0
    %3471 = vmatpush1.msra.mxu0 0.0
    %3472 = vmatprep.subr.mxu0 0.0
    %3473 = vmatpush1.msra.mxu0 0.0
    %3474 = vmatprep.subr.mxu0 0.0
    %3475 = vmatpush1.msra.mxu0 0.0
    %3476 = vmatprep.subr.mxu0 0.0
    %3477 = vmatpush1.msra.mxu0 0.0
    %3478 = vmatprep.mubr.f32.mxu0 0.0
    %v3479 = vand.u32 %v3047, 4294901760
    %v3480 = vsub.f32 %v3047, %v3479
    %v3481 = vand.u32 %v3480, 4294901760
    %3482 = vmatmul.mubr.f32.gmra.mrb[0].mxu0 %v3481
    %v3483 = vpop.f32.mrb[0].mxu0
    %v3484 = vadd.f32 %v3394, %v3483
    %v3485 = vpop.f32.mrb[0].mxu0
    %v3486 = vadd.f32 %v3396, %v3485
    %3487 = vdwg.mxu0
    %v3488 = vand.u32 %v77, 4294901760
    %v3489 = vsub.f32 %v77, %v3488
    %v3490 = vand.u32 %v3489, 4294901760
    %3491 = vmatprep.subr.mxu0 %v3490
    %v3492 = vand.u32 %v76, 4294901760
    %v3493 = vsub.f32 %v76, %v3492
    %v3494 = vand.u32 %v3493, 4294901760
    %3495 = vmatpush1.msra.mxu0 %v3494
    %v3496 = vand.u32 %v79, 4294901760
    %v3497 = vsub.f32 %v79, %v3496
    %v3498 = vand.u32 %v3497, 4294901760
    %3499 = vmatprep.subr.mxu0 %v3498
    %v3500 = vand.u32 %v78, 4294901760
    %v3501 = vsub.f32 %v78, %v3500
    %v3502 = vand.u32 %v3501, 4294901760
    %3503 = vmatpush1.msra.mxu0 %v3502
    %v3504 = vand.u32 %v81, 4294901760
    %v3505 = vsub.f32 %v81, %v3504
    %v3506 = vand.u32 %v3505, 4294901760
    %3507 = vmatprep.subr.mxu0 %v3506
    %v3508 = vand.u32 %v80, 4294901760
    %v3509 = vsub.f32 %v80, %v3508
    %v3510 = vand.u32 %v3509, 4294901760
    %3511 = vmatpush1.msra.mxu0 %v3510
    %v3512 = vand.u32 %v83, 4294901760
    %v3513 = vsub.f32 %v83, %v3512
    %v3514 = vand.u32 %v3513, 4294901760
    %3515 = vmatprep.subr.mxu0 %v3514
    %v3516 = vand.u32 %v82, 4294901760
    %v3517 = vsub.f32 %v82, %v3516
    %v3518 = vand.u32 %v3517, 4294901760
    %3519 = vmatpush1.msra.mxu0 %v3518
    %v3520 = vand.u32 %v85, 4294901760
    %v3521 = vsub.f32 %v85, %v3520
    %v3522 = vand.u32 %v3521, 4294901760
    %3523 = vmatprep.subr.mxu0 %v3522
    %v3524 = vand.u32 %v84, 4294901760
    %v3525 = vsub.f32 %v84, %v3524
    %v3526 = vand.u32 %v3525, 4294901760
    %3527 = vmatpush1.msra.mxu0 %v3526
    %v3528 = vand.u32 %v87, 4294901760
    %v3529 = vsub.f32 %v87, %v3528
    %v3530 = vand.u32 %v3529, 4294901760
    %3531 = vmatprep.subr.mxu0 %v3530
    %v3532 = vand.u32 %v86, 4294901760
    %v3533 = vsub.f32 %v86, %v3532
    %v3534 = vand.u32 %v3533, 4294901760
    %3535 = vmatpush1.msra.mxu0 %v3534
    %v3536 = vand.u32 %v89, 4294901760
    %v3537 = vsub.f32 %v89, %v3536
    %v3538 = vand.u32 %v3537, 4294901760
    %3539 = vmatprep.subr.mxu0 %v3538
    %v3540 = vand.u32 %v88, 4294901760
    %v3541 = vsub.f32 %v88, %v3540
    %v3542 = vand.u32 %v3541, 4294901760
    %3543 = vmatpush1.msra.mxu0 %v3542
    %v3544 = vand.u32 %v91, 4294901760
    %v3545 = vsub.f32 %v91, %v3544
    %v3546 = vand.u32 %v3545, 4294901760
    %3547 = vmatprep.subr.mxu0 %v3546
    %v3548 = vand.u32 %v90, 4294901760
    %v3549 = vsub.f32 %v90, %v3548
    %v3550 = vand.u32 %v3549, 4294901760
    %3551 = vmatpush1.msra.mxu0 %v3550
    %3552 = vmatprep.subr.mxu0 0.0
    %3553 = vmatpush1.msra.mxu0 0.0
    %3554 = vmatprep.subr.mxu0 0.0
    %3555 = vmatpush1.msra.mxu0 0.0
    %3556 = vmatprep.subr.mxu0 0.0
    %3557 = vmatpush1.msra.mxu0 0.0
    %3558 = vmatprep.subr.mxu0 0.0
    %3559 = vmatpush1.msra.mxu0 0.0
    %3560 = vmatprep.subr.mxu0 0.0
    %3561 = vmatpush1.msra.mxu0 0.0
    %3562 = vmatprep.subr.mxu0 0.0
    %3563 = vmatpush1.msra.mxu0 0.0
    %3564 = vmatprep.subr.mxu0 0.0
    %3565 = vmatpush1.msra.mxu0 0.0
    %3566 = vmatprep.subr.mxu0 0.0
    %3567 = vmatpush1.msra.mxu0 0.0
    %3568 = vmatprep.subr.mxu0 0.0
    %3569 = vmatpush1.msra.mxu0 0.0
    %3570 = vmatprep.subr.mxu0 0.0
    %3571 = vmatpush1.msra.mxu0 0.0
    %3572 = vmatprep.subr.mxu0 0.0
    %3573 = vmatpush1.msra.mxu0 0.0
    %3574 = vmatprep.subr.mxu0 0.0
    %3575 = vmatpush1.msra.mxu0 0.0
    %3576 = vmatprep.subr.mxu0 0.0
    %3577 = vmatpush1.msra.mxu0 0.0
    %3578 = vmatprep.subr.mxu0 0.0
    %3579 = vmatpush1.msra.mxu0 0.0
    %3580 = vmatprep.subr.mxu0 0.0
    %3581 = vmatpush1.msra.mxu0 0.0
    %3582 = vmatprep.subr.mxu0 0.0
    %3583 = vmatpush1.msra.mxu0 0.0
    %3584 = vmatprep.subr.mxu0 0.0
    %3585 = vmatpush1.msra.mxu0 0.0
    %3586 = vmatprep.subr.mxu0 0.0
    %3587 = vmatpush1.msra.mxu0 0.0
    %3588 = vmatprep.subr.mxu0 0.0
    %3589 = vmatpush1.msra.mxu0 0.0
    %3590 = vmatprep.subr.mxu0 0.0
    %3591 = vmatpush1.msra.mxu0 0.0
    %3592 = vmatprep.subr.mxu0 0.0
    %3593 = vmatpush1.msra.mxu0 0.0
    %3594 = vmatprep.subr.mxu0 0.0
    %3595 = vmatpush1.msra.mxu0 0.0
    %3596 = vmatprep.subr.mxu0 0.0
    %3597 = vmatpush1.msra.mxu0 0.0
    %3598 = vmatprep.subr.mxu0 0.0
    %3599 = vmatpush1.msra.mxu0 0.0
    %3600 = vmatprep.mubr.f32.mxu0 0.0
    %v3601 = vand.u32 %v3047, 4294901760
    %3602 = vmatmul.mubr.f32.gmra.mrb[0].mxu0 %v3601
    %v3603 = vpop.f32.mrb[0].mxu0
    %v3604 = vadd.f32 %v3484, %v3603
    %v3605 = vpop.f32.mrb[0].mxu0
    %v3606 = vadd.f32 %v3486, %v3605
    %3607 = vdwg.mxu0
    %v3608 = vand.u32 %v77, 4294901760
    %3609 = vmatprep.subr.mxu0 %v3608
    %v3610 = vand.u32 %v76, 4294901760
    %3611 = vmatpush1.msra.mxu0 %v3610
    %v3612 = vand.u32 %v79, 4294901760
    %3613 = vmatprep.subr.mxu0 %v3612
    %v3614 = vand.u32 %v78, 4294901760
    %3615 = vmatpush1.msra.mxu0 %v3614
    %v3616 = vand.u32 %v81, 4294901760
    %3617 = vmatprep.subr.mxu0 %v3616
    %v3618 = vand.u32 %v80, 4294901760
    %3619 = vmatpush1.msra.mxu0 %v3618
    %v3620 = vand.u32 %v83, 4294901760
    %3621 = vmatprep.subr.mxu0 %v3620
    %v3622 = vand.u32 %v82, 4294901760
    %3623 = vmatpush1.msra.mxu0 %v3622
    %v3624 = vand.u32 %v85, 4294901760
    %3625 = vmatprep.subr.mxu0 %v3624
    %v3626 = vand.u32 %v84, 4294901760
    %3627 = vmatpush1.msra.mxu0 %v3626
    %v3628 = vand.u32 %v87, 4294901760
    %3629 = vmatprep.subr.mxu0 %v3628
    %v3630 = vand.u32 %v86, 4294901760
    %3631 = vmatpush1.msra.mxu0 %v3630
    %v3632 = vand.u32 %v89, 4294901760
    %3633 = vmatprep.subr.mxu0 %v3632
    %v3634 = vand.u32 %v88, 4294901760
    %3635 = vmatpush1.msra.mxu0 %v3634
    %v3636 = vand.u32 %v91, 4294901760
    %3637 = vmatprep.subr.mxu0 %v3636
    %v3638 = vand.u32 %v90, 4294901760
    %3639 = vmatpush1.msra.mxu0 %v3638
    %3640 = vmatprep.subr.mxu0 0.0
    %3641 = vmatpush1.msra.mxu0 0.0
    %3642 = vmatprep.subr.mxu0 0.0
    %3643 = vmatpush1.msra.mxu0 0.0
    %3644 = vmatprep.subr.mxu0 0.0
    %3645 = vmatpush1.msra.mxu0 0.0
    %3646 = vmatprep.subr.mxu0 0.0
    %3647 = vmatpush1.msra.mxu0 0.0
    %3648 = vmatprep.subr.mxu0 0.0
    %3649 = vmatpush1.msra.mxu0 0.0
    %3650 = vmatprep.subr.mxu0 0.0
    %3651 = vmatpush1.msra.mxu0 0.0
    %3652 = vmatprep.subr.mxu0 0.0
    %3653 = vmatpush1.msra.mxu0 0.0
    %3654 = vmatprep.subr.mxu0 0.0
    %3655 = vmatpush1.msra.mxu0 0.0
    %3656 = vmatprep.subr.mxu0 0.0
    %3657 = vmatpush1.msra.mxu0 0.0
    %3658 = vmatprep.subr.mxu0 0.0
    %3659 = vmatpush1.msra.mxu0 0.0
    %3660 = vmatprep.subr.mxu0 0.0
    %3661 = vmatpush1.msra.mxu0 0.0
    %3662 = vmatprep.subr.mxu0 0.0
    %3663 = vmatpush1.msra.mxu0 0.0
    %3664 = vmatprep.subr.mxu0 0.0
    %3665 = vmatpush1.msra.mxu0 0.0
    %3666 = vmatprep.subr.mxu0 0.0
    %3667 = vmatpush1.msra.mxu0 0.0
    %3668 = vmatprep.subr.mxu0 0.0
    %3669 = vmatpush1.msra.mxu0 0.0
    %3670 = vmatprep.subr.mxu0 0.0
    %3671 = vmatpush1.msra.mxu0 0.0
    %3672 = vmatprep.subr.mxu0 0.0
    %3673 = vmatpush1.msra.mxu0 0.0
    %3674 = vmatprep.subr.mxu0 0.0
    %3675 = vmatpush1.msra.mxu0 0.0
    %3676 = vmatprep.subr.mxu0 0.0
    %3677 = vmatpush1.msra.mxu0 0.0
    %3678 = vmatprep.subr.mxu0 0.0
    %3679 = vmatpush1.msra.mxu0 0.0
    %3680 = vmatprep.subr.mxu0 0.0
    %3681 = vmatpush1.msra.mxu0 0.0
    %3682 = vmatprep.subr.mxu0 0.0
    %3683 = vmatpush1.msra.mxu0 0.0
    %3684 = vmatprep.subr.mxu0 0.0
    %3685 = vmatpush1.msra.mxu0 0.0
    %3686 = vmatprep.subr.mxu0 0.0
    %3687 = vmatpush1.msra.mxu0 0.0
    %3688 = vmatprep.mubr.f32.mxu0 0.0
    %v3689 = vand.u32 %v3047, 4294901760
    %3690 = vmatmul.mubr.f32.gmra.mrb[0].mxu0 %v3689
    %v3691 = vpop.f32.mrb[0].mxu0
    %v3692 = vadd.f32 %v3604, %v3691
    %v3693 = vpop.f32.mrb[0].mxu0
    %v3694 = vadd.f32 %v3606, %v3693
    %3695 = vdwg.mxu0
    %s3696 = scalar_lea.vmem [#allocation3], 8
    %v3697 = vld [vmem:[%s3696] sm:$0x3]
    %s3698 = scalar_lea.vmem [#allocation6], 6
    %v3699 = vld [vmem:[%s3698] sm:$0x3]
    %v3700 = vadd.f32 %v3697, %v3692
    %v3701 = vxor.u32 %v3700, 2147483648
    %v3702 = vmul.f32 %v3701, 1.442695
    %v3703 = vpow.pop %v3702
    %v3704 = vadd.f32 %v3703, 1.0
    %v3705 = vrcp.pop %v3704
    %v3706 = vmul.f32 1.0, %v3705
    %3708 = vrot.lane.b32.xlu0 %v3692, 64
    %v3709 = vpop.permute.xlu0 %3708
    %v3711 = vmul.f32 %v3706, %v3709
    %3713 = vrot.lane.b32.xlu0 %v3711, 64
    %v3714 = vpop.permute.xlu0 %3713
    %v3716 = vadd.f32 %v3697, %v3714
    %v3717 = vtanh.pop %v3716
    %v3718 = vsub.f32 1.0, %v3706
    %3720 = vrot.lane.b32.xlu0 %v3717, 96
    %v3721 = vpop.permute.xlu0 %3720
    %v3723 = vmul.f32 %v3718, %v3721
    %3724 = vrot.lane.b32.xlu0 %v3045, 32
    %v3725 = vpop.permute.xlu0 %3724
    %v3727 = vmul.f32 %v3706, %v3725
    %v3728 = vadd.f32 %v3723, %v3727
    %3729 = vrot.lane.b32.xlu0 %v3692, 32
    %v3730 = vpop.permute.xlu0 %3729
    %v3732 = vadd.f32 %v3699, %v3730
    %v3733 = vxor.u32 %v3732, 2147483648
    %v3734 = vmul.f32 %v3733, 1.442695
    %v3735 = vpow.pop %v3734
    %v3736 = vadd.f32 %v3735, 1.0
    %v3737 = vrcp.pop %v3736
    %v3738 = vmul.f32 1.0, %v3737
    %3740 = vrot.lane.b32.xlu0 %v3694, 32
    %v3741 = vpop.permute.xlu0 %3740
    %v3743 = vadd.f32 %v3699, %v3741
    %v3744 = vxor.u32 %v3743, 2147483648
    %v3745 = vmul.f32 %v3744, 1.442695
    %v3746 = vpow.pop %v3745
    %v3747 = vadd.f32 %v3746, 1.0
    %v3748 = vrcp.pop %v3747
    %v3749 = vmul.f32 1.0, %v3748
    %3750 = vrot.lane.b32.xlu0 %v3694, 96
    %v3751 = vpop.permute.xlu0 %3750
    %v3753 = vmul.f32 %v3738, %v3751
    %3755 = vrot.lane.b32.xlu0 %v3753, 64
    %v3756 = vpop.permute.xlu0 %3755
    %v3758 = vadd.f32 %v3699, %v3756
    %v3759 = vtanh.pop %v3758
    %v3760 = vsub.f32 1.0, %v3749
    %3762 = vrot.lane.b32.xlu0 %v3759, 96
    %v3763 = vpop.permute.xlu0 %3762
    %v3765 = vmul.f32 %v3760, %v3763
    %v3766 = vmul.f32 %v3749, %v3045
    %v3767 = vadd.f32 %v3765, %v3766
    %3769 = vrot.lane.b32.xlu0 %v3728, 96
    %v3770 = vpop.permute.xlu0 %3769
    %s3772 = scalar_lea.vmem [#allocation9], 8
    %3773 = vst.msk [vmem:[%s3772] sm:$0x3] %vm831, %v3770
    %3775 = vrot.lane.b32.xlu0 %v3767, 96
    %v3776 = vpop.permute.xlu0 %3775
    %s3778 = scalar_lea.vmem [#allocation10], 6
    %3779 = vst.msk [vmem:[%s3778] sm:$0x3] %vm831, %v3776
    %v3780 = vsel %vm839, %v3770, %v3767
    %v3782 = vsel %vm105, %v3780, 0
    %v3784 = vand.u32 %v77, 4294901760
    %3785 = vmatprep.subr.mxu0 %v3784
    %v3786 = vand.u32 %v76, 4294901760
    %3787 = vmatpush1.msra.mxu0 %v3786
    %v3788 = vand.u32 %v79, 4294901760
    %3789 = vmatprep.subr.mxu0 %v3788
    %v3790 = vand.u32 %v78, 4294901760
    %3791 = vmatpush1.msra.mxu0 %v3790
    %v3792 = vand.u32 %v81, 4294901760
    %3793 = vmatprep.subr.mxu0 %v3792
    %v3794 = vand.u32 %v80, 4294901760
    %3795 = vmatpush1.msra.mxu0 %v3794
    %v3796 = vand.u32 %v83, 4294901760
    %3797 = vmatprep.subr.mxu0 %v3796
    %v3798 = vand.u32 %v82, 4294901760
    %3799 = vmatpush1.msra.mxu0 %v3798
    %v3800 = vand.u32 %v85, 4294901760
    %3801 = vmatprep.subr.mxu0 %v3800
    %v3802 = vand.u32 %v84, 4294901760
    %3803 = vmatpush1.msra.mxu0 %v3802
    %v3804 = vand.u32 %v87, 4294901760
    %3805 = vmatprep.subr.mxu0 %v3804
    %v3806 = vand.u32 %v86, 4294901760
    %3807 = vmatpush1.msra.mxu0 %v3806
    %v3808 = vand.u32 %v89, 4294901760
    %3809 = vmatprep.subr.mxu0 %v3808
    %v3810 = vand.u32 %v88, 4294901760
    %3811 = vmatpush1.msra.mxu0 %v3810
    %v3812 = vand.u32 %v91, 4294901760
    %3813 = vmatprep.subr.mxu0 %v3812
    %v3814 = vand.u32 %v90, 4294901760
    %3815 = vmatpush1.msra.mxu0 %v3814
    %3816 = vmatprep.subr.mxu0 0.0
    %3817 = vmatpush1.msra.mxu0 0.0
    %3818 = vmatprep.subr.mxu0 0.0
    %3819 = vmatpush1.msra.mxu0 0.0
    %3820 = vmatprep.subr.mxu0 0.0
    %3821 = vmatpush1.msra.mxu0 0.0
    %3822 = vmatprep.subr.mxu0 0.0
    %3823 = vmatpush1.msra.mxu0 0.0
    %3824 = vmatprep.subr.mxu0 0.0
    %3825 = vmatpush1.msra.mxu0 0.0
    %3826 = vmatprep.subr.mxu0 0.0
    %3827 = vmatpush1.msra.mxu0 0.0
    %3828 = vmatprep.subr.mxu0 0.0
    %3829 = vmatpush1.msra.mxu0 0.0
    %3830 = vmatprep.subr.mxu0 0.0
    %3831 = vmatpush1.msra.mxu0 0.0
    %3832 = vmatprep.subr.mxu0 0.0
    %3833 = vmatpush1.msra.mxu0 0.0
    %3834 = vmatprep.subr.mxu0 0.0
    %3835 = vmatpush1.msra.mxu0 0.0
    %3836 = vmatprep.subr.mxu0 0.0
    %3837 = vmatpush1.msra.mxu0 0.0
    %3838 = vmatprep.subr.mxu0 0.0
    %3839 = vmatpush1.msra.mxu0 0.0
    %3840 = vmatprep.subr.mxu0 0.0
    %3841 = vmatpush1.msra.mxu0 0.0
    %3842 = vmatprep.subr.mxu0 0.0
    %3843 = vmatpush1.msra.mxu0 0.0
    %3844 = vmatprep.subr.mxu0 0.0
    %3845 = vmatpush1.msra.mxu0 0.0
    %3846 = vmatprep.subr.mxu0 0.0
    %3847 = vmatpush1.msra.mxu0 0.0
    %3848 = vmatprep.subr.mxu0 0.0
    %3849 = vmatpush1.msra.mxu0 0.0
    %3850 = vmatprep.subr.mxu0 0.0
    %3851 = vmatpush1.msra.mxu0 0.0
    %3852 = vmatprep.subr.mxu0 0.0
    %3853 = vmatpush1.msra.mxu0 0.0
    %3854 = vmatprep.subr.mxu0 0.0
    %3855 = vmatpush1.msra.mxu0 0.0
    %3856 = vmatprep.subr.mxu0 0.0
    %3857 = vmatpush1.msra.mxu0 0.0
    %3858 = vmatprep.subr.mxu0 0.0
    %3859 = vmatpush1.msra.mxu0 0.0
    %3860 = vmatprep.subr.mxu0 0.0
    %3861 = vmatpush1.msra.mxu0 0.0
    %3862 = vmatprep.subr.mxu0 0.0
    %3863 = vmatpush1.msra.mxu0 0.0
    %3864 = vmatprep.mubr.f32.mxu0 0.0
    %v3865 = vand.u32 %v3782, 4294901760
    %v3866 = vsub.f32 %v3782, %v3865
    %v3867 = vand.u32 %v3866, 4294901760
    %v3868 = vsub.f32 %v3866, %v3867
    %v3869 = vand.u32 %v3868, 4294901760
    %3870 = vmatmul.mubr.f32.gmra.mrb[0].mxu0 %v3869
    %v3871 = vpop.f32.mrb[0].mxu0
    %v3872 = vadd.f32 %v98, %v3871
    %v3873 = vpop.f32.mrb[0].mxu0
    %v3874 = vadd.f32 %v102, %v3873
    %3875 = vdwg.mxu0
    %v3876 = vand.u32 %v77, 4294901760
    %v3877 = vsub.f32 %v77, %v3876
    %v3878 = vand.u32 %v3877, 4294901760
    %v3879 = vsub.f32 %v3877, %v3878
    %v3880 = vand.u32 %v3879, 4294901760
    %3881 = vmatprep.subr.mxu0 %v3880
    %v3882 = vand.u32 %v76, 4294901760
    %v3883 = vsub.f32 %v76, %v3882
    %v3884 = vand.u32 %v3883, 4294901760
    %v3885 = vsub.f32 %v3883, %v3884
    %v3886 = vand.u32 %v3885, 4294901760
    %3887 = vmatpush1.msra.mxu0 %v3886
    %v3888 = vand.u32 %v79, 4294901760
    %v3889 = vsub.f32 %v79, %v3888
    %v3890 = vand.u32 %v3889, 4294901760
    %v3891 = vsub.f32 %v3889, %v3890
    %v3892 = vand.u32 %v3891, 4294901760
    %3893 = vmatprep.subr.mxu0 %v3892
    %v3894 = vand.u32 %v78, 4294901760
    %v3895 = vsub.f32 %v78, %v3894
    %v3896 = vand.u32 %v3895, 4294901760
    %v3897 = vsub.f32 %v3895, %v3896
    %v3898 = vand.u32 %v3897, 4294901760
    %3899 = vmatpush1.msra.mxu0 %v3898
    %v3900 = vand.u32 %v81, 4294901760
    %v3901 = vsub.f32 %v81, %v3900
    %v3902 = vand.u32 %v3901, 4294901760
    %v3903 = vsub.f32 %v3901, %v3902
    %v3904 = vand.u32 %v3903, 4294901760
    %3905 = vmatprep.subr.mxu0 %v3904
    %v3906 = vand.u32 %v80, 4294901760
    %v3907 = vsub.f32 %v80, %v3906
    %v3908 = vand.u32 %v3907, 4294901760
    %v3909 = vsub.f32 %v3907, %v3908
    %v3910 = vand.u32 %v3909, 4294901760
    %3911 = vmatpush1.msra.mxu0 %v3910
    %v3912 = vand.u32 %v83, 4294901760
    %v3913 = vsub.f32 %v83, %v3912
    %v3914 = vand.u32 %v3913, 4294901760
    %v3915 = vsub.f32 %v3913, %v3914
    %v3916 = vand.u32 %v3915, 4294901760
    %3917 = vmatprep.subr.mxu0 %v3916
    %v3918 = vand.u32 %v82, 4294901760
    %v3919 = vsub.f32 %v82, %v3918
    %v3920 = vand.u32 %v3919, 4294901760
    %v3921 = vsub.f32 %v3919, %v3920
    %v3922 = vand.u32 %v3921, 4294901760
    %3923 = vmatpush1.msra.mxu0 %v3922
    %v3924 = vand.u32 %v85, 4294901760
    %v3925 = vsub.f32 %v85, %v3924
    %v3926 = vand.u32 %v3925, 4294901760
    %v3927 = vsub.f32 %v3925, %v3926
    %v3928 = vand.u32 %v3927, 4294901760
    %3929 = vmatprep.subr.mxu0 %v3928
    %v3930 = vand.u32 %v84, 4294901760
    %v3931 = vsub.f32 %v84, %v3930
    %v3932 = vand.u32 %v3931, 4294901760
    %v3933 = vsub.f32 %v3931, %v3932
    %v3934 = vand.u32 %v3933, 4294901760
    %3935 = vmatpush1.msra.mxu0 %v3934
    %v3936 = vand.u32 %v87, 4294901760
    %v3937 = vsub.f32 %v87, %v3936
    %v3938 = vand.u32 %v3937, 4294901760
    %v3939 = vsub.f32 %v3937, %v3938
    %v3940 = vand.u32 %v3939, 4294901760
    %3941 = vmatprep.subr.mxu0 %v3940
    %v3942 = vand.u32 %v86, 4294901760
    %v3943 = vsub.f32 %v86, %v3942
    %v3944 = vand.u32 %v3943, 4294901760
    %v3945 = vsub.f32 %v3943, %v3944
    %v3946 = vand.u32 %v3945, 4294901760
    %3947 = vmatpush1.msra.mxu0 %v3946
    %v3948 = vand.u32 %v89, 4294901760
    %v3949 = vsub.f32 %v89, %v3948
    %v3950 = vand.u32 %v3949, 4294901760
    %v3951 = vsub.f32 %v3949, %v3950
    %v3952 = vand.u32 %v3951, 4294901760
    %3953 = vmatprep.subr.mxu0 %v3952
    %v3954 = vand.u32 %v88, 4294901760
    %v3955 = vsub.f32 %v88, %v3954
    %v3956 = vand.u32 %v3955, 4294901760
    %v3957 = vsub.f32 %v3955, %v3956
    %v3958 = vand.u32 %v3957, 4294901760
    %3959 = vmatpush1.msra.mxu0 %v3958
    %v3960 = vand.u32 %v91, 4294901760
    %v3961 = vsub.f32 %v91, %v3960
    %v3962 = vand.u32 %v3961, 4294901760
    %v3963 = vsub.f32 %v3961, %v3962
    %v3964 = vand.u32 %v3963, 4294901760
    %3965 = vmatprep.subr.mxu0 %v3964
    %v3966 = vand.u32 %v90, 4294901760
    %v3967 = vsub.f32 %v90, %v3966
    %v3968 = vand.u32 %v3967, 4294901760
    %v3969 = vsub.f32 %v3967, %v3968
    %v3970 = vand.u32 %v3969, 4294901760
    %3971 = vmatpush1.msra.mxu0 %v3970
    %3972 = vmatprep.subr.mxu0 0.0
    %3973 = vmatpush1.msra.mxu0 0.0
    %3974 = vmatprep.subr.mxu0 0.0
    %3975 = vmatpush1.msra.mxu0 0.0
    %3976 = vmatprep.subr.mxu0 0.0
    %3977 = vmatpush1.msra.mxu0 0.0
    %3978 = vmatprep.subr.mxu0 0.0
    %3979 = vmatpush1.msra.mxu0 0.0
    %3980 = vmatprep.subr.mxu0 0.0
    %3981 = vmatpush1.msra.mxu0 0.0
    %3982 = vmatprep.subr.mxu0 0.0
    %3983 = vmatpush1.msra.mxu0 0.0
    %3984 = vmatprep.subr.mxu0 0.0
    %3985 = vmatpush1.msra.mxu0 0.0
    %3986 = vmatprep.subr.mxu0 0.0
    %3987 = vmatpush1.msra.mxu0 0.0
    %3988 = vmatprep.subr.mxu0 0.0
    %3989 = vmatpush1.msra.mxu0 0.0
    %3990 = vmatprep.subr.mxu0 0.0
    %3991 = vmatpush1.msra.mxu0 0.0
    %3992 = vmatprep.subr.mxu0 0.0
    %3993 = vmatpush1.msra.mxu0 0.0
    %3994 = vmatprep.subr.mxu0 0.0
    %3995 = vmatpush1.msra.mxu0 0.0
    %3996 = vmatprep.subr.mxu0 0.0
    %3997 = vmatpush1.msra.mxu0 0.0
    %3998 = vmatprep.subr.mxu0 0.0
    %3999 = vmatpush1.msra.mxu0 0.0
    %4000 = vmatprep.subr.mxu0 0.0
    %4001 = vmatpush1.msra.mxu0 0.0
    %4002 = vmatprep.subr.mxu0 0.0
    %4003 = vmatpush1.msra.mxu0 0.0
    %4004 = vmatprep.subr.mxu0 0.0
    %4005 = vmatpush1.msra.mxu0 0.0
    %4006 = vmatprep.subr.mxu0 0.0
    %4007 = vmatpush1.msra.mxu0 0.0
    %4008 = vmatprep.subr.mxu0 0.0
    %4009 = vmatpush1.msra.mxu0 0.0
    %4010 = vmatprep.subr.mxu0 0.0
    %4011 = vmatpush1.msra.mxu0 0.0
    %4012 = vmatprep.subr.mxu0 0.0
    %4013 = vmatpush1.msra.mxu0 0.0
    %4014 = vmatprep.subr.mxu0 0.0
    %4015 = vmatpush1.msra.mxu0 0.0
    %4016 = vmatprep.subr.mxu0 0.0
    %4017 = vmatpush1.msra.mxu0 0.0
    %4018 = vmatprep.subr.mxu0 0.0
    %4019 = vmatpush1.msra.mxu0 0.0
    %4020 = vmatprep.mubr.f32.mxu0 0.0
    %v4021 = vand.u32 %v3782, 4294901760
    %4022 = vmatmul.mubr.f32.gmra.mrb[0].mxu0 %v4021
    %v4023 = vpop.f32.mrb[0].mxu0
    %v4024 = vadd.f32 %v3872, %v4023
    %v4025 = vpop.f32.mrb[0].mxu0
    %v4026 = vadd.f32 %v3874, %v4025
    %4027 = vdwg.mxu0
    %v4028 = vand.u32 %v77, 4294901760
    %v4029 = vsub.f32 %v77, %v4028
    %4030 = vmatprep.subr.mxu0 %v4029
    %v4031 = vand.u32 %v76, 4294901760
    %v4032 = vsub.f32 %v76, %v4031
    %4033 = vmatpush1.msra.mxu0 %v4032
    %v4034 = vand.u32 %v79, 4294901760
    %v4035 = vsub.f32 %v79, %v4034
    %4036 = vmatprep.subr.mxu0 %v4035
    %v4037 = vand.u32 %v78, 4294901760
    %v4038 = vsub.f32 %v78, %v4037
    %4039 = vmatpush1.msra.mxu0 %v4038
    %v4040 = vand.u32 %v81, 4294901760
    %v4041 = vsub.f32 %v81, %v4040
    %4042 = vmatprep.subr.mxu0 %v4041
    %v4043 = vand.u32 %v80, 4294901760
    %v4044 = vsub.f32 %v80, %v4043
    %4045 = vmatpush1.msra.mxu0 %v4044
    %v4046 = vand.u32 %v83, 4294901760
    %v4047 = vsub.f32 %v83, %v4046
    %4048 = vmatprep.subr.mxu0 %v4047
    %v4049 = vand.u32 %v82, 4294901760
    %v4050 = vsub.f32 %v82, %v4049
    %4051 = vmatpush1.msra.mxu0 %v4050
    %v4052 = vand.u32 %v85, 4294901760
    %v4053 = vsub.f32 %v85, %v4052
    %4054 = vmatprep.subr.mxu0 %v4053
    %v4055 = vand.u32 %v84, 4294901760
    %v4056 = vsub.f32 %v84, %v4055
    %4057 = vmatpush1.msra.mxu0 %v4056
    %v4058 = vand.u32 %v87, 4294901760
    %v4059 = vsub.f32 %v87, %v4058
    %4060 = vmatprep.subr.mxu0 %v4059
    %v4061 = vand.u32 %v86, 4294901760
    %v4062 = vsub.f32 %v86, %v4061
    %4063 = vmatpush1.msra.mxu0 %v4062
    %v4064 = vand.u32 %v89, 4294901760
    %v4065 = vsub.f32 %v89, %v4064
    %4066 = vmatprep.subr.mxu0 %v4065
    %v4067 = vand.u32 %v88, 4294901760
    %v4068 = vsub.f32 %v88, %v4067
    %4069 = vmatpush1.msra.mxu0 %v4068
    %v4070 = vand.u32 %v91, 4294901760
    %v4071 = vsub.f32 %v91, %v4070
    %4072 = vmatprep.subr.mxu0 %v4071
    %v4073 = vand.u32 %v90, 4294901760
    %v4074 = vsub.f32 %v90, %v4073
    %4075 = vmatpush1.msra.mxu0 %v4074
    %4076 = vmatprep.subr.mxu0 0.0
    %4077 = vmatpush1.msra.mxu0 0.0
    %4078 = vmatprep.subr.mxu0 0.0
    %4079 = vmatpush1.msra.mxu0 0.0
    %4080 = vmatprep.subr.mxu0 0.0
    %4081 = vmatpush1.msra.mxu0 0.0
    %4082 = vmatprep.subr.mxu0 0.0
    %4083 = vmatpush1.msra.mxu0 0.0
    %4084 = vmatprep.subr.mxu0 0.0
    %4085 = vmatpush1.msra.mxu0 0.0
    %4086 = vmatprep.subr.mxu0 0.0
    %4087 = vmatpush1.msra.mxu0 0.0
    %4088 = vmatprep.subr.mxu0 0.0
    %4089 = vmatpush1.msra.mxu0 0.0
    %4090 = vmatprep.subr.mxu0 0.0
    %4091 = vmatpush1.msra.mxu0 0.0
    %4092 = vmatprep.subr.mxu0 0.0
    %4093 = vmatpush1.msra.mxu0 0.0
    %4094 = vmatprep.subr.mxu0 0.0
    %4095 = vmatpush1.msra.mxu0 0.0
    %4096 = vmatprep.subr.mxu0 0.0
    %4097 = vmatpush1.msra.mxu0 0.0
    %4098 = vmatprep.subr.mxu0 0.0
    %4099 = vmatpush1.msra.mxu0 0.0
    %4100 = vmatprep.subr.mxu0 0.0
    %4101 = vmatpush1.msra.mxu0 0.0
    %4102 = vmatprep.subr.mxu0 0.0
    %4103 = vmatpush1.msra.mxu0 0.0
    %4104 = vmatprep.subr.mxu0 0.0
    %4105 = vmatpush1.msra.mxu0 0.0
    %4106 = vmatprep.subr.mxu0 0.0
    %4107 = vmatpush1.msra.mxu0 0.0
    %4108 = vmatprep.subr.mxu0 0.0
    %4109 = vmatpush1.msra.mxu0 0.0
    %4110 = vmatprep.subr.mxu0 0.0
    %4111 = vmatpush1.msra.mxu0 0.0
    %4112 = vmatprep.subr.mxu0 0.0
    %4113 = vmatpush1.msra.mxu0 0.0
    %4114 = vmatprep.subr.mxu0 0.0
    %4115 = vmatpush1.msra.mxu0 0.0
    %4116 = vmatprep.subr.mxu0 0.0
    %4117 = vmatpush1.msra.mxu0 0.0
    %4118 = vmatprep.subr.mxu0 0.0
    %4119 = vmatpush1.msra.mxu0 0.0
    %4120 = vmatprep.subr.mxu0 0.0
    %4121 = vmatpush1.msra.mxu0 0.0
    %4122 = vmatprep.subr.mxu0 0.0
    %4123 = vmatpush1.msra.mxu0 0.0
    %4124 = vmatprep.mubr.f32.mxu0 0.0
    %v4125 = vand.u32 %v3782, 4294901760
    %v4126 = vsub.f32 %v3782, %v4125
    %4127 = vmatmul.mubr.f32.gmra.mrb[0].mxu0 %v4126
    %v4128 = vpop.f32.mrb[0].mxu0
    %v4129 = vadd.f32 %v4024, %v4128
    %v4130 = vpop.f32.mrb[0].mxu0
    %v4131 = vadd.f32 %v4026, %v4130
    %4132 = vdwg.mxu0
    %v4133 = vand.u32 %v77, 4294901760
    %4134 = vmatprep.subr.mxu0 %v4133
    %v4135 = vand.u32 %v76, 4294901760
    %4136 = vmatpush1.msra.mxu0 %v4135
    %v4137 = vand.u32 %v79, 4294901760
    %4138 = vmatprep.subr.mxu0 %v4137
    %v4139 = vand.u32 %v78, 4294901760
    %4140 = vmatpush1.msra.mxu0 %v4139
    %v4141 = vand.u32 %v81, 4294901760
    %4142 = vmatprep.subr.mxu0 %v4141
    %v4143 = vand.u32 %v80, 4294901760
    %4144 = vmatpush1.msra.mxu0 %v4143
    %v4145 = vand.u32 %v83, 4294901760
    %4146 = vmatprep.subr.mxu0 %v4145
    %v4147 = vand.u32 %v82, 4294901760
    %4148 = vmatpush1.msra.mxu0 %v4147
    %v4149 = vand.u32 %v85, 4294901760
    %4150 = vmatprep.subr.mxu0 %v4149
    %v4151 = vand.u32 %v84, 4294901760
    %4152 = vmatpush1.msra.mxu0 %v4151
    %v4153 = vand.u32 %v87, 4294901760
    %4154 = vmatprep.subr.mxu0 %v4153
    %v4155 = vand.u32 %v86, 4294901760
    %4156 = vmatpush1.msra.mxu0 %v4155
    %v4157 = vand.u32 %v89, 4294901760
    %4158 = vmatprep.subr.mxu0 %v4157
    %v4159 = vand.u32 %v88, 4294901760
    %4160 = vmatpush1.msra.mxu0 %v4159
    %v4161 = vand.u32 %v91, 4294901760
    %4162 = vmatprep.subr.mxu0 %v4161
    %v4163 = vand.u32 %v90, 4294901760
    %4164 = vmatpush1.msra.mxu0 %v4163
    %4165 = vmatprep.subr.mxu0 0.0
    %4166 = vmatpush1.msra.mxu0 0.0
    %4167 = vmatprep.subr.mxu0 0.0
    %4168 = vmatpush1.msra.mxu0 0.0
    %4169 = vmatprep.subr.mxu0 0.0
    %4170 = vmatpush1.msra.mxu0 0.0
    %4171 = vmatprep.subr.mxu0 0.0
    %4172 = vmatpush1.msra.mxu0 0.0
    %4173 = vmatprep.subr.mxu0 0.0
    %4174 = vmatpush1.msra.mxu0 0.0
    %4175 = vmatprep.subr.mxu0 0.0
    %4176 = vmatpush1.msra.mxu0 0.0
    %4177 = vmatprep.subr.mxu0 0.0
    %4178 = vmatpush1.msra.mxu0 0.0
    %4179 = vmatprep.subr.mxu0 0.0
    %4180 = vmatpush1.msra.mxu0 0.0
    %4181 = vmatprep.subr.mxu0 0.0
    %4182 = vmatpush1.msra.mxu0 0.0
    %4183 = vmatprep.subr.mxu0 0.0
    %4184 = vmatpush1.msra.mxu0 0.0
    %4185 = vmatprep.subr.mxu0 0.0
    %4186 = vmatpush1.msra.mxu0 0.0
    %4187 = vmatprep.subr.mxu0 0.0
    %4188 = vmatpush1.msra.mxu0 0.0
    %4189 = vmatprep.subr.mxu0 0.0
    %4190 = vmatpush1.msra.mxu0 0.0
    %4191 = vmatprep.subr.mxu0 0.0
    %4192 = vmatpush1.msra.mxu0 0.0
    %4193 = vmatprep.subr.mxu0 0.0
    %4194 = vmatpush1.msra.mxu0 0.0
    %4195 = vmatprep.subr.mxu0 0.0
    %4196 = vmatpush1.msra.mxu0 0.0
    %4197 = vmatprep.subr.mxu0 0.0
    %4198 = vmatpush1.msra.mxu0 0.0
    %4199 = vmatprep.subr.mxu0 0.0
    %4200 = vmatpush1.msra.mxu0 0.0
    %4201 = vmatprep.subr.mxu0 0.0
    %4202 = vmatpush1.msra.mxu0 0.0
    %4203 = vmatprep.subr.mxu0 0.0
    %4204 = vmatpush1.msra.mxu0 0.0
    %4205 = vmatprep.subr.mxu0 0.0
    %4206 = vmatpush1.msra.mxu0 0.0
    %4207 = vmatprep.subr.mxu0 0.0
    %4208 = vmatpush1.msra.mxu0 0.0
    %4209 = vmatprep.subr.mxu0 0.0
    %4210 = vmatpush1.msra.mxu0 0.0
    %4211 = vmatprep.subr.mxu0 0.0
    %4212 = vmatpush1.msra.mxu0 0.0
    %4213 = vmatprep.mubr.f32.mxu0 0.0
    %v4214 = vand.u32 %v3782, 4294901760
    %v4215 = vsub.f32 %v3782, %v4214
    %v4216 = vand.u32 %v4215, 4294901760
    %4217 = vmatmul.mubr.f32.gmra.mrb[0].mxu0 %v4216
    %v4218 = vpop.f32.mrb[0].mxu0
    %v4219 = vadd.f32 %v4129, %v4218
    %v4220 = vpop.f32.mrb[0].mxu0
    %v4221 = vadd.f32 %v4131, %v4220
    %4222 = vdwg.mxu0
    %v4223 = vand.u32 %v77, 4294901760
    %v4224 = vsub.f32 %v77, %v4223
    %v4225 = vand.u32 %v4224, 4294901760
    %4226 = vmatprep.subr.mxu0 %v4225
    %v4227 = vand.u32 %v76, 4294901760
    %v4228 = vsub.f32 %v76, %v4227
    %v4229 = vand.u32 %v4228, 4294901760
    %4230 = vmatpush1.msra.mxu0 %v4229
    %v4231 = vand.u32 %v79, 4294901760
    %v4232 = vsub.f32 %v79, %v4231
    %v4233 = vand.u32 %v4232, 4294901760
    %4234 = vmatprep.subr.mxu0 %v4233
    %v4235 = vand.u32 %v78, 4294901760
    %v4236 = vsub.f32 %v78, %v4235
    %v4237 = vand.u32 %v4236, 4294901760
    %4238 = vmatpush1.msra.mxu0 %v4237
    %v4239 = vand.u32 %v81, 4294901760
    %v4240 = vsub.f32 %v81, %v4239
    %v4241 = vand.u32 %v4240, 4294901760
    %4242 = vmatprep.subr.mxu0 %v4241
    %v4243 = vand.u32 %v80, 4294901760
    %v4244 = vsub.f32 %v80, %v4243
    %v4245 = vand.u32 %v4244, 4294901760
    %4246 = vmatpush1.msra.mxu0 %v4245
    %v4247 = vand.u32 %v83, 4294901760
    %v4248 = vsub.f32 %v83, %v4247
    %v4249 = vand.u32 %v4248, 4294901760
    %4250 = vmatprep.subr.mxu0 %v4249
    %v4251 = vand.u32 %v82, 4294901760
    %v4252 = vsub.f32 %v82, %v4251
    %v4253 = vand.u32 %v4252, 4294901760
    %4254 = vmatpush1.msra.mxu0 %v4253
    %v4255 = vand.u32 %v85, 4294901760
    %v4256 = vsub.f32 %v85, %v4255
    %v4257 = vand.u32 %v4256, 4294901760
    %4258 = vmatprep.subr.mxu0 %v4257
    %v4259 = vand.u32 %v84, 4294901760
    %v4260 = vsub.f32 %v84, %v4259
    %v4261 = vand.u32 %v4260, 4294901760
    %4262 = vmatpush1.msra.mxu0 %v4261
    %v4263 = vand.u32 %v87, 4294901760
    %v4264 = vsub.f32 %v87, %v4263
    %v4265 = vand.u32 %v4264, 4294901760
    %4266 = vmatprep.subr.mxu0 %v4265
    %v4267 = vand.u32 %v86, 4294901760
    %v4268 = vsub.f32 %v86, %v4267
    %v4269 = vand.u32 %v4268, 4294901760
    %4270 = vmatpush1.msra.mxu0 %v4269
    %v4271 = vand.u32 %v89, 4294901760
    %v4272 = vsub.f32 %v89, %v4271
    %v4273 = vand.u32 %v4272, 4294901760
    %4274 = vmatprep.subr.mxu0 %v4273
    %v4275 = vand.u32 %v88, 4294901760
    %v4276 = vsub.f32 %v88, %v4275
    %v4277 = vand.u32 %v4276, 4294901760
    %4278 = vmatpush1.msra.mxu0 %v4277
    %v4279 = vand.u32 %v91, 4294901760
    %v4280 = vsub.f32 %v91, %v4279
    %v4281 = vand.u32 %v4280, 4294901760
    %4282 = vmatprep.subr.mxu0 %v4281
    %v4283 = vand.u32 %v90, 4294901760
    %v4284 = vsub.f32 %v90, %v4283
    %v4285 = vand.u32 %v4284, 4294901760
    %4286 = vmatpush1.msra.mxu0 %v4285
    %4287 = vmatprep.subr.mxu0 0.0
    %4288 = vmatpush1.msra.mxu0 0.0
    %4289 = vmatprep.subr.mxu0 0.0
    %4290 = vmatpush1.msra.mxu0 0.0
    %4291 = vmatprep.subr.mxu0 0.0
    %4292 = vmatpush1.msra.mxu0 0.0
    %4293 = vmatprep.subr.mxu0 0.0
    %4294 = vmatpush1.msra.mxu0 0.0
    %4295 = vmatprep.subr.mxu0 0.0
    %4296 = vmatpush1.msra.mxu0 0.0
    %4297 = vmatprep.subr.mxu0 0.0
    %4298 = vmatpush1.msra.mxu0 0.0
    %4299 = vmatprep.subr.mxu0 0.0
    %4300 = vmatpush1.msra.mxu0 0.0
    %4301 = vmatprep.subr.mxu0 0.0
    %4302 = vmatpush1.msra.mxu0 0.0
    %4303 = vmatprep.subr.mxu0 0.0
    %4304 = vmatpush1.msra.mxu0 0.0
    %4305 = vmatprep.subr.mxu0 0.0
    %4306 = vmatpush1.msra.mxu0 0.0
    %4307 = vmatprep.subr.mxu0 0.0
    %4308 = vmatpush1.msra.mxu0 0.0
    %4309 = vmatprep.subr.mxu0 0.0
    %4310 = vmatpush1.msra.mxu0 0.0
    %4311 = vmatprep.subr.mxu0 0.0
    %4312 = vmatpush1.msra.mxu0 0.0
    %4313 = vmatprep.subr.mxu0 0.0
    %4314 = vmatpush1.msra.mxu0 0.0
    %4315 = vmatprep.subr.mxu0 0.0
    %4316 = vmatpush1.msra.mxu0 0.0
    %4317 = vmatprep.subr.mxu0 0.0
    %4318 = vmatpush1.msra.mxu0 0.0
    %4319 = vmatprep.subr.mxu0 0.0
    %4320 = vmatpush1.msra.mxu0 0.0
    %4321 = vmatprep.subr.mxu0 0.0
    %4322 = vmatpush1.msra.mxu0 0.0
    %4323 = vmatprep.subr.mxu0 0.0
    %4324 = vmatpush1.msra.mxu0 0.0
    %4325 = vmatprep.subr.mxu0 0.0
    %4326 = vmatpush1.msra.mxu0 0.0
    %4327 = vmatprep.subr.mxu0 0.0
    %4328 = vmatpush1.msra.mxu0 0.0
    %4329 = vmatprep.subr.mxu0 0.0
    %4330 = vmatpush1.msra.mxu0 0.0
    %4331 = vmatprep.subr.mxu0 0.0
    %4332 = vmatpush1.msra.mxu0 0.0
    %4333 = vmatprep.subr.mxu0 0.0
    %4334 = vmatpush1.msra.mxu0 0.0
    %4335 = vmatprep.mubr.f32.mxu0 0.0
    %v4336 = vand.u32 %v3782, 4294901760
    %4337 = vmatmul.mubr.f32.gmra.mrb[0].mxu0 %v4336
    %v4338 = vpop.f32.mrb[0].mxu0
    %v4339 = vadd.f32 %v4219, %v4338
    %v4340 = vpop.f32.mrb[0].mxu0
    %v4341 = vadd.f32 %v4221, %v4340
    %4342 = vdwg.mxu0
    %v4343 = vand.u32 %v77, 4294901760
    %4344 = vmatprep.subr.mxu0 %v4343
    %v4345 = vand.u32 %v76, 4294901760
    %4346 = vmatpush1.msra.mxu0 %v4345
    %v4347 = vand.u32 %v79, 4294901760
    %4348 = vmatprep.subr.mxu0 %v4347
    %v4349 = vand.u32 %v78, 4294901760
    %4350 = vmatpush1.msra.mxu0 %v4349
    %v4351 = vand.u32 %v81, 4294901760
    %4352 = vmatprep.subr.mxu0 %v4351
    %v4353 = vand.u32 %v80, 4294901760
    %4354 = vmatpush1.msra.mxu0 %v4353
    %v4355 = vand.u32 %v83, 4294901760
    %4356 = vmatprep.subr.mxu0 %v4355
    %v4357 = vand.u32 %v82, 4294901760
    %4358 = vmatpush1.msra.mxu0 %v4357
    %v4359 = vand.u32 %v85, 4294901760
    %4360 = vmatprep.subr.mxu0 %v4359
    %v4361 = vand.u32 %v84, 4294901760
    %4362 = vmatpush1.msra.mxu0 %v4361
    %v4363 = vand.u32 %v87, 4294901760
    %4364 = vmatprep.subr.mxu0 %v4363
    %v4365 = vand.u32 %v86, 4294901760
    %4366 = vmatpush1.msra.mxu0 %v4365
    %v4367 = vand.u32 %v89, 4294901760
    %4368 = vmatprep.subr.mxu0 %v4367
    %v4369 = vand.u32 %v88, 4294901760
    %4370 = vmatpush1.msra.mxu0 %v4369
    %v4371 = vand.u32 %v91, 4294901760
    %4372 = vmatprep.subr.mxu0 %v4371
    %v4373 = vand.u32 %v90, 4294901760
    %4374 = vmatpush1.msra.mxu0 %v4373
    %4375 = vmatprep.subr.mxu0 0.0
    %4376 = vmatpush1.msra.mxu0 0.0
    %4377 = vmatprep.subr.mxu0 0.0
    %4378 = vmatpush1.msra.mxu0 0.0
    %4379 = vmatprep.subr.mxu0 0.0
    %4380 = vmatpush1.msra.mxu0 0.0
    %4381 = vmatprep.subr.mxu0 0.0
    %4382 = vmatpush1.msra.mxu0 0.0
    %4383 = vmatprep.subr.mxu0 0.0
    %4384 = vmatpush1.msra.mxu0 0.0
    %4385 = vmatprep.subr.mxu0 0.0
    %4386 = vmatpush1.msra.mxu0 0.0
    %4387 = vmatprep.subr.mxu0 0.0
    %4388 = vmatpush1.msra.mxu0 0.0
    %4389 = vmatprep.subr.mxu0 0.0
    %4390 = vmatpush1.msra.mxu0 0.0
    %4391 = vmatprep.subr.mxu0 0.0
    %4392 = vmatpush1.msra.mxu0 0.0
    %4393 = vmatprep.subr.mxu0 0.0
    %4394 = vmatpush1.msra.mxu0 0.0
    %4395 = vmatprep.subr.mxu0 0.0
    %4396 = vmatpush1.msra.mxu0 0.0
    %4397 = vmatprep.subr.mxu0 0.0
    %4398 = vmatpush1.msra.mxu0 0.0
    %4399 = vmatprep.subr.mxu0 0.0
    %4400 = vmatpush1.msra.mxu0 0.0
    %4401 = vmatprep.subr.mxu0 0.0
    %4402 = vmatpush1.msra.mxu0 0.0
    %4403 = vmatprep.subr.mxu0 0.0
    %4404 = vmatpush1.msra.mxu0 0.0
    %4405 = vmatprep.subr.mxu0 0.0
    %4406 = vmatpush1.msra.mxu0 0.0
    %4407 = vmatprep.subr.mxu0 0.0
    %4408 = vmatpush1.msra.mxu0 0.0
    %4409 = vmatprep.subr.mxu0 0.0
    %4410 = vmatpush1.msra.mxu0 0.0
    %4411 = vmatprep.subr.mxu0 0.0
    %4412 = vmatpush1.msra.mxu0 0.0
    %4413 = vmatprep.subr.mxu0 0.0
    %4414 = vmatpush1.msra.mxu0 0.0
    %4415 = vmatprep.subr.mxu0 0.0
    %4416 = vmatpush1.msra.mxu0 0.0
    %4417 = vmatprep.subr.mxu0 0.0
    %4418 = vmatpush1.msra.mxu0 0.0
    %4419 = vmatprep.subr.mxu0 0.0
    %4420 = vmatpush1.msra.mxu0 0.0
    %4421 = vmatprep.subr.mxu0 0.0
    %4422 = vmatpush1.msra.mxu0 0.0
    %4423 = vmatprep.mubr.f32.mxu0 0.0
    %v4424 = vand.u32 %v3782, 4294901760
    %4425 = vmatmul.mubr.f32.gmra.mrb[0].mxu0 %v4424
    %v4426 = vpop.f32.mrb[0].mxu0
    %v4427 = vadd.f32 %v4339, %v4426
    %v4428 = vpop.f32.mrb[0].mxu0
    %v4429 = vadd.f32 %v4341, %v4428
    %4430 = vdwg.mxu0
    %s4431 = scalar_lea.vmem [#allocation3], 10
    %v4432 = vld [vmem:[%s4431] sm:$0x3]
    %s4433 = scalar_lea.vmem [#allocation6], 4
    %v4434 = vld [vmem:[%s4433] sm:$0x3]
    %v4435 = vadd.f32 %v4432, %v4427
    %v4436 = vxor.u32 %v4435, 2147483648
    %v4437 = vmul.f32 %v4436, 1.442695
    %v4438 = vpow.pop %v4437
    %v4439 = vadd.f32 %v4438, 1.0
    %v4440 = vrcp.pop %v4439
    %v4441 = vmul.f32 1.0, %v4440
    %4443 = vrot.lane.b32.xlu0 %v4427, 64
    %v4444 = vpop.permute.xlu0 %4443
    %v4446 = vmul.f32 %v4441, %v4444
    %4448 = vrot.lane.b32.xlu0 %v4446, 64
    %v4449 = vpop.permute.xlu0 %4448
    %v4451 = vadd.f32 %v4432, %v4449
    %v4452 = vtanh.pop %v4451
    %v4453 = vsub.f32 1.0, %v4441
    %4455 = vrot.lane.b32.xlu0 %v4452, 96
    %v4456 = vpop.permute.xlu0 %4455
    %v4458 = vmul.f32 %v4453, %v4456
    %4459 = vrot.lane.b32.xlu0 %v3780, 32
    %v4460 = vpop.permute.xlu0 %4459
    %v4462 = vmul.f32 %v4441, %v4460
    %v4463 = vadd.f32 %v4458, %v4462
    %4464 = vrot.lane.b32.xlu0 %v4427, 32
    %v4465 = vpop.permute.xlu0 %4464
    %v4467 = vadd.f32 %v4434, %v4465
    %v4468 = vxor.u32 %v4467, 2147483648
    %v4469 = vmul.f32 %v4468, 1.442695
    %v4470 = vpow.pop %v4469
    %v4471 = vadd.f32 %v4470, 1.0
    %v4472 = vrcp.pop %v4471
    %v4473 = vmul.f32 1.0, %v4472
    %4475 = vrot.lane.b32.xlu0 %v4429, 32
    %v4476 = vpop.permute.xlu0 %4475
    %v4478 = vadd.f32 %v4434, %v4476
    %v4479 = vxor.u32 %v4478, 2147483648
    %v4480 = vmul.f32 %v4479, 1.442695
    %v4481 = vpow.pop %v4480
    %v4482 = vadd.f32 %v4481, 1.0
    %v4483 = vrcp.pop %v4482
    %v4484 = vmul.f32 1.0, %v4483
    %4485 = vrot.lane.b32.xlu0 %v4429, 96
    %v4486 = vpop.permute.xlu0 %4485
    %v4488 = vmul.f32 %v4473, %v4486
    %4490 = vrot.lane.b32.xlu0 %v4488, 64
    %v4491 = vpop.permute.xlu0 %4490
    %v4493 = vadd.f32 %v4434, %v4491
    %v4494 = vtanh.pop %v4493
    %v4495 = vsub.f32 1.0, %v4484
    %4497 = vrot.lane.b32.xlu0 %v4494, 96
    %v4498 = vpop.permute.xlu0 %4497
    %v4500 = vmul.f32 %v4495, %v4498
    %v4501 = vmul.f32 %v4484, %v3780
    %v4502 = vadd.f32 %v4500, %v4501
    %4504 = vrot.lane.b32.xlu0 %v4463, 96
    %v4505 = vpop.permute.xlu0 %4504
    %s4507 = scalar_lea.vmem [#allocation9], 10
    %4508 = vst.msk [vmem:[%s4507] sm:$0x3] %vm831, %v4505
    %4510 = vrot.lane.b32.xlu0 %v4502, 96
    %v4511 = vpop.permute.xlu0 %4510
    %s4513 = scalar_lea.vmem [#allocation10], 4
    %4514 = vst.msk [vmem:[%s4513] sm:$0x3] %vm831, %v4511
    %v4515 = vsel %vm839, %v4505, %v4502
    %v4517 = vsel %vm105, %v4515, 0
    %v4519 = vand.u32 %v77, 4294901760
    %4520 = vmatprep.subr.mxu0 %v4519
    %v4521 = vand.u32 %v76, 4294901760
    %4522 = vmatpush1.msra.mxu0 %v4521
    %v4523 = vand.u32 %v79, 4294901760
    %4524 = vmatprep.subr.mxu0 %v4523
    %v4525 = vand.u32 %v78, 4294901760
    %4526 = vmatpush1.msra.mxu0 %v4525
    %v4527 = vand.u32 %v81, 4294901760
    %4528 = vmatprep.subr.mxu0 %v4527
    %v4529 = vand.u32 %v80, 4294901760
    %4530 = vmatpush1.msra.mxu0 %v4529
    %v4531 = vand.u32 %v83, 4294901760
    %4532 = vmatprep.subr.mxu0 %v4531
    %v4533 = vand.u32 %v82, 4294901760
    %4534 = vmatpush1.msra.mxu0 %v4533
    %v4535 = vand.u32 %v85, 4294901760
    %4536 = vmatprep.subr.mxu0 %v4535
    %v4537 = vand.u32 %v84, 4294901760
    %4538 = vmatpush1.msra.mxu0 %v4537
    %v4539 = vand.u32 %v87, 4294901760
    %4540 = vmatprep.subr.mxu0 %v4539
    %v4541 = vand.u32 %v86, 4294901760
    %4542 = vmatpush1.msra.mxu0 %v4541
    %v4543 = vand.u32 %v89, 4294901760
    %4544 = vmatprep.subr.mxu0 %v4543
    %v4545 = vand.u32 %v88, 4294901760
    %4546 = vmatpush1.msra.mxu0 %v4545
    %v4547 = vand.u32 %v91, 4294901760
    %4548 = vmatprep.subr.mxu0 %v4547
    %v4549 = vand.u32 %v90, 4294901760
    %4550 = vmatpush1.msra.mxu0 %v4549
    %4551 = vmatprep.subr.mxu0 0.0
    %4552 = vmatpush1.msra.mxu0 0.0
    %4553 = vmatprep.subr.mxu0 0.0
    %4554 = vmatpush1.msra.mxu0 0.0
    %4555 = vmatprep.subr.mxu0 0.0
    %4556 = vmatpush1.msra.mxu0 0.0
    %4557 = vmatprep.subr.mxu0 0.0
    %4558 = vmatpush1.msra.mxu0 0.0
    %4559 = vmatprep.subr.mxu0 0.0
    %4560 = vmatpush1.msra.mxu0 0.0
    %4561 = vmatprep.subr.mxu0 0.0
    %4562 = vmatpush1.msra.mxu0 0.0
    %4563 = vmatprep.subr.mxu0 0.0
    %4564 = vmatpush1.msra.mxu0 0.0
    %4565 = vmatprep.subr.mxu0 0.0
    %4566 = vmatpush1.msra.mxu0 0.0
    %4567 = vmatprep.subr.mxu0 0.0
    %4568 = vmatpush1.msra.mxu0 0.0
    %4569 = vmatprep.subr.mxu0 0.0
    %4570 = vmatpush1.msra.mxu0 0.0
    %4571 = vmatprep.subr.mxu0 0.0
    %4572 = vmatpush1.msra.mxu0 0.0
    %4573 = vmatprep.subr.mxu0 0.0
    %4574 = vmatpush1.msra.mxu0 0.0
    %4575 = vmatprep.subr.mxu0 0.0
    %4576 = vmatpush1.msra.mxu0 0.0
    %4577 = vmatprep.subr.mxu0 0.0
    %4578 = vmatpush1.msra.mxu0 0.0
    %4579 = vmatprep.subr.mxu0 0.0
    %4580 = vmatpush1.msra.mxu0 0.0
    %4581 = vmatprep.subr.mxu0 0.0
    %4582 = vmatpush1.msra.mxu0 0.0
    %4583 = vmatprep.subr.mxu0 0.0
    %4584 = vmatpush1.msra.mxu0 0.0
    %4585 = vmatprep.subr.mxu0 0.0
    %4586 = vmatpush1.msra.mxu0 0.0
    %4587 = vmatprep.subr.mxu0 0.0
    %4588 = vmatpush1.msra.mxu0 0.0
    %4589 = vmatprep.subr.mxu0 0.0
    %4590 = vmatpush1.msra.mxu0 0.0
    %4591 = vmatprep.subr.mxu0 0.0
    %4592 = vmatpush1.msra.mxu0 0.0
    %4593 = vmatprep.subr.mxu0 0.0
    %4594 = vmatpush1.msra.mxu0 0.0
    %4595 = vmatprep.subr.mxu0 0.0
    %4596 = vmatpush1.msra.mxu0 0.0
    %4597 = vmatprep.subr.mxu0 0.0
    %4598 = vmatpush1.msra.mxu0 0.0
    %4599 = vmatprep.mubr.f32.mxu0 0.0
    %v4600 = vand.u32 %v4517, 4294901760
    %v4601 = vsub.f32 %v4517, %v4600
    %v4602 = vand.u32 %v4601, 4294901760
    %v4603 = vsub.f32 %v4601, %v4602
    %v4604 = vand.u32 %v4603, 4294901760
    %4605 = vmatmul.mubr.f32.gmra.mrb[0].mxu0 %v4604
    %v4606 = vpop.f32.mrb[0].mxu0
    %v4607 = vadd.f32 %v98, %v4606
    %v4608 = vpop.f32.mrb[0].mxu0
    %v4609 = vadd.f32 %v102, %v4608
    %4610 = vdwg.mxu0
    %v4611 = vand.u32 %v77, 4294901760
    %v4612 = vsub.f32 %v77, %v4611
    %v4613 = vand.u32 %v4612, 4294901760
    %v4614 = vsub.f32 %v4612, %v4613
    %v4615 = vand.u32 %v4614, 4294901760
    %4616 = vmatprep.subr.mxu0 %v4615
    %v4617 = vand.u32 %v76, 4294901760
    %v4618 = vsub.f32 %v76, %v4617
    %v4619 = vand.u32 %v4618, 4294901760
    %v4620 = vsub.f32 %v4618, %v4619
    %v4621 = vand.u32 %v4620, 4294901760
    %4622 = vmatpush1.msra.mxu0 %v4621
    %v4623 = vand.u32 %v79, 4294901760
    %v4624 = vsub.f32 %v79, %v4623
    %v4625 = vand.u32 %v4624, 4294901760
    %v4626 = vsub.f32 %v4624, %v4625
    %v4627 = vand.u32 %v4626, 4294901760
    %4628 = vmatprep.subr.mxu0 %v4627
    %v4629 = vand.u32 %v78, 4294901760
    %v4630 = vsub.f32 %v78, %v4629
    %v4631 = vand.u32 %v4630, 4294901760
    %v4632 = vsub.f32 %v4630, %v4631
    %v4633 = vand.u32 %v4632, 4294901760
    %4634 = vmatpush1.msra.mxu0 %v4633
    %v4635 = vand.u32 %v81, 4294901760
    %v4636 = vsub.f32 %v81, %v4635
    %v4637 = vand.u32 %v4636, 4294901760
    %v4638 = vsub.f32 %v4636, %v4637
    %v4639 = vand.u32 %v4638, 4294901760
    %4640 = vmatprep.subr.mxu0 %v4639
    %v4641 = vand.u32 %v80, 4294901760
    %v4642 = vsub.f32 %v80, %v4641
    %v4643 = vand.u32 %v4642, 4294901760
    %v4644 = vsub.f32 %v4642, %v4643
    %v4645 = vand.u32 %v4644, 4294901760
    %4646 = vmatpush1.msra.mxu0 %v4645
    %v4647 = vand.u32 %v83, 4294901760
    %v4648 = vsub.f32 %v83, %v4647
    %v4649 = vand.u32 %v4648, 4294901760
    %v4650 = vsub.f32 %v4648, %v4649
    %v4651 = vand.u32 %v4650, 4294901760
    %4652 = vmatprep.subr.mxu0 %v4651
    %v4653 = vand.u32 %v82, 4294901760
    %v4654 = vsub.f32 %v82, %v4653
    %v4655 = vand.u32 %v4654, 4294901760
    %v4656 = vsub.f32 %v4654, %v4655
    %v4657 = vand.u32 %v4656, 4294901760
    %4658 = vmatpush1.msra.mxu0 %v4657
    %v4659 = vand.u32 %v85, 4294901760
    %v4660 = vsub.f32 %v85, %v4659
    %v4661 = vand.u32 %v4660, 4294901760
    %v4662 = vsub.f32 %v4660, %v4661
    %v4663 = vand.u32 %v4662, 4294901760
    %4664 = vmatprep.subr.mxu0 %v4663
    %v4665 = vand.u32 %v84, 4294901760
    %v4666 = vsub.f32 %v84, %v4665
    %v4667 = vand.u32 %v4666, 4294901760
    %v4668 = vsub.f32 %v4666, %v4667
    %v4669 = vand.u32 %v4668, 4294901760
    %4670 = vmatpush1.msra.mxu0 %v4669
    %v4671 = vand.u32 %v87, 4294901760
    %v4672 = vsub.f32 %v87, %v4671
    %v4673 = vand.u32 %v4672, 4294901760
    %v4674 = vsub.f32 %v4672, %v4673
    %v4675 = vand.u32 %v4674, 4294901760
    %4676 = vmatprep.subr.mxu0 %v4675
    %v4677 = vand.u32 %v86, 4294901760
    %v4678 = vsub.f32 %v86, %v4677
    %v4679 = vand.u32 %v4678, 4294901760
    %v4680 = vsub.f32 %v4678, %v4679
    %v4681 = vand.u32 %v4680, 4294901760
    %4682 = vmatpush1.msra.mxu0 %v4681
    %v4683 = vand.u32 %v89, 4294901760
    %v4684 = vsub.f32 %v89, %v4683
    %v4685 = vand.u32 %v4684, 4294901760
    %v4686 = vsub.f32 %v4684, %v4685
    %v4687 = vand.u32 %v4686, 4294901760
    %4688 = vmatprep.subr.mxu0 %v4687
    %v4689 = vand.u32 %v88, 4294901760
    %v4690 = vsub.f32 %v88, %v4689
    %v4691 = vand.u32 %v4690, 4294901760
    %v4692 = vsub.f32 %v4690, %v4691
    %v4693 = vand.u32 %v4692, 4294901760
    %4694 = vmatpush1.msra.mxu0 %v4693
    %v4695 = vand.u32 %v91, 4294901760
    %v4696 = vsub.f32 %v91, %v4695
    %v4697 = vand.u32 %v4696, 4294901760
    %v4698 = vsub.f32 %v4696, %v4697
    %v4699 = vand.u32 %v4698, 4294901760
    %4700 = vmatprep.subr.mxu0 %v4699
    %v4701 = vand.u32 %v90, 4294901760
    %v4702 = vsub.f32 %v90, %v4701
    %v4703 = vand.u32 %v4702, 4294901760
    %v4704 = vsub.f32 %v4702, %v4703
    %v4705 = vand.u32 %v4704, 4294901760
    %4706 = vmatpush1.msra.mxu0 %v4705
    %4707 = vmatprep.subr.mxu0 0.0
    %4708 = vmatpush1.msra.mxu0 0.0
    %4709 = vmatprep.subr.mxu0 0.0
    %4710 = vmatpush1.msra.mxu0 0.0
    %4711 = vmatprep.subr.mxu0 0.0
    %4712 = vmatpush1.msra.mxu0 0.0
    %4713 = vmatprep.subr.mxu0 0.0
    %4714 = vmatpush1.msra.mxu0 0.0
    %4715 = vmatprep.subr.mxu0 0.0
    %4716 = vmatpush1.msra.mxu0 0.0
    %4717 = vmatprep.subr.mxu0 0.0
    %4718 = vmatpush1.msra.mxu0 0.0
    %4719 = vmatprep.subr.mxu0 0.0
    %4720 = vmatpush1.msra.mxu0 0.0
    %4721 = vmatprep.subr.mxu0 0.0
    %4722 = vmatpush1.msra.mxu0 0.0
    %4723 = vmatprep.subr.mxu0 0.0
    %4724 = vmatpush1.msra.mxu0 0.0
    %4725 = vmatprep.subr.mxu0 0.0
    %4726 = vmatpush1.msra.mxu0 0.0
    %4727 = vmatprep.subr.mxu0 0.0
    %4728 = vmatpush1.msra.mxu0 0.0
    %4729 = vmatprep.subr.mxu0 0.0
    %4730 = vmatpush1.msra.mxu0 0.0
    %4731 = vmatprep.subr.mxu0 0.0
    %4732 = vmatpush1.msra.mxu0 0.0
    %4733 = vmatprep.subr.mxu0 0.0
    %4734 = vmatpush1.msra.mxu0 0.0
    %4735 = vmatprep.subr.mxu0 0.0
    %4736 = vmatpush1.msra.mxu0 0.0
    %4737 = vmatprep.subr.mxu0 0.0
    %4738 = vmatpush1.msra.mxu0 0.0
    %4739 = vmatprep.subr.mxu0 0.0
    %4740 = vmatpush1.msra.mxu0 0.0
    %4741 = vmatprep.subr.mxu0 0.0
    %4742 = vmatpush1.msra.mxu0 0.0
    %4743 = vmatprep.subr.mxu0 0.0
    %4744 = vmatpush1.msra.mxu0 0.0
    %4745 = vmatprep.subr.mxu0 0.0
    %4746 = vmatpush1.msra.mxu0 0.0
    %4747 = vmatprep.subr.mxu0 0.0
    %4748 = vmatpush1.msra.mxu0 0.0
    %4749 = vmatprep.subr.mxu0 0.0
    %4750 = vmatpush1.msra.mxu0 0.0
    %4751 = vmatprep.subr.mxu0 0.0
    %4752 = vmatpush1.msra.mxu0 0.0
    %4753 = vmatprep.subr.mxu0 0.0
    %4754 = vmatpush1.msra.mxu0 0.0
    %4755 = vmatprep.mubr.f32.mxu0 0.0
    %v4756 = vand.u32 %v4517, 4294901760
    %4757 = vmatmul.mubr.f32.gmra.mrb[0].mxu0 %v4756
    %v4758 = vpop.f32.mrb[0].mxu0
    %v4759 = vadd.f32 %v4607, %v4758
    %v4760 = vpop.f32.mrb[0].mxu0
    %v4761 = vadd.f32 %v4609, %v4760
    %4762 = vdwg.mxu0
    %v4763 = vand.u32 %v77, 4294901760
    %v4764 = vsub.f32 %v77, %v4763
    %4765 = vmatprep.subr.mxu0 %v4764
    %v4766 = vand.u32 %v76, 4294901760
    %v4767 = vsub.f32 %v76, %v4766
    %4768 = vmatpush1.msra.mxu0 %v4767
    %v4769 = vand.u32 %v79, 4294901760
    %v4770 = vsub.f32 %v79, %v4769
    %4771 = vmatprep.subr.mxu0 %v4770
    %v4772 = vand.u32 %v78, 4294901760
    %v4773 = vsub.f32 %v78, %v4772
    %4774 = vmatpush1.msra.mxu0 %v4773
    %v4775 = vand.u32 %v81, 4294901760
    %v4776 = vsub.f32 %v81, %v4775
    %4777 = vmatprep.subr.mxu0 %v4776
    %v4778 = vand.u32 %v80, 4294901760
    %v4779 = vsub.f32 %v80, %v4778
    %4780 = vmatpush1.msra.mxu0 %v4779
    %v4781 = vand.u32 %v83, 4294901760
    %v4782 = vsub.f32 %v83, %v4781
    %4783 = vmatprep.subr.mxu0 %v4782
    %v4784 = vand.u32 %v82, 4294901760
    %v4785 = vsub.f32 %v82, %v4784
    %4786 = vmatpush1.msra.mxu0 %v4785
    %v4787 = vand.u32 %v85, 4294901760
    %v4788 = vsub.f32 %v85, %v4787
    %4789 = vmatprep.subr.mxu0 %v4788
    %v4790 = vand.u32 %v84, 4294901760
    %v4791 = vsub.f32 %v84, %v4790
    %4792 = vmatpush1.msra.mxu0 %v4791
    %v4793 = vand.u32 %v87, 4294901760
    %v4794 = vsub.f32 %v87, %v4793
    %4795 = vmatprep.subr.mxu0 %v4794
    %v4796 = vand.u32 %v86, 4294901760
    %v4797 = vsub.f32 %v86, %v4796
    %4798 = vmatpush1.msra.mxu0 %v4797
    %v4799 = vand.u32 %v89, 4294901760
    %v4800 = vsub.f32 %v89, %v4799
    %4801 = vmatprep.subr.mxu0 %v4800
    %v4802 = vand.u32 %v88, 4294901760
    %v4803 = vsub.f32 %v88, %v4802
    %4804 = vmatpush1.msra.mxu0 %v4803
    %v4805 = vand.u32 %v91, 4294901760
    %v4806 = vsub.f32 %v91, %v4805
    %4807 = vmatprep.subr.mxu0 %v4806
    %v4808 = vand.u32 %v90, 4294901760
    %v4809 = vsub.f32 %v90, %v4808
    %4810 = vmatpush1.msra.mxu0 %v4809
    %4811 = vmatprep.subr.mxu0 0.0
    %4812 = vmatpush1.msra.mxu0 0.0
    %4813 = vmatprep.subr.mxu0 0.0
    %4814 = vmatpush1.msra.mxu0 0.0
    %4815 = vmatprep.subr.mxu0 0.0
    %4816 = vmatpush1.msra.mxu0 0.0
    %4817 = vmatprep.subr.mxu0 0.0
    %4818 = vmatpush1.msra.mxu0 0.0
    %4819 = vmatprep.subr.mxu0 0.0
    %4820 = vmatpush1.msra.mxu0 0.0
    %4821 = vmatprep.subr.mxu0 0.0
    %4822 = vmatpush1.msra.mxu0 0.0
    %4823 = vmatprep.subr.mxu0 0.0
    %4824 = vmatpush1.msra.mxu0 0.0
    %4825 = vmatprep.subr.mxu0 0.0
    %4826 = vmatpush1.msra.mxu0 0.0
    %4827 = vmatprep.subr.mxu0 0.0
    %4828 = vmatpush1.msra.mxu0 0.0
    %4829 = vmatprep.subr.mxu0 0.0
    %4830 = vmatpush1.msra.mxu0 0.0
    %4831 = vmatprep.subr.mxu0 0.0
    %4832 = vmatpush1.msra.mxu0 0.0
    %4833 = vmatprep.subr.mxu0 0.0
    %4834 = vmatpush1.msra.mxu0 0.0
    %4835 = vmatprep.subr.mxu0 0.0
    %4836 = vmatpush1.msra.mxu0 0.0
    %4837 = vmatprep.subr.mxu0 0.0
    %4838 = vmatpush1.msra.mxu0 0.0
    %4839 = vmatprep.subr.mxu0 0.0
    %4840 = vmatpush1.msra.mxu0 0.0
    %4841 = vmatprep.subr.mxu0 0.0
    %4842 = vmatpush1.msra.mxu0 0.0
    %4843 = vmatprep.subr.mxu0 0.0
    %4844 = vmatpush1.msra.mxu0 0.0
    %4845 = vmatprep.subr.mxu0 0.0
    %4846 = vmatpush1.msra.mxu0 0.0
    %4847 = vmatprep.subr.mxu0 0.0
    %4848 = vmatpush1.msra.mxu0 0.0
    %4849 = vmatprep.subr.mxu0 0.0
    %4850 = vmatpush1.msra.mxu0 0.0
    %4851 = vmatprep.subr.mxu0 0.0
    %4852 = vmatpush1.msra.mxu0 0.0
    %4853 = vmatprep.subr.mxu0 0.0
    %4854 = vmatpush1.msra.mxu0 0.0
    %4855 = vmatprep.subr.mxu0 0.0
    %4856 = vmatpush1.msra.mxu0 0.0
    %4857 = vmatprep.subr.mxu0 0.0
    %4858 = vmatpush1.msra.mxu0 0.0
    %4859 = vmatprep.mubr.f32.mxu0 0.0
    %v4860 = vand.u32 %v4517, 4294901760
    %v4861 = vsub.f32 %v4517, %v4860
    %4862 = vmatmul.mubr.f32.gmra.mrb[0].mxu0 %v4861
    %v4863 = vpop.f32.mrb[0].mxu0
    %v4864 = vadd.f32 %v4759, %v4863
    %v4865 = vpop.f32.mrb[0].mxu0
    %v4866 = vadd.f32 %v4761, %v4865
    %4867 = vdwg.mxu0
    %v4868 = vand.u32 %v77, 4294901760
    %4869 = vmatprep.subr.mxu0 %v4868
    %v4870 = vand.u32 %v76, 4294901760
    %4871 = vmatpush1.msra.mxu0 %v4870
    %v4872 = vand.u32 %v79, 4294901760
    %4873 = vmatprep.subr.mxu0 %v4872
    %v4874 = vand.u32 %v78, 4294901760
    %4875 = vmatpush1.msra.mxu0 %v4874
    %v4876 = vand.u32 %v81, 4294901760
    %4877 = vmatprep.subr.mxu0 %v4876
    %v4878 = vand.u32 %v80, 4294901760
    %4879 = vmatpush1.msra.mxu0 %v4878
    %v4880 = vand.u32 %v83, 4294901760
    %4881 = vmatprep.subr.mxu0 %v4880
    %v4882 = vand.u32 %v82, 4294901760
    %4883 = vmatpush1.msra.mxu0 %v4882
    %v4884 = vand.u32 %v85, 4294901760
    %4885 = vmatprep.subr.mxu0 %v4884
    %v4886 = vand.u32 %v84, 4294901760
    %4887 = vmatpush1.msra.mxu0 %v4886
    %v4888 = vand.u32 %v87, 4294901760
    %4889 = vmatprep.subr.mxu0 %v4888
    %v4890 = vand.u32 %v86, 4294901760
    %4891 = vmatpush1.msra.mxu0 %v4890
    %v4892 = vand.u32 %v89, 4294901760
    %4893 = vmatprep.subr.mxu0 %v4892
    %v4894 = vand.u32 %v88, 4294901760
    %4895 = vmatpush1.msra.mxu0 %v4894
    %v4896 = vand.u32 %v91, 4294901760
    %4897 = vmatprep.subr.mxu0 %v4896
    %v4898 = vand.u32 %v90, 4294901760
    %4899 = vmatpush1.msra.mxu0 %v4898
    %4900 = vmatprep.subr.mxu0 0.0
    %4901 = vmatpush1.msra.mxu0 0.0
    %4902 = vmatprep.subr.mxu0 0.0
    %4903 = vmatpush1.msra.mxu0 0.0
    %4904 = vmatprep.subr.mxu0 0.0
    %4905 = vmatpush1.msra.mxu0 0.0
    %4906 = vmatprep.subr.mxu0 0.0
    %4907 = vmatpush1.msra.mxu0 0.0
    %4908 = vmatprep.subr.mxu0 0.0
    %4909 = vmatpush1.msra.mxu0 0.0
    %4910 = vmatprep.subr.mxu0 0.0
    %4911 = vmatpush1.msra.mxu0 0.0
    %4912 = vmatprep.subr.mxu0 0.0
    %4913 = vmatpush1.msra.mxu0 0.0
    %4914 = vmatprep.subr.mxu0 0.0
    %4915 = vmatpush1.msra.mxu0 0.0
    %4916 = vmatprep.subr.mxu0 0.0
    %4917 = vmatpush1.msra.mxu0 0.0
    %4918 = vmatprep.subr.mxu0 0.0
    %4919 = vmatpush1.msra.mxu0 0.0
    %4920 = vmatprep.subr.mxu0 0.0
    %4921 = vmatpush1.msra.mxu0 0.0
    %4922 = vmatprep.subr.mxu0 0.0
    %4923 = vmatpush1.msra.mxu0 0.0
    %4924 = vmatprep.subr.mxu0 0.0
    %4925 = vmatpush1.msra.mxu0 0.0
    %4926 = vmatprep.subr.mxu0 0.0
    %4927 = vmatpush1.msra.mxu0 0.0
    %4928 = vmatprep.subr.mxu0 0.0
    %4929 = vmatpush1.msra.mxu0 0.0
    %4930 = vmatprep.subr.mxu0 0.0
    %4931 = vmatpush1.msra.mxu0 0.0
    %4932 = vmatprep.subr.mxu0 0.0
    %4933 = vmatpush1.msra.mxu0 0.0
    %4934 = vmatprep.subr.mxu0 0.0
    %4935 = vmatpush1.msra.mxu0 0.0
    %4936 = vmatprep.subr.mxu0 0.0
    %4937 = vmatpush1.msra.mxu0 0.0
    %4938 = vmatprep.subr.mxu0 0.0
    %4939 = vmatpush1.msra.mxu0 0.0
    %4940 = vmatprep.subr.mxu0 0.0
    %4941 = vmatpush1.msra.mxu0 0.0
    %4942 = vmatprep.subr.mxu0 0.0
    %4943 = vmatpush1.msra.mxu0 0.0
    %4944 = vmatprep.subr.mxu0 0.0
    %4945 = vmatpush1.msra.mxu0 0.0
    %4946 = vmatprep.subr.mxu0 0.0
    %4947 = vmatpush1.msra.mxu0 0.0
    %4948 = vmatprep.mubr.f32.mxu0 0.0
    %v4949 = vand.u32 %v4517, 4294901760
    %v4950 = vsub.f32 %v4517, %v4949
    %v4951 = vand.u32 %v4950, 4294901760
    %4952 = vmatmul.mubr.f32.gmra.mrb[0].mxu0 %v4951
    %v4953 = vpop.f32.mrb[0].mxu0
    %v4954 = vadd.f32 %v4864, %v4953
    %v4955 = vpop.f32.mrb[0].mxu0
    %v4956 = vadd.f32 %v4866, %v4955
    %4957 = vdwg.mxu0
    %v4958 = vand.u32 %v77, 4294901760
    %v4959 = vsub.f32 %v77, %v4958
    %v4960 = vand.u32 %v4959, 4294901760
    %4961 = vmatprep.subr.mxu0 %v4960
    %v4962 = vand.u32 %v76, 4294901760
    %v4963 = vsub.f32 %v76, %v4962
    %v4964 = vand.u32 %v4963, 4294901760
    %4965 = vmatpush1.msra.mxu0 %v4964
    %v4966 = vand.u32 %v79, 4294901760
    %v4967 = vsub.f32 %v79, %v4966
    %v4968 = vand.u32 %v4967, 4294901760
    %4969 = vmatprep.subr.mxu0 %v4968
    %v4970 = vand.u32 %v78, 4294901760
    %v4971 = vsub.f32 %v78, %v4970
    %v4972 = vand.u32 %v4971, 4294901760
    %4973 = vmatpush1.msra.mxu0 %v4972
    %v4974 = vand.u32 %v81, 4294901760
    %v4975 = vsub.f32 %v81, %v4974
    %v4976 = vand.u32 %v4975, 4294901760
    %4977 = vmatprep.subr.mxu0 %v4976
    %v4978 = vand.u32 %v80, 4294901760
    %v4979 = vsub.f32 %v80, %v4978
    %v4980 = vand.u32 %v4979, 4294901760
    %4981 = vmatpush1.msra.mxu0 %v4980
    %v4982 = vand.u32 %v83, 4294901760
    %v4983 = vsub.f32 %v83, %v4982
    %v4984 = vand.u32 %v4983, 4294901760
    %4985 = vmatprep.subr.mxu0 %v4984
    %v4986 = vand.u32 %v82, 4294901760
    %v4987 = vsub.f32 %v82, %v4986
    %v4988 = vand.u32 %v4987, 4294901760
    %4989 = vmatpush1.msra.mxu0 %v4988
    %v4990 = vand.u32 %v85, 4294901760
    %v4991 = vsub.f32 %v85, %v4990
    %v4992 = vand.u32 %v4991, 4294901760
    %4993 = vmatprep.subr.mxu0 %v4992
    %v4994 = vand.u32 %v84, 4294901760
    %v4995 = vsub.f32 %v84, %v4994
    %v4996 = vand.u32 %v4995, 4294901760
    %4997 = vmatpush1.msra.mxu0 %v4996
    %v4998 = vand.u32 %v87, 4294901760
    %v4999 = vsub.f32 %v87, %v4998
    %v5000 = vand.u32 %v4999, 4294901760
    %5001 = vmatprep.subr.mxu0 %v5000
    %v5002 = vand.u32 %v86, 4294901760
    %v5003 = vsub.f32 %v86, %v5002
    %v5004 = vand.u32 %v5003, 4294901760
    %5005 = vmatpush1.msra.mxu0 %v5004
    %v5006 = vand.u32 %v89, 4294901760
    %v5007 = vsub.f32 %v89, %v5006
    %v5008 = vand.u32 %v5007, 4294901760
    %5009 = vmatprep.subr.mxu0 %v5008
    %v5010 = vand.u32 %v88, 4294901760
    %v5011 = vsub.f32 %v88, %v5010
    %v5012 = vand.u32 %v5011, 4294901760
    %5013 = vmatpush1.msra.mxu0 %v5012
    %v5014 = vand.u32 %v91, 4294901760
    %v5015 = vsub.f32 %v91, %v5014
    %v5016 = vand.u32 %v5015, 4294901760
    %5017 = vmatprep.subr.mxu0 %v5016
    %v5018 = vand.u32 %v90, 4294901760
    %v5019 = vsub.f32 %v90, %v5018
    %v5020 = vand.u32 %v5019, 4294901760
    %5021 = vmatpush1.msra.mxu0 %v5020
    %5022 = vmatprep.subr.mxu0 0.0
    %5023 = vmatpush1.msra.mxu0 0.0
    %5024 = vmatprep.subr.mxu0 0.0
    %5025 = vmatpush1.msra.mxu0 0.0
    %5026 = vmatprep.subr.mxu0 0.0
    %5027 = vmatpush1.msra.mxu0 0.0
    %5028 = vmatprep.subr.mxu0 0.0
    %5029 = vmatpush1.msra.mxu0 0.0
    %5030 = vmatprep.subr.mxu0 0.0
    %5031 = vmatpush1.msra.mxu0 0.0
    %5032 = vmatprep.subr.mxu0 0.0
    %5033 = vmatpush1.msra.mxu0 0.0
    %5034 = vmatprep.subr.mxu0 0.0
    %5035 = vmatpush1.msra.mxu0 0.0
    %5036 = vmatprep.subr.mxu0 0.0
    %5037 = vmatpush1.msra.mxu0 0.0
    %5038 = vmatprep.subr.mxu0 0.0
    %5039 = vmatpush1.msra.mxu0 0.0
    %5040 = vmatprep.subr.mxu0 0.0
    %5041 = vmatpush1.msra.mxu0 0.0
    %5042 = vmatprep.subr.mxu0 0.0
    %5043 = vmatpush1.msra.mxu0 0.0
    %5044 = vmatprep.subr.mxu0 0.0
    %5045 = vmatpush1.msra.mxu0 0.0
    %5046 = vmatprep.subr.mxu0 0.0
    %5047 = vmatpush1.msra.mxu0 0.0
    %5048 = vmatprep.subr.mxu0 0.0
    %5049 = vmatpush1.msra.mxu0 0.0
    %5050 = vmatprep.subr.mxu0 0.0
    %5051 = vmatpush1.msra.mxu0 0.0
    %5052 = vmatprep.subr.mxu0 0.0
    %5053 = vmatpush1.msra.mxu0 0.0
    %5054 = vmatprep.subr.mxu0 0.0
    %5055 = vmatpush1.msra.mxu0 0.0
    %5056 = vmatprep.subr.mxu0 0.0
    %5057 = vmatpush1.msra.mxu0 0.0
    %5058 = vmatprep.subr.mxu0 0.0
    %5059 = vmatpush1.msra.mxu0 0.0
    %5060 = vmatprep.subr.mxu0 0.0
    %5061 = vmatpush1.msra.mxu0 0.0
    %5062 = vmatprep.subr.mxu0 0.0
    %5063 = vmatpush1.msra.mxu0 0.0
    %5064 = vmatprep.subr.mxu0 0.0
    %5065 = vmatpush1.msra.mxu0 0.0
    %5066 = vmatprep.subr.mxu0 0.0
    %5067 = vmatpush1.msra.mxu0 0.0
    %5068 = vmatprep.subr.mxu0 0.0
    %5069 = vmatpush1.msra.mxu0 0.0
    %5070 = vmatprep.mubr.f32.mxu0 0.0
    %v5071 = vand.u32 %v4517, 4294901760
    %5072 = vmatmul.mubr.f32.gmra.mrb[0].mxu0 %v5071
    %v5073 = vpop.f32.mrb[0].mxu0
    %v5074 = vadd.f32 %v4954, %v5073
    %v5075 = vpop.f32.mrb[0].mxu0
    %v5076 = vadd.f32 %v4956, %v5075
    %5077 = vdwg.mxu0
    %v5078 = vand.u32 %v77, 4294901760
    %5079 = vmatprep.subr.mxu0 %v5078
    %v5080 = vand.u32 %v76, 4294901760
    %5081 = vmatpush1.msra.mxu0 %v5080
    %v5082 = vand.u32 %v79, 4294901760
    %5083 = vmatprep.subr.mxu0 %v5082
    %v5084 = vand.u32 %v78, 4294901760
    %5085 = vmatpush1.msra.mxu0 %v5084
    %v5086 = vand.u32 %v81, 4294901760
    %5087 = vmatprep.subr.mxu0 %v5086
    %v5088 = vand.u32 %v80, 4294901760
    %5089 = vmatpush1.msra.mxu0 %v5088
    %v5090 = vand.u32 %v83, 4294901760
    %5091 = vmatprep.subr.mxu0 %v5090
    %v5092 = vand.u32 %v82, 4294901760
    %5093 = vmatpush1.msra.mxu0 %v5092
    %v5094 = vand.u32 %v85, 4294901760
    %5095 = vmatprep.subr.mxu0 %v5094
    %v5096 = vand.u32 %v84, 4294901760
    %5097 = vmatpush1.msra.mxu0 %v5096
    %v5098 = vand.u32 %v87, 4294901760
    %5099 = vmatprep.subr.mxu0 %v5098
    %v5100 = vand.u32 %v86, 4294901760
    %5101 = vmatpush1.msra.mxu0 %v5100
    %v5102 = vand.u32 %v89, 4294901760
    %5103 = vmatprep.subr.mxu0 %v5102
    %v5104 = vand.u32 %v88, 4294901760
    %5105 = vmatpush1.msra.mxu0 %v5104
    %v5106 = vand.u32 %v91, 4294901760
    %5107 = vmatprep.subr.mxu0 %v5106
    %v5108 = vand.u32 %v90, 4294901760
    %5109 = vmatpush1.msra.mxu0 %v5108
    %5110 = vmatprep.subr.mxu0 0.0
    %5111 = vmatpush1.msra.mxu0 0.0
    %5112 = vmatprep.subr.mxu0 0.0
    %5113 = vmatpush1.msra.mxu0 0.0
    %5114 = vmatprep.subr.mxu0 0.0
    %5115 = vmatpush1.msra.mxu0 0.0
    %5116 = vmatprep.subr.mxu0 0.0
    %5117 = vmatpush1.msra.mxu0 0.0
    %5118 = vmatprep.subr.mxu0 0.0
    %5119 = vmatpush1.msra.mxu0 0.0
    %5120 = vmatprep.subr.mxu0 0.0
    %5121 = vmatpush1.msra.mxu0 0.0
    %5122 = vmatprep.subr.mxu0 0.0
    %5123 = vmatpush1.msra.mxu0 0.0
    %5124 = vmatprep.subr.mxu0 0.0
    %5125 = vmatpush1.msra.mxu0 0.0
    %5126 = vmatprep.subr.mxu0 0.0
    %5127 = vmatpush1.msra.mxu0 0.0
    %5128 = vmatprep.subr.mxu0 0.0
    %5129 = vmatpush1.msra.mxu0 0.0
    %5130 = vmatprep.subr.mxu0 0.0
    %5131 = vmatpush1.msra.mxu0 0.0
    %5132 = vmatprep.subr.mxu0 0.0
    %5133 = vmatpush1.msra.mxu0 0.0
    %5134 = vmatprep.subr.mxu0 0.0
    %5135 = vmatpush1.msra.mxu0 0.0
    %5136 = vmatprep.subr.mxu0 0.0
    %5137 = vmatpush1.msra.mxu0 0.0
    %5138 = vmatprep.subr.mxu0 0.0
    %5139 = vmatpush1.msra.mxu0 0.0
    %5140 = vmatprep.subr.mxu0 0.0
    %5141 = vmatpush1.msra.mxu0 0.0
    %5142 = vmatprep.subr.mxu0 0.0
    %5143 = vmatpush1.msra.mxu0 0.0
    %5144 = vmatprep.subr.mxu0 0.0
    %5145 = vmatpush1.msra.mxu0 0.0
    %5146 = vmatprep.subr.mxu0 0.0
    %5147 = vmatpush1.msra.mxu0 0.0
    %5148 = vmatprep.subr.mxu0 0.0
    %5149 = vmatpush1.msra.mxu0 0.0
    %5150 = vmatprep.subr.mxu0 0.0
    %5151 = vmatpush1.msra.mxu0 0.0
    %5152 = vmatprep.subr.mxu0 0.0
    %5153 = vmatpush1.msra.mxu0 0.0
    %5154 = vmatprep.subr.mxu0 0.0
    %5155 = vmatpush1.msra.mxu0 0.0
    %5156 = vmatprep.subr.mxu0 0.0
    %5157 = vmatpush1.msra.mxu0 0.0
    %5158 = vmatprep.mubr.f32.mxu0 0.0
    %v5159 = vand.u32 %v4517, 4294901760
    %5160 = vmatmul.mubr.f32.gmra.mrb[0].mxu0 %v5159
    %v5161 = vpop.f32.mrb[0].mxu0
    %v5162 = vadd.f32 %v5074, %v5161
    %v5163 = vpop.f32.mrb[0].mxu0
    %v5164 = vadd.f32 %v5076, %v5163
    %5165 = vdwg.mxu0
    %s5166 = scalar_lea.vmem [#allocation3], 12
    %v5167 = vld [vmem:[%s5166] sm:$0x3]
    %s5168 = scalar_lea.vmem [#allocation6], 2
    %v5169 = vld [vmem:[%s5168] sm:$0x3]
    %v5170 = vadd.f32 %v5167, %v5162
    %v5171 = vxor.u32 %v5170, 2147483648
    %v5172 = vmul.f32 %v5171, 1.442695
    %v5173 = vpow.pop %v5172
    %v5174 = vadd.f32 %v5173, 1.0
    %v5175 = vrcp.pop %v5174
    %v5176 = vmul.f32 1.0, %v5175
    %5178 = vrot.lane.b32.xlu0 %v5162, 64
    %v5179 = vpop.permute.xlu0 %5178
    %v5181 = vmul.f32 %v5176, %v5179
    %5183 = vrot.lane.b32.xlu0 %v5181, 64
    %v5184 = vpop.permute.xlu0 %5183
    %v5186 = vadd.f32 %v5167, %v5184
    %v5187 = vtanh.pop %v5186
    %v5188 = vsub.f32 1.0, %v5176
    %5190 = vrot.lane.b32.xlu0 %v5187, 96
    %v5191 = vpop.permute.xlu0 %5190
    %v5193 = vmul.f32 %v5188, %v5191
    %5194 = vrot.lane.b32.xlu0 %v4515, 32
    %v5195 = vpop.permute.xlu0 %5194
    %v5197 = vmul.f32 %v5176, %v5195
    %v5198 = vadd.f32 %v5193, %v5197
    %5199 = vrot.lane.b32.xlu0 %v5162, 32
    %v5200 = vpop.permute.xlu0 %5199
    %v5202 = vadd.f32 %v5169, %v5200
    %v5203 = vxor.u32 %v5202, 2147483648
    %v5204 = vmul.f32 %v5203, 1.442695
    %v5205 = vpow.pop %v5204
    %v5206 = vadd.f32 %v5205, 1.0
    %v5207 = vrcp.pop %v5206
    %v5208 = vmul.f32 1.0, %v5207
    %5210 = vrot.lane.b32.xlu0 %v5164, 32
    %v5211 = vpop.permute.xlu0 %5210
    %v5213 = vadd.f32 %v5169, %v5211
    %v5214 = vxor.u32 %v5213, 2147483648
    %v5215 = vmul.f32 %v5214, 1.442695
    %v5216 = vpow.pop %v5215
    %v5217 = vadd.f32 %v5216, 1.0
    %v5218 = vrcp.pop %v5217
    %v5219 = vmul.f32 1.0, %v5218
    %5220 = vrot.lane.b32.xlu0 %v5164, 96
    %v5221 = vpop.permute.xlu0 %5220
    %v5223 = vmul.f32 %v5208, %v5221
    %5225 = vrot.lane.b32.xlu0 %v5223, 64
    %v5226 = vpop.permute.xlu0 %5225
    %v5228 = vadd.f32 %v5169, %v5226
    %v5229 = vtanh.pop %v5228
    %v5230 = vsub.f32 1.0, %v5219
    %5232 = vrot.lane.b32.xlu0 %v5229, 96
    %v5233 = vpop.permute.xlu0 %5232
    %v5235 = vmul.f32 %v5230, %v5233
    %v5236 = vmul.f32 %v5219, %v4515
    %v5237 = vadd.f32 %v5235, %v5236
    %5239 = vrot.lane.b32.xlu0 %v5198, 96
    %v5240 = vpop.permute.xlu0 %5239
    %s5242 = scalar_lea.vmem [#allocation9], 12
    %5243 = vst.msk [vmem:[%s5242] sm:$0x3] %vm831, %v5240
    %5245 = vrot.lane.b32.xlu0 %v5237, 96
    %v5246 = vpop.permute.xlu0 %5245
    %s5248 = scalar_lea.vmem [#allocation10], 2
    %5249 = vst.msk [vmem:[%s5248] sm:$0x3] %vm831, %v5246
    %v5250 = vsel %vm839, %v5240, %v5237
    %v5252 = vsel %vm105, %v5250, 0
    %v5254 = vand.u32 %v77, 4294901760
    %5255 = vmatprep.subr.mxu0 %v5254
    %v5256 = vand.u32 %v76, 4294901760
    %5257 = vmatpush1.msra.mxu0 %v5256
    %v5258 = vand.u32 %v79, 4294901760
    %5259 = vmatprep.subr.mxu0 %v5258
    %v5260 = vand.u32 %v78, 4294901760
    %5261 = vmatpush1.msra.mxu0 %v5260
    %v5262 = vand.u32 %v81, 4294901760
    %5263 = vmatprep.subr.mxu0 %v5262
    %v5264 = vand.u32 %v80, 4294901760
    %5265 = vmatpush1.msra.mxu0 %v5264
    %v5266 = vand.u32 %v83, 4294901760
    %5267 = vmatprep.subr.mxu0 %v5266
    %v5268 = vand.u32 %v82, 4294901760
    %5269 = vmatpush1.msra.mxu0 %v5268
    %v5270 = vand.u32 %v85, 4294901760
    %5271 = vmatprep.subr.mxu0 %v5270
    %v5272 = vand.u32 %v84, 4294901760
    %5273 = vmatpush1.msra.mxu0 %v5272
    %v5274 = vand.u32 %v87, 4294901760
    %5275 = vmatprep.subr.mxu0 %v5274
    %v5276 = vand.u32 %v86, 4294901760
    %5277 = vmatpush1.msra.mxu0 %v5276
    %v5278 = vand.u32 %v89, 4294901760
    %5279 = vmatprep.subr.mxu0 %v5278
    %v5280 = vand.u32 %v88, 4294901760
    %5281 = vmatpush1.msra.mxu0 %v5280
    %v5282 = vand.u32 %v91, 4294901760
    %5283 = vmatprep.subr.mxu0 %v5282
    %v5284 = vand.u32 %v90, 4294901760
    %5285 = vmatpush1.msra.mxu0 %v5284
    %5286 = vmatprep.subr.mxu0 0.0
    %5287 = vmatpush1.msra.mxu0 0.0
    %5288 = vmatprep.subr.mxu0 0.0
    %5289 = vmatpush1.msra.mxu0 0.0
    %5290 = vmatprep.subr.mxu0 0.0
    %5291 = vmatpush1.msra.mxu0 0.0
    %5292 = vmatprep.subr.mxu0 0.0
    %5293 = vmatpush1.msra.mxu0 0.0
    %5294 = vmatprep.subr.mxu0 0.0
    %5295 = vmatpush1.msra.mxu0 0.0
    %5296 = vmatprep.subr.mxu0 0.0
    %5297 = vmatpush1.msra.mxu0 0.0
    %5298 = vmatprep.subr.mxu0 0.0
    %5299 = vmatpush1.msra.mxu0 0.0
    %5300 = vmatprep.subr.mxu0 0.0
    %5301 = vmatpush1.msra.mxu0 0.0
    %5302 = vmatprep.subr.mxu0 0.0
    %5303 = vmatpush1.msra.mxu0 0.0
    %5304 = vmatprep.subr.mxu0 0.0
    %5305 = vmatpush1.msra.mxu0 0.0
    %5306 = vmatprep.subr.mxu0 0.0
    %5307 = vmatpush1.msra.mxu0 0.0
    %5308 = vmatprep.subr.mxu0 0.0
    %5309 = vmatpush1.msra.mxu0 0.0
    %5310 = vmatprep.subr.mxu0 0.0
    %5311 = vmatpush1.msra.mxu0 0.0
    %5312 = vmatprep.subr.mxu0 0.0
    %5313 = vmatpush1.msra.mxu0 0.0
    %5314 = vmatprep.subr.mxu0 0.0
    %5315 = vmatpush1.msra.mxu0 0.0
    %5316 = vmatprep.subr.mxu0 0.0
    %5317 = vmatpush1.msra.mxu0 0.0
    %5318 = vmatprep.subr.mxu0 0.0
    %5319 = vmatpush1.msra.mxu0 0.0
    %5320 = vmatprep.subr.mxu0 0.0
    %5321 = vmatpush1.msra.mxu0 0.0
    %5322 = vmatprep.subr.mxu0 0.0
    %5323 = vmatpush1.msra.mxu0 0.0
    %5324 = vmatprep.subr.mxu0 0.0
    %5325 = vmatpush1.msra.mxu0 0.0
    %5326 = vmatprep.subr.mxu0 0.0
    %5327 = vmatpush1.msra.mxu0 0.0
    %5328 = vmatprep.subr.mxu0 0.0
    %5329 = vmatpush1.msra.mxu0 0.0
    %5330 = vmatprep.subr.mxu0 0.0
    %5331 = vmatpush1.msra.mxu0 0.0
    %5332 = vmatprep.subr.mxu0 0.0
    %5333 = vmatpush1.msra.mxu0 0.0
    %5334 = vmatprep.mubr.f32.mxu0 0.0
    %v5335 = vand.u32 %v5252, 4294901760
    %v5336 = vsub.f32 %v5252, %v5335
    %v5337 = vand.u32 %v5336, 4294901760
    %v5338 = vsub.f32 %v5336, %v5337
    %v5339 = vand.u32 %v5338, 4294901760
    %5340 = vmatmul.mubr.f32.gmra.mrb[0].mxu0 %v5339
    %v5341 = vpop.f32.mrb[0].mxu0
    %v5342 = vadd.f32 %v98, %v5341
    %v5343 = vpop.f32.mrb[0].mxu0
    %v5344 = vadd.f32 %v102, %v5343
    %5345 = vdwg.mxu0
    %v5346 = vand.u32 %v77, 4294901760
    %v5347 = vsub.f32 %v77, %v5346
    %v5348 = vand.u32 %v5347, 4294901760
    %v5349 = vsub.f32 %v5347, %v5348
    %v5350 = vand.u32 %v5349, 4294901760
    %5351 = vmatprep.subr.mxu0 %v5350
    %v5352 = vand.u32 %v76, 4294901760
    %v5353 = vsub.f32 %v76, %v5352
    %v5354 = vand.u32 %v5353, 4294901760
    %v5355 = vsub.f32 %v5353, %v5354
    %v5356 = vand.u32 %v5355, 4294901760
    %5357 = vmatpush1.msra.mxu0 %v5356
    %v5358 = vand.u32 %v79, 4294901760
    %v5359 = vsub.f32 %v79, %v5358
    %v5360 = vand.u32 %v5359, 4294901760
    %v5361 = vsub.f32 %v5359, %v5360
    %v5362 = vand.u32 %v5361, 4294901760
    %5363 = vmatprep.subr.mxu0 %v5362
    %v5364 = vand.u32 %v78, 4294901760
    %v5365 = vsub.f32 %v78, %v5364
    %v5366 = vand.u32 %v5365, 4294901760
    %v5367 = vsub.f32 %v5365, %v5366
    %v5368 = vand.u32 %v5367, 4294901760
    %5369 = vmatpush1.msra.mxu0 %v5368
    %v5370 = vand.u32 %v81, 4294901760
    %v5371 = vsub.f32 %v81, %v5370
    %v5372 = vand.u32 %v5371, 4294901760
    %v5373 = vsub.f32 %v5371, %v5372
    %v5374 = vand.u32 %v5373, 4294901760
    %5375 = vmatprep.subr.mxu0 %v5374
    %v5376 = vand.u32 %v80, 4294901760
    %v5377 = vsub.f32 %v80, %v5376
    %v5378 = vand.u32 %v5377, 4294901760
    %v5379 = vsub.f32 %v5377, %v5378
    %v5380 = vand.u32 %v5379, 4294901760
    %5381 = vmatpush1.msra.mxu0 %v5380
    %v5382 = vand.u32 %v83, 4294901760
    %v5383 = vsub.f32 %v83, %v5382
    %v5384 = vand.u32 %v5383, 4294901760
    %v5385 = vsub.f32 %v5383, %v5384
    %v5386 = vand.u32 %v5385, 4294901760
    %5387 = vmatprep.subr.mxu0 %v5386
    %v5388 = vand.u32 %v82, 4294901760
    %v5389 = vsub.f32 %v82, %v5388
    %v5390 = vand.u32 %v5389, 4294901760
    %v5391 = vsub.f32 %v5389, %v5390
    %v5392 = vand.u32 %v5391, 4294901760
    %5393 = vmatpush1.msra.mxu0 %v5392
    %v5394 = vand.u32 %v85, 4294901760
    %v5395 = vsub.f32 %v85, %v5394
    %v5396 = vand.u32 %v5395, 4294901760
    %v5397 = vsub.f32 %v5395, %v5396
    %v5398 = vand.u32 %v5397, 4294901760
    %5399 = vmatprep.subr.mxu0 %v5398
    %v5400 = vand.u32 %v84, 4294901760
    %v5401 = vsub.f32 %v84, %v5400
    %v5402 = vand.u32 %v5401, 4294901760
    %v5403 = vsub.f32 %v5401, %v5402
    %v5404 = vand.u32 %v5403, 4294901760
    %5405 = vmatpush1.msra.mxu0 %v5404
    %v5406 = vand.u32 %v87, 4294901760
    %v5407 = vsub.f32 %v87, %v5406
    %v5408 = vand.u32 %v5407, 4294901760
    %v5409 = vsub.f32 %v5407, %v5408
    %v5410 = vand.u32 %v5409, 4294901760
    %5411 = vmatprep.subr.mxu0 %v5410
    %v5412 = vand.u32 %v86, 4294901760
    %v5413 = vsub.f32 %v86, %v5412
    %v5414 = vand.u32 %v5413, 4294901760
    %v5415 = vsub.f32 %v5413, %v5414
    %v5416 = vand.u32 %v5415, 4294901760
    %5417 = vmatpush1.msra.mxu0 %v5416
    %v5418 = vand.u32 %v89, 4294901760
    %v5419 = vsub.f32 %v89, %v5418
    %v5420 = vand.u32 %v5419, 4294901760
    %v5421 = vsub.f32 %v5419, %v5420
    %v5422 = vand.u32 %v5421, 4294901760
    %5423 = vmatprep.subr.mxu0 %v5422
    %v5424 = vand.u32 %v88, 4294901760
    %v5425 = vsub.f32 %v88, %v5424
    %v5426 = vand.u32 %v5425, 4294901760
    %v5427 = vsub.f32 %v5425, %v5426
    %v5428 = vand.u32 %v5427, 4294901760
    %5429 = vmatpush1.msra.mxu0 %v5428
    %v5430 = vand.u32 %v91, 4294901760
    %v5431 = vsub.f32 %v91, %v5430
    %v5432 = vand.u32 %v5431, 4294901760
    %v5433 = vsub.f32 %v5431, %v5432
    %v5434 = vand.u32 %v5433, 4294901760
    %5435 = vmatprep.subr.mxu0 %v5434
    %v5436 = vand.u32 %v90, 4294901760
    %v5437 = vsub.f32 %v90, %v5436
    %v5438 = vand.u32 %v5437, 4294901760
    %v5439 = vsub.f32 %v5437, %v5438
    %v5440 = vand.u32 %v5439, 4294901760
    %5441 = vmatpush1.msra.mxu0 %v5440
    %5442 = vmatprep.subr.mxu0 0.0
    %5443 = vmatpush1.msra.mxu0 0.0
    %5444 = vmatprep.subr.mxu0 0.0
    %5445 = vmatpush1.msra.mxu0 0.0
    %5446 = vmatprep.subr.mxu0 0.0
    %5447 = vmatpush1.msra.mxu0 0.0
    %5448 = vmatprep.subr.mxu0 0.0
    %5449 = vmatpush1.msra.mxu0 0.0
    %5450 = vmatprep.subr.mxu0 0.0
    %5451 = vmatpush1.msra.mxu0 0.0
    %5452 = vmatprep.subr.mxu0 0.0
    %5453 = vmatpush1.msra.mxu0 0.0
    %5454 = vmatprep.subr.mxu0 0.0
    %5455 = vmatpush1.msra.mxu0 0.0
    %5456 = vmatprep.subr.mxu0 0.0
    %5457 = vmatpush1.msra.mxu0 0.0
    %5458 = vmatprep.subr.mxu0 0.0
    %5459 = vmatpush1.msra.mxu0 0.0
    %5460 = vmatprep.subr.mxu0 0.0
    %5461 = vmatpush1.msra.mxu0 0.0
    %5462 = vmatprep.subr.mxu0 0.0
    %5463 = vmatpush1.msra.mxu0 0.0
    %5464 = vmatprep.subr.mxu0 0.0
    %5465 = vmatpush1.msra.mxu0 0.0
    %5466 = vmatprep.subr.mxu0 0.0
    %5467 = vmatpush1.msra.mxu0 0.0
    %5468 = vmatprep.subr.mxu0 0.0
    %5469 = vmatpush1.msra.mxu0 0.0
    %5470 = vmatprep.subr.mxu0 0.0
    %5471 = vmatpush1.msra.mxu0 0.0
    %5472 = vmatprep.subr.mxu0 0.0
    %5473 = vmatpush1.msra.mxu0 0.0
    %5474 = vmatprep.subr.mxu0 0.0
    %5475 = vmatpush1.msra.mxu0 0.0
    %5476 = vmatprep.subr.mxu0 0.0
    %5477 = vmatpush1.msra.mxu0 0.0
    %5478 = vmatprep.subr.mxu0 0.0
    %5479 = vmatpush1.msra.mxu0 0.0
    %5480 = vmatprep.subr.mxu0 0.0
    %5481 = vmatpush1.msra.mxu0 0.0
    %5482 = vmatprep.subr.mxu0 0.0
    %5483 = vmatpush1.msra.mxu0 0.0
    %5484 = vmatprep.subr.mxu0 0.0
    %5485 = vmatpush1.msra.mxu0 0.0
    %5486 = vmatprep.subr.mxu0 0.0
    %5487 = vmatpush1.msra.mxu0 0.0
    %5488 = vmatprep.subr.mxu0 0.0
    %5489 = vmatpush1.msra.mxu0 0.0
    %5490 = vmatprep.mubr.f32.mxu0 0.0
    %v5491 = vand.u32 %v5252, 4294901760
    %5492 = vmatmul.mubr.f32.gmra.mrb[0].mxu0 %v5491
    %v5493 = vpop.f32.mrb[0].mxu0
    %v5494 = vadd.f32 %v5342, %v5493
    %v5495 = vpop.f32.mrb[0].mxu0
    %v5496 = vadd.f32 %v5344, %v5495
    %5497 = vdwg.mxu0
    %v5498 = vand.u32 %v77, 4294901760
    %v5499 = vsub.f32 %v77, %v5498
    %5500 = vmatprep.subr.mxu0 %v5499
    %v5501 = vand.u32 %v76, 4294901760
    %v5502 = vsub.f32 %v76, %v5501
    %5503 = vmatpush1.msra.mxu0 %v5502
    %v5504 = vand.u32 %v79, 4294901760
    %v5505 = vsub.f32 %v79, %v5504
    %5506 = vmatprep.subr.mxu0 %v5505
    %v5507 = vand.u32 %v78, 4294901760
    %v5508 = vsub.f32 %v78, %v5507
    %5509 = vmatpush1.msra.mxu0 %v5508
    %v5510 = vand.u32 %v81, 4294901760
    %v5511 = vsub.f32 %v81, %v5510
    %5512 = vmatprep.subr.mxu0 %v5511
    %v5513 = vand.u32 %v80, 4294901760
    %v5514 = vsub.f32 %v80, %v5513
    %5515 = vmatpush1.msra.mxu0 %v5514
    %v5516 = vand.u32 %v83, 4294901760
    %v5517 = vsub.f32 %v83, %v5516
    %5518 = vmatprep.subr.mxu0 %v5517
    %v5519 = vand.u32 %v82, 4294901760
    %v5520 = vsub.f32 %v82, %v5519
    %5521 = vmatpush1.msra.mxu0 %v5520
    %v5522 = vand.u32 %v85, 4294901760
    %v5523 = vsub.f32 %v85, %v5522
    %5524 = vmatprep.subr.mxu0 %v5523
    %v5525 = vand.u32 %v84, 4294901760
    %v5526 = vsub.f32 %v84, %v5525
    %5527 = vmatpush1.msra.mxu0 %v5526
    %v5528 = vand.u32 %v87, 4294901760
    %v5529 = vsub.f32 %v87, %v5528
    %5530 = vmatprep.subr.mxu0 %v5529
    %v5531 = vand.u32 %v86, 4294901760
    %v5532 = vsub.f32 %v86, %v5531
    %5533 = vmatpush1.msra.mxu0 %v5532
    %v5534 = vand.u32 %v89, 4294901760
    %v5535 = vsub.f32 %v89, %v5534
    %5536 = vmatprep.subr.mxu0 %v5535
    %v5537 = vand.u32 %v88, 4294901760
    %v5538 = vsub.f32 %v88, %v5537
    %5539 = vmatpush1.msra.mxu0 %v5538
    %v5540 = vand.u32 %v91, 4294901760
    %v5541 = vsub.f32 %v91, %v5540
    %5542 = vmatprep.subr.mxu0 %v5541
    %v5543 = vand.u32 %v90, 4294901760
    %v5544 = vsub.f32 %v90, %v5543
    %5545 = vmatpush1.msra.mxu0 %v5544
    %5546 = vmatprep.subr.mxu0 0.0
    %5547 = vmatpush1.msra.mxu0 0.0
    %5548 = vmatprep.subr.mxu0 0.0
    %5549 = vmatpush1.msra.mxu0 0.0
    %5550 = vmatprep.subr.mxu0 0.0
    %5551 = vmatpush1.msra.mxu0 0.0
    %5552 = vmatprep.subr.mxu0 0.0
    %5553 = vmatpush1.msra.mxu0 0.0
    %5554 = vmatprep.subr.mxu0 0.0
    %5555 = vmatpush1.msra.mxu0 0.0
    %5556 = vmatprep.subr.mxu0 0.0
    %5557 = vmatpush1.msra.mxu0 0.0
    %5558 = vmatprep.subr.mxu0 0.0
    %5559 = vmatpush1.msra.mxu0 0.0
    %5560 = vmatprep.subr.mxu0 0.0
    %5561 = vmatpush1.msra.mxu0 0.0
    %5562 = vmatprep.subr.mxu0 0.0
    %5563 = vmatpush1.msra.mxu0 0.0
    %5564 = vmatprep.subr.mxu0 0.0
    %5565 = vmatpush1.msra.mxu0 0.0
    %5566 = vmatprep.subr.mxu0 0.0
    %5567 = vmatpush1.msra.mxu0 0.0
    %5568 = vmatprep.subr.mxu0 0.0
    %5569 = vmatpush1.msra.mxu0 0.0
    %5570 = vmatprep.subr.mxu0 0.0
    %5571 = vmatpush1.msra.mxu0 0.0
    %5572 = vmatprep.subr.mxu0 0.0
    %5573 = vmatpush1.msra.mxu0 0.0
    %5574 = vmatprep.subr.mxu0 0.0
    %5575 = vmatpush1.msra.mxu0 0.0
    %5576 = vmatprep.subr.mxu0 0.0
    %5577 = vmatpush1.msra.mxu0 0.0
    %5578 = vmatprep.subr.mxu0 0.0
    %5579 = vmatpush1.msra.mxu0 0.0
    %5580 = vmatprep.subr.mxu0 0.0
    %5581 = vmatpush1.msra.mxu0 0.0
    %5582 = vmatprep.subr.mxu0 0.0
    %5583 = vmatpush1.msra.mxu0 0.0
    %5584 = vmatprep.subr.mxu0 0.0
    %5585 = vmatpush1.msra.mxu0 0.0
    %5586 = vmatprep.subr.mxu0 0.0
    %5587 = vmatpush1.msra.mxu0 0.0
    %5588 = vmatprep.subr.mxu0 0.0
    %5589 = vmatpush1.msra.mxu0 0.0
    %5590 = vmatprep.subr.mxu0 0.0
    %5591 = vmatpush1.msra.mxu0 0.0
    %5592 = vmatprep.subr.mxu0 0.0
    %5593 = vmatpush1.msra.mxu0 0.0
    %5594 = vmatprep.mubr.f32.mxu0 0.0
    %v5595 = vand.u32 %v5252, 4294901760
    %v5596 = vsub.f32 %v5252, %v5595
    %5597 = vmatmul.mubr.f32.gmra.mrb[0].mxu0 %v5596
    %v5598 = vpop.f32.mrb[0].mxu0
    %v5599 = vadd.f32 %v5494, %v5598
    %v5600 = vpop.f32.mrb[0].mxu0
    %v5601 = vadd.f32 %v5496, %v5600
    %5602 = vdwg.mxu0
    %v5603 = vand.u32 %v77, 4294901760
    %5604 = vmatprep.subr.mxu0 %v5603
    %v5605 = vand.u32 %v76, 4294901760
    %5606 = vmatpush1.msra.mxu0 %v5605
    %v5607 = vand.u32 %v79, 4294901760
    %5608 = vmatprep.subr.mxu0 %v5607
    %v5609 = vand.u32 %v78, 4294901760
    %5610 = vmatpush1.msra.mxu0 %v5609
    %v5611 = vand.u32 %v81, 4294901760
    %5612 = vmatprep.subr.mxu0 %v5611
    %v5613 = vand.u32 %v80, 4294901760
    %5614 = vmatpush1.msra.mxu0 %v5613
    %v5615 = vand.u32 %v83, 4294901760
    %5616 = vmatprep.subr.mxu0 %v5615
    %v5617 = vand.u32 %v82, 4294901760
    %5618 = vmatpush1.msra.mxu0 %v5617
    %v5619 = vand.u32 %v85, 4294901760
    %5620 = vmatprep.subr.mxu0 %v5619
    %v5621 = vand.u32 %v84, 4294901760
    %5622 = vmatpush1.msra.mxu0 %v5621
    %v5623 = vand.u32 %v87, 4294901760
    %5624 = vmatprep.subr.mxu0 %v5623
    %v5625 = vand.u32 %v86, 4294901760
    %5626 = vmatpush1.msra.mxu0 %v5625
    %v5627 = vand.u32 %v89, 4294901760
    %5628 = vmatprep.subr.mxu0 %v5627
    %v5629 = vand.u32 %v88, 4294901760
    %5630 = vmatpush1.msra.mxu0 %v5629
    %v5631 = vand.u32 %v91, 4294901760
    %5632 = vmatprep.subr.mxu0 %v5631
    %v5633 = vand.u32 %v90, 4294901760
    %5634 = vmatpush1.msra.mxu0 %v5633
    %5635 = vmatprep.subr.mxu0 0.0
    %5636 = vmatpush1.msra.mxu0 0.0
    %5637 = vmatprep.subr.mxu0 0.0
    %5638 = vmatpush1.msra.mxu0 0.0
    %5639 = vmatprep.subr.mxu0 0.0
    %5640 = vmatpush1.msra.mxu0 0.0
    %5641 = vmatprep.subr.mxu0 0.0
    %5642 = vmatpush1.msra.mxu0 0.0
    %5643 = vmatprep.subr.mxu0 0.0
    %5644 = vmatpush1.msra.mxu0 0.0
    %5645 = vmatprep.subr.mxu0 0.0
    %5646 = vmatpush1.msra.mxu0 0.0
    %5647 = vmatprep.subr.mxu0 0.0
    %5648 = vmatpush1.msra.mxu0 0.0
    %5649 = vmatprep.subr.mxu0 0.0
    %5650 = vmatpush1.msra.mxu0 0.0
    %5651 = vmatprep.subr.mxu0 0.0
    %5652 = vmatpush1.msra.mxu0 0.0
    %5653 = vmatprep.subr.mxu0 0.0
    %5654 = vmatpush1.msra.mxu0 0.0
    %5655 = vmatprep.subr.mxu0 0.0
    %5656 = vmatpush1.msra.mxu0 0.0
    %5657 = vmatprep.subr.mxu0 0.0
    %5658 = vmatpush1.msra.mxu0 0.0
    %5659 = vmatprep.subr.mxu0 0.0
    %5660 = vmatpush1.msra.mxu0 0.0
    %5661 = vmatprep.subr.mxu0 0.0
    %5662 = vmatpush1.msra.mxu0 0.0
    %5663 = vmatprep.subr.mxu0 0.0
    %5664 = vmatpush1.msra.mxu0 0.0
    %5665 = vmatprep.subr.mxu0 0.0
    %5666 = vmatpush1.msra.mxu0 0.0
    %5667 = vmatprep.subr.mxu0 0.0
    %5668 = vmatpush1.msra.mxu0 0.0
    %5669 = vmatprep.subr.mxu0 0.0
    %5670 = vmatpush1.msra.mxu0 0.0
    %5671 = vmatprep.subr.mxu0 0.0
    %5672 = vmatpush1.msra.mxu0 0.0
    %5673 = vmatprep.subr.mxu0 0.0
    %5674 = vmatpush1.msra.mxu0 0.0
    %5675 = vmatprep.subr.mxu0 0.0
    %5676 = vmatpush1.msra.mxu0 0.0
    %5677 = vmatprep.subr.mxu0 0.0
    %5678 = vmatpush1.msra.mxu0 0.0
    %5679 = vmatprep.subr.mxu0 0.0
    %5680 = vmatpush1.msra.mxu0 0.0
    %5681 = vmatprep.subr.mxu0 0.0
    %5682 = vmatpush1.msra.mxu0 0.0
    %5683 = vmatprep.mubr.f32.mxu0 0.0
    %v5684 = vand.u32 %v5252, 4294901760
    %v5685 = vsub.f32 %v5252, %v5684
    %v5686 = vand.u32 %v5685, 4294901760
    %5687 = vmatmul.mubr.f32.gmra.mrb[0].mxu0 %v5686
    %v5688 = vpop.f32.mrb[0].mxu0
    %v5689 = vadd.f32 %v5599, %v5688
    %v5690 = vpop.f32.mrb[0].mxu0
    %v5691 = vadd.f32 %v5601, %v5690
    %5692 = vdwg.mxu0
    %v5693 = vand.u32 %v77, 4294901760
    %v5694 = vsub.f32 %v77, %v5693
    %v5695 = vand.u32 %v5694, 4294901760
    %5696 = vmatprep.subr.mxu0 %v5695
    %v5697 = vand.u32 %v76, 4294901760
    %v5698 = vsub.f32 %v76, %v5697
    %v5699 = vand.u32 %v5698, 4294901760
    %5700 = vmatpush1.msra.mxu0 %v5699
    %v5701 = vand.u32 %v79, 4294901760
    %v5702 = vsub.f32 %v79, %v5701
    %v5703 = vand.u32 %v5702, 4294901760
    %5704 = vmatprep.subr.mxu0 %v5703
    %v5705 = vand.u32 %v78, 4294901760
    %v5706 = vsub.f32 %v78, %v5705
    %v5707 = vand.u32 %v5706, 4294901760
    %5708 = vmatpush1.msra.mxu0 %v5707
    %v5709 = vand.u32 %v81, 4294901760
    %v5710 = vsub.f32 %v81, %v5709
    %v5711 = vand.u32 %v5710, 4294901760
    %5712 = vmatprep.subr.mxu0 %v5711
    %v5713 = vand.u32 %v80, 4294901760
    %v5714 = vsub.f32 %v80, %v5713
    %v5715 = vand.u32 %v5714, 4294901760
    %5716 = vmatpush1.msra.mxu0 %v5715
    %v5717 = vand.u32 %v83, 4294901760
    %v5718 = vsub.f32 %v83, %v5717
    %v5719 = vand.u32 %v5718, 4294901760
    %5720 = vmatprep.subr.mxu0 %v5719
    %v5721 = vand.u32 %v82, 4294901760
    %v5722 = vsub.f32 %v82, %v5721
    %v5723 = vand.u32 %v5722, 4294901760
    %5724 = vmatpush1.msra.mxu0 %v5723
    %v5725 = vand.u32 %v85, 4294901760
    %v5726 = vsub.f32 %v85, %v5725
    %v5727 = vand.u32 %v5726, 4294901760
    %5728 = vmatprep.subr.mxu0 %v5727
    %v5729 = vand.u32 %v84, 4294901760
    %v5730 = vsub.f32 %v84, %v5729
    %v5731 = vand.u32 %v5730, 4294901760
    %5732 = vmatpush1.msra.mxu0 %v5731
    %v5733 = vand.u32 %v87, 4294901760
    %v5734 = vsub.f32 %v87, %v5733
    %v5735 = vand.u32 %v5734, 4294901760
    %5736 = vmatprep.subr.mxu0 %v5735
    %v5737 = vand.u32 %v86, 4294901760
    %v5738 = vsub.f32 %v86, %v5737
    %v5739 = vand.u32 %v5738, 4294901760
    %5740 = vmatpush1.msra.mxu0 %v5739
    %v5741 = vand.u32 %v89, 4294901760
    %v5742 = vsub.f32 %v89, %v5741
    %v5743 = vand.u32 %v5742, 4294901760
    %5744 = vmatprep.subr.mxu0 %v5743
    %v5745 = vand.u32 %v88, 4294901760
    %v5746 = vsub.f32 %v88, %v5745
    %v5747 = vand.u32 %v5746, 4294901760
    %5748 = vmatpush1.msra.mxu0 %v5747
    %v5749 = vand.u32 %v91, 4294901760
    %v5750 = vsub.f32 %v91, %v5749
    %v5751 = vand.u32 %v5750, 4294901760
    %5752 = vmatprep.subr.mxu0 %v5751
    %v5753 = vand.u32 %v90, 4294901760
    %v5754 = vsub.f32 %v90, %v5753
    %v5755 = vand.u32 %v5754, 4294901760
    %5756 = vmatpush1.msra.mxu0 %v5755
    %5757 = vmatprep.subr.mxu0 0.0
    %5758 = vmatpush1.msra.mxu0 0.0
    %5759 = vmatprep.subr.mxu0 0.0
    %5760 = vmatpush1.msra.mxu0 0.0
    %5761 = vmatprep.subr.mxu0 0.0
    %5762 = vmatpush1.msra.mxu0 0.0
    %5763 = vmatprep.subr.mxu0 0.0
    %5764 = vmatpush1.msra.mxu0 0.0
    %5765 = vmatprep.subr.mxu0 0.0
    %5766 = vmatpush1.msra.mxu0 0.0
    %5767 = vmatprep.subr.mxu0 0.0
    %5768 = vmatpush1.msra.mxu0 0.0
    %5769 = vmatprep.subr.mxu0 0.0
    %5770 = vmatpush1.msra.mxu0 0.0
    %5771 = vmatprep.subr.mxu0 0.0
    %5772 = vmatpush1.msra.mxu0 0.0
    %5773 = vmatprep.subr.mxu0 0.0
    %5774 = vmatpush1.msra.mxu0 0.0
    %5775 = vmatprep.subr.mxu0 0.0
    %5776 = vmatpush1.msra.mxu0 0.0
    %5777 = vmatprep.subr.mxu0 0.0
    %5778 = vmatpush1.msra.mxu0 0.0
    %5779 = vmatprep.subr.mxu0 0.0
    %5780 = vmatpush1.msra.mxu0 0.0
    %5781 = vmatprep.subr.mxu0 0.0
    %5782 = vmatpush1.msra.mxu0 0.0
    %5783 = vmatprep.subr.mxu0 0.0
    %5784 = vmatpush1.msra.mxu0 0.0
    %5785 = vmatprep.subr.mxu0 0.0
    %5786 = vmatpush1.msra.mxu0 0.0
    %5787 = vmatprep.subr.mxu0 0.0
    %5788 = vmatpush1.msra.mxu0 0.0
    %5789 = vmatprep.subr.mxu0 0.0
    %5790 = vmatpush1.msra.mxu0 0.0
    %5791 = vmatprep.subr.mxu0 0.0
    %5792 = vmatpush1.msra.mxu0 0.0
    %5793 = vmatprep.subr.mxu0 0.0
    %5794 = vmatpush1.msra.mxu0 0.0
    %5795 = vmatprep.subr.mxu0 0.0
    %5796 = vmatpush1.msra.mxu0 0.0
    %5797 = vmatprep.subr.mxu0 0.0
    %5798 = vmatpush1.msra.mxu0 0.0
    %5799 = vmatprep.subr.mxu0 0.0
    %5800 = vmatpush1.msra.mxu0 0.0
    %5801 = vmatprep.subr.mxu0 0.0
    %5802 = vmatpush1.msra.mxu0 0.0
    %5803 = vmatprep.subr.mxu0 0.0
    %5804 = vmatpush1.msra.mxu0 0.0
    %5805 = vmatprep.mubr.f32.mxu0 0.0
    %v5806 = vand.u32 %v5252, 4294901760
    %5807 = vmatmul.mubr.f32.gmra.mrb[0].mxu0 %v5806
    %v5808 = vpop.f32.mrb[0].mxu0
    %v5809 = vadd.f32 %v5689, %v5808
    %v5810 = vpop.f32.mrb[0].mxu0
    %v5811 = vadd.f32 %v5691, %v5810
    %5812 = vdwg.mxu0
    %v5813 = vand.u32 %v77, 4294901760
    %5814 = vmatprep.subr.mxu0 %v5813
    %v5815 = vand.u32 %v76, 4294901760
    %5816 = vmatpush1.msra.mxu0 %v5815
    %v5817 = vand.u32 %v79, 4294901760
    %5818 = vmatprep.subr.mxu0 %v5817
    %v5819 = vand.u32 %v78, 4294901760
    %5820 = vmatpush1.msra.mxu0 %v5819
    %v5821 = vand.u32 %v81, 4294901760
    %5822 = vmatprep.subr.mxu0 %v5821
    %v5823 = vand.u32 %v80, 4294901760
    %5824 = vmatpush1.msra.mxu0 %v5823
    %v5825 = vand.u32 %v83, 4294901760
    %5826 = vmatprep.subr.mxu0 %v5825
    %v5827 = vand.u32 %v82, 4294901760
    %5828 = vmatpush1.msra.mxu0 %v5827
    %v5829 = vand.u32 %v85, 4294901760
    %5830 = vmatprep.subr.mxu0 %v5829
    %v5831 = vand.u32 %v84, 4294901760
    %5832 = vmatpush1.msra.mxu0 %v5831
    %v5833 = vand.u32 %v87, 4294901760
    %5834 = vmatprep.subr.mxu0 %v5833
    %v5835 = vand.u32 %v86, 4294901760
    %5836 = vmatpush1.msra.mxu0 %v5835
    %v5837 = vand.u32 %v89, 4294901760
    %5838 = vmatprep.subr.mxu0 %v5837
    %v5839 = vand.u32 %v88, 4294901760
    %5840 = vmatpush1.msra.mxu0 %v5839
    %v5841 = vand.u32 %v91, 4294901760
    %5842 = vmatprep.subr.mxu0 %v5841
    %v5843 = vand.u32 %v90, 4294901760
    %5844 = vmatpush1.msra.mxu0 %v5843
    %5845 = vmatprep.subr.mxu0 0.0
    %5846 = vmatpush1.msra.mxu0 0.0
    %5847 = vmatprep.subr.mxu0 0.0
    %5848 = vmatpush1.msra.mxu0 0.0
    %5849 = vmatprep.subr.mxu0 0.0
    %5850 = vmatpush1.msra.mxu0 0.0
    %5851 = vmatprep.subr.mxu0 0.0
    %5852 = vmatpush1.msra.mxu0 0.0
    %5853 = vmatprep.subr.mxu0 0.0
    %5854 = vmatpush1.msra.mxu0 0.0
    %5855 = vmatprep.subr.mxu0 0.0
    %5856 = vmatpush1.msra.mxu0 0.0
    %5857 = vmatprep.subr.mxu0 0.0
    %5858 = vmatpush1.msra.mxu0 0.0
    %5859 = vmatprep.subr.mxu0 0.0
    %5860 = vmatpush1.msra.mxu0 0.0
    %5861 = vmatprep.subr.mxu0 0.0
    %5862 = vmatpush1.msra.mxu0 0.0
    %5863 = vmatprep.subr.mxu0 0.0
    %5864 = vmatpush1.msra.mxu0 0.0
    %5865 = vmatprep.subr.mxu0 0.0
    %5866 = vmatpush1.msra.mxu0 0.0
    %5867 = vmatprep.subr.mxu0 0.0
    %5868 = vmatpush1.msra.mxu0 0.0
    %5869 = vmatprep.subr.mxu0 0.0
    %5870 = vmatpush1.msra.mxu0 0.0
    %5871 = vmatprep.subr.mxu0 0.0
    %5872 = vmatpush1.msra.mxu0 0.0
    %5873 = vmatprep.subr.mxu0 0.0
    %5874 = vmatpush1.msra.mxu0 0.0
    %5875 = vmatprep.subr.mxu0 0.0
    %5876 = vmatpush1.msra.mxu0 0.0
    %5877 = vmatprep.subr.mxu0 0.0
    %5878 = vmatpush1.msra.mxu0 0.0
    %5879 = vmatprep.subr.mxu0 0.0
    %5880 = vmatpush1.msra.mxu0 0.0
    %5881 = vmatprep.subr.mxu0 0.0
    %5882 = vmatpush1.msra.mxu0 0.0
    %5883 = vmatprep.subr.mxu0 0.0
    %5884 = vmatpush1.msra.mxu0 0.0
    %5885 = vmatprep.subr.mxu0 0.0
    %5886 = vmatpush1.msra.mxu0 0.0
    %5887 = vmatprep.subr.mxu0 0.0
    %5888 = vmatpush1.msra.mxu0 0.0
    %5889 = vmatprep.subr.mxu0 0.0
    %5890 = vmatpush1.msra.mxu0 0.0
    %5891 = vmatprep.subr.mxu0 0.0
    %5892 = vmatpush1.msra.mxu0 0.0
    %5893 = vmatprep.mubr.f32.mxu0 0.0
    %v5894 = vand.u32 %v5252, 4294901760
    %5895 = vmatmul.mubr.f32.gmra.mrb[0].mxu0 %v5894
    %v5896 = vpop.f32.mrb[0].mxu0
    %v5897 = vadd.f32 %v5809, %v5896
    %v5898 = vpop.f32.mrb[0].mxu0
    %v5899 = vadd.f32 %v5811, %v5898
    %5900 = vdwg.mxu0
    %s5901 = scalar_lea.vmem [#allocation3], 14
    %v5902 = vld [vmem:[%s5901] sm:$0x3]
    %v5903 = vld [vmem:[#allocation6] sm:$0x3]
    %v5904 = vadd.f32 %v5902, %v5897
    %v5905 = vxor.u32 %v5904, 2147483648
    %v5906 = vmul.f32 %v5905, 1.442695
    %v5907 = vpow.pop %v5906
    %v5908 = vadd.f32 %v5907, 1.0
    %v5909 = vrcp.pop %v5908
    %v5910 = vmul.f32 1.0, %v5909
    %5912 = vrot.lane.b32.xlu0 %v5897, 64
    %v5913 = vpop.permute.xlu0 %5912
    %v5915 = vmul.f32 %v5910, %v5913
    %5917 = vrot.lane.b32.xlu0 %v5915, 64
    %v5918 = vpop.permute.xlu0 %5917
    %v5920 = vadd.f32 %v5902, %v5918
    %v5921 = vtanh.pop %v5920
    %v5922 = vsub.f32 1.0, %v5910
    %5924 = vrot.lane.b32.xlu0 %v5921, 96
    %v5925 = vpop.permute.xlu0 %5924
    %v5927 = vmul.f32 %v5922, %v5925
    %5928 = vrot.lane.b32.xlu0 %v5250, 32
    %v5929 = vpop.permute.xlu0 %5928
    %v5931 = vmul.f32 %v5910, %v5929
    %v5932 = vadd.f32 %v5927, %v5931
    %5933 = vrot.lane.b32.xlu0 %v5897, 32
    %v5934 = vpop.permute.xlu0 %5933
    %v5936 = vadd.f32 %v5903, %v5934
    %v5937 = vxor.u32 %v5936, 2147483648
    %v5938 = vmul.f32 %v5937, 1.442695
    %v5939 = vpow.pop %v5938
    %v5940 = vadd.f32 %v5939, 1.0
    %v5941 = vrcp.pop %v5940
    %v5942 = vmul.f32 1.0, %v5941
    %5944 = vrot.lane.b32.xlu0 %v5899, 32
    %v5945 = vpop.permute.xlu0 %5944
    %v5947 = vadd.f32 %v5903, %v5945
    %v5948 = vxor.u32 %v5947, 2147483648
    %v5949 = vmul.f32 %v5948, 1.442695
    %v5950 = vpow.pop %v5949
    %v5951 = vadd.f32 %v5950, 1.0
    %v5952 = vrcp.pop %v5951
    %v5953 = vmul.f32 1.0, %v5952
    %5954 = vrot.lane.b32.xlu0 %v5899, 96
    %v5955 = vpop.permute.xlu0 %5954
    %v5957 = vmul.f32 %v5942, %v5955
    %5959 = vrot.lane.b32.xlu0 %v5957, 64
    %v5960 = vpop.permute.xlu0 %5959
    %v5962 = vadd.f32 %v5903, %v5960
    %v5963 = vtanh.pop %v5962
    %v5964 = vsub.f32 1.0, %v5953
    %5966 = vrot.lane.b32.xlu0 %v5963, 96
    %v5967 = vpop.permute.xlu0 %5966
    %v5969 = vmul.f32 %v5964, %v5967
    %v5970 = vmul.f32 %v5953, %v5250
    %v5971 = vadd.f32 %v5969, %v5970
    %5973 = vrot.lane.b32.xlu0 %v5932, 96
    %v5974 = vpop.permute.xlu0 %5973
    %s5976 = scalar_lea.vmem [#allocation9], 14
    %5977 = vst.msk [vmem:[%s5976] sm:$0x3] %vm831, %v5974
    %5979 = vrot.lane.b32.xlu0 %v5971, 96
    %v5980 = vpop.permute.xlu0 %5979
    %5982 = vst.msk [vmem:[#allocation10] sm:$0x3] %vm831, %v5980
    %v5983 = vsel %vm839, %v5974, %v5971
    %vm5984 = vcmask 517120
    %5985 = vst.msk [vmem:[#allocation2] sm:$0x3] %vm5984, %v5983
    // Predicated region
    $region34: #{tpu_custom_call.1} parent=1 // pred_check
      _
    $region35: #{tpu_custom_call.1} parent=1 // pred_check_branch
      %5987 = sbr.rel (0) target = $region37
    $region36: #{tpu_custom_call.1} parent=1 // pred_region
      %s5989 = ssub.s32 256, 256
      %5990 = vsyncadd [#allocation5], %s5989
      %s5991 = sshll.u32 [#allocation9], 4
      %s5992 = int_to_ptr.vmem [resolvable:$true] %s5991
      %5997 = dma.vmem_to_hbm [thread:$0]  %s5992, 256, %s4, [#allocation5], 32, 32, 2
    $region37: #{tpu_custom_call.1} parent=1 // pred_fallthru
      _
    // Predicated region
    $region38: #{tpu_custom_call.1} parent=1 // pred_check
      _
    $region39: #{tpu_custom_call.1} parent=1 // pred_check_branch
      %5999 = sbr.rel (0) target = $region41
    $region40: #{tpu_custom_call.1} parent=1 // pred_region
      %s6000 = ssub.s32 0, 0
      %s6001 = smul.u32 8, %s6000
      %s6003 = ssub.s32 256, 256
      %6004 = vsyncadd [#allocation11], %s6003
      %s6005 = smul.addr %s6001, 32
      %s6006 = scalar_lea.hbm %s5, %s6005
      %s6007 = sshll.u32 [#allocation10], 4
      %s6008 = int_to_ptr.vmem [resolvable:$true] %s6007
      %6013 = dma.vmem_to_hbm [thread:$0]  %s6008, 256, %s6006, [#allocation11], 32, 32, 2
    $region41: #{tpu_custom_call.1} parent=1 // pred_fallthru
      _
    // Predicated region
    $region42: #{tpu_custom_call.1} parent=1 // pred_check
      _
    $region43: #{tpu_custom_call.1} parent=1 // pred_check_branch
      %6015 = sbr.rel (0) target = $region45
    $region44: #{tpu_custom_call.1} parent=1 // pred_region
      %6016 = dma.done [#allocation5], 256
    $region45: #{tpu_custom_call.1} parent=1 // pred_fallthru
      _
    // Predicated region
    $region46: #{tpu_custom_call.1} parent=1 // pred_check
      _
    $region47: #{tpu_custom_call.1} parent=1 // pred_check_branch
      %6018 = sbr.rel (0) target = $region49
    $region48: #{tpu_custom_call.1} parent=1 // pred_region
      %6019 = dma.done [#allocation11], 256
    $region49: #{tpu_custom_call.1} parent=1 // pred_fallthru
      _
    %6020 = vsyncpa [#allocation4], 1
    %6021 = vsyncpa [#allocation7], 1
    %6022 = vsyncpa [#allocation5], 1
    %6023 = vsyncpa [#allocation11], 1

</llo_original>
